<compile_context>
chip_gen: v5e
topology: v5e:2x2
jax: 0.10.0
libtpu: 0.0.40
codegen_flags: <defaults>
</compile_context>

<pallas_src>
import functools

import jax
import jax.numpy as jnp
import numpy as np
from jax import lax
from jax.experimental import pallas as pl
from jax.experimental.pallas import tpu as pltpu


_VMEM_LIMIT = 48 * 1024 * 1024      # safe on v7x (64 MiB phys), generous on v5e/v6e
_LIVE_BUDGET = 28 * 1024 * 1024     # live-set budget used to size the plane batch


# ------------------------------- host helpers --------------------------------

def _band_matrix_host(n, n_valid, radius):
    """0/1 matrix M[i, j] = 1 iff |i-j| <= radius and both i, j < n_valid."""
    idx = np.arange(n)
    band = np.abs(idx[:, None] - idx[None, :]) <= radius
    valid = idx < n_valid
    return (band & valid[:, None] & valid[None, :]).astype(np.float32)


def _choose_batch(n_items, est_bytes, budget=_LIVE_BUDGET):
    """Largest divisor of n_items fitting the VMEM budget, preferring an even
    grid length (v7x has two TensorCores); divisors avoid plane padding."""
    divs = [d for d in range(1, n_items + 1)
            if n_items % d == 0 and est_bytes(d) <= budget]
    if not divs:
        return 1
    even = [d for d in divs if (n_items // d) % 2 == 0]
    return max(even) if even else max(divs)


# ----------------------------- Pallas kernels ---------------------------------

def _nonlocal_kernel(x_ref, min_ref, scale_ref, step_ref, mh_ref, mw_ref, o_ref,
                     *, p, eps, bins, G, Pg, Hp, W):
    J = x_ref[...]                              # (nrows, L) f32, lane-packed planes
    nrows, L = J.shape
    MH = mh_ref[...]                            # (nrows, nrows) block-diag H band
    MW = mw_ref[...]                            # (L, L)         block-diag W band

    # --- per-plane constants (min, B/denom, denom/B) broadcast onto the block ---
    pid = pl.program_id(0)
    rows = lax.broadcasted_iota(jnp.int32, (nrows, L), 0)
    lanes = lax.broadcasted_iota(jnp.int32, (nrows, L), 1)
    minf = jnp.zeros((nrows, L), jnp.float32)
    scalef = jnp.zeros((nrows, L), jnp.float32)
    stepf = jnp.zeros((nrows, L), jnp.float32)
    base = pid * (Pg * G)
    for g in range(Pg):                         # static, tiny unroll (once per step)
        rmask = jnp.logical_and(rows >= g * Hp, rows < (g + 1) * Hp)
        for s in range(G):
            mask = jnp.logical_and(
                rmask, jnp.logical_and(lanes >= s * W, lanes < (s + 1) * W))
            idx = base + g * G + s
            minf = jnp.where(mask, min_ref[idx], minf)
            scalef = jnp.where(mask, scale_ref[idx], scalef)
            stepf = jnp.where(mask, step_ref[idx], stepf)

    I2 = J * J
    t = (J - minf) * scalef                     # == (J - min)/denom * B, no divide
    t_floor = jnp.floor(t)
    t_ceil = jnp.ceil(t)

    def box3(w):
        # Fused clipped 2-D box filter of (w, w*J, w*J^2): one W-side 2-D matmul
        # on the row-stacked operand (band matrix stays staged), three H-side
        # 2-D matmuls with the block-diagonal H band.  All pure 2-D MXU dots.
        stacked = jnp.concatenate([w, w * J, w * I2], axis=0)        # (3*nrows, L)
        y = jnp.dot(stacked, MW, preferred_element_type=jnp.float32)
        w_sum = jnp.dot(MH, y[0:nrows], preferred_element_type=jnp.float32)
        wi_sum = jnp.dot(MH, y[nrows:2 * nrows], preferred_element_type=jnp.float32)
        wi2_sum = jnp.dot(MH, y[2 * nrows:3 * nrows], preferred_element_type=jnp.float32)
        return w_sum, wi_sum, wi2_sum

    def w_of(i):
        # (|J - Q_i| + eps) ** (p - 2)  with  |J - Q_i| == step * |t - i|
        return jnp.exp((p - 2.0) * jnp.log(stepf * jnp.abs(t - float(i)) + eps))

    w1 = w_of(0)
    ws1, wis1, wi2s1 = box3(w1)
    loss1 = ws1 * I2 - 2.0 * J * wis1 + wi2s1

    loss_acc = jnp.zeros_like(J)
    wsum_acc = jnp.zeros_like(J)
    for i in range(1, bins + 1):                # B is small & static -> unrolled
        w2 = w_of(i)
        ws2, wis2, wi2s2 = box3(w2)
        loss2 = ws2 * I2 - 2.0 * J * wis2 + wi2s2
        # (Q_i - J)/dq == i - t and (J - Q_{i-1})/dq == t - (i-1): the per-bin
        # '/ dq' of the reference cancels exactly (uniform bins), so the
        # per-plane step factor never appears here.
        a1 = jnp.where(t_floor == float(i - 1), float(i) - t, 0.0)
        a2 = jnp.where(t_ceil == float(i), t - float(i - 1), 0.0)
        loss_acc = loss_acc + loss1 * a1 + loss2 * a2
        wsum_acc = wsum_acc + ws1 * a1 + ws2 * a2
        ws1 = ws2
        loss1 = loss2

    o_ref[...] = loss_acc * pl.reciprocal(wsum_acc, approx=True)


def _simple_kernel(x_ref, o_ref, *, p, eps):
    # TODO(synk): tiny fallback path (H<10 or W<10) — roll-based shifts /
    # lane-dense full-width output skipped; static slices are sufficient here.
    I = x_ref[...]                              # (P, H, W)
    c = I[:, 1:-1, 1:-1]

    def term(shifted):
        d = shifted - c
        w = jnp.exp((p - 2.0) * jnp.log(jnp.abs(d) + eps))
        return w, w * d * d

    w1, l1 = term(I[:, 2:, 1:-1])
    w2, l2 = term(I[:, 1:-1, 2:])
    w3, l3 = term(I[:, :-2, 1:-1])
    w4, l4 = term(I[:, 1:-1, :-2])
    o_ref[...] = (l1 + l2 + l3 + l4) * pl.reciprocal(w1 + w2 + w3 + w4, approx=True)


# ------------------------------ Pallas wrappers --------------------------------

def _simple_smoothness_loss(I, p=1.0, eps=0.01):
    N, C, H, W = I.shape
    NC = N * C
    x = I.reshape(NC, H, W).astype(jnp.float32)
    P = _choose_batch(NC, lambda d: 16 * d * H * W * 4)
    out = pl.pallas_call(
        functools.partial(_simple_kernel, p=float(p), eps=float(eps)),
        out_shape=jax.ShapeDtypeStruct((NC, H - 2, W - 2), jnp.float32),
        grid=(NC // P,),
        in_specs=[pl.BlockSpec((P, H, W), lambda i: (i, 0, 0))],
        out_specs=pl.BlockSpec((P, H - 2, W - 2), lambda i: (i, 0, 0)),
        compiler_params=pltpu.CompilerParams(
            dimension_semantics=("parallel",),
            vmem_limit_bytes=_VMEM_LIMIT),
    )(x)
    return jnp.mean(out.reshape(N, -1), axis=1)


def _nonlocal_smoothness_loss(I, p=1.0, eps=1e-4, R=0.1, B=10):
    N, C, H, W = I.shape
    radius = int(min(H, W) * R)
    if H < 10 or W < 10 or radius < 2:
        return _simple_smoothness_loss(I, p, eps)
    NC = N * C
    x = I.reshape(NC, H, W).astype(jnp.float32)

    # Lane packing: G = floor(128/W) planes share the lane axis (lane density).
    G = min(max(1, 128 // W), NC)
    L = G * W
    Hp = ((H + 7) // 8) * 8                     # sublane pad so blocks are 2-D legal
    NP = -(-NC // G)                            # number of packed plane-rows
    est = lambda d: (32 * d * Hp * L + (d * Hp) ** 2 + L * L) * 4
    Pg = _choose_batch(NP, est)                 # packed rows per grid step
    NPp = -(-NP // Pg) * Pg
    total = NPp * G                             # planes incl. padding

    # ---- pack data -> (NPp*Hp, L) -------------------------------------------
    x_p = x
    if total != NC:
        x_p = jnp.concatenate(
            [x_p, jnp.zeros((total - NC, H, W), jnp.float32)], axis=0)
    if Hp != H:
        x_p = jnp.pad(x_p, ((0, 0), (0, Hp - H), (0, 0)))
    x_p = x_p.reshape(NPp, G, Hp, W).transpose(0, 2, 1, 3).reshape(NPp * Hp, L)

    # ---- per-plane stats (exact, done once here, not per pixel in-kernel) ----
    min_j = jnp.min(x.reshape(NC, -1), axis=1)
    max_j = jnp.max(x.reshape(NC, -1), axis=1)
    if total != NC:
        z = jnp.zeros((total - NC,), jnp.float32)
        min_j = jnp.concatenate([min_j, z])
        max_j = jnp.concatenate([max_j, z])
    denom = max_j - min_j + 1e-5
    scale = float(B) / denom                    # t = (J - min) * scale
    step = denom / float(B)                     # bin width Q_i - Q_{i-1}

    # ---- grid-invariant block-diagonal band matrices (box filter as matmul) --
    mh = jnp.asarray(np.kron(np.eye(Pg, dtype=np.float32),
                             _band_matrix_host(Hp, H, radius)))
    mw = jnp.asarray(np.kron(np.eye(G, dtype=np.float32),
                             _band_matrix_host(W, W, radius)))

    nrows = Pg * Hp
    out = pl.pallas_call(
        functools.partial(_nonlocal_kernel, p=float(p), eps=float(eps),
                          bins=int(B), G=G, Pg=Pg, Hp=Hp, W=W),
        out_shape=jax.ShapeDtypeStruct((NPp * Hp, L), jnp.float32),
        grid=(NPp // Pg,),
        in_specs=[
            pl.BlockSpec((nrows, L), lambda i: (i, 0)),           # packed planes
            pl.BlockSpec(memory_space=pltpu.MemorySpace.SMEM),    # per-plane min
            pl.BlockSpec(memory_space=pltpu.MemorySpace.SMEM),    # per-plane B/denom
            pl.BlockSpec(memory_space=pltpu.MemorySpace.SMEM),    # per-plane denom/B
            pl.BlockSpec((nrows, nrows), lambda i: (0, 0)),       # H band (invariant)
            pl.BlockSpec((L, L), lambda i: (0, 0)),               # W band (invariant)
        ],
        out_specs=pl.BlockSpec((nrows, L), lambda i: (i, 0)),
        compiler_params=pltpu.CompilerParams(
            dimension_semantics=("parallel",),
            vmem_limit_bytes=_VMEM_LIMIT),
    )(x_p, min_j, scale, step, mh, mw)

    # ---- unpack, crop padding, per-sample mean --------------------------------
    out = out.reshape(NPp, Hp, G, W).transpose(0, 2, 1, 3).reshape(NPp * G, Hp, W)
    out = out[:NC, :H, :]
    return jnp.mean(out.reshape(N, -1), axis=1)


# ------------------------------- forward (glue) --------------------------------

def _gradient(pred):
    D_dy = pred[:, :, 1:] - pred[:, :, :-1]
    D_dx = pred[:, :, :, 1:] - pred[:, :, :, :-1]
    return D_dx, D_dy


def _make_dd(scaled_map):
    dx, dy = _gradient(scaled_map)
    dx2, dxdy = _gradient(dx)
    dydx, dy2 = _gradient(dy)
    return jnp.concatenate(
        [dx2[:, :, 1:-1, :], dy2[:, :, :, 1:-1],
         dxdy[:, :, :-1, :-1], dydx[:, :, :-1, :-1]], axis=1)


def non_local_smooth_loss_forward(pred_map, p=0.5, eps=1e-4):
    """Matches non_local_smooth_loss.forward (no learnable parameters)."""
    if not isinstance(pred_map, (tuple, list)):
        pred_map = [pred_map]
    loss = 0.0
    weight = 0
    for scaled_map in pred_map:
        N, C, H, W = scaled_map.shape
        dd = _make_dd(scaled_map)
        loss = loss + _nonlocal_smoothness_loss(dd, p=0.8, eps=1e-4, R=0.1, B=10)
        weight += H * W
    return loss / weight


# --------------------------- pure-JAX reference (check) ------------------------

def _box_filter_ref(x, R):
    N, C, H, W = x.shape
    cs = jnp.cumsum(x, axis=2)
    ss = jnp.concatenate(
        [cs[:, :, R:2 * R + 1, :],
         cs[:, :, 2 * R + 1:H, :] - cs[:, :, 0:H - 2 * R - 1, :],
         cs[:, :, -1:, :] - cs[:, :, H - 2 * R - 1:H - R - 1, :]], axis=2)
    cs = jnp.cumsum(ss, axis=3)
    ss = jnp.concatenate(
        [cs[:, :, :, R:2 * R + 1],
         cs[:, :, :, 2 * R + 1:W] - cs[:, :, :, 0:W - 2 * R - 1],
         cs[:, :, :, -1:] - cs[:, :, :, W - 2 * R - 1:W - R - 1]], axis=3)
    return ss


def _simple_ref(I, p, eps):
    N, C, H, W = I.shape
    c = I[:, :, 1:-1, 1:-1]

    def term(sh):
        d = sh - c
        return (jnp.abs(d) + eps) ** (p - 2), d * d

    W1, I1 = term(I[:, :, 2:, 1:-1])
    W2, I2 = term(I[:, :, 1:-1, 2:])
    W3, I3 = term(I[:, :, :-2, 1:-1])
    W4, I4 = term(I[:, :, 1:-1, :-2])
    loss = (W1 * I1 + W2 * I2 + W3 * I3 + W4 * I4) / (W1 + W2 + W3 + W4)
    return jnp.mean(loss.reshape(N, -1), axis=1)


def _nonlocal_ref(I, p=1.0, eps=1e-4, R=0.1, B=10):
    N, C, H, W = I.shape
    Ri = int(min(H, W) * R)
    if H < 10 or W < 10 or Ri < 2:
        return _simple_ref(I, p, eps)
    J = I
    min_J = jnp.min(J.reshape(N, C, -1), axis=2).reshape(N, C, 1, 1)
    max_J = jnp.max(J.reshape(N, C, -1), axis=2).reshape(N, C, 1, 1)
    Q = jnp.asarray(np.linspace(0.0, 1.0, B + 1), dtype=I.dtype).reshape(1, 1, 1, 1, B + 1)
    Q = Q * (max_J - min_J + 1e-5)[..., None] + min_J[..., None]
    Bin1 = jnp.floor((J - min_J) / (max_J - min_J + 1e-5) * B).astype(jnp.int32)
    Bin2 = jnp.ceil((J - min_J) / (max_J - min_J + 1e-5) * B).astype(jnp.int32)
    I_old = I
    Wt1 = (jnp.abs(J - Q[..., 0]) + eps) ** (p - 2)
    W_sum1 = _box_filter_ref(Wt1, Ri)
    WI_sum1 = _box_filter_ref(Wt1 * I_old, Ri)
    WI2_sum1 = _box_filter_ref(Wt1 * I_old ** 2, Ri)
    loss1 = W_sum1 * I ** 2 - 2 * I * WI_sum1 + WI2_sum1
    loss = 0.0
    W_sum = 0.0
    for i in range(1, B + 1):
        Wt2 = (jnp.abs(J - Q[..., i]) + eps) ** (p - 2)
        W_sum2 = _box_filter_ref(Wt2, Ri)
        WI_sum2 = _box_filter_ref(Wt2 * I_old, Ri)
        WI2_sum2 = _box_filter_ref(Wt2 * I_old ** 2, Ri)
        loss2 = W_sum2 * I ** 2 - 2 * I * WI_sum2 + WI2_sum2
        mask1 = (Bin1 == i - 1).astype(I.dtype)
        mask2 = (Bin2 == i).astype(I.dtype)
        dq = Q[..., i] - Q[..., i - 1]
        loss = loss + (loss1 * (Q[..., i] - J) * mask1 + loss2 * (J - Q[..., i - 1]) * mask2) / dq
        W_sum = W_sum + (W_sum1 * (Q[..., i] - J) * mask1 + W_sum2 * (J - Q[..., i - 1]) * mask2) / dq
        W_sum1 = W_sum2
        loss1 = loss2
    return jnp.mean((loss / W_sum).reshape(N, -1), axis=1)


def _forward_ref(pred_map, p=0.5, eps=1e-4):
    if not isinstance(pred_map, (tuple, list)):
        pred_map = [pred_map]
    loss = 0.0
    weight = 0
    for scaled_map in pred_map:
        N, C, H, W = scaled_map.shape
        dd = _make_dd(scaled_map)
        loss = loss + _nonlocal_ref(dd, p=0.8, eps=1e-4, R=0.1, B=10)
        weight += H * W
    return loss / weight


# ------------------------------------ main --------------------------------------

if __name__ == "__main__":
    key = jax.random.PRNGKey(0)
    k1, k2 = jax.random.split(key)

    # Non-local path: dd is (2, 12, 30, 30) -> radius 3 >= 2.  G=4 planes packed
    # per lane row, Pg=3 packed rows per step -> grid length 2 (both v7x cores).
    x = jax.random.normal(k1, (2, 3, 32, 32), dtype=jnp.float32)
    loss = jax.block_until_ready(non_local_smooth_loss_forward(x))
    loss_ref = jax.block_until_ready(_forward_ref(x))
    assert loss.shape == (2,)
    assert bool(jnp.all(jnp.isfinite(loss)))
    if not jnp.allclose(loss, loss_ref, rtol=2e-2, atol=1e-6):
        raise AssertionError(f"non-local path mismatch: {loss} vs {loss_ref}")

    # Small-spatial fallback (SimpleSmoothnessLoss kernel): dd is (2, 12, 6, 6).
    x_small = jax.random.normal(k2, (2, 3, 8, 8), dtype=jnp.float32)
    loss_s = jax.block_until_ready(non_local_smooth_loss_forward(x_small))
    loss_s_ref = jax.block_until_ready(_forward_ref(x_small))
    if not jnp.allclose(loss_s, loss_s_ref, rtol=2e-2, atol=1e-6):
        raise AssertionError(f"simple path mismatch: {loss_s} vs {loss_s_ref}")

    print("KERNEL_OK")
</pallas_src>

<mosaic_0001>
module attributes {stable_mosaic.version = 11 : i64} {
  func.func @_nonlocal_kernel(%arg0: i32, %arg1: memref<96x120xf32, #tpu.memory_space<vmem>>, %arg2: memref<24xf32, #tpu.memory_space<smem>>, %arg3: memref<24xf32, #tpu.memory_space<smem>>, %arg4: memref<24xf32, #tpu.memory_space<smem>>, %arg5: memref<96x96xf32, #tpu.memory_space<vmem>>, %arg6: memref<120x120xf32, #tpu.memory_space<vmem>>, %arg7: memref<96x120xf32, #tpu.memory_space<vmem>>) attributes {dimension_semantics = [#tpu.dimension_semantics<parallel>], iteration_bounds = array<i64: 2>, scalar_prefetch = 0 : i64, scratch_operands = 0 : i64, tpu.core_type = #tpu.core_type<tc>, window_params = [{transform_indices = @transform_0, window_bounds = array<i64: 96, 120>}, {transform_indices = @transform_1, window_bounds = array<i64: 24>}, {transform_indices = @transform_2, window_bounds = array<i64: 24>}, {transform_indices = @transform_3, window_bounds = array<i64: 24>}, {pipeline_mode = #tpu.pipeline_mode<synchronous>, transform_indices = @transform_4, window_bounds = array<i64: 96, 96>}, {pipeline_mode = #tpu.pipeline_mode<synchronous>, transform_indices = @transform_5, window_bounds = array<i64: 120, 120>}, {transform_indices = @transform_6, window_bounds = array<i64: 96, 120>}]} {
    %c0 = arith.constant 0 : index
    %c0_0 = arith.constant 0 : index
    %0 = vector.load %arg1[%c0, %c0_0] : memref<96x120xf32, #tpu.memory_space<vmem>>, vector<96x120xf32>
    %c0_1 = arith.constant 0 : index
    %c0_2 = arith.constant 0 : index
    %1 = vector.load %arg5[%c0_1, %c0_2] : memref<96x96xf32, #tpu.memory_space<vmem>>, vector<96x96xf32>
    %c0_3 = arith.constant 0 : index
    %c0_4 = arith.constant 0 : index
    %2 = vector.load %arg6[%c0_3, %c0_4] : memref<120x120xf32, #tpu.memory_space<vmem>>, vector<120x120xf32>
    %3 = tpu.iota {dimensions = array<i32: 0>} : vector<96x120xi32>
    %4 = tpu.iota {dimensions = array<i32: 1>} : vector<96x120xi32>
    %cst = arith.constant 0.000000e+00 : f32
    %5 = vector.broadcast %cst : f32 to vector<96x120xf32>
    %cst_5 = arith.constant 0.000000e+00 : f32
    %6 = vector.broadcast %cst_5 : f32 to vector<96x120xf32>
    %cst_6 = arith.constant 0.000000e+00 : f32
    %7 = vector.broadcast %cst_6 : f32 to vector<96x120xf32>
    %c12_i32 = arith.constant 12 : i32
    %8 = arith.muli %arg0, %c12_i32 : i32
    %c0_i32 = arith.constant 0 : i32
    %9 = vector.broadcast %c0_i32 : i32 to vector<96x120xi32>
    %10 = arith.cmpi sge, %3, %9 : vector<96x120xi32>
    %c32_i32 = arith.constant 32 : i32
    %11 = vector.broadcast %c32_i32 : i32 to vector<96x120xi32>
    %12 = arith.cmpi slt, %3, %11 : vector<96x120xi32>
    %13 = arith.andi %10, %12 : vector<96x120xi1>
    %c0_i32_7 = arith.constant 0 : i32
    %14 = vector.broadcast %c0_i32_7 : i32 to vector<96x120xi32>
    %15 = arith.cmpi sge, %4, %14 : vector<96x120xi32>
    %c30_i32 = arith.constant 30 : i32
    %16 = vector.broadcast %c30_i32 : i32 to vector<96x120xi32>
    %17 = arith.cmpi slt, %4, %16 : vector<96x120xi32>
    %18 = arith.andi %15, %17 : vector<96x120xi1>
    %19 = arith.andi %13, %18 : vector<96x120xi1>
    %c0_i32_8 = arith.constant 0 : i32
    %20 = arith.addi %8, %c0_i32_8 : i32
    %c0_i32_9 = arith.constant 0 : i32
    %21 = arith.addi %20, %c0_i32_9 : i32
    %22 = arith.index_cast %21 : i32 to index
    %23 = memref.load %arg2[%22] : memref<24xf32, #tpu.memory_space<smem>>
    %24 = vector.broadcast %23 : f32 to vector<96x120xf32>
    %25 = arith.select %19, %24, %5 : vector<96x120xi1>, vector<96x120xf32>
    %26 = arith.index_cast %21 : i32 to index
    %27 = memref.load %arg3[%26] : memref<24xf32, #tpu.memory_space<smem>>
    %28 = vector.broadcast %27 : f32 to vector<96x120xf32>
    %29 = arith.select %19, %28, %6 : vector<96x120xi1>, vector<96x120xf32>
    %30 = arith.index_cast %21 : i32 to index
    %31 = memref.load %arg4[%30] : memref<24xf32, #tpu.memory_space<smem>>
    %32 = vector.broadcast %31 : f32 to vector<96x120xf32>
    %33 = arith.select %19, %32, %7 : vector<96x120xi1>, vector<96x120xf32>
    %c30_i32_10 = arith.constant 30 : i32
    %34 = vector.broadcast %c30_i32_10 : i32 to vector<96x120xi32>
    %35 = arith.cmpi sge, %4, %34 : vector<96x120xi32>
    %c60_i32 = arith.constant 60 : i32
    %36 = vector.broadcast %c60_i32 : i32 to vector<96x120xi32>
    %37 = arith.cmpi slt, %4, %36 : vector<96x120xi32>
    %38 = arith.andi %35, %37 : vector<96x120xi1>
    %39 = arith.andi %13, %38 : vector<96x120xi1>
    %c0_i32_11 = arith.constant 0 : i32
    %40 = arith.addi %8, %c0_i32_11 : i32
    %c1_i32 = arith.constant 1 : i32
    %41 = arith.addi %40, %c1_i32 : i32
    %42 = arith.index_cast %41 : i32 to index
    %43 = memref.load %arg2[%42] : memref<24xf32, #tpu.memory_space<smem>>
    %44 = vector.broadcast %43 : f32 to vector<96x120xf32>
    %45 = arith.select %39, %44, %25 : vector<96x120xi1>, vector<96x120xf32>
    %46 = arith.index_cast %41 : i32 to index
    %47 = memref.load %arg3[%46] : memref<24xf32, #tpu.memory_space<smem>>
    %48 = vector.broadcast %47 : f32 to vector<96x120xf32>
    %49 = arith.select %39, %48, %29 : vector<96x120xi1>, vector<96x120xf32>
    %50 = arith.index_cast %41 : i32 to index
    %51 = memref.load %arg4[%50] : memref<24xf32, #tpu.memory_space<smem>>
    %52 = vector.broadcast %51 : f32 to vector<96x120xf32>
    %53 = arith.select %39, %52, %33 : vector<96x120xi1>, vector<96x120xf32>
    %c60_i32_12 = arith.constant 60 : i32
    %54 = vector.broadcast %c60_i32_12 : i32 to vector<96x120xi32>
    %55 = arith.cmpi sge, %4, %54 : vector<96x120xi32>
    %c90_i32 = arith.constant 90 : i32
    %56 = vector.broadcast %c90_i32 : i32 to vector<96x120xi32>
    %57 = arith.cmpi slt, %4, %56 : vector<96x120xi32>
    %58 = arith.andi %55, %57 : vector<96x120xi1>
    %59 = arith.andi %13, %58 : vector<96x120xi1>
    %c0_i32_13 = arith.constant 0 : i32
    %60 = arith.addi %8, %c0_i32_13 : i32
    %c2_i32 = arith.constant 2 : i32
    %61 = arith.addi %60, %c2_i32 : i32
    %62 = arith.index_cast %61 : i32 to index
    %63 = memref.load %arg2[%62] : memref<24xf32, #tpu.memory_space<smem>>
    %64 = vector.broadcast %63 : f32 to vector<96x120xf32>
    %65 = arith.select %59, %64, %45 : vector<96x120xi1>, vector<96x120xf32>
    %66 = arith.index_cast %61 : i32 to index
    %67 = memref.load %arg3[%66] : memref<24xf32, #tpu.memory_space<smem>>
    %68 = vector.broadcast %67 : f32 to vector<96x120xf32>
    %69 = arith.select %59, %68, %49 : vector<96x120xi1>, vector<96x120xf32>
    %70 = arith.index_cast %61 : i32 to index
    %71 = memref.load %arg4[%70] : memref<24xf32, #tpu.memory_space<smem>>
    %72 = vector.broadcast %71 : f32 to vector<96x120xf32>
    %73 = arith.select %59, %72, %53 : vector<96x120xi1>, vector<96x120xf32>
    %c90_i32_14 = arith.constant 90 : i32
    %74 = vector.broadcast %c90_i32_14 : i32 to vector<96x120xi32>
    %75 = arith.cmpi sge, %4, %74 : vector<96x120xi32>
    %c120_i32 = arith.constant 120 : i32
    %76 = vector.broadcast %c120_i32 : i32 to vector<96x120xi32>
    %77 = arith.cmpi slt, %4, %76 : vector<96x120xi32>
    %78 = arith.andi %75, %77 : vector<96x120xi1>
    %79 = arith.andi %13, %78 : vector<96x120xi1>
    %c0_i32_15 = arith.constant 0 : i32
    %80 = arith.addi %8, %c0_i32_15 : i32
    %c3_i32 = arith.constant 3 : i32
    %81 = arith.addi %80, %c3_i32 : i32
    %82 = arith.index_cast %81 : i32 to index
    %83 = memref.load %arg2[%82] : memref<24xf32, #tpu.memory_space<smem>>
    %84 = vector.broadcast %83 : f32 to vector<96x120xf32>
    %85 = arith.select %79, %84, %65 : vector<96x120xi1>, vector<96x120xf32>
    %86 = arith.index_cast %81 : i32 to index
    %87 = memref.load %arg3[%86] : memref<24xf32, #tpu.memory_space<smem>>
    %88 = vector.broadcast %87 : f32 to vector<96x120xf32>
    %89 = arith.select %79, %88, %69 : vector<96x120xi1>, vector<96x120xf32>
    %90 = arith.index_cast %81 : i32 to index
    %91 = memref.load %arg4[%90] : memref<24xf32, #tpu.memory_space<smem>>
    %92 = vector.broadcast %91 : f32 to vector<96x120xf32>
    %93 = arith.select %79, %92, %73 : vector<96x120xi1>, vector<96x120xf32>
    %c32_i32_16 = arith.constant 32 : i32
    %94 = vector.broadcast %c32_i32_16 : i32 to vector<96x120xi32>
    %95 = arith.cmpi sge, %3, %94 : vector<96x120xi32>
    %c64_i32 = arith.constant 64 : i32
    %96 = vector.broadcast %c64_i32 : i32 to vector<96x120xi32>
    %97 = arith.cmpi slt, %3, %96 : vector<96x120xi32>
    %98 = arith.andi %95, %97 : vector<96x120xi1>
    %c0_i32_17 = arith.constant 0 : i32
    %99 = vector.broadcast %c0_i32_17 : i32 to vector<96x120xi32>
    %100 = arith.cmpi sge, %4, %99 : vector<96x120xi32>
    %c30_i32_18 = arith.constant 30 : i32
    %101 = vector.broadcast %c30_i32_18 : i32 to vector<96x120xi32>
    %102 = arith.cmpi slt, %4, %101 : vector<96x120xi32>
    %103 = arith.andi %100, %102 : vector<96x120xi1>
    %104 = arith.andi %98, %103 : vector<96x120xi1>
    %c4_i32 = arith.constant 4 : i32
    %105 = arith.addi %8, %c4_i32 : i32
    %c0_i32_19 = arith.constant 0 : i32
    %106 = arith.addi %105, %c0_i32_19 : i32
    %107 = arith.index_cast %106 : i32 to index
    %108 = memref.load %arg2[%107] : memref<24xf32, #tpu.memory_space<smem>>
    %109 = vector.broadcast %108 : f32 to vector<96x120xf32>
    %110 = arith.select %104, %109, %85 : vector<96x120xi1>, vector<96x120xf32>
    %111 = arith.index_cast %106 : i32 to index
    %112 = memref.load %arg3[%111] : memref<24xf32, #tpu.memory_space<smem>>
    %113 = vector.broadcast %112 : f32 to vector<96x120xf32>
    %114 = arith.select %104, %113, %89 : vector<96x120xi1>, vector<96x120xf32>
    %115 = arith.index_cast %106 : i32 to index
    %116 = memref.load %arg4[%115] : memref<24xf32, #tpu.memory_space<smem>>
    %117 = vector.broadcast %116 : f32 to vector<96x120xf32>
    %118 = arith.select %104, %117, %93 : vector<96x120xi1>, vector<96x120xf32>
    %c30_i32_20 = arith.constant 30 : i32
    %119 = vector.broadcast %c30_i32_20 : i32 to vector<96x120xi32>
    %120 = arith.cmpi sge, %4, %119 : vector<96x120xi32>
    %c60_i32_21 = arith.constant 60 : i32
    %121 = vector.broadcast %c60_i32_21 : i32 to vector<96x120xi32>
    %122 = arith.cmpi slt, %4, %121 : vector<96x120xi32>
    %123 = arith.andi %120, %122 : vector<96x120xi1>
    %124 = arith.andi %98, %123 : vector<96x120xi1>
    %c4_i32_22 = arith.constant 4 : i32
    %125 = arith.addi %8, %c4_i32_22 : i32
    %c1_i32_23 = arith.constant 1 : i32
    %126 = arith.addi %125, %c1_i32_23 : i32
    %127 = arith.index_cast %126 : i32 to index
    %128 = memref.load %arg2[%127] : memref<24xf32, #tpu.memory_space<smem>>
    %129 = vector.broadcast %128 : f32 to vector<96x120xf32>
    %130 = arith.select %124, %129, %110 : vector<96x120xi1>, vector<96x120xf32>
    %131 = arith.index_cast %126 : i32 to index
    %132 = memref.load %arg3[%131] : memref<24xf32, #tpu.memory_space<smem>>
    %133 = vector.broadcast %132 : f32 to vector<96x120xf32>
    %134 = arith.select %124, %133, %114 : vector<96x120xi1>, vector<96x120xf32>
    %135 = arith.index_cast %126 : i32 to index
    %136 = memref.load %arg4[%135] : memref<24xf32, #tpu.memory_space<smem>>
    %137 = vector.broadcast %136 : f32 to vector<96x120xf32>
    %138 = arith.select %124, %137, %118 : vector<96x120xi1>, vector<96x120xf32>
    %c60_i32_24 = arith.constant 60 : i32
    %139 = vector.broadcast %c60_i32_24 : i32 to vector<96x120xi32>
    %140 = arith.cmpi sge, %4, %139 : vector<96x120xi32>
    %c90_i32_25 = arith.constant 90 : i32
    %141 = vector.broadcast %c90_i32_25 : i32 to vector<96x120xi32>
    %142 = arith.cmpi slt, %4, %141 : vector<96x120xi32>
    %143 = arith.andi %140, %142 : vector<96x120xi1>
    %144 = arith.andi %98, %143 : vector<96x120xi1>
    %c4_i32_26 = arith.constant 4 : i32
    %145 = arith.addi %8, %c4_i32_26 : i32
    %c2_i32_27 = arith.constant 2 : i32
    %146 = arith.addi %145, %c2_i32_27 : i32
    %147 = arith.index_cast %146 : i32 to index
    %148 = memref.load %arg2[%147] : memref<24xf32, #tpu.memory_space<smem>>
    %149 = vector.broadcast %148 : f32 to vector<96x120xf32>
    %150 = arith.select %144, %149, %130 : vector<96x120xi1>, vector<96x120xf32>
    %151 = arith.index_cast %146 : i32 to index
    %152 = memref.load %arg3[%151] : memref<24xf32, #tpu.memory_space<smem>>
    %153 = vector.broadcast %152 : f32 to vector<96x120xf32>
    %154 = arith.select %144, %153, %134 : vector<96x120xi1>, vector<96x120xf32>
    %155 = arith.index_cast %146 : i32 to index
    %156 = memref.load %arg4[%155] : memref<24xf32, #tpu.memory_space<smem>>
    %157 = vector.broadcast %156 : f32 to vector<96x120xf32>
    %158 = arith.select %144, %157, %138 : vector<96x120xi1>, vector<96x120xf32>
    %c90_i32_28 = arith.constant 90 : i32
    %159 = vector.broadcast %c90_i32_28 : i32 to vector<96x120xi32>
    %160 = arith.cmpi sge, %4, %159 : vector<96x120xi32>
    %c120_i32_29 = arith.constant 120 : i32
    %161 = vector.broadcast %c120_i32_29 : i32 to vector<96x120xi32>
    %162 = arith.cmpi slt, %4, %161 : vector<96x120xi32>
    %163 = arith.andi %160, %162 : vector<96x120xi1>
    %164 = arith.andi %98, %163 : vector<96x120xi1>
    %c4_i32_30 = arith.constant 4 : i32
    %165 = arith.addi %8, %c4_i32_30 : i32
    %c3_i32_31 = arith.constant 3 : i32
    %166 = arith.addi %165, %c3_i32_31 : i32
    %167 = arith.index_cast %166 : i32 to index
    %168 = memref.load %arg2[%167] : memref<24xf32, #tpu.memory_space<smem>>
    %169 = vector.broadcast %168 : f32 to vector<96x120xf32>
    %170 = arith.select %164, %169, %150 : vector<96x120xi1>, vector<96x120xf32>
    %171 = arith.index_cast %166 : i32 to index
    %172 = memref.load %arg3[%171] : memref<24xf32, #tpu.memory_space<smem>>
    %173 = vector.broadcast %172 : f32 to vector<96x120xf32>
    %174 = arith.select %164, %173, %154 : vector<96x120xi1>, vector<96x120xf32>
    %175 = arith.index_cast %166 : i32 to index
    %176 = memref.load %arg4[%175] : memref<24xf32, #tpu.memory_space<smem>>
    %177 = vector.broadcast %176 : f32 to vector<96x120xf32>
    %178 = arith.select %164, %177, %158 : vector<96x120xi1>, vector<96x120xf32>
    %c64_i32_32 = arith.constant 64 : i32
    %179 = vector.broadcast %c64_i32_32 : i32 to vector<96x120xi32>
    %180 = arith.cmpi sge, %3, %179 : vector<96x120xi32>
    %c96_i32 = arith.constant 96 : i32
    %181 = vector.broadcast %c96_i32 : i32 to vector<96x120xi32>
    %182 = arith.cmpi slt, %3, %181 : vector<96x120xi32>
    %183 = arith.andi %180, %182 : vector<96x120xi1>
    %c0_i32_33 = arith.constant 0 : i32
    %184 = vector.broadcast %c0_i32_33 : i32 to vector<96x120xi32>
    %185 = arith.cmpi sge, %4, %184 : vector<96x120xi32>
    %c30_i32_34 = arith.constant 30 : i32
    %186 = vector.broadcast %c30_i32_34 : i32 to vector<96x120xi32>
    %187 = arith.cmpi slt, %4, %186 : vector<96x120xi32>
    %188 = arith.andi %185, %187 : vector<96x120xi1>
    %189 = arith.andi %183, %188 : vector<96x120xi1>
    %c8_i32 = arith.constant 8 : i32
    %190 = arith.addi %8, %c8_i32 : i32
    %c0_i32_35 = arith.constant 0 : i32
    %191 = arith.addi %190, %c0_i32_35 : i32
    %192 = arith.index_cast %191 : i32 to index
    %193 = memref.load %arg2[%192] : memref<24xf32, #tpu.memory_space<smem>>
    %194 = vector.broadcast %193 : f32 to vector<96x120xf32>
    %195 = arith.select %189, %194, %170 : vector<96x120xi1>, vector<96x120xf32>
    %196 = arith.index_cast %191 : i32 to index
    %197 = memref.load %arg3[%196] : memref<24xf32, #tpu.memory_space<smem>>
    %198 = vector.broadcast %197 : f32 to vector<96x120xf32>
    %199 = arith.select %189, %198, %174 : vector<96x120xi1>, vector<96x120xf32>
    %200 = arith.index_cast %191 : i32 to index
    %201 = memref.load %arg4[%200] : memref<24xf32, #tpu.memory_space<smem>>
    %202 = vector.broadcast %201 : f32 to vector<96x120xf32>
    %203 = arith.select %189, %202, %178 : vector<96x120xi1>, vector<96x120xf32>
    %c30_i32_36 = arith.constant 30 : i32
    %204 = vector.broadcast %c30_i32_36 : i32 to vector<96x120xi32>
    %205 = arith.cmpi sge, %4, %204 : vector<96x120xi32>
    %c60_i32_37 = arith.constant 60 : i32
    %206 = vector.broadcast %c60_i32_37 : i32 to vector<96x120xi32>
    %207 = arith.cmpi slt, %4, %206 : vector<96x120xi32>
    %208 = arith.andi %205, %207 : vector<96x120xi1>
    %209 = arith.andi %183, %208 : vector<96x120xi1>
    %c8_i32_38 = arith.constant 8 : i32
    %210 = arith.addi %8, %c8_i32_38 : i32
    %c1_i32_39 = arith.constant 1 : i32
    %211 = arith.addi %210, %c1_i32_39 : i32
    %212 = arith.index_cast %211 : i32 to index
    %213 = memref.load %arg2[%212] : memref<24xf32, #tpu.memory_space<smem>>
    %214 = vector.broadcast %213 : f32 to vector<96x120xf32>
    %215 = arith.select %209, %214, %195 : vector<96x120xi1>, vector<96x120xf32>
    %216 = arith.index_cast %211 : i32 to index
    %217 = memref.load %arg3[%216] : memref<24xf32, #tpu.memory_space<smem>>
    %218 = vector.broadcast %217 : f32 to vector<96x120xf32>
    %219 = arith.select %209, %218, %199 : vector<96x120xi1>, vector<96x120xf32>
    %220 = arith.index_cast %211 : i32 to index
    %221 = memref.load %arg4[%220] : memref<24xf32, #tpu.memory_space<smem>>
    %222 = vector.broadcast %221 : f32 to vector<96x120xf32>
    %223 = arith.select %209, %222, %203 : vector<96x120xi1>, vector<96x120xf32>
    %c60_i32_40 = arith.constant 60 : i32
    %224 = vector.broadcast %c60_i32_40 : i32 to vector<96x120xi32>
    %225 = arith.cmpi sge, %4, %224 : vector<96x120xi32>
    %c90_i32_41 = arith.constant 90 : i32
    %226 = vector.broadcast %c90_i32_41 : i32 to vector<96x120xi32>
    %227 = arith.cmpi slt, %4, %226 : vector<96x120xi32>
    %228 = arith.andi %225, %227 : vector<96x120xi1>
    %229 = arith.andi %183, %228 : vector<96x120xi1>
    %c8_i32_42 = arith.constant 8 : i32
    %230 = arith.addi %8, %c8_i32_42 : i32
    %c2_i32_43 = arith.constant 2 : i32
    %231 = arith.addi %230, %c2_i32_43 : i32
    %232 = arith.index_cast %231 : i32 to index
    %233 = memref.load %arg2[%232] : memref<24xf32, #tpu.memory_space<smem>>
    %234 = vector.broadcast %233 : f32 to vector<96x120xf32>
    %235 = arith.select %229, %234, %215 : vector<96x120xi1>, vector<96x120xf32>
    %236 = arith.index_cast %231 : i32 to index
    %237 = memref.load %arg3[%236] : memref<24xf32, #tpu.memory_space<smem>>
    %238 = vector.broadcast %237 : f32 to vector<96x120xf32>
    %239 = arith.select %229, %238, %219 : vector<96x120xi1>, vector<96x120xf32>
    %240 = arith.index_cast %231 : i32 to index
    %241 = memref.load %arg4[%240] : memref<24xf32, #tpu.memory_space<smem>>
    %242 = vector.broadcast %241 : f32 to vector<96x120xf32>
    %243 = arith.select %229, %242, %223 : vector<96x120xi1>, vector<96x120xf32>
    %c90_i32_44 = arith.constant 90 : i32
    %244 = vector.broadcast %c90_i32_44 : i32 to vector<96x120xi32>
    %245 = arith.cmpi sge, %4, %244 : vector<96x120xi32>
    %c120_i32_45 = arith.constant 120 : i32
    %246 = vector.broadcast %c120_i32_45 : i32 to vector<96x120xi32>
    %247 = arith.cmpi slt, %4, %246 : vector<96x120xi32>
    %248 = arith.andi %245, %247 : vector<96x120xi1>
    %249 = arith.andi %183, %248 : vector<96x120xi1>
    %c8_i32_46 = arith.constant 8 : i32
    %250 = arith.addi %8, %c8_i32_46 : i32
    %c3_i32_47 = arith.constant 3 : i32
    %251 = arith.addi %250, %c3_i32_47 : i32
    %252 = arith.index_cast %251 : i32 to index
    %253 = memref.load %arg2[%252] : memref<24xf32, #tpu.memory_space<smem>>
    %254 = vector.broadcast %253 : f32 to vector<96x120xf32>
    %255 = arith.select %249, %254, %235 : vector<96x120xi1>, vector<96x120xf32>
    %256 = arith.index_cast %251 : i32 to index
    %257 = memref.load %arg3[%256] : memref<24xf32, #tpu.memory_space<smem>>
    %258 = vector.broadcast %257 : f32 to vector<96x120xf32>
    %259 = arith.select %249, %258, %239 : vector<96x120xi1>, vector<96x120xf32>
    %260 = arith.index_cast %251 : i32 to index
    %261 = memref.load %arg4[%260] : memref<24xf32, #tpu.memory_space<smem>>
    %262 = vector.broadcast %261 : f32 to vector<96x120xf32>
    %263 = arith.select %249, %262, %243 : vector<96x120xi1>, vector<96x120xf32>
    %264 = arith.mulf %0, %0 : vector<96x120xf32>
    %265 = arith.subf %0, %255 : vector<96x120xf32>
    %266 = arith.mulf %265, %259 : vector<96x120xf32>
    %267 = math.floor %266 : vector<96x120xf32>
    %268 = math.ceil %266 : vector<96x120xf32>
    %cst_48 = arith.constant 0.000000e+00 : f32
    %269 = vector.broadcast %cst_48 : f32 to vector<96x120xf32>
    %270 = arith.subf %266, %269 : vector<96x120xf32>
    %271 = math.absf %270 : vector<96x120xf32>
    %272 = arith.mulf %263, %271 : vector<96x120xf32>
    %cst_49 = arith.constant 9.99999974E-5 : f32
    %273 = vector.broadcast %cst_49 : f32 to vector<96x120xf32>
    %274 = arith.addf %272, %273 : vector<96x120xf32>
    %275 = math.log %274 : vector<96x120xf32>
    %cst_50 = arith.constant -1.200000e+00 : f32
    %276 = vector.broadcast %cst_50 : f32 to vector<96x120xf32>
    %277 = arith.mulf %276, %275 : vector<96x120xf32>
    %278 = math.exp %277 : vector<96x120xf32>
    %279 = arith.mulf %278, %0 : vector<96x120xf32>
    %280 = arith.mulf %278, %264 : vector<96x120xf32>
    %281 = tpu.concatenate %278, %279, %280 in 0 : vector<96x120xf32>, vector<96x120xf32>, vector<96x120xf32> -> vector<288x120xf32>
    %cst_51 = arith.constant dense<0.000000e+00> : vector<288x120xf32>
    %282 = tpu.matmul %281, %2, %cst_51 {dimension_numbers = #tpu.dot_dimension_numbers<[1], [0], [0], [1], [0, 0, 1, 1], [], []>} : vector<288x120xf32>, vector<120x120xf32>, vector<288x120xf32> -> vector<288x120xf32>
    %283 = vector.extract_strided_slice %282 {offsets = [0, 0], sizes = [96, 120], strides = [1, 1]} : vector<288x120xf32> to vector<96x120xf32>
    %cst_52 = arith.constant dense<0.000000e+00> : vector<96x120xf32>
    %284 = tpu.matmul %1, %283, %cst_52 {dimension_numbers = #tpu.dot_dimension_numbers<[1], [0], [0], [1], [0, 0, 1, 1], [], []>} : vector<96x96xf32>, vector<96x120xf32>, vector<96x120xf32> -> vector<96x120xf32>
    %285 = vector.extract_strided_slice %282 {offsets = [96, 0], sizes = [96, 120], strides = [1, 1]} : vector<288x120xf32> to vector<96x120xf32>
    %cst_53 = arith.constant dense<0.000000e+00> : vector<96x120xf32>
    %286 = tpu.matmul %1, %285, %cst_53 {dimension_numbers = #tpu.dot_dimension_numbers<[1], [0], [0], [1], [0, 0, 1, 1], [], []>} : vector<96x96xf32>, vector<96x120xf32>, vector<96x120xf32> -> vector<96x120xf32>
    %287 = vector.extract_strided_slice %282 {offsets = [192, 0], sizes = [96, 120], strides = [1, 1]} : vector<288x120xf32> to vector<96x120xf32>
    %cst_54 = arith.constant dense<0.000000e+00> : vector<96x120xf32>
    %288 = tpu.matmul %1, %287, %cst_54 {dimension_numbers = #tpu.dot_dimension_numbers<[1], [0], [0], [1], [0, 0, 1, 1], [], []>} : vector<96x96xf32>, vector<96x120xf32>, vector<96x120xf32> -> vector<96x120xf32>
    %289 = arith.mulf %284, %264 : vector<96x120xf32>
    %cst_55 = arith.constant 2.000000e+00 : f32
    %290 = vector.broadcast %cst_55 : f32 to vector<96x120xf32>
    %291 = arith.mulf %290, %0 : vector<96x120xf32>
    %292 = arith.mulf %291, %286 : vector<96x120xf32>
    %293 = arith.subf %289, %292 : vector<96x120xf32>
    %294 = arith.addf %293, %288 : vector<96x120xf32>
    %cst_56 = arith.constant 0.000000e+00 : f32
    %295 = vector.broadcast %cst_56 : f32 to vector<96x120xf32>
    %cst_57 = arith.constant 0.000000e+00 : f32
    %296 = vector.broadcast %cst_57 : f32 to vector<96x120xf32>
    %cst_58 = arith.constant 1.000000e+00 : f32
    %297 = vector.broadcast %cst_58 : f32 to vector<96x120xf32>
    %298 = arith.subf %266, %297 : vector<96x120xf32>
    %299 = math.absf %298 : vector<96x120xf32>
    %300 = arith.mulf %263, %299 : vector<96x120xf32>
    %cst_59 = arith.constant 9.99999974E-5 : f32
    %301 = vector.broadcast %cst_59 : f32 to vector<96x120xf32>
    %302 = arith.addf %300, %301 : vector<96x120xf32>
    %303 = math.log %302 : vector<96x120xf32>
    %cst_60 = arith.constant -1.200000e+00 : f32
    %304 = vector.broadcast %cst_60 : f32 to vector<96x120xf32>
    %305 = arith.mulf %304, %303 : vector<96x120xf32>
    %306 = math.exp %305 : vector<96x120xf32>
    %307 = arith.mulf %306, %0 : vector<96x120xf32>
    %308 = arith.mulf %306, %264 : vector<96x120xf32>
    %309 = tpu.concatenate %306, %307, %308 in 0 : vector<96x120xf32>, vector<96x120xf32>, vector<96x120xf32> -> vector<288x120xf32>
    %cst_61 = arith.constant dense<0.000000e+00> : vector<288x120xf32>
    %310 = tpu.matmul %309, %2, %cst_61 {dimension_numbers = #tpu.dot_dimension_numbers<[1], [0], [0], [1], [0, 0, 1, 1], [], []>} : vector<288x120xf32>, vector<120x120xf32>, vector<288x120xf32> -> vector<288x120xf32>
    %311 = vector.extract_strided_slice %310 {offsets = [0, 0], sizes = [96, 120], strides = [1, 1]} : vector<288x120xf32> to vector<96x120xf32>
    %cst_62 = arith.constant dense<0.000000e+00> : vector<96x120xf32>
    %312 = tpu.matmul %1, %311, %cst_62 {dimension_numbers = #tpu.dot_dimension_numbers<[1], [0], [0], [1], [0, 0, 1, 1], [], []>} : vector<96x96xf32>, vector<96x120xf32>, vector<96x120xf32> -> vector<96x120xf32>
    %313 = vector.extract_strided_slice %310 {offsets = [96, 0], sizes = [96, 120], strides = [1, 1]} : vector<288x120xf32> to vector<96x120xf32>
    %cst_63 = arith.constant dense<0.000000e+00> : vector<96x120xf32>
    %314 = tpu.matmul %1, %313, %cst_63 {dimension_numbers = #tpu.dot_dimension_numbers<[1], [0], [0], [1], [0, 0, 1, 1], [], []>} : vector<96x96xf32>, vector<96x120xf32>, vector<96x120xf32> -> vector<96x120xf32>
    %315 = vector.extract_strided_slice %310 {offsets = [192, 0], sizes = [96, 120], strides = [1, 1]} : vector<288x120xf32> to vector<96x120xf32>
    %cst_64 = arith.constant dense<0.000000e+00> : vector<96x120xf32>
    %316 = tpu.matmul %1, %315, %cst_64 {dimension_numbers = #tpu.dot_dimension_numbers<[1], [0], [0], [1], [0, 0, 1, 1], [], []>} : vector<96x96xf32>, vector<96x120xf32>, vector<96x120xf32> -> vector<96x120xf32>
    %317 = arith.mulf %312, %264 : vector<96x120xf32>
    %cst_65 = arith.constant 2.000000e+00 : f32
    %318 = vector.broadcast %cst_65 : f32 to vector<96x120xf32>
    %319 = arith.mulf %318, %0 : vector<96x120xf32>
    %320 = arith.mulf %319, %314 : vector<96x120xf32>
    %321 = arith.subf %317, %320 : vector<96x120xf32>
    %322 = arith.addf %321, %316 : vector<96x120xf32>
    %cst_66 = arith.constant 0.000000e+00 : f32
    %323 = vector.broadcast %cst_66 : f32 to vector<96x120xf32>
    %324 = arith.cmpf oeq, %267, %323 : vector<96x120xf32>
    %cst_67 = arith.constant 1.000000e+00 : f32
    %325 = vector.broadcast %cst_67 : f32 to vector<96x120xf32>
    %326 = arith.subf %325, %266 : vector<96x120xf32>
    %cst_68 = arith.constant 0.000000e+00 : f32
    %327 = vector.broadcast %cst_68 : f32 to vector<96x120xf32>
    %328 = arith.select %324, %326, %327 : vector<96x120xi1>, vector<96x120xf32>
    %cst_69 = arith.constant 1.000000e+00 : f32
    %329 = vector.broadcast %cst_69 : f32 to vector<96x120xf32>
    %330 = arith.cmpf oeq, %268, %329 : vector<96x120xf32>
    %cst_70 = arith.constant 0.000000e+00 : f32
    %331 = vector.broadcast %cst_70 : f32 to vector<96x120xf32>
    %332 = arith.subf %266, %331 : vector<96x120xf32>
    %cst_71 = arith.constant 0.000000e+00 : f32
    %333 = vector.broadcast %cst_71 : f32 to vector<96x120xf32>
    %334 = arith.select %330, %332, %333 : vector<96x120xi1>, vector<96x120xf32>
    %335 = arith.mulf %294, %328 : vector<96x120xf32>
    %336 = arith.addf %295, %335 : vector<96x120xf32>
    %337 = arith.mulf %322, %334 : vector<96x120xf32>
    %338 = arith.addf %336, %337 : vector<96x120xf32>
    %339 = arith.mulf %284, %328 : vector<96x120xf32>
    %340 = arith.addf %296, %339 : vector<96x120xf32>
    %341 = arith.mulf %312, %334 : vector<96x120xf32>
    %342 = arith.addf %340, %341 : vector<96x120xf32>
    %cst_72 = arith.constant 2.000000e+00 : f32
    %343 = vector.broadcast %cst_72 : f32 to vector<96x120xf32>
    %344 = arith.subf %266, %343 : vector<96x120xf32>
    %345 = math.absf %344 : vector<96x120xf32>
    %346 = arith.mulf %263, %345 : vector<96x120xf32>
    %cst_73 = arith.constant 9.99999974E-5 : f32
    %347 = vector.broadcast %cst_73 : f32 to vector<96x120xf32>
    %348 = arith.addf %346, %347 : vector<96x120xf32>
    %349 = math.log %348 : vector<96x120xf32>
    %cst_74 = arith.constant -1.200000e+00 : f32
    %350 = vector.broadcast %cst_74 : f32 to vector<96x120xf32>
    %351 = arith.mulf %350, %349 : vector<96x120xf32>
    %352 = math.exp %351 : vector<96x120xf32>
    %353 = arith.mulf %352, %0 : vector<96x120xf32>
    %354 = arith.mulf %352, %264 : vector<96x120xf32>
    %355 = tpu.concatenate %352, %353, %354 in 0 : vector<96x120xf32>, vector<96x120xf32>, vector<96x120xf32> -> vector<288x120xf32>
    %cst_75 = arith.constant dense<0.000000e+00> : vector<288x120xf32>
    %356 = tpu.matmul %355, %2, %cst_75 {dimension_numbers = #tpu.dot_dimension_numbers<[1], [0], [0], [1], [0, 0, 1, 1], [], []>} : vector<288x120xf32>, vector<120x120xf32>, vector<288x120xf32> -> vector<288x120xf32>
    %357 = vector.extract_strided_slice %356 {offsets = [0, 0], sizes = [96, 120], strides = [1, 1]} : vector<288x120xf32> to vector<96x120xf32>
    %cst_76 = arith.constant dense<0.000000e+00> : vector<96x120xf32>
    %358 = tpu.matmul %1, %357, %cst_76 {dimension_numbers = #tpu.dot_dimension_numbers<[1], [0], [0], [1], [0, 0, 1, 1], [], []>} : vector<96x96xf32>, vector<96x120xf32>, vector<96x120xf32> -> vector<96x120xf32>
    %359 = vector.extract_strided_slice %356 {offsets = [96, 0], sizes = [96, 120], strides = [1, 1]} : vector<288x120xf32> to vector<96x120xf32>
    %cst_77 = arith.constant dense<0.000000e+00> : vector<96x120xf32>
    %360 = tpu.matmul %1, %359, %cst_77 {dimension_numbers = #tpu.dot_dimension_numbers<[1], [0], [0], [1], [0, 0, 1, 1], [], []>} : vector<96x96xf32>, vector<96x120xf32>, vector<96x120xf32> -> vector<96x120xf32>
    %361 = vector.extract_strided_slice %356 {offsets = [192, 0], sizes = [96, 120], strides = [1, 1]} : vector<288x120xf32> to vector<96x120xf32>
    %cst_78 = arith.constant dense<0.000000e+00> : vector<96x120xf32>
    %362 = tpu.matmul %1, %361, %cst_78 {dimension_numbers = #tpu.dot_dimension_numbers<[1], [0], [0], [1], [0, 0, 1, 1], [], []>} : vector<96x96xf32>, vector<96x120xf32>, vector<96x120xf32> -> vector<96x120xf32>
    %363 = arith.mulf %358, %264 : vector<96x120xf32>
    %cst_79 = arith.constant 2.000000e+00 : f32
    %364 = vector.broadcast %cst_79 : f32 to vector<96x120xf32>
    %365 = arith.mulf %364, %0 : vector<96x120xf32>
    %366 = arith.mulf %365, %360 : vector<96x120xf32>
    %367 = arith.subf %363, %366 : vector<96x120xf32>
    %368 = arith.addf %367, %362 : vector<96x120xf32>
    %cst_80 = arith.constant 1.000000e+00 : f32
    %369 = vector.broadcast %cst_80 : f32 to vector<96x120xf32>
    %370 = arith.cmpf oeq, %267, %369 : vector<96x120xf32>
    %cst_81 = arith.constant 2.000000e+00 : f32
    %371 = vector.broadcast %cst_81 : f32 to vector<96x120xf32>
    %372 = arith.subf %371, %266 : vector<96x120xf32>
    %cst_82 = arith.constant 0.000000e+00 : f32
    %373 = vector.broadcast %cst_82 : f32 to vector<96x120xf32>
    %374 = arith.select %370, %372, %373 : vector<96x120xi1>, vector<96x120xf32>
    %cst_83 = arith.constant 2.000000e+00 : f32
    %375 = vector.broadcast %cst_83 : f32 to vector<96x120xf32>
    %376 = arith.cmpf oeq, %268, %375 : vector<96x120xf32>
    %cst_84 = arith.constant 1.000000e+00 : f32
    %377 = vector.broadcast %cst_84 : f32 to vector<96x120xf32>
    %378 = arith.subf %266, %377 : vector<96x120xf32>
    %cst_85 = arith.constant 0.000000e+00 : f32
    %379 = vector.broadcast %cst_85 : f32 to vector<96x120xf32>
    %380 = arith.select %376, %378, %379 : vector<96x120xi1>, vector<96x120xf32>
    %381 = arith.mulf %322, %374 : vector<96x120xf32>
    %382 = arith.addf %338, %381 : vector<96x120xf32>
    %383 = arith.mulf %368, %380 : vector<96x120xf32>
    %384 = arith.addf %382, %383 : vector<96x120xf32>
    %385 = arith.mulf %312, %374 : vector<96x120xf32>
    %386 = arith.addf %342, %385 : vector<96x120xf32>
    %387 = arith.mulf %358, %380 : vector<96x120xf32>
    %388 = arith.addf %386, %387 : vector<96x120xf32>
    %cst_86 = arith.constant 3.000000e+00 : f32
    %389 = vector.broadcast %cst_86 : f32 to vector<96x120xf32>
    %390 = arith.subf %266, %389 : vector<96x120xf32>
    %391 = math.absf %390 : vector<96x120xf32>
    %392 = arith.mulf %263, %391 : vector<96x120xf32>
    %cst_87 = arith.constant 9.99999974E-5 : f32
    %393 = vector.broadcast %cst_87 : f32 to vector<96x120xf32>
    %394 = arith.addf %392, %393 : vector<96x120xf32>
    %395 = math.log %394 : vector<96x120xf32>
    %cst_88 = arith.constant -1.200000e+00 : f32
    %396 = vector.broadcast %cst_88 : f32 to vector<96x120xf32>
    %397 = arith.mulf %396, %395 : vector<96x120xf32>
    %398 = math.exp %397 : vector<96x120xf32>
    %399 = arith.mulf %398, %0 : vector<96x120xf32>
    %400 = arith.mulf %398, %264 : vector<96x120xf32>
    %401 = tpu.concatenate %398, %399, %400 in 0 : vector<96x120xf32>, vector<96x120xf32>, vector<96x120xf32> -> vector<288x120xf32>
    %cst_89 = arith.constant dense<0.000000e+00> : vector<288x120xf32>
    %402 = tpu.matmul %401, %2, %cst_89 {dimension_numbers = #tpu.dot_dimension_numbers<[1], [0], [0], [1], [0, 0, 1, 1], [], []>} : vector<288x120xf32>, vector<120x120xf32>, vector<288x120xf32> -> vector<288x120xf32>
    %403 = vector.extract_strided_slice %402 {offsets = [0, 0], sizes = [96, 120], strides = [1, 1]} : vector<288x120xf32> to vector<96x120xf32>
    %cst_90 = arith.constant dense<0.000000e+00> : vector<96x120xf32>
    %404 = tpu.matmul %1, %403, %cst_90 {dimension_numbers = #tpu.dot_dimension_numbers<[1], [0], [0], [1], [0, 0, 1, 1], [], []>} : vector<96x96xf32>, vector<96x120xf32>, vector<96x120xf32> -> vector<96x120xf32>
    %405 = vector.extract_strided_slice %402 {offsets = [96, 0], sizes = [96, 120], strides = [1, 1]} : vector<288x120xf32> to vector<96x120xf32>
    %cst_91 = arith.constant dense<0.000000e+00> : vector<96x120xf32>
    %406 = tpu.matmul %1, %405, %cst_91 {dimension_numbers = #tpu.dot_dimension_numbers<[1], [0], [0], [1], [0, 0, 1, 1], [], []>} : vector<96x96xf32>, vector<96x120xf32>, vector<96x120xf32> -> vector<96x120xf32>
    %407 = vector.extract_strided_slice %402 {offsets = [192, 0], sizes = [96, 120], strides = [1, 1]} : vector<288x120xf32> to vector<96x120xf32>
    %cst_92 = arith.constant dense<0.000000e+00> : vector<96x120xf32>
    %408 = tpu.matmul %1, %407, %cst_92 {dimension_numbers = #tpu.dot_dimension_numbers<[1], [0], [0], [1], [0, 0, 1, 1], [], []>} : vector<96x96xf32>, vector<96x120xf32>, vector<96x120xf32> -> vector<96x120xf32>
    %409 = arith.mulf %404, %264 : vector<96x120xf32>
    %cst_93 = arith.constant 2.000000e+00 : f32
    %410 = vector.broadcast %cst_93 : f32 to vector<96x120xf32>
    %411 = arith.mulf %410, %0 : vector<96x120xf32>
    %412 = arith.mulf %411, %406 : vector<96x120xf32>
    %413 = arith.subf %409, %412 : vector<96x120xf32>
    %414 = arith.addf %413, %408 : vector<96x120xf32>
    %cst_94 = arith.constant 2.000000e+00 : f32
    %415 = vector.broadcast %cst_94 : f32 to vector<96x120xf32>
    %416 = arith.cmpf oeq, %267, %415 : vector<96x120xf32>
    %cst_95 = arith.constant 3.000000e+00 : f32
    %417 = vector.broadcast %cst_95 : f32 to vector<96x120xf32>
    %418 = arith.subf %417, %266 : vector<96x120xf32>
    %cst_96 = arith.constant 0.000000e+00 : f32
    %419 = vector.broadcast %cst_96 : f32 to vector<96x120xf32>
    %420 = arith.select %416, %418, %419 : vector<96x120xi1>, vector<96x120xf32>
    %cst_97 = arith.constant 3.000000e+00 : f32
    %421 = vector.broadcast %cst_97 : f32 to vector<96x120xf32>
    %422 = arith.cmpf oeq, %268, %421 : vector<96x120xf32>
    %cst_98 = arith.constant 2.000000e+00 : f32
    %423 = vector.broadcast %cst_98 : f32 to vector<96x120xf32>
    %424 = arith.subf %266, %423 : vector<96x120xf32>
    %cst_99 = arith.constant 0.000000e+00 : f32
    %425 = vector.broadcast %cst_99 : f32 to vector<96x120xf32>
    %426 = arith.select %422, %424, %425 : vector<96x120xi1>, vector<96x120xf32>
    %427 = arith.mulf %368, %420 : vector<96x120xf32>
    %428 = arith.addf %384, %427 : vector<96x120xf32>
    %429 = arith.mulf %414, %426 : vector<96x120xf32>
    %430 = arith.addf %428, %429 : vector<96x120xf32>
    %431 = arith.mulf %358, %420 : vector<96x120xf32>
    %432 = arith.addf %388, %431 : vector<96x120xf32>
    %433 = arith.mulf %404, %426 : vector<96x120xf32>
    %434 = arith.addf %432, %433 : vector<96x120xf32>
    %cst_100 = arith.constant 4.000000e+00 : f32
    %435 = vector.broadcast %cst_100 : f32 to vector<96x120xf32>
    %436 = arith.subf %266, %435 : vector<96x120xf32>
    %437 = math.absf %436 : vector<96x120xf32>
    %438 = arith.mulf %263, %437 : vector<96x120xf32>
    %cst_101 = arith.constant 9.99999974E-5 : f32
    %439 = vector.broadcast %cst_101 : f32 to vector<96x120xf32>
    %440 = arith.addf %438, %439 : vector<96x120xf32>
    %441 = math.log %440 : vector<96x120xf32>
    %cst_102 = arith.constant -1.200000e+00 : f32
    %442 = vector.broadcast %cst_102 : f32 to vector<96x120xf32>
    %443 = arith.mulf %442, %441 : vector<96x120xf32>
    %444 = math.exp %443 : vector<96x120xf32>
    %445 = arith.mulf %444, %0 : vector<96x120xf32>
    %446 = arith.mulf %444, %264 : vector<96x120xf32>
    %447 = tpu.concatenate %444, %445, %446 in 0 : vector<96x120xf32>, vector<96x120xf32>, vector<96x120xf32> -> vector<288x120xf32>
    %cst_103 = arith.constant dense<0.000000e+00> : vector<288x120xf32>
    %448 = tpu.matmul %447, %2, %cst_103 {dimension_numbers = #tpu.dot_dimension_numbers<[1], [0], [0], [1], [0, 0, 1, 1], [], []>} : vector<288x120xf32>, vector<120x120xf32>, vector<288x120xf32> -> vector<288x120xf32>
    %449 = vector.extract_strided_slice %448 {offsets = [0, 0], sizes = [96, 120], strides = [1, 1]} : vector<288x120xf32> to vector<96x120xf32>
    %cst_104 = arith.constant dense<0.000000e+00> : vector<96x120xf32>
    %450 = tpu.matmul %1, %449, %cst_104 {dimension_numbers = #tpu.dot_dimension_numbers<[1], [0], [0], [1], [0, 0, 1, 1], [], []>} : vector<96x96xf32>, vector<96x120xf32>, vector<96x120xf32> -> vector<96x120xf32>
    %451 = vector.extract_strided_slice %448 {offsets = [96, 0], sizes = [96, 120], strides = [1, 1]} : vector<288x120xf32> to vector<96x120xf32>
    %cst_105 = arith.constant dense<0.000000e+00> : vector<96x120xf32>
    %452 = tpu.matmul %1, %451, %cst_105 {dimension_numbers = #tpu.dot_dimension_numbers<[1], [0], [0], [1], [0, 0, 1, 1], [], []>} : vector<96x96xf32>, vector<96x120xf32>, vector<96x120xf32> -> vector<96x120xf32>
    %453 = vector.extract_strided_slice %448 {offsets = [192, 0], sizes = [96, 120], strides = [1, 1]} : vector<288x120xf32> to vector<96x120xf32>
    %cst_106 = arith.constant dense<0.000000e+00> : vector<96x120xf32>
    %454 = tpu.matmul %1, %453, %cst_106 {dimension_numbers = #tpu.dot_dimension_numbers<[1], [0], [0], [1], [0, 0, 1, 1], [], []>} : vector<96x96xf32>, vector<96x120xf32>, vector<96x120xf32> -> vector<96x120xf32>
    %455 = arith.mulf %450, %264 : vector<96x120xf32>
    %cst_107 = arith.constant 2.000000e+00 : f32
    %456 = vector.broadcast %cst_107 : f32 to vector<96x120xf32>
    %457 = arith.mulf %456, %0 : vector<96x120xf32>
    %458 = arith.mulf %457, %452 : vector<96x120xf32>
    %459 = arith.subf %455, %458 : vector<96x120xf32>
    %460 = arith.addf %459, %454 : vector<96x120xf32>
    %cst_108 = arith.constant 3.000000e+00 : f32
    %461 = vector.broadcast %cst_108 : f32 to vector<96x120xf32>
    %462 = arith.cmpf oeq, %267, %461 : vector<96x120xf32>
    %cst_109 = arith.constant 4.000000e+00 : f32
    %463 = vector.broadcast %cst_109 : f32 to vector<96x120xf32>
    %464 = arith.subf %463, %266 : vector<96x120xf32>
    %cst_110 = arith.constant 0.000000e+00 : f32
    %465 = vector.broadcast %cst_110 : f32 to vector<96x120xf32>
    %466 = arith.select %462, %464, %465 : vector<96x120xi1>, vector<96x120xf32>
    %cst_111 = arith.constant 4.000000e+00 : f32
    %467 = vector.broadcast %cst_111 : f32 to vector<96x120xf32>
    %468 = arith.cmpf oeq, %268, %467 : vector<96x120xf32>
    %cst_112 = arith.constant 3.000000e+00 : f32
    %469 = vector.broadcast %cst_112 : f32 to vector<96x120xf32>
    %470 = arith.subf %266, %469 : vector<96x120xf32>
    %cst_113 = arith.constant 0.000000e+00 : f32
    %471 = vector.broadcast %cst_113 : f32 to vector<96x120xf32>
    %472 = arith.select %468, %470, %471 : vector<96x120xi1>, vector<96x120xf32>
    %473 = arith.mulf %414, %466 : vector<96x120xf32>
    %474 = arith.addf %430, %473 : vector<96x120xf32>
    %475 = arith.mulf %460, %472 : vector<96x120xf32>
    %476 = arith.addf %474, %475 : vector<96x120xf32>
    %477 = arith.mulf %404, %466 : vector<96x120xf32>
    %478 = arith.addf %434, %477 : vector<96x120xf32>
    %479 = arith.mulf %450, %472 : vector<96x120xf32>
    %480 = arith.addf %478, %479 : vector<96x120xf32>
    %cst_114 = arith.constant 5.000000e+00 : f32
    %481 = vector.broadcast %cst_114 : f32 to vector<96x120xf32>
    %482 = arith.subf %266, %481 : vector<96x120xf32>
    %483 = math.absf %482 : vector<96x120xf32>
    %484 = arith.mulf %263, %483 : vector<96x120xf32>
    %cst_115 = arith.constant 9.99999974E-5 : f32
    %485 = vector.broadcast %cst_115 : f32 to vector<96x120xf32>
    %486 = arith.addf %484, %485 : vector<96x120xf32>
    %487 = math.log %486 : vector<96x120xf32>
    %cst_116 = arith.constant -1.200000e+00 : f32
    %488 = vector.broadcast %cst_116 : f32 to vector<96x120xf32>
    %489 = arith.mulf %488, %487 : vector<96x120xf32>
    %490 = math.exp %489 : vector<96x120xf32>
    %491 = arith.mulf %490, %0 : vector<96x120xf32>
    %492 = arith.mulf %490, %264 : vector<96x120xf32>
    %493 = tpu.concatenate %490, %491, %492 in 0 : vector<96x120xf32>, vector<96x120xf32>, vector<96x120xf32> -> vector<288x120xf32>
    %cst_117 = arith.constant dense<0.000000e+00> : vector<288x120xf32>
    %494 = tpu.matmul %493, %2, %cst_117 {dimension_numbers = #tpu.dot_dimension_numbers<[1], [0], [0], [1], [0, 0, 1, 1], [], []>} : vector<288x120xf32>, vector<120x120xf32>, vector<288x120xf32> -> vector<288x120xf32>
    %495 = vector.extract_strided_slice %494 {offsets = [0, 0], sizes = [96, 120], strides = [1, 1]} : vector<288x120xf32> to vector<96x120xf32>
    %cst_118 = arith.constant dense<0.000000e+00> : vector<96x120xf32>
    %496 = tpu.matmul %1, %495, %cst_118 {dimension_numbers = #tpu.dot_dimension_numbers<[1], [0], [0], [1], [0, 0, 1, 1], [], []>} : vector<96x96xf32>, vector<96x120xf32>, vector<96x120xf32> -> vector<96x120xf32>
    %497 = vector.extract_strided_slice %494 {offsets = [96, 0], sizes = [96, 120], strides = [1, 1]} : vector<288x120xf32> to vector<96x120xf32>
    %cst_119 = arith.constant dense<0.000000e+00> : vector<96x120xf32>
    %498 = tpu.matmul %1, %497, %cst_119 {dimension_numbers = #tpu.dot_dimension_numbers<[1], [0], [0], [1], [0, 0, 1, 1], [], []>} : vector<96x96xf32>, vector<96x120xf32>, vector<96x120xf32> -> vector<96x120xf32>
    %499 = vector.extract_strided_slice %494 {offsets = [192, 0], sizes = [96, 120], strides = [1, 1]} : vector<288x120xf32> to vector<96x120xf32>
    %cst_120 = arith.constant dense<0.000000e+00> : vector<96x120xf32>
    %500 = tpu.matmul %1, %499, %cst_120 {dimension_numbers = #tpu.dot_dimension_numbers<[1], [0], [0], [1], [0, 0, 1, 1], [], []>} : vector<96x96xf32>, vector<96x120xf32>, vector<96x120xf32> -> vector<96x120xf32>
    %501 = arith.mulf %496, %264 : vector<96x120xf32>
    %cst_121 = arith.constant 2.000000e+00 : f32
    %502 = vector.broadcast %cst_121 : f32 to vector<96x120xf32>
    %503 = arith.mulf %502, %0 : vector<96x120xf32>
    %504 = arith.mulf %503, %498 : vector<96x120xf32>
    %505 = arith.subf %501, %504 : vector<96x120xf32>
    %506 = arith.addf %505, %500 : vector<96x120xf32>
    %cst_122 = arith.constant 4.000000e+00 : f32
    %507 = vector.broadcast %cst_122 : f32 to vector<96x120xf32>
    %508 = arith.cmpf oeq, %267, %507 : vector<96x120xf32>
    %cst_123 = arith.constant 5.000000e+00 : f32
    %509 = vector.broadcast %cst_123 : f32 to vector<96x120xf32>
    %510 = arith.subf %509, %266 : vector<96x120xf32>
    %cst_124 = arith.constant 0.000000e+00 : f32
    %511 = vector.broadcast %cst_124 : f32 to vector<96x120xf32>
    %512 = arith.select %508, %510, %511 : vector<96x120xi1>, vector<96x120xf32>
    %cst_125 = arith.constant 5.000000e+00 : f32
    %513 = vector.broadcast %cst_125 : f32 to vector<96x120xf32>
    %514 = arith.cmpf oeq, %268, %513 : vector<96x120xf32>
    %cst_126 = arith.constant 4.000000e+00 : f32
    %515 = vector.broadcast %cst_126 : f32 to vector<96x120xf32>
    %516 = arith.subf %266, %515 : vector<96x120xf32>
    %cst_127 = arith.constant 0.000000e+00 : f32
    %517 = vector.broadcast %cst_127 : f32 to vector<96x120xf32>
    %518 = arith.select %514, %516, %517 : vector<96x120xi1>, vector<96x120xf32>
    %519 = arith.mulf %460, %512 : vector<96x120xf32>
    %520 = arith.addf %476, %519 : vector<96x120xf32>
    %521 = arith.mulf %506, %518 : vector<96x120xf32>
    %522 = arith.addf %520, %521 : vector<96x120xf32>
    %523 = arith.mulf %450, %512 : vector<96x120xf32>
    %524 = arith.addf %480, %523 : vector<96x120xf32>
    %525 = arith.mulf %496, %518 : vector<96x120xf32>
    %526 = arith.addf %524, %525 : vector<96x120xf32>
    %cst_128 = arith.constant 6.000000e+00 : f32
    %527 = vector.broadcast %cst_128 : f32 to vector<96x120xf32>
    %528 = arith.subf %266, %527 : vector<96x120xf32>
    %529 = math.absf %528 : vector<96x120xf32>
    %530 = arith.mulf %263, %529 : vector<96x120xf32>
    %cst_129 = arith.constant 9.99999974E-5 : f32
    %531 = vector.broadcast %cst_129 : f32 to vector<96x120xf32>
    %532 = arith.addf %530, %531 : vector<96x120xf32>
    %533 = math.log %532 : vector<96x120xf32>
    %cst_130 = arith.constant -1.200000e+00 : f32
    %534 = vector.broadcast %cst_130 : f32 to vector<96x120xf32>
    %535 = arith.mulf %534, %533 : vector<96x120xf32>
    %536 = math.exp %535 : vector<96x120xf32>
    %537 = arith.mulf %536, %0 : vector<96x120xf32>
    %538 = arith.mulf %536, %264 : vector<96x120xf32>
    %539 = tpu.concatenate %536, %537, %538 in 0 : vector<96x120xf32>, vector<96x120xf32>, vector<96x120xf32> -> vector<288x120xf32>
    %cst_131 = arith.constant dense<0.000000e+00> : vector<288x120xf32>
    %540 = tpu.matmul %539, %2, %cst_131 {dimension_numbers = #tpu.dot_dimension_numbers<[1], [0], [0], [1], [0, 0, 1, 1], [], []>} : vector<288x120xf32>, vector<120x120xf32>, vector<288x120xf32> -> vector<288x120xf32>
    %541 = vector.extract_strided_slice %540 {offsets = [0, 0], sizes = [96, 120], strides = [1, 1]} : vector<288x120xf32> to vector<96x120xf32>
    %cst_132 = arith.constant dense<0.000000e+00> : vector<96x120xf32>
    %542 = tpu.matmul %1, %541, %cst_132 {dimension_numbers = #tpu.dot_dimension_numbers<[1], [0], [0], [1], [0, 0, 1, 1], [], []>} : vector<96x96xf32>, vector<96x120xf32>, vector<96x120xf32> -> vector<96x120xf32>
    %543 = vector.extract_strided_slice %540 {offsets = [96, 0], sizes = [96, 120], strides = [1, 1]} : vector<288x120xf32> to vector<96x120xf32>
    %cst_133 = arith.constant dense<0.000000e+00> : vector<96x120xf32>
    %544 = tpu.matmul %1, %543, %cst_133 {dimension_numbers = #tpu.dot_dimension_numbers<[1], [0], [0], [1], [0, 0, 1, 1], [], []>} : vector<96x96xf32>, vector<96x120xf32>, vector<96x120xf32> -> vector<96x120xf32>
    %545 = vector.extract_strided_slice %540 {offsets = [192, 0], sizes = [96, 120], strides = [1, 1]} : vector<288x120xf32> to vector<96x120xf32>
    %cst_134 = arith.constant dense<0.000000e+00> : vector<96x120xf32>
    %546 = tpu.matmul %1, %545, %cst_134 {dimension_numbers = #tpu.dot_dimension_numbers<[1], [0], [0], [1], [0, 0, 1, 1], [], []>} : vector<96x96xf32>, vector<96x120xf32>, vector<96x120xf32> -> vector<96x120xf32>
    %547 = arith.mulf %542, %264 : vector<96x120xf32>
    %cst_135 = arith.constant 2.000000e+00 : f32
    %548 = vector.broadcast %cst_135 : f32 to vector<96x120xf32>
    %549 = arith.mulf %548, %0 : vector<96x120xf32>
    %550 = arith.mulf %549, %544 : vector<96x120xf32>
    %551 = arith.subf %547, %550 : vector<96x120xf32>
    %552 = arith.addf %551, %546 : vector<96x120xf32>
    %cst_136 = arith.constant 5.000000e+00 : f32
    %553 = vector.broadcast %cst_136 : f32 to vector<96x120xf32>
    %554 = arith.cmpf oeq, %267, %553 : vector<96x120xf32>
    %cst_137 = arith.constant 6.000000e+00 : f32
    %555 = vector.broadcast %cst_137 : f32 to vector<96x120xf32>
    %556 = arith.subf %555, %266 : vector<96x120xf32>
    %cst_138 = arith.constant 0.000000e+00 : f32
    %557 = vector.broadcast %cst_138 : f32 to vector<96x120xf32>
    %558 = arith.select %554, %556, %557 : vector<96x120xi1>, vector<96x120xf32>
    %cst_139 = arith.constant 6.000000e+00 : f32
    %559 = vector.broadcast %cst_139 : f32 to vector<96x120xf32>
    %560 = arith.cmpf oeq, %268, %559 : vector<96x120xf32>
    %cst_140 = arith.constant 5.000000e+00 : f32
    %561 = vector.broadcast %cst_140 : f32 to vector<96x120xf32>
    %562 = arith.subf %266, %561 : vector<96x120xf32>
    %cst_141 = arith.constant 0.000000e+00 : f32
    %563 = vector.broadcast %cst_141 : f32 to vector<96x120xf32>
    %564 = arith.select %560, %562, %563 : vector<96x120xi1>, vector<96x120xf32>
    %565 = arith.mulf %506, %558 : vector<96x120xf32>
    %566 = arith.addf %522, %565 : vector<96x120xf32>
    %567 = arith.mulf %552, %564 : vector<96x120xf32>
    %568 = arith.addf %566, %567 : vector<96x120xf32>
    %569 = arith.mulf %496, %558 : vector<96x120xf32>
    %570 = arith.addf %526, %569 : vector<96x120xf32>
    %571 = arith.mulf %542, %564 : vector<96x120xf32>
    %572 = arith.addf %570, %571 : vector<96x120xf32>
    %cst_142 = arith.constant 7.000000e+00 : f32
    %573 = vector.broadcast %cst_142 : f32 to vector<96x120xf32>
    %574 = arith.subf %266, %573 : vector<96x120xf32>
    %575 = math.absf %574 : vector<96x120xf32>
    %576 = arith.mulf %263, %575 : vector<96x120xf32>
    %cst_143 = arith.constant 9.99999974E-5 : f32
    %577 = vector.broadcast %cst_143 : f32 to vector<96x120xf32>
    %578 = arith.addf %576, %577 : vector<96x120xf32>
    %579 = math.log %578 : vector<96x120xf32>
    %cst_144 = arith.constant -1.200000e+00 : f32
    %580 = vector.broadcast %cst_144 : f32 to vector<96x120xf32>
    %581 = arith.mulf %580, %579 : vector<96x120xf32>
    %582 = math.exp %581 : vector<96x120xf32>
    %583 = arith.mulf %582, %0 : vector<96x120xf32>
    %584 = arith.mulf %582, %264 : vector<96x120xf32>
    %585 = tpu.concatenate %582, %583, %584 in 0 : vector<96x120xf32>, vector<96x120xf32>, vector<96x120xf32> -> vector<288x120xf32>
    %cst_145 = arith.constant dense<0.000000e+00> : vector<288x120xf32>
    %586 = tpu.matmul %585, %2, %cst_145 {dimension_numbers = #tpu.dot_dimension_numbers<[1], [0], [0], [1], [0, 0, 1, 1], [], []>} : vector<288x120xf32>, vector<120x120xf32>, vector<288x120xf32> -> vector<288x120xf32>
    %587 = vector.extract_strided_slice %586 {offsets = [0, 0], sizes = [96, 120], strides = [1, 1]} : vector<288x120xf32> to vector<96x120xf32>
    %cst_146 = arith.constant dense<0.000000e+00> : vector<96x120xf32>
    %588 = tpu.matmul %1, %587, %cst_146 {dimension_numbers = #tpu.dot_dimension_numbers<[1], [0], [0], [1], [0, 0, 1, 1], [], []>} : vector<96x96xf32>, vector<96x120xf32>, vector<96x120xf32> -> vector<96x120xf32>
    %589 = vector.extract_strided_slice %586 {offsets = [96, 0], sizes = [96, 120], strides = [1, 1]} : vector<288x120xf32> to vector<96x120xf32>
    %cst_147 = arith.constant dense<0.000000e+00> : vector<96x120xf32>
    %590 = tpu.matmul %1, %589, %cst_147 {dimension_numbers = #tpu.dot_dimension_numbers<[1], [0], [0], [1], [0, 0, 1, 1], [], []>} : vector<96x96xf32>, vector<96x120xf32>, vector<96x120xf32> -> vector<96x120xf32>
    %591 = vector.extract_strided_slice %586 {offsets = [192, 0], sizes = [96, 120], strides = [1, 1]} : vector<288x120xf32> to vector<96x120xf32>
    %cst_148 = arith.constant dense<0.000000e+00> : vector<96x120xf32>
    %592 = tpu.matmul %1, %591, %cst_148 {dimension_numbers = #tpu.dot_dimension_numbers<[1], [0], [0], [1], [0, 0, 1, 1], [], []>} : vector<96x96xf32>, vector<96x120xf32>, vector<96x120xf32> -> vector<96x120xf32>
    %593 = arith.mulf %588, %264 : vector<96x120xf32>
    %cst_149 = arith.constant 2.000000e+00 : f32
    %594 = vector.broadcast %cst_149 : f32 to vector<96x120xf32>
    %595 = arith.mulf %594, %0 : vector<96x120xf32>
    %596 = arith.mulf %595, %590 : vector<96x120xf32>
    %597 = arith.subf %593, %596 : vector<96x120xf32>
    %598 = arith.addf %597, %592 : vector<96x120xf32>
    %cst_150 = arith.constant 6.000000e+00 : f32
    %599 = vector.broadcast %cst_150 : f32 to vector<96x120xf32>
    %600 = arith.cmpf oeq, %267, %599 : vector<96x120xf32>
    %cst_151 = arith.constant 7.000000e+00 : f32
    %601 = vector.broadcast %cst_151 : f32 to vector<96x120xf32>
    %602 = arith.subf %601, %266 : vector<96x120xf32>
    %cst_152 = arith.constant 0.000000e+00 : f32
    %603 = vector.broadcast %cst_152 : f32 to vector<96x120xf32>
    %604 = arith.select %600, %602, %603 : vector<96x120xi1>, vector<96x120xf32>
    %cst_153 = arith.constant 7.000000e+00 : f32
    %605 = vector.broadcast %cst_153 : f32 to vector<96x120xf32>
    %606 = arith.cmpf oeq, %268, %605 : vector<96x120xf32>
    %cst_154 = arith.constant 6.000000e+00 : f32
    %607 = vector.broadcast %cst_154 : f32 to vector<96x120xf32>
    %608 = arith.subf %266, %607 : vector<96x120xf32>
    %cst_155 = arith.constant 0.000000e+00 : f32
    %609 = vector.broadcast %cst_155 : f32 to vector<96x120xf32>
    %610 = arith.select %606, %608, %609 : vector<96x120xi1>, vector<96x120xf32>
    %611 = arith.mulf %552, %604 : vector<96x120xf32>
    %612 = arith.addf %568, %611 : vector<96x120xf32>
    %613 = arith.mulf %598, %610 : vector<96x120xf32>
    %614 = arith.addf %612, %613 : vector<96x120xf32>
    %615 = arith.mulf %542, %604 : vector<96x120xf32>
    %616 = arith.addf %572, %615 : vector<96x120xf32>
    %617 = arith.mulf %588, %610 : vector<96x120xf32>
    %618 = arith.addf %616, %617 : vector<96x120xf32>
    %cst_156 = arith.constant 8.000000e+00 : f32
    %619 = vector.broadcast %cst_156 : f32 to vector<96x120xf32>
    %620 = arith.subf %266, %619 : vector<96x120xf32>
    %621 = math.absf %620 : vector<96x120xf32>
    %622 = arith.mulf %263, %621 : vector<96x120xf32>
    %cst_157 = arith.constant 9.99999974E-5 : f32
    %623 = vector.broadcast %cst_157 : f32 to vector<96x120xf32>
    %624 = arith.addf %622, %623 : vector<96x120xf32>
    %625 = math.log %624 : vector<96x120xf32>
    %cst_158 = arith.constant -1.200000e+00 : f32
    %626 = vector.broadcast %cst_158 : f32 to vector<96x120xf32>
    %627 = arith.mulf %626, %625 : vector<96x120xf32>
    %628 = math.exp %627 : vector<96x120xf32>
    %629 = arith.mulf %628, %0 : vector<96x120xf32>
    %630 = arith.mulf %628, %264 : vector<96x120xf32>
    %631 = tpu.concatenate %628, %629, %630 in 0 : vector<96x120xf32>, vector<96x120xf32>, vector<96x120xf32> -> vector<288x120xf32>
    %cst_159 = arith.constant dense<0.000000e+00> : vector<288x120xf32>
    %632 = tpu.matmul %631, %2, %cst_159 {dimension_numbers = #tpu.dot_dimension_numbers<[1], [0], [0], [1], [0, 0, 1, 1], [], []>} : vector<288x120xf32>, vector<120x120xf32>, vector<288x120xf32> -> vector<288x120xf32>
    %633 = vector.extract_strided_slice %632 {offsets = [0, 0], sizes = [96, 120], strides = [1, 1]} : vector<288x120xf32> to vector<96x120xf32>
    %cst_160 = arith.constant dense<0.000000e+00> : vector<96x120xf32>
    %634 = tpu.matmul %1, %633, %cst_160 {dimension_numbers = #tpu.dot_dimension_numbers<[1], [0], [0], [1], [0, 0, 1, 1], [], []>} : vector<96x96xf32>, vector<96x120xf32>, vector<96x120xf32> -> vector<96x120xf32>
    %635 = vector.extract_strided_slice %632 {offsets = [96, 0], sizes = [96, 120], strides = [1, 1]} : vector<288x120xf32> to vector<96x120xf32>
    %cst_161 = arith.constant dense<0.000000e+00> : vector<96x120xf32>
    %636 = tpu.matmul %1, %635, %cst_161 {dimension_numbers = #tpu.dot_dimension_numbers<[1], [0], [0], [1], [0, 0, 1, 1], [], []>} : vector<96x96xf32>, vector<96x120xf32>, vector<96x120xf32> -> vector<96x120xf32>
    %637 = vector.extract_strided_slice %632 {offsets = [192, 0], sizes = [96, 120], strides = [1, 1]} : vector<288x120xf32> to vector<96x120xf32>
    %cst_162 = arith.constant dense<0.000000e+00> : vector<96x120xf32>
    %638 = tpu.matmul %1, %637, %cst_162 {dimension_numbers = #tpu.dot_dimension_numbers<[1], [0], [0], [1], [0, 0, 1, 1], [], []>} : vector<96x96xf32>, vector<96x120xf32>, vector<96x120xf32> -> vector<96x120xf32>
    %639 = arith.mulf %634, %264 : vector<96x120xf32>
    %cst_163 = arith.constant 2.000000e+00 : f32
    %640 = vector.broadcast %cst_163 : f32 to vector<96x120xf32>
    %641 = arith.mulf %640, %0 : vector<96x120xf32>
    %642 = arith.mulf %641, %636 : vector<96x120xf32>
    %643 = arith.subf %639, %642 : vector<96x120xf32>
    %644 = arith.addf %643, %638 : vector<96x120xf32>
    %cst_164 = arith.constant 7.000000e+00 : f32
    %645 = vector.broadcast %cst_164 : f32 to vector<96x120xf32>
    %646 = arith.cmpf oeq, %267, %645 : vector<96x120xf32>
    %cst_165 = arith.constant 8.000000e+00 : f32
    %647 = vector.broadcast %cst_165 : f32 to vector<96x120xf32>
    %648 = arith.subf %647, %266 : vector<96x120xf32>
    %cst_166 = arith.constant 0.000000e+00 : f32
    %649 = vector.broadcast %cst_166 : f32 to vector<96x120xf32>
    %650 = arith.select %646, %648, %649 : vector<96x120xi1>, vector<96x120xf32>
    %cst_167 = arith.constant 8.000000e+00 : f32
    %651 = vector.broadcast %cst_167 : f32 to vector<96x120xf32>
    %652 = arith.cmpf oeq, %268, %651 : vector<96x120xf32>
    %cst_168 = arith.constant 7.000000e+00 : f32
    %653 = vector.broadcast %cst_168 : f32 to vector<96x120xf32>
    %654 = arith.subf %266, %653 : vector<96x120xf32>
    %cst_169 = arith.constant 0.000000e+00 : f32
    %655 = vector.broadcast %cst_169 : f32 to vector<96x120xf32>
    %656 = arith.select %652, %654, %655 : vector<96x120xi1>, vector<96x120xf32>
    %657 = arith.mulf %598, %650 : vector<96x120xf32>
    %658 = arith.addf %614, %657 : vector<96x120xf32>
    %659 = arith.mulf %644, %656 : vector<96x120xf32>
    %660 = arith.addf %658, %659 : vector<96x120xf32>
    %661 = arith.mulf %588, %650 : vector<96x120xf32>
    %662 = arith.addf %618, %661 : vector<96x120xf32>
    %663 = arith.mulf %634, %656 : vector<96x120xf32>
    %664 = arith.addf %662, %663 : vector<96x120xf32>
    %cst_170 = arith.constant 9.000000e+00 : f32
    %665 = vector.broadcast %cst_170 : f32 to vector<96x120xf32>
    %666 = arith.subf %266, %665 : vector<96x120xf32>
    %667 = math.absf %666 : vector<96x120xf32>
    %668 = arith.mulf %263, %667 : vector<96x120xf32>
    %cst_171 = arith.constant 9.99999974E-5 : f32
    %669 = vector.broadcast %cst_171 : f32 to vector<96x120xf32>
    %670 = arith.addf %668, %669 : vector<96x120xf32>
    %671 = math.log %670 : vector<96x120xf32>
    %cst_172 = arith.constant -1.200000e+00 : f32
    %672 = vector.broadcast %cst_172 : f32 to vector<96x120xf32>
    %673 = arith.mulf %672, %671 : vector<96x120xf32>
    %674 = math.exp %673 : vector<96x120xf32>
    %675 = arith.mulf %674, %0 : vector<96x120xf32>
    %676 = arith.mulf %674, %264 : vector<96x120xf32>
    %677 = tpu.concatenate %674, %675, %676 in 0 : vector<96x120xf32>, vector<96x120xf32>, vector<96x120xf32> -> vector<288x120xf32>
    %cst_173 = arith.constant dense<0.000000e+00> : vector<288x120xf32>
    %678 = tpu.matmul %677, %2, %cst_173 {dimension_numbers = #tpu.dot_dimension_numbers<[1], [0], [0], [1], [0, 0, 1, 1], [], []>} : vector<288x120xf32>, vector<120x120xf32>, vector<288x120xf32> -> vector<288x120xf32>
    %679 = vector.extract_strided_slice %678 {offsets = [0, 0], sizes = [96, 120], strides = [1, 1]} : vector<288x120xf32> to vector<96x120xf32>
    %cst_174 = arith.constant dense<0.000000e+00> : vector<96x120xf32>
    %680 = tpu.matmul %1, %679, %cst_174 {dimension_numbers = #tpu.dot_dimension_numbers<[1], [0], [0], [1], [0, 0, 1, 1], [], []>} : vector<96x96xf32>, vector<96x120xf32>, vector<96x120xf32> -> vector<96x120xf32>
    %681 = vector.extract_strided_slice %678 {offsets = [96, 0], sizes = [96, 120], strides = [1, 1]} : vector<288x120xf32> to vector<96x120xf32>
    %cst_175 = arith.constant dense<0.000000e+00> : vector<96x120xf32>
    %682 = tpu.matmul %1, %681, %cst_175 {dimension_numbers = #tpu.dot_dimension_numbers<[1], [0], [0], [1], [0, 0, 1, 1], [], []>} : vector<96x96xf32>, vector<96x120xf32>, vector<96x120xf32> -> vector<96x120xf32>
    %683 = vector.extract_strided_slice %678 {offsets = [192, 0], sizes = [96, 120], strides = [1, 1]} : vector<288x120xf32> to vector<96x120xf32>
    %cst_176 = arith.constant dense<0.000000e+00> : vector<96x120xf32>
    %684 = tpu.matmul %1, %683, %cst_176 {dimension_numbers = #tpu.dot_dimension_numbers<[1], [0], [0], [1], [0, 0, 1, 1], [], []>} : vector<96x96xf32>, vector<96x120xf32>, vector<96x120xf32> -> vector<96x120xf32>
    %685 = arith.mulf %680, %264 : vector<96x120xf32>
    %cst_177 = arith.constant 2.000000e+00 : f32
    %686 = vector.broadcast %cst_177 : f32 to vector<96x120xf32>
    %687 = arith.mulf %686, %0 : vector<96x120xf32>
    %688 = arith.mulf %687, %682 : vector<96x120xf32>
    %689 = arith.subf %685, %688 : vector<96x120xf32>
    %690 = arith.addf %689, %684 : vector<96x120xf32>
    %cst_178 = arith.constant 8.000000e+00 : f32
    %691 = vector.broadcast %cst_178 : f32 to vector<96x120xf32>
    %692 = arith.cmpf oeq, %267, %691 : vector<96x120xf32>
    %cst_179 = arith.constant 9.000000e+00 : f32
    %693 = vector.broadcast %cst_179 : f32 to vector<96x120xf32>
    %694 = arith.subf %693, %266 : vector<96x120xf32>
    %cst_180 = arith.constant 0.000000e+00 : f32
    %695 = vector.broadcast %cst_180 : f32 to vector<96x120xf32>
    %696 = arith.select %692, %694, %695 : vector<96x120xi1>, vector<96x120xf32>
    %cst_181 = arith.constant 9.000000e+00 : f32
    %697 = vector.broadcast %cst_181 : f32 to vector<96x120xf32>
    %698 = arith.cmpf oeq, %268, %697 : vector<96x120xf32>
    %cst_182 = arith.constant 8.000000e+00 : f32
    %699 = vector.broadcast %cst_182 : f32 to vector<96x120xf32>
    %700 = arith.subf %266, %699 : vector<96x120xf32>
    %cst_183 = arith.constant 0.000000e+00 : f32
    %701 = vector.broadcast %cst_183 : f32 to vector<96x120xf32>
    %702 = arith.select %698, %700, %701 : vector<96x120xi1>, vector<96x120xf32>
    %703 = arith.mulf %644, %696 : vector<96x120xf32>
    %704 = arith.addf %660, %703 : vector<96x120xf32>
    %705 = arith.mulf %690, %702 : vector<96x120xf32>
    %706 = arith.addf %704, %705 : vector<96x120xf32>
    %707 = arith.mulf %634, %696 : vector<96x120xf32>
    %708 = arith.addf %664, %707 : vector<96x120xf32>
    %709 = arith.mulf %680, %702 : vector<96x120xf32>
    %710 = arith.addf %708, %709 : vector<96x120xf32>
    %cst_184 = arith.constant 1.000000e+01 : f32
    %711 = vector.broadcast %cst_184 : f32 to vector<96x120xf32>
    %712 = arith.subf %266, %711 : vector<96x120xf32>
    %713 = math.absf %712 : vector<96x120xf32>
    %714 = arith.mulf %263, %713 : vector<96x120xf32>
    %cst_185 = arith.constant 9.99999974E-5 : f32
    %715 = vector.broadcast %cst_185 : f32 to vector<96x120xf32>
    %716 = arith.addf %714, %715 : vector<96x120xf32>
    %717 = math.log %716 : vector<96x120xf32>
    %cst_186 = arith.constant -1.200000e+00 : f32
    %718 = vector.broadcast %cst_186 : f32 to vector<96x120xf32>
    %719 = arith.mulf %718, %717 : vector<96x120xf32>
    %720 = math.exp %719 : vector<96x120xf32>
    %721 = arith.mulf %720, %0 : vector<96x120xf32>
    %722 = arith.mulf %720, %264 : vector<96x120xf32>
    %723 = tpu.concatenate %720, %721, %722 in 0 : vector<96x120xf32>, vector<96x120xf32>, vector<96x120xf32> -> vector<288x120xf32>
    %cst_187 = arith.constant dense<0.000000e+00> : vector<288x120xf32>
    %724 = tpu.matmul %723, %2, %cst_187 {dimension_numbers = #tpu.dot_dimension_numbers<[1], [0], [0], [1], [0, 0, 1, 1], [], []>} : vector<288x120xf32>, vector<120x120xf32>, vector<288x120xf32> -> vector<288x120xf32>
    %725 = vector.extract_strided_slice %724 {offsets = [0, 0], sizes = [96, 120], strides = [1, 1]} : vector<288x120xf32> to vector<96x120xf32>
    %cst_188 = arith.constant dense<0.000000e+00> : vector<96x120xf32>
    %726 = tpu.matmul %1, %725, %cst_188 {dimension_numbers = #tpu.dot_dimension_numbers<[1], [0], [0], [1], [0, 0, 1, 1], [], []>} : vector<96x96xf32>, vector<96x120xf32>, vector<96x120xf32> -> vector<96x120xf32>
    %727 = vector.extract_strided_slice %724 {offsets = [96, 0], sizes = [96, 120], strides = [1, 1]} : vector<288x120xf32> to vector<96x120xf32>
    %cst_189 = arith.constant dense<0.000000e+00> : vector<96x120xf32>
    %728 = tpu.matmul %1, %727, %cst_189 {dimension_numbers = #tpu.dot_dimension_numbers<[1], [0], [0], [1], [0, 0, 1, 1], [], []>} : vector<96x96xf32>, vector<96x120xf32>, vector<96x120xf32> -> vector<96x120xf32>
    %729 = vector.extract_strided_slice %724 {offsets = [192, 0], sizes = [96, 120], strides = [1, 1]} : vector<288x120xf32> to vector<96x120xf32>
    %cst_190 = arith.constant dense<0.000000e+00> : vector<96x120xf32>
    %730 = tpu.matmul %1, %729, %cst_190 {dimension_numbers = #tpu.dot_dimension_numbers<[1], [0], [0], [1], [0, 0, 1, 1], [], []>} : vector<96x96xf32>, vector<96x120xf32>, vector<96x120xf32> -> vector<96x120xf32>
    %731 = arith.mulf %726, %264 : vector<96x120xf32>
    %cst_191 = arith.constant 2.000000e+00 : f32
    %732 = vector.broadcast %cst_191 : f32 to vector<96x120xf32>
    %733 = arith.mulf %732, %0 : vector<96x120xf32>
    %734 = arith.mulf %733, %728 : vector<96x120xf32>
    %735 = arith.subf %731, %734 : vector<96x120xf32>
    %736 = arith.addf %735, %730 : vector<96x120xf32>
    %cst_192 = arith.constant 9.000000e+00 : f32
    %737 = vector.broadcast %cst_192 : f32 to vector<96x120xf32>
    %738 = arith.cmpf oeq, %267, %737 : vector<96x120xf32>
    %cst_193 = arith.constant 1.000000e+01 : f32
    %739 = vector.broadcast %cst_193 : f32 to vector<96x120xf32>
    %740 = arith.subf %739, %266 : vector<96x120xf32>
    %cst_194 = arith.constant 0.000000e+00 : f32
    %741 = vector.broadcast %cst_194 : f32 to vector<96x120xf32>
    %742 = arith.select %738, %740, %741 : vector<96x120xi1>, vector<96x120xf32>
    %cst_195 = arith.constant 1.000000e+01 : f32
    %743 = vector.broadcast %cst_195 : f32 to vector<96x120xf32>
    %744 = arith.cmpf oeq, %268, %743 : vector<96x120xf32>
    %cst_196 = arith.constant 9.000000e+00 : f32
    %745 = vector.broadcast %cst_196 : f32 to vector<96x120xf32>
    %746 = arith.subf %266, %745 : vector<96x120xf32>
    %cst_197 = arith.constant 0.000000e+00 : f32
    %747 = vector.broadcast %cst_197 : f32 to vector<96x120xf32>
    %748 = arith.select %744, %746, %747 : vector<96x120xi1>, vector<96x120xf32>
    %749 = arith.mulf %690, %742 : vector<96x120xf32>
    %750 = arith.addf %706, %749 : vector<96x120xf32>
    %751 = arith.mulf %736, %748 : vector<96x120xf32>
    %752 = arith.addf %750, %751 : vector<96x120xf32>
    %753 = arith.mulf %680, %742 : vector<96x120xf32>
    %754 = arith.addf %710, %753 : vector<96x120xf32>
    %755 = arith.mulf %726, %748 : vector<96x120xf32>
    %756 = arith.addf %754, %755 : vector<96x120xf32>
    %757 = tpu.reciprocal %756 {approx = true} : vector<96x120xf32> -> vector<96x120xf32>
    %758 = arith.mulf %752, %757 : vector<96x120xf32>
    %c0_198 = arith.constant 0 : index
    %c0_199 = arith.constant 0 : index
    %759 = vector.load %arg7[%c0_198, %c0_199] : memref<96x120xf32, #tpu.memory_space<vmem>>, vector<96x120xf32>
    tpu.vector_store %arg7[%c0_198, %c0_199], %758 {strides = array<i32>} : memref<96x120xf32, #tpu.memory_space<vmem>>, vector<96x120xf32>,
    return
  }
  func.func @transform_0(%arg0: i32) -> (i32, i32) {
    %c0_i32 = arith.constant 0 : i32
    %c0_i32_0 = arith.constant 0 : i32
    return %arg0, %c0_i32 : i32, i32
  }
  func.func @transform_1(%arg0: i32) -> i32 {
    %c0_i32 = arith.constant 0 : i32
    %c0_i32_0 = arith.constant 0 : i32
    return %c0_i32 : i32
  }
  func.func @transform_2(%arg0: i32) -> i32 {
    %c0_i32 = arith.constant 0 : i32
    %c0_i32_0 = arith.constant 0 : i32
    return %c0_i32 : i32
  }
  func.func @transform_3(%arg0: i32) -> i32 {
    %c0_i32 = arith.constant 0 : i32
    %c0_i32_0 = arith.constant 0 : i32
    return %c0_i32 : i32
  }
  func.func @transform_4(%arg0: i32) -> (i32, i32) {
    %c0_i32 = arith.constant 0 : i32
    %c0_i32_0 = arith.constant 0 : i32
    %c0_i32_1 = arith.constant 0 : i32
    return %c0_i32, %c0_i32_0 : i32, i32
  }
  func.func @transform_5(%arg0: i32) -> (i32, i32) {
    %c0_i32 = arith.constant 0 : i32
    %c0_i32_0 = arith.constant 0 : i32
    %c0_i32_1 = arith.constant 0 : i32
    return %c0_i32, %c0_i32_0 : i32, i32
  }
  func.func @transform_6(%arg0: i32) -> (i32, i32) {
    %c0_i32 = arith.constant 0 : i32
    %c0_i32_0 = arith.constant 0 : i32
    return %arg0, %c0_i32 : i32, i32
  }
}

</mosaic_0001>

<llo_original>
// kernel: tpu_custom_call.1
$region0: #{tpu_custom_call.1}
  #allocation0 [shape = 'u32[]', space=smem, size = 0x4, offset = 0x4, fixed_abs, tag = 'smem constant byte address 0x4 - core index']
  #allocation1 [shape = 'u32[72,128]{1,0:T(1,128)}', space=vmem, size = 0x9000, scoped, tag = 'internal scratch']
  %s0 = inlined_call_operand.hbm [shape: f32[192,120], index: 0, kind: input, shape index: {}]
  %s1 = inlined_call_operand.hbm [shape: f32[24], index: 1, kind: input, shape index: {}]
  %s2 = inlined_call_operand.vmem [shape: f32[24], index: 2, kind: input, shape index: {}]
  %s3 = inlined_call_operand.vmem [shape: f32[24], index: 3, kind: input, shape index: {}]
  %s4 = inlined_call_operand.hbm [shape: f32[96,96], index: 4, kind: input, shape index: {}]
  %s5 = inlined_call_operand.hbm [shape: f32[120,120], index: 5, kind: input, shape index: {}]
  %s6 = inlined_call_operand.hbm [shape: f32[192,120], index: 6, kind: output, shape index: {}]
  %s7 = sld [smem:[#allocation0]]
  $region81: #{tpu_custom_call.1} parent=0
    _
  %s9 = ssub.s32 1, %s7
  %s10 = scalar_select 0, %s9, %s7
  $region1: #{tpu_custom_call.1} parent=0
    #allocation2 [shape = 'u8[98304]{0}', space=vmem, size = 0x18000, scoped, tag = 'input window, operand 0']
    #allocation3 [shape = 's32[2]{0}', space=sflag, size = 0x8, scoped, tag = 'scoped memory for tpu_custom_call.1']
    #allocation4 [shape = 's32[2]{0}', space=sflag, size = 0x8, scoped, tag = 'scoped memory for tpu_custom_call.1']
    #allocation5 [shape = 's32[2]{0}', space=sflag, size = 0x8, scoped, tag = 'scoped memory for tpu_custom_call.1']
    #allocation6 [shape = 's32[2]{0}', space=sflag, size = 0x8, scoped, tag = 'scoped memory for tpu_custom_call.1']
    #allocation7 [shape = 'u8[512]{0}', space=smem, size = 0x200, scoped, tag = 'input window, operand 1, single buffered']
    #allocation8 [shape = 'u8[512]{0}', space=smem, size = 0x200, scoped, tag = 'input window, operand 2, single buffered']
    #allocation9 [shape = 'u8[512]{0}', space=smem, size = 0x200, scoped, tag = 'input window, operand 3, single buffered']
    #allocation10 [shape = 's32[1]{0}', space=sflag, size = 0x4, scoped, tag = 'scoped memory for tpu_custom_call.1']
    #allocation11 [shape = 'u8[49152]{0}', space=vmem, size = 0xc000, scoped, tag = 'input window, operand 4, single buffered']
    #allocation12 [shape = 's32[1]{0}', space=sflag, size = 0x4, scoped, tag = 'scoped memory for tpu_custom_call.1']
    #allocation13 [shape = 'u8[61440]{0}', space=vmem, size = 0xf000, scoped, tag = 'input window, operand 5, single buffered']
    #allocation14 [shape = 'u8[98304]{0}', space=vmem, size = 0x18000, scoped, tag = 'output window, operand 0']
    %11 = vsyncpa [#allocation3], 0
    %s12 = scalar_lea.sflag [#allocation3], 1
    %13 = vsyncpa %s12, 0
    %14 = vsyncpa [#allocation5], 0
    %15 = vsyncpa [#allocation6], 0
    %16 = vsyncpa [#allocation10], 0
    %17 = vsyncpa [#allocation12], 0
    %18 = vsyncpa [#allocation4], 0
    %s19 = scalar_lea.sflag [#allocation4], 1
    %20 = vsyncpa %s19, 0
    loop: start=0, step=1, limit=4
    $region2: #{tpu_custom_call.1} parent=1 // loop_pre_header
      _
    $region3: #{tpu_custom_call.1} parent=1 // loop_header
      %s22 = sphi 0, %s26
      %p23 = scmp.ge.s32.totalorder %s22, 4
      %s32 = sphi 0, %s34
      %s35 = sphi 0, %s32
      %s36 = sphi 0, %s35
      %s52 = sphi 0, %s36
      %s56 = sphi 0, %s56
      %s58 = sphi 0, %s56
      %s59 = sphi 0, %s58
      %s73 = sphi 0, %s59
      %s77 = sphi 0, %s77
      %s79 = sphi 0, %s77
      %s80 = sphi 0, %s79
      %s94 = sphi 0, %s80
      %s98 = sphi 0, %s98
      %s100 = sphi 0, %s98
      %s101 = sphi 0, %s100
      %s115 = sphi 0, %s101
      %s119 = sphi 0, %s119
      %s121 = sphi 0, %s119
      %s122 = sphi 0, %s121
      %s136 = sphi 0, %s122
      %s140 = sphi 0, %s140
      %s142 = sphi 0, %s140
      %s143 = sphi 0, %s142
      %s157 = sphi 0, %s143
      %s163 = sphi 0, %s165
      %s166 = sphi 0, %s163
      %s167 = sphi 0, %s166
      %s183 = sphi 0, %s167
    $region4: #{tpu_custom_call.1} parent=1 // loop_header_branch
      %25 = sbr.rel (%p23) target = $region8
    $region5: #{tpu_custom_call.1} parent=1 // loop_body
      %s27 = ssub.s32 %s22, 1
      %s28 = ssub.s32 %s22, 2
      %s29 = sadd.s32 %s22, 1
      %s30 = ssub.s32 %s22, %s29
      %p31 = scmp.eq.s32.totalorder %s30, 0
      %s33 = sadd.s32 %s32, 1
      %s34 = scalar_select %p31, %s32, %s33
      %p37 = pneg %p31
      %p38 = scmp.eq.s32.totalorder %s22, 1
      %p39 = por %p37, %p38
      %p40 = scmp.ne.s32.totalorder %s32, %s35
      %p41 = scmp.eq.s32.totalorder %s22, 0
      %p42 = por %p40, %p41
      %p43 = scmp.ne.s32.totalorder %s32, %s35
      %p44 = scmp.eq.s32.totalorder %s27, 1
      %p45 = por %p43, %p44
      %p46 = scmp.ne.s32.totalorder %s35, %s36
      %p47 = scmp.eq.s32.totalorder %s27, 0
      %p48 = por %p46, %p47
      %p49 = scmp.ne.s32.totalorder %s35, %s36
      %p50 = scmp.eq.s32.totalorder %s28, 1
      %p51 = por %p49, %p50
      %p53 = scmp.ne.s32.totalorder %s36, %s52
      %p54 = scmp.eq.s32.totalorder %s28, 0
      %p55 = por %p53, %p54
      %s57 = sadd.s32 %s56, 1
      %p60 = scmp.eq.s32.totalorder %s22, 1
      %p61 = scmp.ne.s32.totalorder %s56, %s58
      %p62 = scmp.eq.s32.totalorder %s22, 0
      %p63 = por %p61, %p62
      %p64 = scmp.ne.s32.totalorder %s56, %s58
      %p65 = scmp.eq.s32.totalorder %s27, 1
      %p66 = por %p64, %p65
      %p67 = scmp.ne.s32.totalorder %s58, %s59
      %p68 = scmp.eq.s32.totalorder %s27, 0
      %p69 = por %p67, %p68
      %p70 = scmp.ne.s32.totalorder %s58, %s59
      %p71 = scmp.eq.s32.totalorder %s28, 1
      %p72 = por %p70, %p71
      %p74 = scmp.ne.s32.totalorder %s59, %s73
      %p75 = scmp.eq.s32.totalorder %s28, 0
      %p76 = por %p74, %p75
      %s78 = sadd.s32 %s77, 1
      %p81 = scmp.eq.s32.totalorder %s22, 1
      %p82 = scmp.ne.s32.totalorder %s77, %s79
      %p83 = scmp.eq.s32.totalorder %s22, 0
      %p84 = por %p82, %p83
      %p85 = scmp.ne.s32.totalorder %s77, %s79
      %p86 = scmp.eq.s32.totalorder %s27, 1
      %p87 = por %p85, %p86
      %p88 = scmp.ne.s32.totalorder %s79, %s80
      %p89 = scmp.eq.s32.totalorder %s27, 0
      %p90 = por %p88, %p89
      %p91 = scmp.ne.s32.totalorder %s79, %s80
      %p92 = scmp.eq.s32.totalorder %s28, 1
      %p93 = por %p91, %p92
      %p95 = scmp.ne.s32.totalorder %s80, %s94
      %p96 = scmp.eq.s32.totalorder %s28, 0
      %p97 = por %p95, %p96
      %s99 = sadd.s32 %s98, 1
      %p102 = scmp.eq.s32.totalorder %s22, 1
      %p103 = scmp.ne.s32.totalorder %s98, %s100
      %p104 = scmp.eq.s32.totalorder %s22, 0
      %p105 = por %p103, %p104
      %p106 = scmp.ne.s32.totalorder %s98, %s100
      %p107 = scmp.eq.s32.totalorder %s27, 1
      %p108 = por %p106, %p107
      %p109 = scmp.ne.s32.totalorder %s100, %s101
      %p110 = scmp.eq.s32.totalorder %s27, 0
      %p111 = por %p109, %p110
      %p112 = scmp.ne.s32.totalorder %s100, %s101
      %p113 = scmp.eq.s32.totalorder %s28, 1
      %p114 = por %p112, %p113
      %p116 = scmp.ne.s32.totalorder %s101, %s115
      %p117 = scmp.eq.s32.totalorder %s28, 0
      %p118 = por %p116, %p117
      %s120 = sadd.s32 %s119, 1
      %p123 = scmp.eq.s32.totalorder %s22, 1
      %p124 = scmp.ne.s32.totalorder %s119, %s121
      %p125 = scmp.eq.s32.totalorder %s22, 0
      %p126 = por %p124, %p125
      %p127 = scmp.ne.s32.totalorder %s119, %s121
      %p128 = scmp.eq.s32.totalorder %s27, 1
      %p129 = por %p127, %p128
      %p130 = scmp.ne.s32.totalorder %s121, %s122
      %p131 = scmp.eq.s32.totalorder %s27, 0
      %p132 = por %p130, %p131
      %p133 = scmp.ne.s32.totalorder %s121, %s122
      %p134 = scmp.eq.s32.totalorder %s28, 1
      %p135 = por %p133, %p134
      %p137 = scmp.ne.s32.totalorder %s122, %s136
      %p138 = scmp.eq.s32.totalorder %s28, 0
      %p139 = por %p137, %p138
      %s141 = sadd.s32 %s140, 1
      %p144 = scmp.eq.s32.totalorder %s22, 1
      %p145 = scmp.ne.s32.totalorder %s140, %s142
      %p146 = scmp.eq.s32.totalorder %s22, 0
      %p147 = por %p145, %p146
      %p148 = scmp.ne.s32.totalorder %s140, %s142
      %p149 = scmp.eq.s32.totalorder %s27, 1
      %p150 = por %p148, %p149
      %p151 = scmp.ne.s32.totalorder %s142, %s143
      %p152 = scmp.eq.s32.totalorder %s27, 0
      %p153 = por %p151, %p152
      %p154 = scmp.ne.s32.totalorder %s142, %s143
      %p155 = scmp.eq.s32.totalorder %s28, 1
      %p156 = por %p154, %p155
      %p158 = scmp.ne.s32.totalorder %s143, %s157
      %p159 = scmp.eq.s32.totalorder %s28, 0
      %p160 = por %p158, %p159
      %s161 = ssub.s32 %s22, %s29
      %p162 = scmp.eq.s32.totalorder %s161, 0
      %s164 = sadd.s32 %s163, 1
      %s165 = scalar_select %p162, %s163, %s164
      %p168 = pneg %p162
      %p169 = scmp.eq.s32.totalorder %s22, 1
      %p170 = por %p168, %p169
      %p171 = scmp.ne.s32.totalorder %s163, %s166
      %p172 = scmp.eq.s32.totalorder %s22, 0
      %p173 = por %p171, %p172
      %p174 = scmp.ne.s32.totalorder %s163, %s166
      %p175 = scmp.eq.s32.totalorder %s27, 1
      %p176 = por %p174, %p175
      %p177 = scmp.ne.s32.totalorder %s166, %s167
      %p178 = scmp.eq.s32.totalorder %s27, 0
      %p179 = por %p177, %p178
      %p180 = scmp.ne.s32.totalorder %s166, %s167
      %p181 = scmp.eq.s32.totalorder %s28, 1
      %p182 = por %p180, %p181
      %p184 = scmp.ne.s32.totalorder %s167, %s183
      %p185 = scmp.eq.s32.totalorder %s28, 0
      %p186 = por %p184, %p185
      %p187 = scmp.le.s32.totalorder 1, %s22
      %p188 = scmp.lt.s32.totalorder %s22, 3
      %p189 = pnand %p187, %p188
      %p190 = pneg %p189
      // Predicated region
      $region9: #{tpu_custom_call.1} parent=5 // pred_check
        _
      $region10: #{tpu_custom_call.1} parent=5 // pred_check_branch
        %192 = sbr.rel (%p189) target = $region12
      $region11: #{tpu_custom_call.1} parent=5 // pred_region
        %s193 = ssub.s32 %s22, 1
        // Predicated region
        $region13: #{tpu_custom_call.1} parent=11 // pred_check
          %p194 = pneg %p69
        $region14: #{tpu_custom_call.1} parent=11 // pred_check_branch
          %196 = sbr.rel (%p194) target = $region16
        $region15: #{tpu_custom_call.1} parent=11 // pred_region
          %198 = vsyncadd [#allocation5], 0
          %s200 = sshll.u32 %s1, 4
          %s201 = int_to_ptr.hbm [resolvable:$true] %s200
          %203 = dma.hbm_to_smem %s201, 16, [#allocation7], [#allocation5]
        $region16: #{tpu_custom_call.1} parent=11 // pred_fallthru
          _
        // Predicated region
        $region17: #{tpu_custom_call.1} parent=11 // pred_check
          %p204 = pneg %p90
        $region18: #{tpu_custom_call.1} parent=11 // pred_check_branch
          %206 = sbr.rel (%p204) target = $region20
        $region19: #{tpu_custom_call.1} parent=11 // pred_region
          %208 = vsyncadd [#allocation6], 0
          %s210 = sshll.u32 %s2, 4
          %s211 = int_to_ptr.vmem [resolvable:$true] %s210
          %213 = dma.vmem_to_smem %s211, 16, [#allocation8], [#allocation6]
        $region20: #{tpu_custom_call.1} parent=11 // pred_fallthru
          _
        // Predicated region
        $region21: #{tpu_custom_call.1} parent=11 // pred_check
          %p214 = pneg %p111
        $region22: #{tpu_custom_call.1} parent=11 // pred_check_branch
          %216 = sbr.rel (%p214) target = $region24
        $region23: #{tpu_custom_call.1} parent=11 // pred_region
          %218 = vsyncadd [#allocation10], 0
          %s220 = sshll.u32 %s3, 4
          %s221 = int_to_ptr.vmem [resolvable:$true] %s220
          %223 = dma.vmem_to_smem %s221, 16, [#allocation9], [#allocation10]
        $region24: #{tpu_custom_call.1} parent=11 // pred_fallthru
          _
        // Predicated region
        $region25: #{tpu_custom_call.1} parent=11 // pred_check
          %p224 = pneg %p132
        $region26: #{tpu_custom_call.1} parent=11 // pred_check_branch
          %226 = sbr.rel (%p224) target = $region28
        $region27: #{tpu_custom_call.1} parent=11 // pred_region
          %228 = vsyncadd [#allocation12], 0
          %s229 = sshll.u32 %s4, 4
          %s230 = int_to_ptr.hbm [resolvable:$true] %s229
          %s231 = sshll.u32 [#allocation11], 4
          %s232 = int_to_ptr.vmem [resolvable:$true] %s231
          %237 = dma.hbm_to_vmem [thread:$0]  %s230, 1536, %s232, [#allocation12], 128, 128, 8
        $region28: #{tpu_custom_call.1} parent=11 // pred_fallthru
          _
        // Predicated region
        $region29: #{tpu_custom_call.1} parent=11 // pred_check
          %p238 = pneg %p153
        $region30: #{tpu_custom_call.1} parent=11 // pred_check_branch
          %240 = sbr.rel (%p238) target = $region32
        $region31: #{tpu_custom_call.1} parent=11 // pred_region
          %242 = vsyncadd [#allocation12], 0
          %s243 = sshll.u32 %s5, 4
          %s244 = int_to_ptr.hbm [resolvable:$true] %s243
          %s245 = sshll.u32 [#allocation13], 4
          %s246 = int_to_ptr.vmem [resolvable:$true] %s245
          %251 = dma.hbm_to_vmem [thread:$0]  %s244, 1920, %s246, [#allocation12], 128, 128, 8
        $region32: #{tpu_custom_call.1} parent=11 // pred_fallthru
          _
      $region12: #{tpu_custom_call.1} parent=5 // pred_fallthru
        _
      %p252 = scmp.lt.s32.totalorder %s22, 2
      // Predicated region
      $region33: #{tpu_custom_call.1} parent=5 // pred_check
        %p253 = pneg %p252
      $region34: #{tpu_custom_call.1} parent=5 // pred_check_branch
        %255 = sbr.rel (%p253) target = $region36
      $region35: #{tpu_custom_call.1} parent=5 // pred_region
        // Predicated region
        $region37: #{tpu_custom_call.1} parent=35 // pred_check
          %p256 = pneg %p42
        $region38: #{tpu_custom_call.1} parent=35 // pred_check_branch
          %258 = sbr.rel (%p256) target = $region40
        $region39: #{tpu_custom_call.1} parent=35 // pred_region
          %s259 = sand.u32 %s32, 1
          %s260 = scalar_lea.sflag [#allocation3], %s259
          %s261 = sand.u32 %s32, 1
          %s262 = smul.addr %s261, 96
          %s263 = scalar_lea.vmem [#allocation2], %s262
          %s264 = smul.u32 12, %s22
          %266 = vsyncadd %s260, 0
          %s267 = smul.addr %s264, 8
          %s268 = scalar_lea.hbm %s0, %s267
          %s269 = sshll.u32 %s268, 4
          %s270 = int_to_ptr.hbm [resolvable:$true] %s269
          %s271 = sshll.u32 %s263, 4
          %s272 = int_to_ptr.vmem [resolvable:$true] %s271
          %277 = dma.hbm_to_vmem [thread:$0]  %s270, 1536, %s272, %s260, 128, 128, 8
        $region40: #{tpu_custom_call.1} parent=35 // pred_fallthru
          _
      $region36: #{tpu_custom_call.1} parent=5 // pred_fallthru
        _
      %p278 = scmp.le.s32.totalorder 1, %s22
      %p279 = scmp.lt.s32.totalorder %s22, 3
      %p280 = pnand %p278, %p279
      %p281 = pneg %p280
      // Predicated region
      $region41: #{tpu_custom_call.1} parent=5 // pred_check
        _
      $region42: #{tpu_custom_call.1} parent=5 // pred_check_branch
        %283 = sbr.rel (%p280) target = $region44
      $region43: #{tpu_custom_call.1} parent=5 // pred_region
        %s284 = ssub.s32 %s22, 1
        %s285 = sand.u32 %s35, 1
        %s286 = scalar_lea.sflag [#allocation3], %s285
        %s287 = sand.u32 %s35, 1
        %s288 = smul.addr %s287, 96
        %s289 = scalar_lea.vmem [#allocation2], %s288
        // Predicated region
        $region45: #{tpu_custom_call.1} parent=43 // pred_check
          %p290 = pneg %p48
        $region46: #{tpu_custom_call.1} parent=43 // pred_check_branch
          %292 = sbr.rel (%p290) target = $region48
        $region47: #{tpu_custom_call.1} parent=43 // pred_region
          %294 = dma.done %s286, 1536
        $region48: #{tpu_custom_call.1} parent=43 // pred_fallthru
          _
        // Predicated region
        $region49: #{tpu_custom_call.1} parent=43 // pred_check
          %p295 = pneg %p69
        $region50: #{tpu_custom_call.1} parent=43 // pred_check_branch
          %297 = sbr.rel (%p295) target = $region52
        $region51: #{tpu_custom_call.1} parent=43 // pred_region
          %299 = dma.done [#allocation5], 16
        $region52: #{tpu_custom_call.1} parent=43 // pred_fallthru
          _
        // Predicated region
        $region53: #{tpu_custom_call.1} parent=43 // pred_check
          %p300 = pneg %p90
        $region54: #{tpu_custom_call.1} parent=43 // pred_check_branch
          %302 = sbr.rel (%p300) target = $region56
        $region55: #{tpu_custom_call.1} parent=43 // pred_region
          %304 = dma.done [#allocation6], 16
        $region56: #{tpu_custom_call.1} parent=43 // pred_fallthru
          _
        // Predicated region
        $region57: #{tpu_custom_call.1} parent=43 // pred_check
          %p305 = pneg %p111
        $region58: #{tpu_custom_call.1} parent=43 // pred_check_branch
          %307 = sbr.rel (%p305) target = $region60
        $region59: #{tpu_custom_call.1} parent=43 // pred_region
          %309 = dma.done [#allocation10], 16
        $region60: #{tpu_custom_call.1} parent=43 // pred_fallthru
          _
        // Predicated region
        $region61: #{tpu_custom_call.1} parent=43 // pred_check
          %p310 = pneg %p132
        $region62: #{tpu_custom_call.1} parent=43 // pred_check_branch
          %312 = sbr.rel (%p310) target = $region64
        $region63: #{tpu_custom_call.1} parent=43 // pred_region
          %314 = dma.done [#allocation12], 1536
        $region64: #{tpu_custom_call.1} parent=43 // pred_fallthru
          _
        // Predicated region
        $region65: #{tpu_custom_call.1} parent=43 // pred_check
          %p315 = pneg %p153
        $region66: #{tpu_custom_call.1} parent=43 // pred_check_branch
          %317 = sbr.rel (%p315) target = $region68
        $region67: #{tpu_custom_call.1} parent=43 // pred_region
          %319 = dma.done [#allocation12], 1920
        $region68: #{tpu_custom_call.1} parent=43 // pred_fallthru
          _
        %320 = sfence
        %s321 = sand.u32 %s35, 1
        %s322 = scalar_lea.sflag [#allocation3], %s321
        %s323 = sand.u32 %s35, 1
        %s324 = smul.addr %s323, 96
        %s325 = scalar_lea.vmem [#allocation2], %s324
        %p326 = pneg %p48
        %p327 = pneg %p45
        %p328 = pneg %p69
        %p329 = pneg %p66
        %p330 = pneg %p90
        %p331 = pneg %p87
        %p332 = pneg %p111
        %p333 = pneg %p108
        %p334 = pneg %p132
        %p335 = pneg %p129
        %p336 = pneg %p153
        %p337 = pneg %p150
        %p338 = pneg %p179
        %p339 = pneg %p176
        %s340 = sand.u32 %s166, 1
        %s341 = scalar_lea.sflag [#allocation4], %s340
        %s342 = sand.u32 %s166, 1
        %s343 = smul.addr %s342, 96
        %s344 = scalar_lea.vmem [#allocation14], %s343
        %s345 = smul.u32 12, %s27
        %s346 = smul.u32 12, %s27
        %v347 = vld [vmem:[%s289] sm:$0xff]
        %v348 = vld [vmem:[%s289 + $0x8] sm:$0xff]
        %v349 = vld [vmem:[%s289 + $0x10] sm:$0xff]
        %v350 = vld [vmem:[%s289 + $0x18] sm:$0xff]
        %v351 = vld [vmem:[%s289 + $0x20] sm:$0xff]
        %v352 = vld [vmem:[%s289 + $0x28] sm:$0xff]
        %v353 = vld [vmem:[%s289 + $0x30] sm:$0xff]
        %v354 = vld [vmem:[%s289 + $0x38] sm:$0xff]
        %v355 = vld [vmem:[%s289 + $0x40] sm:$0xff]
        %v356 = vld [vmem:[%s289 + $0x48] sm:$0xff]
        %v357 = vld [vmem:[%s289 + $0x50] sm:$0xff]
        %v358 = vld [vmem:[%s289 + $0x58] sm:$0xff]
        %v359 = vld [vmem:[#allocation11] sm:$0xff]
        %v360 = vld [vmem:[#allocation11 + $0x8] sm:$0xff]
        %v361 = vld [vmem:[#allocation11 + $0x10] sm:$0xff]
        %v362 = vld [vmem:[#allocation11 + $0x18] sm:$0xff]
        %v363 = vld [vmem:[#allocation11 + $0x20] sm:$0xff]
        %v364 = vld [vmem:[#allocation11 + $0x28] sm:$0xff]
        %v365 = vld [vmem:[#allocation11 + $0x30] sm:$0xff]
        %v366 = vld [vmem:[#allocation11 + $0x38] sm:$0xff]
        %v367 = vld [vmem:[#allocation11 + $0x40] sm:$0xff]
        %v368 = vld [vmem:[#allocation11 + $0x48] sm:$0xff]
        %v369 = vld [vmem:[#allocation11 + $0x50] sm:$0xff]
        %v370 = vld [vmem:[#allocation11 + $0x58] sm:$0xff]
        %v371 = vld [vmem:[#allocation13] sm:$0xff]
        %v372 = vld [vmem:[#allocation13 + $0x8] sm:$0xff]
        %v373 = vld [vmem:[#allocation13 + $0x10] sm:$0xff]
        %v374 = vld [vmem:[#allocation13 + $0x18] sm:$0xff]
        %v375 = vld [vmem:[#allocation13 + $0x20] sm:$0xff]
        %v376 = vld [vmem:[#allocation13 + $0x28] sm:$0xff]
        %v377 = vld [vmem:[#allocation13 + $0x30] sm:$0xff]
        %v378 = vld [vmem:[#allocation13 + $0x38] sm:$0xff]
        %v379 = vld [vmem:[#allocation13 + $0x40] sm:$0xff]
        %v380 = vld [vmem:[#allocation13 + $0x48] sm:$0xff]
        %v381 = vld [vmem:[#allocation13 + $0x50] sm:$0xff]
        %v382 = vld [vmem:[#allocation13 + $0x58] sm:$0xff]
        %v383 = vld [vmem:[#allocation13 + $0x60] sm:$0xff]
        %v384 = vld [vmem:[#allocation13 + $0x68] sm:$0xff]
        %v385 = vld [vmem:[#allocation13 + $0x70] sm:$0xff]
        %v386 = vlaneseq
        %v387 = vshrl.u32 %v386, 7
        %v388 = vadd.s32 %v387, 8
        %v389 = vadd.s32 %v387, 16
        %v390 = vadd.s32 %v387, 24
        %v391 = vadd.s32 %v387, 32
        %v392 = vadd.s32 %v387, 40
        %v393 = vadd.s32 %v387, 48
        %v394 = vadd.s32 %v387, 56
        %v395 = vadd.s32 %v387, 64
        %v396 = vadd.s32 %v387, 72
        %v397 = vadd.s32 %v387, 80
        %v398 = vadd.s32 %v387, 88
        %v399 = vlaneseq
        %v400 = vand.u32 %v399, 127
        %s401 = smul.u32 %s27, 12
        %vm402 = vcmp.ge.s32.totalorder %v387, 0
        %vm403 = vcmp.ge.s32.totalorder %v388, 0
        %vm404 = vcmp.ge.s32.totalorder %v389, 0
        %vm405 = vcmp.ge.s32.totalorder %v390, 0
        %vm406 = vcmp.ge.s32.totalorder %v391, 0
        %vm407 = vcmp.ge.s32.totalorder %v392, 0
        %vm408 = vcmp.ge.s32.totalorder %v393, 0
        %vm409 = vcmp.ge.s32.totalorder %v394, 0
        %vm410 = vcmp.ge.s32.totalorder %v395, 0
        %vm411 = vcmp.ge.s32.totalorder %v396, 0
        %vm412 = vcmp.ge.s32.totalorder %v397, 0
        %vm413 = vcmp.ge.s32.totalorder %v398, 0
        %vm414 = vcmp.lt.s32.totalorder %v387, 32
        %vm415 = vcmp.lt.s32.totalorder %v388, 32
        %vm416 = vcmp.lt.s32.totalorder %v389, 32
        %vm417 = vcmp.lt.s32.totalorder %v390, 32
        %vm418 = vcmp.lt.s32.totalorder %v391, 32
        %vm419 = vcmp.lt.s32.totalorder %v392, 32
        %vm420 = vcmp.lt.s32.totalorder %v393, 32
        %vm421 = vcmp.lt.s32.totalorder %v394, 32
        %vm422 = vcmp.lt.s32.totalorder %v395, 32
        %vm423 = vcmp.lt.s32.totalorder %v396, 32
        %vm424 = vcmp.lt.s32.totalorder %v397, 32
        %vm425 = vcmp.lt.s32.totalorder %v398, 32
        %vm426 = vmand %vm402, %vm414
        %vm427 = vmand %vm403, %vm415
        %vm428 = vmand %vm404, %vm416
        %vm429 = vmand %vm405, %vm417
        %vm430 = vmand %vm406, %vm418
        %vm431 = vmand %vm407, %vm419
        %vm432 = vmand %vm408, %vm420
        %vm433 = vmand %vm409, %vm421
        %vm434 = vmand %vm410, %vm422
        %vm435 = vmand %vm411, %vm423
        %vm436 = vmand %vm412, %vm424
        %vm437 = vmand %vm413, %vm425
        %vm438 = vcmp.ge.s32.totalorder %v400, 0
        %vm439 = vcmp.lt.s32.totalorder %v400, 30
        %vm440 = vmand %vm438, %vm439
        %vm441 = vmand %vm426, %vm440
        %vm442 = vmand %vm427, %vm440
        %vm443 = vmand %vm428, %vm440
        %vm444 = vmand %vm429, %vm440
        %vm445 = vmand %vm430, %vm440
        %vm446 = vmand %vm431, %vm440
        %vm447 = vmand %vm432, %vm440
        %vm448 = vmand %vm433, %vm440
        %vm449 = vmand %vm434, %vm440
        %vm450 = vmand %vm435, %vm440
        %vm451 = vmand %vm436, %vm440
        %vm452 = vmand %vm437, %vm440
        %s453 = sld [smem:[#allocation7 + %s401]]
        %v454 = vstv %s453
        %v455 = vsel %vm441, %v454, 0.0
        %v456 = vsel %vm442, %v454, 0.0
        %v457 = vsel %vm443, %v454, 0.0
        %v458 = vsel %vm444, %v454, 0.0
        %v459 = vsel %vm445, %v454, 0.0
        %v460 = vsel %vm446, %v454, 0.0
        %v461 = vsel %vm447, %v454, 0.0
        %v462 = vsel %vm448, %v454, 0.0
        %v463 = vsel %vm449, %v454, 0.0
        %v464 = vsel %vm450, %v454, 0.0
        %v465 = vsel %vm451, %v454, 0.0
        %v466 = vsel %vm452, %v454, 0.0
        %s467 = sld [smem:[#allocation8 + %s401]]
        %v468 = vstv %s467
        %v469 = vsel %vm441, %v468, 0.0
        %v470 = vsel %vm442, %v468, 0.0
        %v471 = vsel %vm443, %v468, 0.0
        %v472 = vsel %vm444, %v468, 0.0
        %v473 = vsel %vm445, %v468, 0.0
        %v474 = vsel %vm446, %v468, 0.0
        %v475 = vsel %vm447, %v468, 0.0
        %v476 = vsel %vm448, %v468, 0.0
        %v477 = vsel %vm449, %v468, 0.0
        %v478 = vsel %vm450, %v468, 0.0
        %v479 = vsel %vm451, %v468, 0.0
        %v480 = vsel %vm452, %v468, 0.0
        %s481 = sld [smem:[#allocation9 + %s401]]
        %v482 = vstv %s481
        %v483 = vsel %vm441, %v482, 0.0
        %v484 = vsel %vm442, %v482, 0.0
        %v485 = vsel %vm443, %v482, 0.0
        %v486 = vsel %vm444, %v482, 0.0
        %v487 = vsel %vm445, %v482, 0.0
        %v488 = vsel %vm446, %v482, 0.0
        %v489 = vsel %vm447, %v482, 0.0
        %v490 = vsel %vm448, %v482, 0.0
        %v491 = vsel %vm449, %v482, 0.0
        %v492 = vsel %vm450, %v482, 0.0
        %v493 = vsel %vm451, %v482, 0.0
        %v494 = vsel %vm452, %v482, 0.0
        %vm495 = vcmp.ge.s32.totalorder %v400, 30
        %vm496 = vcmp.lt.s32.totalorder %v400, 60
        %vm497 = vmand %vm495, %vm496
        %vm498 = vmand %vm426, %vm497
        %vm499 = vmand %vm427, %vm497
        %vm500 = vmand %vm428, %vm497
        %vm501 = vmand %vm429, %vm497
        %vm502 = vmand %vm430, %vm497
        %vm503 = vmand %vm431, %vm497
        %vm504 = vmand %vm432, %vm497
        %vm505 = vmand %vm433, %vm497
        %vm506 = vmand %vm434, %vm497
        %vm507 = vmand %vm435, %vm497
        %vm508 = vmand %vm436, %vm497
        %vm509 = vmand %vm437, %vm497
        %s510 = sadd.s32 %s401, 1
        %s511 = sld [smem:[#allocation7 + %s510]]
        %v512 = vstv %s511
        %v513 = vsel %vm498, %v512, %v455
        %v514 = vsel %vm499, %v512, %v456
        %v515 = vsel %vm500, %v512, %v457
        %v516 = vsel %vm501, %v512, %v458
        %v517 = vsel %vm502, %v512, %v459
        %v518 = vsel %vm503, %v512, %v460
        %v519 = vsel %vm504, %v512, %v461
        %v520 = vsel %vm505, %v512, %v462
        %v521 = vsel %vm506, %v512, %v463
        %v522 = vsel %vm507, %v512, %v464
        %v523 = vsel %vm508, %v512, %v465
        %v524 = vsel %vm509, %v512, %v466
        %s525 = sld [smem:[#allocation8 + %s510]]
        %v526 = vstv %s525
        %v527 = vsel %vm498, %v526, %v469
        %v528 = vsel %vm499, %v526, %v470
        %v529 = vsel %vm500, %v526, %v471
        %v530 = vsel %vm501, %v526, %v472
        %v531 = vsel %vm502, %v526, %v473
        %v532 = vsel %vm503, %v526, %v474
        %v533 = vsel %vm504, %v526, %v475
        %v534 = vsel %vm505, %v526, %v476
        %v535 = vsel %vm506, %v526, %v477
        %v536 = vsel %vm507, %v526, %v478
        %v537 = vsel %vm508, %v526, %v479
        %v538 = vsel %vm509, %v526, %v480
        %s539 = sld [smem:[#allocation9 + %s510]]
        %v540 = vstv %s539
        %v541 = vsel %vm498, %v540, %v483
        %v542 = vsel %vm499, %v540, %v484
        %v543 = vsel %vm500, %v540, %v485
        %v544 = vsel %vm501, %v540, %v486
        %v545 = vsel %vm502, %v540, %v487
        %v546 = vsel %vm503, %v540, %v488
        %v547 = vsel %vm504, %v540, %v489
        %v548 = vsel %vm505, %v540, %v490
        %v549 = vsel %vm506, %v540, %v491
        %v550 = vsel %vm507, %v540, %v492
        %v551 = vsel %vm508, %v540, %v493
        %v552 = vsel %vm509, %v540, %v494
        %vm553 = vcmp.ge.s32.totalorder %v400, 60
        %vm554 = vcmp.lt.s32.totalorder %v400, 90
        %vm555 = vmand %vm553, %vm554
        %vm556 = vmand %vm426, %vm555
        %vm557 = vmand %vm427, %vm555
        %vm558 = vmand %vm428, %vm555
        %vm559 = vmand %vm429, %vm555
        %vm560 = vmand %vm430, %vm555
        %vm561 = vmand %vm431, %vm555
        %vm562 = vmand %vm432, %vm555
        %vm563 = vmand %vm433, %vm555
        %vm564 = vmand %vm434, %vm555
        %vm565 = vmand %vm435, %vm555
        %vm566 = vmand %vm436, %vm555
        %vm567 = vmand %vm437, %vm555
        %s568 = sadd.s32 %s401, 2
        %s569 = sld [smem:[#allocation7 + %s568]]
        %v570 = vstv %s569
        %v571 = vsel %vm556, %v570, %v513
        %v572 = vsel %vm557, %v570, %v514
        %v573 = vsel %vm558, %v570, %v515
        %v574 = vsel %vm559, %v570, %v516
        %v575 = vsel %vm560, %v570, %v517
        %v576 = vsel %vm561, %v570, %v518
        %v577 = vsel %vm562, %v570, %v519
        %v578 = vsel %vm563, %v570, %v520
        %v579 = vsel %vm564, %v570, %v521
        %v580 = vsel %vm565, %v570, %v522
        %v581 = vsel %vm566, %v570, %v523
        %v582 = vsel %vm567, %v570, %v524
        %s583 = sld [smem:[#allocation8 + %s568]]
        %v584 = vstv %s583
        %v585 = vsel %vm556, %v584, %v527
        %v586 = vsel %vm557, %v584, %v528
        %v587 = vsel %vm558, %v584, %v529
        %v588 = vsel %vm559, %v584, %v530
        %v589 = vsel %vm560, %v584, %v531
        %v590 = vsel %vm561, %v584, %v532
        %v591 = vsel %vm562, %v584, %v533
        %v592 = vsel %vm563, %v584, %v534
        %v593 = vsel %vm564, %v584, %v535
        %v594 = vsel %vm565, %v584, %v536
        %v595 = vsel %vm566, %v584, %v537
        %v596 = vsel %vm567, %v584, %v538
        %s597 = sld [smem:[#allocation9 + %s568]]
        %v598 = vstv %s597
        %v599 = vsel %vm556, %v598, %v541
        %v600 = vsel %vm557, %v598, %v542
        %v601 = vsel %vm558, %v598, %v543
        %v602 = vsel %vm559, %v598, %v544
        %v603 = vsel %vm560, %v598, %v545
        %v604 = vsel %vm561, %v598, %v546
        %v605 = vsel %vm562, %v598, %v547
        %v606 = vsel %vm563, %v598, %v548
        %v607 = vsel %vm564, %v598, %v549
        %v608 = vsel %vm565, %v598, %v550
        %v609 = vsel %vm566, %v598, %v551
        %v610 = vsel %vm567, %v598, %v552
        %vm611 = vcmp.ge.s32.totalorder %v400, 90
        %vm612 = vcmp.lt.s32.totalorder %v400, 120
        %vm613 = vmand %vm611, %vm612
        %vm614 = vmand %vm426, %vm613
        %vm615 = vmand %vm427, %vm613
        %vm616 = vmand %vm428, %vm613
        %vm617 = vmand %vm429, %vm613
        %vm618 = vmand %vm430, %vm613
        %vm619 = vmand %vm431, %vm613
        %vm620 = vmand %vm432, %vm613
        %vm621 = vmand %vm433, %vm613
        %vm622 = vmand %vm434, %vm613
        %vm623 = vmand %vm435, %vm613
        %vm624 = vmand %vm436, %vm613
        %vm625 = vmand %vm437, %vm613
        %s626 = sadd.s32 %s401, 3
        %s627 = sld [smem:[#allocation7 + %s626]]
        %v628 = vstv %s627
        %v629 = vsel %vm614, %v628, %v571
        %v630 = vsel %vm615, %v628, %v572
        %v631 = vsel %vm616, %v628, %v573
        %v632 = vsel %vm617, %v628, %v574
        %v633 = vsel %vm618, %v628, %v575
        %v634 = vsel %vm619, %v628, %v576
        %v635 = vsel %vm620, %v628, %v577
        %v636 = vsel %vm621, %v628, %v578
        %v637 = vsel %vm622, %v628, %v579
        %v638 = vsel %vm623, %v628, %v580
        %v639 = vsel %vm624, %v628, %v581
        %v640 = vsel %vm625, %v628, %v582
        %s641 = sld [smem:[#allocation8 + %s626]]
        %v642 = vstv %s641
        %v643 = vsel %vm614, %v642, %v585
        %v644 = vsel %vm615, %v642, %v586
        %v645 = vsel %vm616, %v642, %v587
        %v646 = vsel %vm617, %v642, %v588
        %v647 = vsel %vm618, %v642, %v589
        %v648 = vsel %vm619, %v642, %v590
        %v649 = vsel %vm620, %v642, %v591
        %v650 = vsel %vm621, %v642, %v592
        %v651 = vsel %vm622, %v642, %v593
        %v652 = vsel %vm623, %v642, %v594
        %v653 = vsel %vm624, %v642, %v595
        %v654 = vsel %vm625, %v642, %v596
        %s655 = sld [smem:[#allocation9 + %s626]]
        %v656 = vstv %s655
        %v657 = vsel %vm614, %v656, %v599
        %v658 = vsel %vm615, %v656, %v600
        %v659 = vsel %vm616, %v656, %v601
        %v660 = vsel %vm617, %v656, %v602
        %v661 = vsel %vm618, %v656, %v603
        %v662 = vsel %vm619, %v656, %v604
        %v663 = vsel %vm620, %v656, %v605
        %v664 = vsel %vm621, %v656, %v606
        %v665 = vsel %vm622, %v656, %v607
        %v666 = vsel %vm623, %v656, %v608
        %v667 = vsel %vm624, %v656, %v609
        %v668 = vsel %vm625, %v656, %v610
        %vm669 = vcmp.ge.s32.totalorder %v387, 32
        %vm670 = vcmp.ge.s32.totalorder %v388, 32
        %vm671 = vcmp.ge.s32.totalorder %v389, 32
        %vm672 = vcmp.ge.s32.totalorder %v390, 32
        %vm673 = vcmp.ge.s32.totalorder %v391, 32
        %vm674 = vcmp.ge.s32.totalorder %v392, 32
        %vm675 = vcmp.ge.s32.totalorder %v393, 32
        %vm676 = vcmp.ge.s32.totalorder %v394, 32
        %vm677 = vcmp.ge.s32.totalorder %v395, 32
        %vm678 = vcmp.ge.s32.totalorder %v396, 32
        %vm679 = vcmp.ge.s32.totalorder %v397, 32
        %vm680 = vcmp.ge.s32.totalorder %v398, 32
        %vm681 = vcmp.lt.s32.totalorder %v387, 64
        %vm682 = vcmp.lt.s32.totalorder %v388, 64
        %vm683 = vcmp.lt.s32.totalorder %v389, 64
        %vm684 = vcmp.lt.s32.totalorder %v390, 64
        %vm685 = vcmp.lt.s32.totalorder %v391, 64
        %vm686 = vcmp.lt.s32.totalorder %v392, 64
        %vm687 = vcmp.lt.s32.totalorder %v393, 64
        %vm688 = vcmp.lt.s32.totalorder %v394, 64
        %vm689 = vcmp.lt.s32.totalorder %v395, 64
        %vm690 = vcmp.lt.s32.totalorder %v396, 64
        %vm691 = vcmp.lt.s32.totalorder %v397, 64
        %vm692 = vcmp.lt.s32.totalorder %v398, 64
        %vm693 = vmand %vm669, %vm681
        %vm694 = vmand %vm670, %vm682
        %vm695 = vmand %vm671, %vm683
        %vm696 = vmand %vm672, %vm684
        %vm697 = vmand %vm673, %vm685
        %vm698 = vmand %vm674, %vm686
        %vm699 = vmand %vm675, %vm687
        %vm700 = vmand %vm676, %vm688
        %vm701 = vmand %vm677, %vm689
        %vm702 = vmand %vm678, %vm690
        %vm703 = vmand %vm679, %vm691
        %vm704 = vmand %vm680, %vm692
        %vm705 = vmand %vm693, %vm440
        %vm706 = vmand %vm694, %vm440
        %vm707 = vmand %vm695, %vm440
        %vm708 = vmand %vm696, %vm440
        %vm709 = vmand %vm697, %vm440
        %vm710 = vmand %vm698, %vm440
        %vm711 = vmand %vm699, %vm440
        %vm712 = vmand %vm700, %vm440
        %vm713 = vmand %vm701, %vm440
        %vm714 = vmand %vm702, %vm440
        %vm715 = vmand %vm703, %vm440
        %vm716 = vmand %vm704, %vm440
        %s717 = sadd.s32 %s401, 4
        %s718 = sld [smem:[#allocation7 + %s717]]
        %v719 = vstv %s718
        %v720 = vsel %vm705, %v719, %v629
        %v721 = vsel %vm706, %v719, %v630
        %v722 = vsel %vm707, %v719, %v631
        %v723 = vsel %vm708, %v719, %v632
        %v724 = vsel %vm709, %v719, %v633
        %v725 = vsel %vm710, %v719, %v634
        %v726 = vsel %vm711, %v719, %v635
        %v727 = vsel %vm712, %v719, %v636
        %v728 = vsel %vm713, %v719, %v637
        %v729 = vsel %vm714, %v719, %v638
        %v730 = vsel %vm715, %v719, %v639
        %v731 = vsel %vm716, %v719, %v640
        %s732 = sld [smem:[#allocation8 + %s717]]
        %v733 = vstv %s732
        %v734 = vsel %vm705, %v733, %v643
        %v735 = vsel %vm706, %v733, %v644
        %v736 = vsel %vm707, %v733, %v645
        %v737 = vsel %vm708, %v733, %v646
        %v738 = vsel %vm709, %v733, %v647
        %v739 = vsel %vm710, %v733, %v648
        %v740 = vsel %vm711, %v733, %v649
        %v741 = vsel %vm712, %v733, %v650
        %v742 = vsel %vm713, %v733, %v651
        %v743 = vsel %vm714, %v733, %v652
        %v744 = vsel %vm715, %v733, %v653
        %v745 = vsel %vm716, %v733, %v654
        %s746 = sld [smem:[#allocation9 + %s717]]
        %v747 = vstv %s746
        %v748 = vsel %vm705, %v747, %v657
        %v749 = vsel %vm706, %v747, %v658
        %v750 = vsel %vm707, %v747, %v659
        %v751 = vsel %vm708, %v747, %v660
        %v752 = vsel %vm709, %v747, %v661
        %v753 = vsel %vm710, %v747, %v662
        %v754 = vsel %vm711, %v747, %v663
        %v755 = vsel %vm712, %v747, %v664
        %v756 = vsel %vm713, %v747, %v665
        %v757 = vsel %vm714, %v747, %v666
        %v758 = vsel %vm715, %v747, %v667
        %v759 = vsel %vm716, %v747, %v668
        %vm760 = vmand %vm693, %vm497
        %vm761 = vmand %vm694, %vm497
        %vm762 = vmand %vm695, %vm497
        %vm763 = vmand %vm696, %vm497
        %vm764 = vmand %vm697, %vm497
        %vm765 = vmand %vm698, %vm497
        %vm766 = vmand %vm699, %vm497
        %vm767 = vmand %vm700, %vm497
        %vm768 = vmand %vm701, %vm497
        %vm769 = vmand %vm702, %vm497
        %vm770 = vmand %vm703, %vm497
        %vm771 = vmand %vm704, %vm497
        %s772 = sadd.s32 %s401, 5
        %s773 = sld [smem:[#allocation7 + %s772]]
        %v774 = vstv %s773
        %v775 = vsel %vm760, %v774, %v720
        %v776 = vsel %vm761, %v774, %v721
        %v777 = vsel %vm762, %v774, %v722
        %v778 = vsel %vm763, %v774, %v723
        %v779 = vsel %vm764, %v774, %v724
        %v780 = vsel %vm765, %v774, %v725
        %v781 = vsel %vm766, %v774, %v726
        %v782 = vsel %vm767, %v774, %v727
        %v783 = vsel %vm768, %v774, %v728
        %v784 = vsel %vm769, %v774, %v729
        %v785 = vsel %vm770, %v774, %v730
        %v786 = vsel %vm771, %v774, %v731
        %s787 = sld [smem:[#allocation8 + %s772]]
        %v788 = vstv %s787
        %v789 = vsel %vm760, %v788, %v734
        %v790 = vsel %vm761, %v788, %v735
        %v791 = vsel %vm762, %v788, %v736
        %v792 = vsel %vm763, %v788, %v737
        %v793 = vsel %vm764, %v788, %v738
        %v794 = vsel %vm765, %v788, %v739
        %v795 = vsel %vm766, %v788, %v740
        %v796 = vsel %vm767, %v788, %v741
        %v797 = vsel %vm768, %v788, %v742
        %v798 = vsel %vm769, %v788, %v743
        %v799 = vsel %vm770, %v788, %v744
        %v800 = vsel %vm771, %v788, %v745
        %s801 = sld [smem:[#allocation9 + %s772]]
        %v802 = vstv %s801
        %v803 = vsel %vm760, %v802, %v748
        %v804 = vsel %vm761, %v802, %v749
        %v805 = vsel %vm762, %v802, %v750
        %v806 = vsel %vm763, %v802, %v751
        %v807 = vsel %vm764, %v802, %v752
        %v808 = vsel %vm765, %v802, %v753
        %v809 = vsel %vm766, %v802, %v754
        %v810 = vsel %vm767, %v802, %v755
        %v811 = vsel %vm768, %v802, %v756
        %v812 = vsel %vm769, %v802, %v757
        %v813 = vsel %vm770, %v802, %v758
        %v814 = vsel %vm771, %v802, %v759
        %vm815 = vmand %vm693, %vm555
        %vm816 = vmand %vm694, %vm555
        %vm817 = vmand %vm695, %vm555
        %vm818 = vmand %vm696, %vm555
        %vm819 = vmand %vm697, %vm555
        %vm820 = vmand %vm698, %vm555
        %vm821 = vmand %vm699, %vm555
        %vm822 = vmand %vm700, %vm555
        %vm823 = vmand %vm701, %vm555
        %vm824 = vmand %vm702, %vm555
        %vm825 = vmand %vm703, %vm555
        %vm826 = vmand %vm704, %vm555
        %s827 = sadd.s32 %s401, 6
        %s828 = sld [smem:[#allocation7 + %s827]]
        %v829 = vstv %s828
        %v830 = vsel %vm815, %v829, %v775
        %v831 = vsel %vm816, %v829, %v776
        %v832 = vsel %vm817, %v829, %v777
        %v833 = vsel %vm818, %v829, %v778
        %v834 = vsel %vm819, %v829, %v779
        %v835 = vsel %vm820, %v829, %v780
        %v836 = vsel %vm821, %v829, %v781
        %v837 = vsel %vm822, %v829, %v782
        %v838 = vsel %vm823, %v829, %v783
        %v839 = vsel %vm824, %v829, %v784
        %v840 = vsel %vm825, %v829, %v785
        %v841 = vsel %vm826, %v829, %v786
        %s842 = sld [smem:[#allocation8 + %s827]]
        %v843 = vstv %s842
        %v844 = vsel %vm815, %v843, %v789
        %v845 = vsel %vm816, %v843, %v790
        %v846 = vsel %vm817, %v843, %v791
        %v847 = vsel %vm818, %v843, %v792
        %v848 = vsel %vm819, %v843, %v793
        %v849 = vsel %vm820, %v843, %v794
        %v850 = vsel %vm821, %v843, %v795
        %v851 = vsel %vm822, %v843, %v796
        %v852 = vsel %vm823, %v843, %v797
        %v853 = vsel %vm824, %v843, %v798
        %v854 = vsel %vm825, %v843, %v799
        %v855 = vsel %vm826, %v843, %v800
        %s856 = sld [smem:[#allocation9 + %s827]]
        %v857 = vstv %s856
        %v858 = vsel %vm815, %v857, %v803
        %v859 = vsel %vm816, %v857, %v804
        %v860 = vsel %vm817, %v857, %v805
        %v861 = vsel %vm818, %v857, %v806
        %v862 = vsel %vm819, %v857, %v807
        %v863 = vsel %vm820, %v857, %v808
        %v864 = vsel %vm821, %v857, %v809
        %v865 = vsel %vm822, %v857, %v810
        %v866 = vsel %vm823, %v857, %v811
        %v867 = vsel %vm824, %v857, %v812
        %v868 = vsel %vm825, %v857, %v813
        %v869 = vsel %vm826, %v857, %v814
        %vm870 = vmand %vm693, %vm613
        %vm871 = vmand %vm694, %vm613
        %vm872 = vmand %vm695, %vm613
        %vm873 = vmand %vm696, %vm613
        %vm874 = vmand %vm697, %vm613
        %vm875 = vmand %vm698, %vm613
        %vm876 = vmand %vm699, %vm613
        %vm877 = vmand %vm700, %vm613
        %vm878 = vmand %vm701, %vm613
        %vm879 = vmand %vm702, %vm613
        %vm880 = vmand %vm703, %vm613
        %vm881 = vmand %vm704, %vm613
        %s882 = sadd.s32 %s401, 7
        %s883 = sld [smem:[#allocation7 + %s882]]
        %v884 = vstv %s883
        %v885 = vsel %vm870, %v884, %v830
        %v886 = vsel %vm871, %v884, %v831
        %v887 = vsel %vm872, %v884, %v832
        %v888 = vsel %vm873, %v884, %v833
        %v889 = vsel %vm874, %v884, %v834
        %v890 = vsel %vm875, %v884, %v835
        %v891 = vsel %vm876, %v884, %v836
        %v892 = vsel %vm877, %v884, %v837
        %v893 = vsel %vm878, %v884, %v838
        %v894 = vsel %vm879, %v884, %v839
        %v895 = vsel %vm880, %v884, %v840
        %v896 = vsel %vm881, %v884, %v841
        %s897 = sld [smem:[#allocation8 + %s882]]
        %v898 = vstv %s897
        %v899 = vsel %vm870, %v898, %v844
        %v900 = vsel %vm871, %v898, %v845
        %v901 = vsel %vm872, %v898, %v846
        %v902 = vsel %vm873, %v898, %v847
        %v903 = vsel %vm874, %v898, %v848
        %v904 = vsel %vm875, %v898, %v849
        %v905 = vsel %vm876, %v898, %v850
        %v906 = vsel %vm877, %v898, %v851
        %v907 = vsel %vm878, %v898, %v852
        %v908 = vsel %vm879, %v898, %v853
        %v909 = vsel %vm880, %v898, %v854
        %v910 = vsel %vm881, %v898, %v855
        %s911 = sld [smem:[#allocation9 + %s882]]
        %v912 = vstv %s911
        %v913 = vsel %vm870, %v912, %v858
        %v914 = vsel %vm871, %v912, %v859
        %v915 = vsel %vm872, %v912, %v860
        %v916 = vsel %vm873, %v912, %v861
        %v917 = vsel %vm874, %v912, %v862
        %v918 = vsel %vm875, %v912, %v863
        %v919 = vsel %vm876, %v912, %v864
        %v920 = vsel %vm877, %v912, %v865
        %v921 = vsel %vm878, %v912, %v866
        %v922 = vsel %vm879, %v912, %v867
        %v923 = vsel %vm880, %v912, %v868
        %v924 = vsel %vm881, %v912, %v869
        %vm925 = vcmp.ge.s32.totalorder %v387, 64
        %vm926 = vcmp.ge.s32.totalorder %v388, 64
        %vm927 = vcmp.ge.s32.totalorder %v389, 64
        %vm928 = vcmp.ge.s32.totalorder %v390, 64
        %vm929 = vcmp.ge.s32.totalorder %v391, 64
        %vm930 = vcmp.ge.s32.totalorder %v392, 64
        %vm931 = vcmp.ge.s32.totalorder %v393, 64
        %vm932 = vcmp.ge.s32.totalorder %v394, 64
        %vm933 = vcmp.ge.s32.totalorder %v395, 64
        %vm934 = vcmp.ge.s32.totalorder %v396, 64
        %vm935 = vcmp.ge.s32.totalorder %v397, 64
        %vm936 = vcmp.ge.s32.totalorder %v398, 64
        %vm937 = vcmp.lt.s32.totalorder %v387, 96
        %vm938 = vcmp.lt.s32.totalorder %v388, 96
        %vm939 = vcmp.lt.s32.totalorder %v389, 96
        %vm940 = vcmp.lt.s32.totalorder %v390, 96
        %vm941 = vcmp.lt.s32.totalorder %v391, 96
        %vm942 = vcmp.lt.s32.totalorder %v392, 96
        %vm943 = vcmp.lt.s32.totalorder %v393, 96
        %vm944 = vcmp.lt.s32.totalorder %v394, 96
        %vm945 = vcmp.lt.s32.totalorder %v395, 96
        %vm946 = vcmp.lt.s32.totalorder %v396, 96
        %vm947 = vcmp.lt.s32.totalorder %v397, 96
        %vm948 = vcmp.lt.s32.totalorder %v398, 96
        %vm949 = vmand %vm925, %vm937
        %vm950 = vmand %vm926, %vm938
        %vm951 = vmand %vm927, %vm939
        %vm952 = vmand %vm928, %vm940
        %vm953 = vmand %vm929, %vm941
        %vm954 = vmand %vm930, %vm942
        %vm955 = vmand %vm931, %vm943
        %vm956 = vmand %vm932, %vm944
        %vm957 = vmand %vm933, %vm945
        %vm958 = vmand %vm934, %vm946
        %vm959 = vmand %vm935, %vm947
        %vm960 = vmand %vm936, %vm948
        %vm961 = vmand %vm949, %vm440
        %vm962 = vmand %vm950, %vm440
        %vm963 = vmand %vm951, %vm440
        %vm964 = vmand %vm952, %vm440
        %vm965 = vmand %vm953, %vm440
        %vm966 = vmand %vm954, %vm440
        %vm967 = vmand %vm955, %vm440
        %vm968 = vmand %vm956, %vm440
        %vm969 = vmand %vm957, %vm440
        %vm970 = vmand %vm958, %vm440
        %vm971 = vmand %vm959, %vm440
        %vm972 = vmand %vm960, %vm440
        %s973 = sadd.s32 %s401, 8
        %s974 = sld [smem:[#allocation7 + %s973]]
        %v975 = vstv %s974
        %v976 = vsel %vm961, %v975, %v885
        %v977 = vsel %vm962, %v975, %v886
        %v978 = vsel %vm963, %v975, %v887
        %v979 = vsel %vm964, %v975, %v888
        %v980 = vsel %vm965, %v975, %v889
        %v981 = vsel %vm966, %v975, %v890
        %v982 = vsel %vm967, %v975, %v891
        %v983 = vsel %vm968, %v975, %v892
        %v984 = vsel %vm969, %v975, %v893
        %v985 = vsel %vm970, %v975, %v894
        %v986 = vsel %vm971, %v975, %v895
        %v987 = vsel %vm972, %v975, %v896
        %s988 = sld [smem:[#allocation8 + %s973]]
        %v989 = vstv %s988
        %v990 = vsel %vm961, %v989, %v899
        %v991 = vsel %vm962, %v989, %v900
        %v992 = vsel %vm963, %v989, %v901
        %v993 = vsel %vm964, %v989, %v902
        %v994 = vsel %vm965, %v989, %v903
        %v995 = vsel %vm966, %v989, %v904
        %v996 = vsel %vm967, %v989, %v905
        %v997 = vsel %vm968, %v989, %v906
        %v998 = vsel %vm969, %v989, %v907
        %v999 = vsel %vm970, %v989, %v908
        %v1000 = vsel %vm971, %v989, %v909
        %v1001 = vsel %vm972, %v989, %v910
        %s1002 = sld [smem:[#allocation9 + %s973]]
        %v1003 = vstv %s1002
        %v1004 = vsel %vm961, %v1003, %v913
        %v1005 = vsel %vm962, %v1003, %v914
        %v1006 = vsel %vm963, %v1003, %v915
        %v1007 = vsel %vm964, %v1003, %v916
        %v1008 = vsel %vm965, %v1003, %v917
        %v1009 = vsel %vm966, %v1003, %v918
        %v1010 = vsel %vm967, %v1003, %v919
        %v1011 = vsel %vm968, %v1003, %v920
        %v1012 = vsel %vm969, %v1003, %v921
        %v1013 = vsel %vm970, %v1003, %v922
        %v1014 = vsel %vm971, %v1003, %v923
        %v1015 = vsel %vm972, %v1003, %v924
        %vm1016 = vmand %vm949, %vm497
        %vm1017 = vmand %vm950, %vm497
        %vm1018 = vmand %vm951, %vm497
        %vm1019 = vmand %vm952, %vm497
        %vm1020 = vmand %vm953, %vm497
        %vm1021 = vmand %vm954, %vm497
        %vm1022 = vmand %vm955, %vm497
        %vm1023 = vmand %vm956, %vm497
        %vm1024 = vmand %vm957, %vm497
        %vm1025 = vmand %vm958, %vm497
        %vm1026 = vmand %vm959, %vm497
        %vm1027 = vmand %vm960, %vm497
        %s1028 = sadd.s32 %s401, 9
        %s1029 = sld [smem:[#allocation7 + %s1028]]
        %v1030 = vstv %s1029
        %v1031 = vsel %vm1016, %v1030, %v976
        %v1032 = vsel %vm1017, %v1030, %v977
        %v1033 = vsel %vm1018, %v1030, %v978
        %v1034 = vsel %vm1019, %v1030, %v979
        %v1035 = vsel %vm1020, %v1030, %v980
        %v1036 = vsel %vm1021, %v1030, %v981
        %v1037 = vsel %vm1022, %v1030, %v982
        %v1038 = vsel %vm1023, %v1030, %v983
        %v1039 = vsel %vm1024, %v1030, %v984
        %v1040 = vsel %vm1025, %v1030, %v985
        %v1041 = vsel %vm1026, %v1030, %v986
        %v1042 = vsel %vm1027, %v1030, %v987
        %s1043 = sld [smem:[#allocation8 + %s1028]]
        %v1044 = vstv %s1043
        %v1045 = vsel %vm1016, %v1044, %v990
        %v1046 = vsel %vm1017, %v1044, %v991
        %v1047 = vsel %vm1018, %v1044, %v992
        %v1048 = vsel %vm1019, %v1044, %v993
        %v1049 = vsel %vm1020, %v1044, %v994
        %v1050 = vsel %vm1021, %v1044, %v995
        %v1051 = vsel %vm1022, %v1044, %v996
        %v1052 = vsel %vm1023, %v1044, %v997
        %v1053 = vsel %vm1024, %v1044, %v998
        %v1054 = vsel %vm1025, %v1044, %v999
        %v1055 = vsel %vm1026, %v1044, %v1000
        %v1056 = vsel %vm1027, %v1044, %v1001
        %s1057 = sld [smem:[#allocation9 + %s1028]]
        %v1058 = vstv %s1057
        %v1059 = vsel %vm1016, %v1058, %v1004
        %v1060 = vsel %vm1017, %v1058, %v1005
        %v1061 = vsel %vm1018, %v1058, %v1006
        %v1062 = vsel %vm1019, %v1058, %v1007
        %v1063 = vsel %vm1020, %v1058, %v1008
        %v1064 = vsel %vm1021, %v1058, %v1009
        %v1065 = vsel %vm1022, %v1058, %v1010
        %v1066 = vsel %vm1023, %v1058, %v1011
        %v1067 = vsel %vm1024, %v1058, %v1012
        %v1068 = vsel %vm1025, %v1058, %v1013
        %v1069 = vsel %vm1026, %v1058, %v1014
        %v1070 = vsel %vm1027, %v1058, %v1015
        %vm1071 = vmand %vm949, %vm555
        %vm1072 = vmand %vm950, %vm555
        %vm1073 = vmand %vm951, %vm555
        %vm1074 = vmand %vm952, %vm555
        %vm1075 = vmand %vm953, %vm555
        %vm1076 = vmand %vm954, %vm555
        %vm1077 = vmand %vm955, %vm555
        %vm1078 = vmand %vm956, %vm555
        %vm1079 = vmand %vm957, %vm555
        %vm1080 = vmand %vm958, %vm555
        %vm1081 = vmand %vm959, %vm555
        %vm1082 = vmand %vm960, %vm555
        %s1083 = sadd.s32 %s401, 10
        %s1084 = sld [smem:[#allocation7 + %s1083]]
        %v1085 = vstv %s1084
        %v1086 = vsel %vm1071, %v1085, %v1031
        %v1087 = vsel %vm1072, %v1085, %v1032
        %v1088 = vsel %vm1073, %v1085, %v1033
        %v1089 = vsel %vm1074, %v1085, %v1034
        %v1090 = vsel %vm1075, %v1085, %v1035
        %v1091 = vsel %vm1076, %v1085, %v1036
        %v1092 = vsel %vm1077, %v1085, %v1037
        %v1093 = vsel %vm1078, %v1085, %v1038
        %v1094 = vsel %vm1079, %v1085, %v1039
        %v1095 = vsel %vm1080, %v1085, %v1040
        %v1096 = vsel %vm1081, %v1085, %v1041
        %v1097 = vsel %vm1082, %v1085, %v1042
        %s1098 = sld [smem:[#allocation8 + %s1083]]
        %v1099 = vstv %s1098
        %v1100 = vsel %vm1071, %v1099, %v1045
        %v1101 = vsel %vm1072, %v1099, %v1046
        %v1102 = vsel %vm1073, %v1099, %v1047
        %v1103 = vsel %vm1074, %v1099, %v1048
        %v1104 = vsel %vm1075, %v1099, %v1049
        %v1105 = vsel %vm1076, %v1099, %v1050
        %v1106 = vsel %vm1077, %v1099, %v1051
        %v1107 = vsel %vm1078, %v1099, %v1052
        %v1108 = vsel %vm1079, %v1099, %v1053
        %v1109 = vsel %vm1080, %v1099, %v1054
        %v1110 = vsel %vm1081, %v1099, %v1055
        %v1111 = vsel %vm1082, %v1099, %v1056
        %s1112 = sld [smem:[#allocation9 + %s1083]]
        %v1113 = vstv %s1112
        %v1114 = vsel %vm1071, %v1113, %v1059
        %v1115 = vsel %vm1072, %v1113, %v1060
        %v1116 = vsel %vm1073, %v1113, %v1061
        %v1117 = vsel %vm1074, %v1113, %v1062
        %v1118 = vsel %vm1075, %v1113, %v1063
        %v1119 = vsel %vm1076, %v1113, %v1064
        %v1120 = vsel %vm1077, %v1113, %v1065
        %v1121 = vsel %vm1078, %v1113, %v1066
        %v1122 = vsel %vm1079, %v1113, %v1067
        %v1123 = vsel %vm1080, %v1113, %v1068
        %v1124 = vsel %vm1081, %v1113, %v1069
        %v1125 = vsel %vm1082, %v1113, %v1070
        %vm1126 = vmand %vm949, %vm613
        %vm1127 = vmand %vm950, %vm613
        %vm1128 = vmand %vm951, %vm613
        %vm1129 = vmand %vm952, %vm613
        %vm1130 = vmand %vm953, %vm613
        %vm1131 = vmand %vm954, %vm613
        %vm1132 = vmand %vm955, %vm613
        %vm1133 = vmand %vm956, %vm613
        %vm1134 = vmand %vm957, %vm613
        %vm1135 = vmand %vm958, %vm613
        %vm1136 = vmand %vm959, %vm613
        %vm1137 = vmand %vm960, %vm613
        %s1138 = sadd.s32 %s401, 11
        %s1139 = sld [smem:[#allocation7 + %s1138]]
        %v1140 = vstv %s1139
        %v1141 = vsel %vm1126, %v1140, %v1086
        %v1142 = vsel %vm1127, %v1140, %v1087
        %v1143 = vsel %vm1128, %v1140, %v1088
        %v1144 = vsel %vm1129, %v1140, %v1089
        %v1145 = vsel %vm1130, %v1140, %v1090
        %v1146 = vsel %vm1131, %v1140, %v1091
        %v1147 = vsel %vm1132, %v1140, %v1092
        %v1148 = vsel %vm1133, %v1140, %v1093
        %v1149 = vsel %vm1134, %v1140, %v1094
        %v1150 = vsel %vm1135, %v1140, %v1095
        %v1151 = vsel %vm1136, %v1140, %v1096
        %v1152 = vsel %vm1137, %v1140, %v1097
        %s1153 = sld [smem:[#allocation8 + %s1138]]
        %v1154 = vstv %s1153
        %v1155 = vsel %vm1126, %v1154, %v1100
        %v1156 = vsel %vm1127, %v1154, %v1101
        %v1157 = vsel %vm1128, %v1154, %v1102
        %v1158 = vsel %vm1129, %v1154, %v1103
        %v1159 = vsel %vm1130, %v1154, %v1104
        %v1160 = vsel %vm1131, %v1154, %v1105
        %v1161 = vsel %vm1132, %v1154, %v1106
        %v1162 = vsel %vm1133, %v1154, %v1107
        %v1163 = vsel %vm1134, %v1154, %v1108
        %v1164 = vsel %vm1135, %v1154, %v1109
        %v1165 = vsel %vm1136, %v1154, %v1110
        %v1166 = vsel %vm1137, %v1154, %v1111
        %s1167 = sld [smem:[#allocation9 + %s1138]]
        %v1168 = vstv %s1167
        %v1169 = vsel %vm1126, %v1168, %v1114
        %v1170 = vsel %vm1127, %v1168, %v1115
        %v1171 = vsel %vm1128, %v1168, %v1116
        %v1172 = vsel %vm1129, %v1168, %v1117
        %v1173 = vsel %vm1130, %v1168, %v1118
        %v1174 = vsel %vm1131, %v1168, %v1119
        %v1175 = vsel %vm1132, %v1168, %v1120
        %v1176 = vsel %vm1133, %v1168, %v1121
        %v1177 = vsel %vm1134, %v1168, %v1122
        %v1178 = vsel %vm1135, %v1168, %v1123
        %v1179 = vsel %vm1136, %v1168, %v1124
        %v1180 = vsel %vm1137, %v1168, %v1125
        %v1181 = vmul.f32 %v347, %v347
        %v1182 = vmul.f32 %v348, %v348
        %v1183 = vmul.f32 %v349, %v349
        %v1184 = vmul.f32 %v350, %v350
        %v1185 = vmul.f32 %v351, %v351
        %v1186 = vmul.f32 %v352, %v352
        %v1187 = vmul.f32 %v353, %v353
        %v1188 = vmul.f32 %v354, %v354
        %v1189 = vmul.f32 %v355, %v355
        %v1190 = vmul.f32 %v356, %v356
        %v1191 = vmul.f32 %v357, %v357
        %v1192 = vmul.f32 %v358, %v358
        %v1193 = vsub.f32 %v347, %v1141
        %v1194 = vsub.f32 %v348, %v1142
        %v1195 = vsub.f32 %v349, %v1143
        %v1196 = vsub.f32 %v350, %v1144
        %v1197 = vsub.f32 %v351, %v1145
        %v1198 = vsub.f32 %v352, %v1146
        %v1199 = vsub.f32 %v353, %v1147
        %v1200 = vsub.f32 %v354, %v1148
        %v1201 = vsub.f32 %v355, %v1149
        %v1202 = vsub.f32 %v356, %v1150
        %v1203 = vsub.f32 %v357, %v1151
        %v1204 = vsub.f32 %v358, %v1152
        %v1205 = vmul.f32 %v1193, %v1155
        %v1206 = vmul.f32 %v1194, %v1156
        %v1207 = vmul.f32 %v1195, %v1157
        %v1208 = vmul.f32 %v1196, %v1158
        %v1209 = vmul.f32 %v1197, %v1159
        %v1210 = vmul.f32 %v1198, %v1160
        %v1211 = vmul.f32 %v1199, %v1161
        %v1212 = vmul.f32 %v1200, %v1162
        %v1213 = vmul.f32 %v1201, %v1163
        %v1214 = vmul.f32 %v1202, %v1164
        %v1215 = vmul.f32 %v1203, %v1165
        %v1216 = vmul.f32 %v1204, %v1166
        %v1217 = vfloor.f32 %v1205
        %v1218 = vfloor.f32 %v1206
        %v1219 = vfloor.f32 %v1207
        %v1220 = vfloor.f32 %v1208
        %v1221 = vfloor.f32 %v1209
        %v1222 = vfloor.f32 %v1210
        %v1223 = vfloor.f32 %v1211
        %v1224 = vfloor.f32 %v1212
        %v1225 = vfloor.f32 %v1213
        %v1226 = vfloor.f32 %v1214
        %v1227 = vfloor.f32 %v1215
        %v1228 = vfloor.f32 %v1216
        %v1229 = vceil.f32 %v1205
        %v1230 = vceil.f32 %v1206
        %v1231 = vceil.f32 %v1207
        %v1232 = vceil.f32 %v1208
        %v1233 = vceil.f32 %v1209
        %v1234 = vceil.f32 %v1210
        %v1235 = vceil.f32 %v1211
        %v1236 = vceil.f32 %v1212
        %v1237 = vceil.f32 %v1213
        %v1238 = vceil.f32 %v1214
        %v1239 = vceil.f32 %v1215
        %v1240 = vceil.f32 %v1216
        %v1241 = vand.u32 2147483647, %v1205
        %v1242 = vand.u32 2147483647, %v1206
        %v1243 = vand.u32 2147483647, %v1207
        %v1244 = vand.u32 2147483647, %v1208
        %v1245 = vand.u32 2147483647, %v1209
        %v1246 = vand.u32 2147483647, %v1210
        %v1247 = vand.u32 2147483647, %v1211
        %v1248 = vand.u32 2147483647, %v1212
        %v1249 = vand.u32 2147483647, %v1213
        %v1250 = vand.u32 2147483647, %v1214
        %v1251 = vand.u32 2147483647, %v1215
        %v1252 = vand.u32 2147483647, %v1216
        %v1253 = vmul.f32 %v1169, %v1241
        %v1254 = vmul.f32 %v1170, %v1242
        %v1255 = vmul.f32 %v1171, %v1243
        %v1256 = vmul.f32 %v1172, %v1244
        %v1257 = vmul.f32 %v1173, %v1245
        %v1258 = vmul.f32 %v1174, %v1246
        %v1259 = vmul.f32 %v1175, %v1247
        %v1260 = vmul.f32 %v1176, %v1248
        %v1261 = vmul.f32 %v1177, %v1249
        %v1262 = vmul.f32 %v1178, %v1250
        %v1263 = vmul.f32 %v1179, %v1251
        %v1264 = vmul.f32 %v1180, %v1252
        %v1265 = vadd.f32 %v1253, 0.0001
        %v1266 = vadd.f32 %v1254, 0.0001
        %v1267 = vadd.f32 %v1255, 0.0001
        %v1268 = vadd.f32 %v1256, 0.0001
        %v1269 = vadd.f32 %v1257, 0.0001
        %v1270 = vadd.f32 %v1258, 0.0001
        %v1271 = vadd.f32 %v1259, 0.0001
        %v1272 = vadd.f32 %v1260, 0.0001
        %v1273 = vadd.f32 %v1261, 0.0001
        %v1274 = vadd.f32 %v1262, 0.0001
        %v1275 = vadd.f32 %v1263, 0.0001
        %v1276 = vadd.f32 %v1264, 0.0001
        %v1277 = vlog2.pop %v1265
        %v1278 = vmul.f32 %v1277, 0.6931472
        %v1279 = vlog2.pop %v1266
        %v1280 = vmul.f32 %v1279, 0.6931472
        %v1281 = vlog2.pop %v1267
        %v1282 = vmul.f32 %v1281, 0.6931472
        %v1283 = vlog2.pop %v1268
        %v1284 = vmul.f32 %v1283, 0.6931472
        %v1285 = vlog2.pop %v1269
        %v1286 = vmul.f32 %v1285, 0.6931472
        %v1287 = vlog2.pop %v1270
        %v1288 = vmul.f32 %v1287, 0.6931472
        %v1289 = vlog2.pop %v1271
        %v1290 = vmul.f32 %v1289, 0.6931472
        %v1291 = vlog2.pop %v1272
        %v1292 = vmul.f32 %v1291, 0.6931472
        %v1293 = vlog2.pop %v1273
        %v1294 = vmul.f32 %v1293, 0.6931472
        %v1295 = vlog2.pop %v1274
        %v1296 = vmul.f32 %v1295, 0.6931472
        %v1297 = vlog2.pop %v1275
        %v1298 = vmul.f32 %v1297, 0.6931472
        %v1299 = vlog2.pop %v1276
        %v1300 = vmul.f32 %v1299, 0.6931472
        %v1301 = vmul.f32 %v1278, -1.2
        %v1302 = vmul.f32 %v1280, -1.2
        %v1303 = vmul.f32 %v1282, -1.2
        %v1304 = vmul.f32 %v1284, -1.2
        %v1305 = vmul.f32 %v1286, -1.2
        %v1306 = vmul.f32 %v1288, -1.2
        %v1307 = vmul.f32 %v1290, -1.2
        %v1308 = vmul.f32 %v1292, -1.2
        %v1309 = vmul.f32 %v1294, -1.2
        %v1310 = vmul.f32 %v1296, -1.2
        %v1311 = vmul.f32 %v1298, -1.2
        %v1312 = vmul.f32 %v1300, -1.2
        %v1313 = vmul.f32 %v1301, 1.442695
        %v1314 = vpow.pop %v1313
        %v1315 = vmul.f32 %v1302, 1.442695
        %v1316 = vpow.pop %v1315
        %v1317 = vmul.f32 %v1303, 1.442695
        %v1318 = vpow.pop %v1317
        %v1319 = vmul.f32 %v1304, 1.442695
        %v1320 = vpow.pop %v1319
        %v1321 = vmul.f32 %v1305, 1.442695
        %v1322 = vpow.pop %v1321
        %v1323 = vmul.f32 %v1306, 1.442695
        %v1324 = vpow.pop %v1323
        %v1325 = vmul.f32 %v1307, 1.442695
        %v1326 = vpow.pop %v1325
        %v1327 = vmul.f32 %v1308, 1.442695
        %v1328 = vpow.pop %v1327
        %v1329 = vmul.f32 %v1309, 1.442695
        %v1330 = vpow.pop %v1329
        %v1331 = vmul.f32 %v1310, 1.442695
        %v1332 = vpow.pop %v1331
        %v1333 = vmul.f32 %v1311, 1.442695
        %v1334 = vpow.pop %v1333
        %v1335 = vmul.f32 %v1312, 1.442695
        %v1336 = vpow.pop %v1335
        %v1337 = vmul.f32 %v1314, %v347
        %v1338 = vmul.f32 %v1316, %v348
        %v1339 = vmul.f32 %v1318, %v349
        %v1340 = vmul.f32 %v1320, %v350
        %v1341 = vmul.f32 %v1322, %v351
        %v1342 = vmul.f32 %v1324, %v352
        %v1343 = vmul.f32 %v1326, %v353
        %v1344 = vmul.f32 %v1328, %v354
        %v1345 = vmul.f32 %v1330, %v355
        %v1346 = vmul.f32 %v1332, %v356
        %v1347 = vmul.f32 %v1334, %v357
        %v1348 = vmul.f32 %v1336, %v358
        %v1349 = vmul.f32 %v1314, %v1181
        %v1350 = vmul.f32 %v1316, %v1182
        %v1351 = vmul.f32 %v1318, %v1183
        %v1352 = vmul.f32 %v1320, %v1184
        %v1353 = vmul.f32 %v1322, %v1185
        %v1354 = vmul.f32 %v1324, %v1186
        %v1355 = vmul.f32 %v1326, %v1187
        %v1356 = vmul.f32 %v1328, %v1188
        %v1357 = vmul.f32 %v1330, %v1189
        %v1358 = vmul.f32 %v1332, %v1190
        %v1359 = vmul.f32 %v1334, %v1191
        %v1360 = vmul.f32 %v1336, %v1192
        %vm1361 = vcmask 982016
        %v1363 = vsel %vm1361, %v1314, 0
        %v1366 = vsel %vm1361, %v1316, 0
        %v1369 = vsel %vm1361, %v1318, 0
        %v1372 = vsel %vm1361, %v1320, 0
        %v1375 = vsel %vm1361, %v1322, 0
        %v1378 = vsel %vm1361, %v1324, 0
        %v1381 = vsel %vm1361, %v1326, 0
        %v1384 = vsel %vm1361, %v1328, 0
        %v1387 = vsel %vm1361, %v1330, 0
        %v1390 = vsel %vm1361, %v1332, 0
        %v1393 = vsel %vm1361, %v1334, 0
        %v1396 = vsel %vm1361, %v1336, 0
        %v1399 = vsel %vm1361, %v1337, 0
        %v1402 = vsel %vm1361, %v1338, 0
        %v1405 = vsel %vm1361, %v1339, 0
        %v1408 = vsel %vm1361, %v1340, 0
        %v1411 = vsel %vm1361, %v1341, 0
        %v1414 = vsel %vm1361, %v1342, 0
        %v1417 = vsel %vm1361, %v1343, 0
        %v1420 = vsel %vm1361, %v1344, 0
        %v1423 = vsel %vm1361, %v1345, 0
        %v1426 = vsel %vm1361, %v1346, 0
        %v1429 = vsel %vm1361, %v1347, 0
        %v1432 = vsel %vm1361, %v1348, 0
        %v1435 = vsel %vm1361, %v1349, 0
        %v1438 = vsel %vm1361, %v1350, 0
        %v1441 = vsel %vm1361, %v1351, 0
        %v1444 = vsel %vm1361, %v1352, 0
        %v1447 = vsel %vm1361, %v1353, 0
        %v1450 = vsel %vm1361, %v1354, 0
        %v1453 = vsel %vm1361, %v1355, 0
        %v1456 = vsel %vm1361, %v1356, 0
        %v1459 = vsel %vm1361, %v1357, 0
        %v1462 = vsel %vm1361, %v1358, 0
        %v1465 = vsel %vm1361, %v1359, 0
        %v1468 = vsel %vm1361, %v1360, 0
        %1470 = vmatpush.msra.mxu0 0.0
        %1471 = vmatpush.msra.mxu0 %v385
        %1472 = vmatpush.msra.mxu0 %v384
        %1473 = vmatpush.msra.mxu0 %v383
        %1474 = vmatpush.msra.mxu0 %v382
        %1475 = vmatpush.msra.mxu0 %v381
        %1476 = vmatpush.msra.mxu0 %v380
        %1477 = vmatpush.msra.mxu0 %v379
        %1478 = vmatpush.msra.mxu0 %v378
        %1479 = vmatpush.msra.mxu0 %v377
        %1480 = vmatpush.msra.mxu0 %v376
        %1481 = vmatpush.msra.mxu0 %v375
        %1482 = vmatpush.msra.mxu0 %v374
        %1483 = vmatpush.msra.mxu0 %v373
        %1484 = vmatpush.msra.mxu0 %v372
        %1485 = vmatpush.msra.mxu0 %v371
        %1486 = vmatmul.f32.gmra.mxu0 %v1363
        %v1487 = vpop.f32.mrf.mxu0
        %v1488 = vadd.f32 0.0, %v1487
        %1489 = vmatmul.f32.gmra.mxu0 %v1366
        %v1490 = vpop.f32.mrf.mxu0
        %v1491 = vadd.f32 0.0, %v1490
        %1492 = vmatmul.f32.gmra.mxu0 %v1369
        %v1493 = vpop.f32.mrf.mxu0
        %v1494 = vadd.f32 0.0, %v1493
        %1495 = vmatmul.f32.gmra.mxu0 %v1372
        %v1496 = vpop.f32.mrf.mxu0
        %v1497 = vadd.f32 0.0, %v1496
        %1498 = vmatmul.f32.gmra.mxu0 %v1375
        %v1499 = vpop.f32.mrf.mxu0
        %v1500 = vadd.f32 0.0, %v1499
        %1501 = vmatmul.f32.gmra.mxu0 %v1378
        %v1502 = vpop.f32.mrf.mxu0
        %v1503 = vadd.f32 0.0, %v1502
        %1504 = vmatmul.f32.gmra.mxu0 %v1381
        %v1505 = vpop.f32.mrf.mxu0
        %v1506 = vadd.f32 0.0, %v1505
        %1507 = vmatmul.f32.gmra.mxu0 %v1384
        %v1508 = vpop.f32.mrf.mxu0
        %v1509 = vadd.f32 0.0, %v1508
        %1510 = vmatmul.f32.gmra.mxu0 %v1387
        %v1511 = vpop.f32.mrf.mxu0
        %v1512 = vadd.f32 0.0, %v1511
        %1513 = vmatmul.f32.gmra.mxu0 %v1390
        %v1514 = vpop.f32.mrf.mxu0
        %v1515 = vadd.f32 0.0, %v1514
        %1516 = vmatmul.f32.gmra.mxu0 %v1393
        %v1517 = vpop.f32.mrf.mxu0
        %v1518 = vadd.f32 0.0, %v1517
        %1519 = vmatmul.f32.gmra.mxu0 %v1396
        %v1520 = vpop.f32.mrf.mxu0
        %v1521 = vadd.f32 0.0, %v1520
        %1522 = vmatmul.f32.gmra.mxu0 %v1399
        %v1523 = vpop.f32.mrf.mxu0
        %v1524 = vadd.f32 0.0, %v1523
        %1525 = vmatmul.f32.gmra.mxu0 %v1402
        %v1526 = vpop.f32.mrf.mxu0
        %v1527 = vadd.f32 0.0, %v1526
        %1528 = vmatmul.f32.gmra.mxu0 %v1405
        %v1529 = vpop.f32.mrf.mxu0
        %v1530 = vadd.f32 0.0, %v1529
        %1531 = vmatmul.f32.gmra.mxu0 %v1408
        %v1532 = vpop.f32.mrf.mxu0
        %v1533 = vadd.f32 0.0, %v1532
        %1534 = vmatmul.f32.gmra.mxu0 %v1411
        %v1535 = vpop.f32.mrf.mxu0
        %v1536 = vadd.f32 0.0, %v1535
        %1537 = vmatmul.f32.gmra.mxu0 %v1414
        %v1538 = vpop.f32.mrf.mxu0
        %v1539 = vadd.f32 0.0, %v1538
        %1540 = vmatmul.f32.gmra.mxu0 %v1417
        %v1541 = vpop.f32.mrf.mxu0
        %v1542 = vadd.f32 0.0, %v1541
        %1543 = vmatmul.f32.gmra.mxu0 %v1420
        %v1544 = vpop.f32.mrf.mxu0
        %v1545 = vadd.f32 0.0, %v1544
        %1546 = vmatmul.f32.gmra.mxu0 %v1423
        %v1547 = vpop.f32.mrf.mxu0
        %v1548 = vadd.f32 0.0, %v1547
        %1549 = vmatmul.f32.gmra.mxu0 %v1426
        %v1550 = vpop.f32.mrf.mxu0
        %v1551 = vadd.f32 0.0, %v1550
        %1552 = vmatmul.f32.gmra.mxu0 %v1429
        %v1553 = vpop.f32.mrf.mxu0
        %v1554 = vadd.f32 0.0, %v1553
        %1555 = vmatmul.f32.gmra.mxu0 %v1432
        %v1556 = vpop.f32.mrf.mxu0
        %v1557 = vadd.f32 0.0, %v1556
        %1558 = vmatmul.f32.gmra.mxu0 %v1435
        %v1559 = vpop.f32.mrf.mxu0
        %v1560 = vadd.f32 0.0, %v1559
        %1561 = vmatmul.f32.gmra.mxu0 %v1438
        %v1562 = vpop.f32.mrf.mxu0
        %v1563 = vadd.f32 0.0, %v1562
        %1564 = vmatmul.f32.gmra.mxu0 %v1441
        %v1565 = vpop.f32.mrf.mxu0
        %v1566 = vadd.f32 0.0, %v1565
        %1567 = vmatmul.f32.gmra.mxu0 %v1444
        %v1568 = vpop.f32.mrf.mxu0
        %v1569 = vadd.f32 0.0, %v1568
        %1570 = vmatmul.f32.gmra.mxu0 %v1447
        %v1571 = vpop.f32.mrf.mxu0
        %v1572 = vadd.f32 0.0, %v1571
        %1573 = vmatmul.f32.gmra.mxu0 %v1450
        %v1574 = vpop.f32.mrf.mxu0
        %v1575 = vadd.f32 0.0, %v1574
        %1576 = vmatmul.f32.gmra.mxu0 %v1453
        %v1577 = vpop.f32.mrf.mxu0
        %v1578 = vadd.f32 0.0, %v1577
        %1579 = vmatmul.f32.gmra.mxu0 %v1456
        %v1580 = vpop.f32.mrf.mxu0
        %v1581 = vadd.f32 0.0, %v1580
        %1582 = vmatmul.f32.gmra.mxu0 %v1459
        %v1583 = vpop.f32.mrf.mxu0
        %v1584 = vadd.f32 0.0, %v1583
        %1585 = vmatmul.f32.gmra.mxu0 %v1462
        %v1586 = vpop.f32.mrf.mxu0
        %v1587 = vadd.f32 0.0, %v1586
        %1588 = vmatmul.f32.gmra.mxu0 %v1465
        %v1589 = vpop.f32.mrf.mxu0
        %v1590 = vadd.f32 0.0, %v1589
        %1591 = vmatmul.f32.gmra.mxu0 %v1468
        %v1592 = vpop.f32.mrf.mxu0
        %v1593 = vadd.f32 0.0, %v1592
        %1594 = vdwg.mxu0
        %vm1595 = vcmask 785408
        %v1597 = vsel %vm1595, %v359, 0
        %v1600 = vsel %vm1595, %v360, 0
        %v1603 = vsel %vm1595, %v361, 0
        %v1606 = vsel %vm1595, %v362, 0
        %v1609 = vsel %vm1595, %v363, 0
        %v1612 = vsel %vm1595, %v364, 0
        %v1615 = vsel %vm1595, %v365, 0
        %v1618 = vsel %vm1595, %v366, 0
        %v1621 = vsel %vm1595, %v367, 0
        %v1624 = vsel %vm1595, %v368, 0
        %v1627 = vsel %vm1595, %v369, 0
        %v1630 = vsel %vm1595, %v370, 0
        %1632 = vmatpush.msra.mxu0 0.0
        %1633 = vmatpush.msra.mxu0 0.0
        %1634 = vmatpush.msra.mxu0 0.0
        %1635 = vmatpush.msra.mxu0 0.0
        %1636 = vmatpush.msra.mxu0 %v1521
        %1637 = vmatpush.msra.mxu0 %v1518
        %1638 = vmatpush.msra.mxu0 %v1515
        %1639 = vmatpush.msra.mxu0 %v1512
        %1640 = vmatpush.msra.mxu0 %v1509
        %1641 = vmatpush.msra.mxu0 %v1506
        %1642 = vmatpush.msra.mxu0 %v1503
        %1643 = vmatpush.msra.mxu0 %v1500
        %1644 = vmatpush.msra.mxu0 %v1497
        %1645 = vmatpush.msra.mxu0 %v1494
        %1646 = vmatpush.msra.mxu0 %v1491
        %1647 = vmatpush.msra.mxu0 %v1488
        %1648 = vmatmul.f32.gmra.mxu0 %v1597
        %v1649 = vpop.f32.mrf.mxu0
        %v1650 = vadd.f32 0.0, %v1649
        %1651 = vmatmul.f32.gmra.mxu0 %v1600
        %v1652 = vpop.f32.mrf.mxu0
        %v1653 = vadd.f32 0.0, %v1652
        %1654 = vmatmul.f32.gmra.mxu0 %v1603
        %v1655 = vpop.f32.mrf.mxu0
        %v1656 = vadd.f32 0.0, %v1655
        %1657 = vmatmul.f32.gmra.mxu0 %v1606
        %v1658 = vpop.f32.mrf.mxu0
        %v1659 = vadd.f32 0.0, %v1658
        %1660 = vmatmul.f32.gmra.mxu0 %v1609
        %v1661 = vpop.f32.mrf.mxu0
        %v1662 = vadd.f32 0.0, %v1661
        %1663 = vmatmul.f32.gmra.mxu0 %v1612
        %v1664 = vpop.f32.mrf.mxu0
        %v1665 = vadd.f32 0.0, %v1664
        %1666 = vmatmul.f32.gmra.mxu0 %v1615
        %v1667 = vpop.f32.mrf.mxu0
        %v1668 = vadd.f32 0.0, %v1667
        %1669 = vmatmul.f32.gmra.mxu0 %v1618
        %v1670 = vpop.f32.mrf.mxu0
        %v1671 = vadd.f32 0.0, %v1670
        %1672 = vmatmul.f32.gmra.mxu0 %v1621
        %v1673 = vpop.f32.mrf.mxu0
        %v1674 = vadd.f32 0.0, %v1673
        %1675 = vmatmul.f32.gmra.mxu0 %v1624
        %v1676 = vpop.f32.mrf.mxu0
        %v1677 = vadd.f32 0.0, %v1676
        %1678 = vmatmul.f32.gmra.mxu0 %v1627
        %v1679 = vpop.f32.mrf.mxu0
        %v1680 = vadd.f32 0.0, %v1679
        %1681 = vmatmul.f32.gmra.mxu0 %v1630
        %v1682 = vpop.f32.mrf.mxu0
        %v1683 = vadd.f32 0.0, %v1682
        %1684 = vdwg.mxu0
        %1685 = vmatpush.msra.mxu0 0.0
        %1686 = vmatpush.msra.mxu0 0.0
        %1687 = vmatpush.msra.mxu0 0.0
        %1688 = vmatpush.msra.mxu0 0.0
        %1689 = vmatpush.msra.mxu0 %v1557
        %1690 = vmatpush.msra.mxu0 %v1554
        %1691 = vmatpush.msra.mxu0 %v1551
        %1692 = vmatpush.msra.mxu0 %v1548
        %1693 = vmatpush.msra.mxu0 %v1545
        %1694 = vmatpush.msra.mxu0 %v1542
        %1695 = vmatpush.msra.mxu0 %v1539
        %1696 = vmatpush.msra.mxu0 %v1536
        %1697 = vmatpush.msra.mxu0 %v1533
        %1698 = vmatpush.msra.mxu0 %v1530
        %1699 = vmatpush.msra.mxu0 %v1527
        %1700 = vmatpush.msra.mxu0 %v1524
        %1701 = vmatmul.f32.gmra.mxu0 %v1597
        %v1702 = vpop.f32.mrf.mxu0
        %v1703 = vadd.f32 0.0, %v1702
        %1704 = vmatmul.f32.gmra.mxu0 %v1600
        %v1705 = vpop.f32.mrf.mxu0
        %v1706 = vadd.f32 0.0, %v1705
        %1707 = vmatmul.f32.gmra.mxu0 %v1603
        %v1708 = vpop.f32.mrf.mxu0
        %v1709 = vadd.f32 0.0, %v1708
        %1710 = vmatmul.f32.gmra.mxu0 %v1606
        %v1711 = vpop.f32.mrf.mxu0
        %v1712 = vadd.f32 0.0, %v1711
        %1713 = vmatmul.f32.gmra.mxu0 %v1609
        %v1714 = vpop.f32.mrf.mxu0
        %v1715 = vadd.f32 0.0, %v1714
        %1716 = vmatmul.f32.gmra.mxu0 %v1612
        %v1717 = vpop.f32.mrf.mxu0
        %v1718 = vadd.f32 0.0, %v1717
        %1719 = vmatmul.f32.gmra.mxu0 %v1615
        %v1720 = vpop.f32.mrf.mxu0
        %v1721 = vadd.f32 0.0, %v1720
        %1722 = vmatmul.f32.gmra.mxu0 %v1618
        %v1723 = vpop.f32.mrf.mxu0
        %v1724 = vadd.f32 0.0, %v1723
        %1725 = vmatmul.f32.gmra.mxu0 %v1621
        %v1726 = vpop.f32.mrf.mxu0
        %v1727 = vadd.f32 0.0, %v1726
        %1728 = vmatmul.f32.gmra.mxu0 %v1624
        %v1729 = vpop.f32.mrf.mxu0
        %v1730 = vadd.f32 0.0, %v1729
        %1731 = vmatmul.f32.gmra.mxu0 %v1627
        %v1732 = vpop.f32.mrf.mxu0
        %v1733 = vadd.f32 0.0, %v1732
        %1734 = vmatmul.f32.gmra.mxu0 %v1630
        %v1735 = vpop.f32.mrf.mxu0
        %v1736 = vadd.f32 0.0, %v1735
        %1737 = vdwg.mxu0
        %1738 = vmatpush.msra.mxu0 0.0
        %1739 = vmatpush.msra.mxu0 0.0
        %1740 = vmatpush.msra.mxu0 0.0
        %1741 = vmatpush.msra.mxu0 0.0
        %1742 = vmatpush.msra.mxu0 %v1593
        %1743 = vmatpush.msra.mxu0 %v1590
        %1744 = vmatpush.msra.mxu0 %v1587
        %1745 = vmatpush.msra.mxu0 %v1584
        %1746 = vmatpush.msra.mxu0 %v1581
        %1747 = vmatpush.msra.mxu0 %v1578
        %1748 = vmatpush.msra.mxu0 %v1575
        %1749 = vmatpush.msra.mxu0 %v1572
        %1750 = vmatpush.msra.mxu0 %v1569
        %1751 = vmatpush.msra.mxu0 %v1566
        %1752 = vmatpush.msra.mxu0 %v1563
        %1753 = vmatpush.msra.mxu0 %v1560
        %1754 = vmatmul.f32.gmra.mxu0 %v1597
        %v1755 = vpop.f32.mrf.mxu0
        %v1756 = vadd.f32 0.0, %v1755
        %1757 = vmatmul.f32.gmra.mxu0 %v1600
        %v1758 = vpop.f32.mrf.mxu0
        %v1759 = vadd.f32 0.0, %v1758
        %1760 = vmatmul.f32.gmra.mxu0 %v1603
        %v1761 = vpop.f32.mrf.mxu0
        %v1762 = vadd.f32 0.0, %v1761
        %1763 = vmatmul.f32.gmra.mxu0 %v1606
        %v1764 = vpop.f32.mrf.mxu0
        %v1765 = vadd.f32 0.0, %v1764
        %1766 = vmatmul.f32.gmra.mxu0 %v1609
        %v1767 = vpop.f32.mrf.mxu0
        %v1768 = vadd.f32 0.0, %v1767
        %1769 = vmatmul.f32.gmra.mxu0 %v1612
        %v1770 = vpop.f32.mrf.mxu0
        %v1771 = vadd.f32 0.0, %v1770
        %1772 = vmatmul.f32.gmra.mxu0 %v1615
        %v1773 = vpop.f32.mrf.mxu0
        %v1774 = vadd.f32 0.0, %v1773
        %1775 = vmatmul.f32.gmra.mxu0 %v1618
        %v1776 = vpop.f32.mrf.mxu0
        %v1777 = vadd.f32 0.0, %v1776
        %1778 = vmatmul.f32.gmra.mxu0 %v1621
        %v1779 = vpop.f32.mrf.mxu0
        %v1780 = vadd.f32 0.0, %v1779
        %1781 = vmatmul.f32.gmra.mxu0 %v1624
        %v1782 = vpop.f32.mrf.mxu0
        %v1783 = vadd.f32 0.0, %v1782
        %1784 = vmatmul.f32.gmra.mxu0 %v1627
        %v1785 = vpop.f32.mrf.mxu0
        %v1786 = vadd.f32 0.0, %v1785
        %1787 = vmatmul.f32.gmra.mxu0 %v1630
        %v1788 = vpop.f32.mrf.mxu0
        %v1789 = vadd.f32 0.0, %v1788
        %1790 = vdwg.mxu0
        %v1791 = vmul.f32 %v1650, %v1181
        %v1792 = vmul.f32 %v1653, %v1182
        %v1793 = vmul.f32 %v1656, %v1183
        %v1794 = vmul.f32 %v1659, %v1184
        %v1795 = vmul.f32 %v1662, %v1185
        %v1796 = vmul.f32 %v1665, %v1186
        %v1797 = vmul.f32 %v1668, %v1187
        %v1798 = vmul.f32 %v1671, %v1188
        %v1799 = vmul.f32 %v1674, %v1189
        %v1800 = vmul.f32 %v1677, %v1190
        %v1801 = vmul.f32 %v1680, %v1191
        %v1802 = vmul.f32 %v1683, %v1192
        %v1803 = vmul.f32 %v347, 2.0
        %v1804 = vmul.f32 %v348, 2.0
        %v1805 = vmul.f32 %v349, 2.0
        %v1806 = vmul.f32 %v350, 2.0
        %v1807 = vmul.f32 %v351, 2.0
        %v1808 = vmul.f32 %v352, 2.0
        %v1809 = vmul.f32 %v353, 2.0
        %v1810 = vmul.f32 %v354, 2.0
        %v1811 = vmul.f32 %v355, 2.0
        %v1812 = vmul.f32 %v356, 2.0
        %v1813 = vmul.f32 %v357, 2.0
        %v1814 = vmul.f32 %v358, 2.0
        %v1815 = vmul.f32 %v1803, %v1703
        %v1816 = vmul.f32 %v1804, %v1706
        %v1817 = vmul.f32 %v1805, %v1709
        %v1818 = vmul.f32 %v1806, %v1712
        %v1819 = vmul.f32 %v1807, %v1715
        %v1820 = vmul.f32 %v1808, %v1718
        %v1821 = vmul.f32 %v1809, %v1721
        %v1822 = vmul.f32 %v1810, %v1724
        %v1823 = vmul.f32 %v1811, %v1727
        %v1824 = vmul.f32 %v1812, %v1730
        %v1825 = vmul.f32 %v1813, %v1733
        %v1826 = vmul.f32 %v1814, %v1736
        %v1827 = vsub.f32 %v1791, %v1815
        %v1828 = vsub.f32 %v1792, %v1816
        %v1829 = vsub.f32 %v1793, %v1817
        %v1830 = vsub.f32 %v1794, %v1818
        %v1831 = vsub.f32 %v1795, %v1819
        %v1832 = vsub.f32 %v1796, %v1820
        %v1833 = vsub.f32 %v1797, %v1821
        %v1834 = vsub.f32 %v1798, %v1822
        %v1835 = vsub.f32 %v1799, %v1823
        %v1836 = vsub.f32 %v1800, %v1824
        %v1837 = vsub.f32 %v1801, %v1825
        %v1838 = vsub.f32 %v1802, %v1826
        %v1839 = vadd.f32 %v1827, %v1756
        %v1840 = vadd.f32 %v1828, %v1759
        %v1841 = vadd.f32 %v1829, %v1762
        %v1842 = vadd.f32 %v1830, %v1765
        %v1843 = vadd.f32 %v1831, %v1768
        %v1844 = vadd.f32 %v1832, %v1771
        %v1845 = vadd.f32 %v1833, %v1774
        %v1846 = vadd.f32 %v1834, %v1777
        %v1847 = vadd.f32 %v1835, %v1780
        %v1848 = vadd.f32 %v1836, %v1783
        %v1849 = vadd.f32 %v1837, %v1786
        %v1850 = vadd.f32 %v1838, %v1789
        %v1851 = vsub.f32 %v1205, 1.0
        %v1852 = vsub.f32 %v1206, 1.0
        %v1853 = vsub.f32 %v1207, 1.0
        %v1854 = vsub.f32 %v1208, 1.0
        %v1855 = vsub.f32 %v1209, 1.0
        %v1856 = vsub.f32 %v1210, 1.0
        %v1857 = vsub.f32 %v1211, 1.0
        %v1858 = vsub.f32 %v1212, 1.0
        %v1859 = vsub.f32 %v1213, 1.0
        %v1860 = vsub.f32 %v1214, 1.0
        %v1861 = vsub.f32 %v1215, 1.0
        %v1862 = vsub.f32 %v1216, 1.0
        %v1863 = vand.u32 2147483647, %v1851
        %v1864 = vand.u32 2147483647, %v1852
        %v1865 = vand.u32 2147483647, %v1853
        %v1866 = vand.u32 2147483647, %v1854
        %v1867 = vand.u32 2147483647, %v1855
        %v1868 = vand.u32 2147483647, %v1856
        %v1869 = vand.u32 2147483647, %v1857
        %v1870 = vand.u32 2147483647, %v1858
        %v1871 = vand.u32 2147483647, %v1859
        %v1872 = vand.u32 2147483647, %v1860
        %v1873 = vand.u32 2147483647, %v1861
        %v1874 = vand.u32 2147483647, %v1862
        %v1875 = vmul.f32 %v1169, %v1863
        %v1876 = vmul.f32 %v1170, %v1864
        %v1877 = vmul.f32 %v1171, %v1865
        %v1878 = vmul.f32 %v1172, %v1866
        %v1879 = vmul.f32 %v1173, %v1867
        %v1880 = vmul.f32 %v1174, %v1868
        %v1881 = vmul.f32 %v1175, %v1869
        %v1882 = vmul.f32 %v1176, %v1870
        %v1883 = vmul.f32 %v1177, %v1871
        %v1884 = vmul.f32 %v1178, %v1872
        %v1885 = vmul.f32 %v1179, %v1873
        %v1886 = vmul.f32 %v1180, %v1874
        %v1887 = vadd.f32 %v1875, 0.0001
        %v1888 = vadd.f32 %v1876, 0.0001
        %v1889 = vadd.f32 %v1877, 0.0001
        %v1890 = vadd.f32 %v1878, 0.0001
        %v1891 = vadd.f32 %v1879, 0.0001
        %v1892 = vadd.f32 %v1880, 0.0001
        %v1893 = vadd.f32 %v1881, 0.0001
        %v1894 = vadd.f32 %v1882, 0.0001
        %v1895 = vadd.f32 %v1883, 0.0001
        %v1896 = vadd.f32 %v1884, 0.0001
        %v1897 = vadd.f32 %v1885, 0.0001
        %v1898 = vadd.f32 %v1886, 0.0001
        %v1899 = vlog2.pop %v1887
        %v1900 = vmul.f32 %v1899, 0.6931472
        %v1901 = vlog2.pop %v1888
        %v1902 = vmul.f32 %v1901, 0.6931472
        %v1903 = vlog2.pop %v1889
        %v1904 = vmul.f32 %v1903, 0.6931472
        %v1905 = vlog2.pop %v1890
        %v1906 = vmul.f32 %v1905, 0.6931472
        %v1907 = vlog2.pop %v1891
        %v1908 = vmul.f32 %v1907, 0.6931472
        %v1909 = vlog2.pop %v1892
        %v1910 = vmul.f32 %v1909, 0.6931472
        %v1911 = vlog2.pop %v1893
        %v1912 = vmul.f32 %v1911, 0.6931472
        %v1913 = vlog2.pop %v1894
        %v1914 = vmul.f32 %v1913, 0.6931472
        %v1915 = vlog2.pop %v1895
        %v1916 = vmul.f32 %v1915, 0.6931472
        %v1917 = vlog2.pop %v1896
        %v1918 = vmul.f32 %v1917, 0.6931472
        %v1919 = vlog2.pop %v1897
        %v1920 = vmul.f32 %v1919, 0.6931472
        %v1921 = vlog2.pop %v1898
        %v1922 = vmul.f32 %v1921, 0.6931472
        %v1923 = vmul.f32 %v1900, -1.2
        %v1924 = vmul.f32 %v1902, -1.2
        %v1925 = vmul.f32 %v1904, -1.2
        %v1926 = vmul.f32 %v1906, -1.2
        %v1927 = vmul.f32 %v1908, -1.2
        %v1928 = vmul.f32 %v1910, -1.2
        %v1929 = vmul.f32 %v1912, -1.2
        %v1930 = vmul.f32 %v1914, -1.2
        %v1931 = vmul.f32 %v1916, -1.2
        %v1932 = vmul.f32 %v1918, -1.2
        %v1933 = vmul.f32 %v1920, -1.2
        %v1934 = vmul.f32 %v1922, -1.2
        %v1935 = vmul.f32 %v1923, 1.442695
        %v1936 = vpow.pop %v1935
        %v1937 = vmul.f32 %v1924, 1.442695
        %v1938 = vpow.pop %v1937
        %v1939 = vmul.f32 %v1925, 1.442695
        %v1940 = vpow.pop %v1939
        %v1941 = vmul.f32 %v1926, 1.442695
        %v1942 = vpow.pop %v1941
        %v1943 = vmul.f32 %v1927, 1.442695
        %v1944 = vpow.pop %v1943
        %v1945 = vmul.f32 %v1928, 1.442695
        %v1946 = vpow.pop %v1945
        %v1947 = vmul.f32 %v1929, 1.442695
        %v1948 = vpow.pop %v1947
        %v1949 = vmul.f32 %v1930, 1.442695
        %v1950 = vpow.pop %v1949
        %v1951 = vmul.f32 %v1931, 1.442695
        %v1952 = vpow.pop %v1951
        %v1953 = vmul.f32 %v1932, 1.442695
        %v1954 = vpow.pop %v1953
        %v1955 = vmul.f32 %v1933, 1.442695
        %v1956 = vpow.pop %v1955
        %v1957 = vmul.f32 %v1934, 1.442695
        %v1958 = vpow.pop %v1957
        %v1959 = vmul.f32 %v1936, %v347
        %v1960 = vmul.f32 %v1938, %v348
        %v1961 = vmul.f32 %v1940, %v349
        %v1962 = vmul.f32 %v1942, %v350
        %v1963 = vmul.f32 %v1944, %v351
        %v1964 = vmul.f32 %v1946, %v352
        %v1965 = vmul.f32 %v1948, %v353
        %v1966 = vmul.f32 %v1950, %v354
        %v1967 = vmul.f32 %v1952, %v355
        %v1968 = vmul.f32 %v1954, %v356
        %v1969 = vmul.f32 %v1956, %v357
        %v1970 = vmul.f32 %v1958, %v358
        %v1971 = vmul.f32 %v1936, %v1181
        %v1972 = vmul.f32 %v1938, %v1182
        %v1973 = vmul.f32 %v1940, %v1183
        %v1974 = vmul.f32 %v1942, %v1184
        %v1975 = vmul.f32 %v1944, %v1185
        %v1976 = vmul.f32 %v1946, %v1186
        %v1977 = vmul.f32 %v1948, %v1187
        %v1978 = vmul.f32 %v1950, %v1188
        %v1979 = vmul.f32 %v1952, %v1189
        %v1980 = vmul.f32 %v1954, %v1190
        %v1981 = vmul.f32 %v1956, %v1191
        %v1982 = vmul.f32 %v1958, %v1192
        %v1984 = vsel %vm1361, %v1936, 0
        %v1987 = vsel %vm1361, %v1938, 0
        %v1990 = vsel %vm1361, %v1940, 0
        %v1993 = vsel %vm1361, %v1942, 0
        %v1996 = vsel %vm1361, %v1944, 0
        %v1999 = vsel %vm1361, %v1946, 0
        %v2002 = vsel %vm1361, %v1948, 0
        %v2005 = vsel %vm1361, %v1950, 0
        %v2008 = vsel %vm1361, %v1952, 0
        %v2011 = vsel %vm1361, %v1954, 0
        %v2014 = vsel %vm1361, %v1956, 0
        %v2017 = vsel %vm1361, %v1958, 0
        %v2020 = vsel %vm1361, %v1959, 0
        %v2023 = vsel %vm1361, %v1960, 0
        %v2026 = vsel %vm1361, %v1961, 0
        %v2029 = vsel %vm1361, %v1962, 0
        %v2032 = vsel %vm1361, %v1963, 0
        %v2035 = vsel %vm1361, %v1964, 0
        %v2038 = vsel %vm1361, %v1965, 0
        %v2041 = vsel %vm1361, %v1966, 0
        %v2044 = vsel %vm1361, %v1967, 0
        %v2047 = vsel %vm1361, %v1968, 0
        %v2050 = vsel %vm1361, %v1969, 0
        %v2053 = vsel %vm1361, %v1970, 0
        %v2056 = vsel %vm1361, %v1971, 0
        %v2059 = vsel %vm1361, %v1972, 0
        %v2062 = vsel %vm1361, %v1973, 0
        %v2065 = vsel %vm1361, %v1974, 0
        %v2068 = vsel %vm1361, %v1975, 0
        %v2071 = vsel %vm1361, %v1976, 0
        %v2074 = vsel %vm1361, %v1977, 0
        %v2077 = vsel %vm1361, %v1978, 0
        %v2080 = vsel %vm1361, %v1979, 0
        %v2083 = vsel %vm1361, %v1980, 0
        %v2086 = vsel %vm1361, %v1981, 0
        %v2089 = vsel %vm1361, %v1982, 0
        %2091 = vmatpush.msra.mxu0 0.0
        %2092 = vmatpush.msra.mxu0 %v385
        %2093 = vmatpush.msra.mxu0 %v384
        %2094 = vmatpush.msra.mxu0 %v383
        %2095 = vmatpush.msra.mxu0 %v382
        %2096 = vmatpush.msra.mxu0 %v381
        %2097 = vmatpush.msra.mxu0 %v380
        %2098 = vmatpush.msra.mxu0 %v379
        %2099 = vmatpush.msra.mxu0 %v378
        %2100 = vmatpush.msra.mxu0 %v377
        %2101 = vmatpush.msra.mxu0 %v376
        %2102 = vmatpush.msra.mxu0 %v375
        %2103 = vmatpush.msra.mxu0 %v374
        %2104 = vmatpush.msra.mxu0 %v373
        %2105 = vmatpush.msra.mxu0 %v372
        %2106 = vmatpush.msra.mxu0 %v371
        %2107 = vmatmul.f32.gmra.mxu0 %v1984
        %v2108 = vpop.f32.mrf.mxu0
        %v2109 = vadd.f32 0.0, %v2108
        %2110 = vmatmul.f32.gmra.mxu0 %v1987
        %v2111 = vpop.f32.mrf.mxu0
        %v2112 = vadd.f32 0.0, %v2111
        %2113 = vmatmul.f32.gmra.mxu0 %v1990
        %v2114 = vpop.f32.mrf.mxu0
        %v2115 = vadd.f32 0.0, %v2114
        %2116 = vmatmul.f32.gmra.mxu0 %v1993
        %v2117 = vpop.f32.mrf.mxu0
        %v2118 = vadd.f32 0.0, %v2117
        %2119 = vmatmul.f32.gmra.mxu0 %v1996
        %v2120 = vpop.f32.mrf.mxu0
        %v2121 = vadd.f32 0.0, %v2120
        %2122 = vmatmul.f32.gmra.mxu0 %v1999
        %v2123 = vpop.f32.mrf.mxu0
        %v2124 = vadd.f32 0.0, %v2123
        %2125 = vmatmul.f32.gmra.mxu0 %v2002
        %v2126 = vpop.f32.mrf.mxu0
        %v2127 = vadd.f32 0.0, %v2126
        %2128 = vmatmul.f32.gmra.mxu0 %v2005
        %v2129 = vpop.f32.mrf.mxu0
        %v2130 = vadd.f32 0.0, %v2129
        %2131 = vmatmul.f32.gmra.mxu0 %v2008
        %v2132 = vpop.f32.mrf.mxu0
        %v2133 = vadd.f32 0.0, %v2132
        %2134 = vmatmul.f32.gmra.mxu0 %v2011
        %v2135 = vpop.f32.mrf.mxu0
        %v2136 = vadd.f32 0.0, %v2135
        %2137 = vmatmul.f32.gmra.mxu0 %v2014
        %v2138 = vpop.f32.mrf.mxu0
        %v2139 = vadd.f32 0.0, %v2138
        %2140 = vmatmul.f32.gmra.mxu0 %v2017
        %v2141 = vpop.f32.mrf.mxu0
        %v2142 = vadd.f32 0.0, %v2141
        %2143 = vmatmul.f32.gmra.mxu0 %v2020
        %v2144 = vpop.f32.mrf.mxu0
        %v2145 = vadd.f32 0.0, %v2144
        %2146 = vmatmul.f32.gmra.mxu0 %v2023
        %v2147 = vpop.f32.mrf.mxu0
        %v2148 = vadd.f32 0.0, %v2147
        %2149 = vmatmul.f32.gmra.mxu0 %v2026
        %v2150 = vpop.f32.mrf.mxu0
        %v2151 = vadd.f32 0.0, %v2150
        %2152 = vmatmul.f32.gmra.mxu0 %v2029
        %v2153 = vpop.f32.mrf.mxu0
        %v2154 = vadd.f32 0.0, %v2153
        %2155 = vmatmul.f32.gmra.mxu0 %v2032
        %v2156 = vpop.f32.mrf.mxu0
        %v2157 = vadd.f32 0.0, %v2156
        %2158 = vmatmul.f32.gmra.mxu0 %v2035
        %v2159 = vpop.f32.mrf.mxu0
        %v2160 = vadd.f32 0.0, %v2159
        %2161 = vmatmul.f32.gmra.mxu0 %v2038
        %v2162 = vpop.f32.mrf.mxu0
        %v2163 = vadd.f32 0.0, %v2162
        %2164 = vmatmul.f32.gmra.mxu0 %v2041
        %v2165 = vpop.f32.mrf.mxu0
        %v2166 = vadd.f32 0.0, %v2165
        %2167 = vmatmul.f32.gmra.mxu0 %v2044
        %v2168 = vpop.f32.mrf.mxu0
        %v2169 = vadd.f32 0.0, %v2168
        %2170 = vmatmul.f32.gmra.mxu0 %v2047
        %v2171 = vpop.f32.mrf.mxu0
        %v2172 = vadd.f32 0.0, %v2171
        %2173 = vmatmul.f32.gmra.mxu0 %v2050
        %v2174 = vpop.f32.mrf.mxu0
        %v2175 = vadd.f32 0.0, %v2174
        %2176 = vmatmul.f32.gmra.mxu0 %v2053
        %v2177 = vpop.f32.mrf.mxu0
        %v2178 = vadd.f32 0.0, %v2177
        %2179 = vmatmul.f32.gmra.mxu0 %v2056
        %v2180 = vpop.f32.mrf.mxu0
        %v2181 = vadd.f32 0.0, %v2180
        %2182 = vmatmul.f32.gmra.mxu0 %v2059
        %v2183 = vpop.f32.mrf.mxu0
        %v2184 = vadd.f32 0.0, %v2183
        %2185 = vmatmul.f32.gmra.mxu0 %v2062
        %v2186 = vpop.f32.mrf.mxu0
        %v2187 = vadd.f32 0.0, %v2186
        %2188 = vmatmul.f32.gmra.mxu0 %v2065
        %v2189 = vpop.f32.mrf.mxu0
        %v2190 = vadd.f32 0.0, %v2189
        %2191 = vmatmul.f32.gmra.mxu0 %v2068
        %v2192 = vpop.f32.mrf.mxu0
        %v2193 = vadd.f32 0.0, %v2192
        %2194 = vmatmul.f32.gmra.mxu0 %v2071
        %v2195 = vpop.f32.mrf.mxu0
        %v2196 = vadd.f32 0.0, %v2195
        %2197 = vmatmul.f32.gmra.mxu0 %v2074
        %v2198 = vpop.f32.mrf.mxu0
        %v2199 = vadd.f32 0.0, %v2198
        %2200 = vmatmul.f32.gmra.mxu0 %v2077
        %v2201 = vpop.f32.mrf.mxu0
        %v2202 = vadd.f32 0.0, %v2201
        %2203 = vmatmul.f32.gmra.mxu0 %v2080
        %v2204 = vpop.f32.mrf.mxu0
        %v2205 = vadd.f32 0.0, %v2204
        %2206 = vmatmul.f32.gmra.mxu0 %v2083
        %v2207 = vpop.f32.mrf.mxu0
        %v2208 = vadd.f32 0.0, %v2207
        %2209 = vmatmul.f32.gmra.mxu0 %v2086
        %v2210 = vpop.f32.mrf.mxu0
        %v2211 = vadd.f32 0.0, %v2210
        %2212 = vmatmul.f32.gmra.mxu0 %v2089
        %v2213 = vpop.f32.mrf.mxu0
        %v2214 = vadd.f32 0.0, %v2213
        %2215 = vdwg.mxu0
        %2216 = vmatpush.msra.mxu0 0.0
        %2217 = vmatpush.msra.mxu0 0.0
        %2218 = vmatpush.msra.mxu0 0.0
        %2219 = vmatpush.msra.mxu0 0.0
        %2220 = vmatpush.msra.mxu0 %v2142
        %2221 = vmatpush.msra.mxu0 %v2139
        %2222 = vmatpush.msra.mxu0 %v2136
        %2223 = vmatpush.msra.mxu0 %v2133
        %2224 = vmatpush.msra.mxu0 %v2130
        %2225 = vmatpush.msra.mxu0 %v2127
        %2226 = vmatpush.msra.mxu0 %v2124
        %2227 = vmatpush.msra.mxu0 %v2121
        %2228 = vmatpush.msra.mxu0 %v2118
        %2229 = vmatpush.msra.mxu0 %v2115
        %2230 = vmatpush.msra.mxu0 %v2112
        %2231 = vmatpush.msra.mxu0 %v2109
        %2232 = vmatmul.f32.gmra.mxu0 %v1597
        %v2233 = vpop.f32.mrf.mxu0
        %v2234 = vadd.f32 0.0, %v2233
        %2235 = vmatmul.f32.gmra.mxu0 %v1600
        %v2236 = vpop.f32.mrf.mxu0
        %v2237 = vadd.f32 0.0, %v2236
        %2238 = vmatmul.f32.gmra.mxu0 %v1603
        %v2239 = vpop.f32.mrf.mxu0
        %v2240 = vadd.f32 0.0, %v2239
        %2241 = vmatmul.f32.gmra.mxu0 %v1606
        %v2242 = vpop.f32.mrf.mxu0
        %v2243 = vadd.f32 0.0, %v2242
        %2244 = vmatmul.f32.gmra.mxu0 %v1609
        %v2245 = vpop.f32.mrf.mxu0
        %v2246 = vadd.f32 0.0, %v2245
        %2247 = vmatmul.f32.gmra.mxu0 %v1612
        %v2248 = vpop.f32.mrf.mxu0
        %v2249 = vadd.f32 0.0, %v2248
        %2250 = vmatmul.f32.gmra.mxu0 %v1615
        %v2251 = vpop.f32.mrf.mxu0
        %v2252 = vadd.f32 0.0, %v2251
        %2253 = vmatmul.f32.gmra.mxu0 %v1618
        %v2254 = vpop.f32.mrf.mxu0
        %v2255 = vadd.f32 0.0, %v2254
        %2256 = vmatmul.f32.gmra.mxu0 %v1621
        %v2257 = vpop.f32.mrf.mxu0
        %v2258 = vadd.f32 0.0, %v2257
        %2259 = vmatmul.f32.gmra.mxu0 %v1624
        %v2260 = vpop.f32.mrf.mxu0
        %v2261 = vadd.f32 0.0, %v2260
        %2262 = vmatmul.f32.gmra.mxu0 %v1627
        %v2263 = vpop.f32.mrf.mxu0
        %v2264 = vadd.f32 0.0, %v2263
        %2265 = vmatmul.f32.gmra.mxu0 %v1630
        %v2266 = vpop.f32.mrf.mxu0
        %v2267 = vadd.f32 0.0, %v2266
        %2268 = vdwg.mxu0
        %2269 = vmatpush.msra.mxu0 0.0
        %2270 = vmatpush.msra.mxu0 0.0
        %2271 = vmatpush.msra.mxu0 0.0
        %2272 = vmatpush.msra.mxu0 0.0
        %2273 = vmatpush.msra.mxu0 %v2178
        %2274 = vmatpush.msra.mxu0 %v2175
        %2275 = vmatpush.msra.mxu0 %v2172
        %2276 = vmatpush.msra.mxu0 %v2169
        %2277 = vmatpush.msra.mxu0 %v2166
        %2278 = vmatpush.msra.mxu0 %v2163
        %2279 = vmatpush.msra.mxu0 %v2160
        %2280 = vmatpush.msra.mxu0 %v2157
        %2281 = vmatpush.msra.mxu0 %v2154
        %2282 = vmatpush.msra.mxu0 %v2151
        %2283 = vmatpush.msra.mxu0 %v2148
        %2284 = vmatpush.msra.mxu0 %v2145
        %2285 = vmatmul.f32.gmra.mxu0 %v1597
        %v2286 = vpop.f32.mrf.mxu0
        %v2287 = vadd.f32 0.0, %v2286
        %2288 = vmatmul.f32.gmra.mxu0 %v1600
        %v2289 = vpop.f32.mrf.mxu0
        %v2290 = vadd.f32 0.0, %v2289
        %2291 = vmatmul.f32.gmra.mxu0 %v1603
        %v2292 = vpop.f32.mrf.mxu0
        %v2293 = vadd.f32 0.0, %v2292
        %2294 = vmatmul.f32.gmra.mxu0 %v1606
        %v2295 = vpop.f32.mrf.mxu0
        %v2296 = vadd.f32 0.0, %v2295
        %2297 = vmatmul.f32.gmra.mxu0 %v1609
        %v2298 = vpop.f32.mrf.mxu0
        %v2299 = vadd.f32 0.0, %v2298
        %2300 = vmatmul.f32.gmra.mxu0 %v1612
        %v2301 = vpop.f32.mrf.mxu0
        %v2302 = vadd.f32 0.0, %v2301
        %2303 = vmatmul.f32.gmra.mxu0 %v1615
        %v2304 = vpop.f32.mrf.mxu0
        %v2305 = vadd.f32 0.0, %v2304
        %2306 = vmatmul.f32.gmra.mxu0 %v1618
        %v2307 = vpop.f32.mrf.mxu0
        %v2308 = vadd.f32 0.0, %v2307
        %2309 = vmatmul.f32.gmra.mxu0 %v1621
        %v2310 = vpop.f32.mrf.mxu0
        %v2311 = vadd.f32 0.0, %v2310
        %2312 = vmatmul.f32.gmra.mxu0 %v1624
        %v2313 = vpop.f32.mrf.mxu0
        %v2314 = vadd.f32 0.0, %v2313
        %2315 = vmatmul.f32.gmra.mxu0 %v1627
        %v2316 = vpop.f32.mrf.mxu0
        %v2317 = vadd.f32 0.0, %v2316
        %2318 = vmatmul.f32.gmra.mxu0 %v1630
        %v2319 = vpop.f32.mrf.mxu0
        %v2320 = vadd.f32 0.0, %v2319
        %2321 = vdwg.mxu0
        %2322 = vmatpush.msra.mxu0 0.0
        %2323 = vmatpush.msra.mxu0 0.0
        %2324 = vmatpush.msra.mxu0 0.0
        %2325 = vmatpush.msra.mxu0 0.0
        %2326 = vmatpush.msra.mxu0 %v2214
        %2327 = vmatpush.msra.mxu0 %v2211
        %2328 = vmatpush.msra.mxu0 %v2208
        %2329 = vmatpush.msra.mxu0 %v2205
        %2330 = vmatpush.msra.mxu0 %v2202
        %2331 = vmatpush.msra.mxu0 %v2199
        %2332 = vmatpush.msra.mxu0 %v2196
        %2333 = vmatpush.msra.mxu0 %v2193
        %2334 = vmatpush.msra.mxu0 %v2190
        %2335 = vmatpush.msra.mxu0 %v2187
        %2336 = vmatpush.msra.mxu0 %v2184
        %2337 = vmatpush.msra.mxu0 %v2181
        %2338 = vmatmul.f32.gmra.mxu0 %v1597
        %v2339 = vpop.f32.mrf.mxu0
        %v2340 = vadd.f32 0.0, %v2339
        %2341 = vmatmul.f32.gmra.mxu0 %v1600
        %v2342 = vpop.f32.mrf.mxu0
        %v2343 = vadd.f32 0.0, %v2342
        %2344 = vmatmul.f32.gmra.mxu0 %v1603
        %v2345 = vpop.f32.mrf.mxu0
        %v2346 = vadd.f32 0.0, %v2345
        %2347 = vmatmul.f32.gmra.mxu0 %v1606
        %v2348 = vpop.f32.mrf.mxu0
        %v2349 = vadd.f32 0.0, %v2348
        %2350 = vmatmul.f32.gmra.mxu0 %v1609
        %v2351 = vpop.f32.mrf.mxu0
        %v2352 = vadd.f32 0.0, %v2351
        %2353 = vmatmul.f32.gmra.mxu0 %v1612
        %v2354 = vpop.f32.mrf.mxu0
        %v2355 = vadd.f32 0.0, %v2354
        %2356 = vmatmul.f32.gmra.mxu0 %v1615
        %v2357 = vpop.f32.mrf.mxu0
        %v2358 = vadd.f32 0.0, %v2357
        %2359 = vmatmul.f32.gmra.mxu0 %v1618
        %v2360 = vpop.f32.mrf.mxu0
        %v2361 = vadd.f32 0.0, %v2360
        %2362 = vmatmul.f32.gmra.mxu0 %v1621
        %v2363 = vpop.f32.mrf.mxu0
        %v2364 = vadd.f32 0.0, %v2363
        %2365 = vmatmul.f32.gmra.mxu0 %v1624
        %v2366 = vpop.f32.mrf.mxu0
        %v2367 = vadd.f32 0.0, %v2366
        %2368 = vmatmul.f32.gmra.mxu0 %v1627
        %v2369 = vpop.f32.mrf.mxu0
        %v2370 = vadd.f32 0.0, %v2369
        %2371 = vmatmul.f32.gmra.mxu0 %v1630
        %v2372 = vpop.f32.mrf.mxu0
        %v2373 = vadd.f32 0.0, %v2372
        %2374 = vdwg.mxu0
        %v2375 = vmul.f32 %v2234, %v1181
        %v2376 = vmul.f32 %v2237, %v1182
        %v2377 = vmul.f32 %v2240, %v1183
        %v2378 = vmul.f32 %v2243, %v1184
        %v2379 = vmul.f32 %v2246, %v1185
        %v2380 = vmul.f32 %v2249, %v1186
        %v2381 = vmul.f32 %v2252, %v1187
        %v2382 = vmul.f32 %v2255, %v1188
        %v2383 = vmul.f32 %v2258, %v1189
        %v2384 = vmul.f32 %v2261, %v1190
        %v2385 = vmul.f32 %v2264, %v1191
        %v2386 = vmul.f32 %v2267, %v1192
        %v2387 = vmul.f32 %v1803, %v2287
        %v2388 = vmul.f32 %v1804, %v2290
        %v2389 = vmul.f32 %v1805, %v2293
        %v2390 = vmul.f32 %v1806, %v2296
        %v2391 = vmul.f32 %v1807, %v2299
        %v2392 = vmul.f32 %v1808, %v2302
        %v2393 = vmul.f32 %v1809, %v2305
        %v2394 = vmul.f32 %v1810, %v2308
        %v2395 = vmul.f32 %v1811, %v2311
        %v2396 = vmul.f32 %v1812, %v2314
        %v2397 = vmul.f32 %v1813, %v2317
        %v2398 = vmul.f32 %v1814, %v2320
        %v2399 = vsub.f32 %v2375, %v2387
        %v2400 = vsub.f32 %v2376, %v2388
        %v2401 = vsub.f32 %v2377, %v2389
        %v2402 = vsub.f32 %v2378, %v2390
        %v2403 = vsub.f32 %v2379, %v2391
        %v2404 = vsub.f32 %v2380, %v2392
        %v2405 = vsub.f32 %v2381, %v2393
        %v2406 = vsub.f32 %v2382, %v2394
        %v2407 = vsub.f32 %v2383, %v2395
        %v2408 = vsub.f32 %v2384, %v2396
        %v2409 = vsub.f32 %v2385, %v2397
        %v2410 = vsub.f32 %v2386, %v2398
        %v2411 = vadd.f32 %v2399, %v2340
        %v2412 = vadd.f32 %v2400, %v2343
        %v2413 = vadd.f32 %v2401, %v2346
        %v2414 = vadd.f32 %v2402, %v2349
        %v2415 = vadd.f32 %v2403, %v2352
        %v2416 = vadd.f32 %v2404, %v2355
        %v2417 = vadd.f32 %v2405, %v2358
        %v2418 = vadd.f32 %v2406, %v2361
        %v2419 = vadd.f32 %v2407, %v2364
        %v2420 = vadd.f32 %v2408, %v2367
        %v2421 = vadd.f32 %v2409, %v2370
        %v2422 = vadd.f32 %v2410, %v2373
        %vm2423 = vcmp.eq.f32.partialorder %v1217, 0.0
        %vm2424 = vcmp.eq.f32.partialorder %v1218, 0.0
        %vm2425 = vcmp.eq.f32.partialorder %v1219, 0.0
        %vm2426 = vcmp.eq.f32.partialorder %v1220, 0.0
        %vm2427 = vcmp.eq.f32.partialorder %v1221, 0.0
        %vm2428 = vcmp.eq.f32.partialorder %v1222, 0.0
        %vm2429 = vcmp.eq.f32.partialorder %v1223, 0.0
        %vm2430 = vcmp.eq.f32.partialorder %v1224, 0.0
        %vm2431 = vcmp.eq.f32.partialorder %v1225, 0.0
        %vm2432 = vcmp.eq.f32.partialorder %v1226, 0.0
        %vm2433 = vcmp.eq.f32.partialorder %v1227, 0.0
        %vm2434 = vcmp.eq.f32.partialorder %v1228, 0.0
        %v2435 = vsub.f32 1.0, %v1205
        %v2436 = vsub.f32 1.0, %v1206
        %v2437 = vsub.f32 1.0, %v1207
        %v2438 = vsub.f32 1.0, %v1208
        %v2439 = vsub.f32 1.0, %v1209
        %v2440 = vsub.f32 1.0, %v1210
        %v2441 = vsub.f32 1.0, %v1211
        %v2442 = vsub.f32 1.0, %v1212
        %v2443 = vsub.f32 1.0, %v1213
        %v2444 = vsub.f32 1.0, %v1214
        %v2445 = vsub.f32 1.0, %v1215
        %v2446 = vsub.f32 1.0, %v1216
        %v2447 = vsel %vm2423, %v2435, 0.0
        %v2448 = vsel %vm2424, %v2436, 0.0
        %v2449 = vsel %vm2425, %v2437, 0.0
        %v2450 = vsel %vm2426, %v2438, 0.0
        %v2451 = vsel %vm2427, %v2439, 0.0
        %v2452 = vsel %vm2428, %v2440, 0.0
        %v2453 = vsel %vm2429, %v2441, 0.0
        %v2454 = vsel %vm2430, %v2442, 0.0
        %v2455 = vsel %vm2431, %v2443, 0.0
        %v2456 = vsel %vm2432, %v2444, 0.0
        %v2457 = vsel %vm2433, %v2445, 0.0
        %v2458 = vsel %vm2434, %v2446, 0.0
        %vm2459 = vcmp.eq.f32.partialorder %v1229, 1.0
        %vm2460 = vcmp.eq.f32.partialorder %v1230, 1.0
        %vm2461 = vcmp.eq.f32.partialorder %v1231, 1.0
        %vm2462 = vcmp.eq.f32.partialorder %v1232, 1.0
        %vm2463 = vcmp.eq.f32.partialorder %v1233, 1.0
        %vm2464 = vcmp.eq.f32.partialorder %v1234, 1.0
        %vm2465 = vcmp.eq.f32.partialorder %v1235, 1.0
        %vm2466 = vcmp.eq.f32.partialorder %v1236, 1.0
        %vm2467 = vcmp.eq.f32.partialorder %v1237, 1.0
        %vm2468 = vcmp.eq.f32.partialorder %v1238, 1.0
        %vm2469 = vcmp.eq.f32.partialorder %v1239, 1.0
        %vm2470 = vcmp.eq.f32.partialorder %v1240, 1.0
        %v2471 = vsel %vm2459, %v1205, 0.0
        %v2472 = vsel %vm2460, %v1206, 0.0
        %v2473 = vsel %vm2461, %v1207, 0.0
        %v2474 = vsel %vm2462, %v1208, 0.0
        %v2475 = vsel %vm2463, %v1209, 0.0
        %v2476 = vsel %vm2464, %v1210, 0.0
        %v2477 = vsel %vm2465, %v1211, 0.0
        %v2478 = vsel %vm2466, %v1212, 0.0
        %v2479 = vsel %vm2467, %v1213, 0.0
        %v2480 = vsel %vm2468, %v1214, 0.0
        %v2481 = vsel %vm2469, %v1215, 0.0
        %v2482 = vsel %vm2470, %v1216, 0.0
        %v2483 = vmul.f32 %v1839, %v2447
        %v2484 = vmul.f32 %v1840, %v2448
        %v2485 = vmul.f32 %v1841, %v2449
        %v2486 = vmul.f32 %v1842, %v2450
        %v2487 = vmul.f32 %v1843, %v2451
        %v2488 = vmul.f32 %v1844, %v2452
        %v2489 = vmul.f32 %v1845, %v2453
        %v2490 = vmul.f32 %v1846, %v2454
        %v2491 = vmul.f32 %v1847, %v2455
        %v2492 = vmul.f32 %v1848, %v2456
        %v2493 = vmul.f32 %v1849, %v2457
        %v2494 = vmul.f32 %v1850, %v2458
        %v2495 = vadd.f32 %v2483, 0.0
        %v2496 = vadd.f32 %v2484, 0.0
        %v2497 = vadd.f32 %v2485, 0.0
        %v2498 = vadd.f32 %v2486, 0.0
        %v2499 = vadd.f32 %v2487, 0.0
        %v2500 = vadd.f32 %v2488, 0.0
        %v2501 = vadd.f32 %v2489, 0.0
        %v2502 = vadd.f32 %v2490, 0.0
        %v2503 = vadd.f32 %v2491, 0.0
        %v2504 = vadd.f32 %v2492, 0.0
        %v2505 = vadd.f32 %v2493, 0.0
        %v2506 = vadd.f32 %v2494, 0.0
        %v2507 = vmul.f32 %v2411, %v2471
        %v2508 = vmul.f32 %v2412, %v2472
        %v2509 = vmul.f32 %v2413, %v2473
        %v2510 = vmul.f32 %v2414, %v2474
        %v2511 = vmul.f32 %v2415, %v2475
        %v2512 = vmul.f32 %v2416, %v2476
        %v2513 = vmul.f32 %v2417, %v2477
        %v2514 = vmul.f32 %v2418, %v2478
        %v2515 = vmul.f32 %v2419, %v2479
        %v2516 = vmul.f32 %v2420, %v2480
        %v2517 = vmul.f32 %v2421, %v2481
        %v2518 = vmul.f32 %v2422, %v2482
        %v2519 = vadd.f32 %v2495, %v2507
        %v2520 = vadd.f32 %v2496, %v2508
        %v2521 = vadd.f32 %v2497, %v2509
        %v2522 = vadd.f32 %v2498, %v2510
        %v2523 = vadd.f32 %v2499, %v2511
        %v2524 = vadd.f32 %v2500, %v2512
        %v2525 = vadd.f32 %v2501, %v2513
        %v2526 = vadd.f32 %v2502, %v2514
        %v2527 = vadd.f32 %v2503, %v2515
        %v2528 = vadd.f32 %v2504, %v2516
        %v2529 = vadd.f32 %v2505, %v2517
        %v2530 = vadd.f32 %v2506, %v2518
        %v2531 = vmul.f32 %v1650, %v2447
        %v2532 = vmul.f32 %v1653, %v2448
        %v2533 = vmul.f32 %v1656, %v2449
        %v2534 = vmul.f32 %v1659, %v2450
        %v2535 = vmul.f32 %v1662, %v2451
        %v2536 = vmul.f32 %v1665, %v2452
        %v2537 = vmul.f32 %v1668, %v2453
        %v2538 = vmul.f32 %v1671, %v2454
        %v2539 = vmul.f32 %v1674, %v2455
        %v2540 = vmul.f32 %v1677, %v2456
        %v2541 = vmul.f32 %v1680, %v2457
        %v2542 = vmul.f32 %v1683, %v2458
        %v2543 = vadd.f32 %v2531, 0.0
        %v2544 = vadd.f32 %v2532, 0.0
        %v2545 = vadd.f32 %v2533, 0.0
        %v2546 = vadd.f32 %v2534, 0.0
        %v2547 = vadd.f32 %v2535, 0.0
        %v2548 = vadd.f32 %v2536, 0.0
        %v2549 = vadd.f32 %v2537, 0.0
        %v2550 = vadd.f32 %v2538, 0.0
        %v2551 = vadd.f32 %v2539, 0.0
        %v2552 = vadd.f32 %v2540, 0.0
        %v2553 = vadd.f32 %v2541, 0.0
        %v2554 = vadd.f32 %v2542, 0.0
        %v2555 = vmul.f32 %v2234, %v2471
        %v2556 = vmul.f32 %v2237, %v2472
        %v2557 = vmul.f32 %v2240, %v2473
        %v2558 = vmul.f32 %v2243, %v2474
        %v2559 = vmul.f32 %v2246, %v2475
        %v2560 = vmul.f32 %v2249, %v2476
        %v2561 = vmul.f32 %v2252, %v2477
        %v2562 = vmul.f32 %v2255, %v2478
        %v2563 = vmul.f32 %v2258, %v2479
        %v2564 = vmul.f32 %v2261, %v2480
        %v2565 = vmul.f32 %v2264, %v2481
        %v2566 = vmul.f32 %v2267, %v2482
        %v2567 = vadd.f32 %v2543, %v2555
        %v2568 = vadd.f32 %v2544, %v2556
        %v2569 = vadd.f32 %v2545, %v2557
        %v2570 = vadd.f32 %v2546, %v2558
        %v2571 = vadd.f32 %v2547, %v2559
        %v2572 = vadd.f32 %v2548, %v2560
        %v2573 = vadd.f32 %v2549, %v2561
        %v2574 = vadd.f32 %v2550, %v2562
        %v2575 = vadd.f32 %v2551, %v2563
        %v2576 = vadd.f32 %v2552, %v2564
        %v2577 = vadd.f32 %v2553, %v2565
        %v2578 = vadd.f32 %v2554, %v2566
        %v2579 = vsub.f32 %v1205, 2.0
        %v2580 = vsub.f32 %v1206, 2.0
        %v2581 = vsub.f32 %v1207, 2.0
        %v2582 = vsub.f32 %v1208, 2.0
        %v2583 = vsub.f32 %v1209, 2.0
        %v2584 = vsub.f32 %v1210, 2.0
        %v2585 = vsub.f32 %v1211, 2.0
        %v2586 = vsub.f32 %v1212, 2.0
        %v2587 = vsub.f32 %v1213, 2.0
        %v2588 = vsub.f32 %v1214, 2.0
        %v2589 = vsub.f32 %v1215, 2.0
        %v2590 = vsub.f32 %v1216, 2.0
        %v2591 = vand.u32 2147483647, %v2579
        %v2592 = vand.u32 2147483647, %v2580
        %v2593 = vand.u32 2147483647, %v2581
        %v2594 = vand.u32 2147483647, %v2582
        %v2595 = vand.u32 2147483647, %v2583
        %v2596 = vand.u32 2147483647, %v2584
        %v2597 = vand.u32 2147483647, %v2585
        %v2598 = vand.u32 2147483647, %v2586
        %v2599 = vand.u32 2147483647, %v2587
        %v2600 = vand.u32 2147483647, %v2588
        %v2601 = vand.u32 2147483647, %v2589
        %v2602 = vand.u32 2147483647, %v2590
        %v2603 = vmul.f32 %v1169, %v2591
        %v2604 = vmul.f32 %v1170, %v2592
        %v2605 = vmul.f32 %v1171, %v2593
        %v2606 = vmul.f32 %v1172, %v2594
        %v2607 = vmul.f32 %v1173, %v2595
        %v2608 = vmul.f32 %v1174, %v2596
        %v2609 = vmul.f32 %v1175, %v2597
        %v2610 = vmul.f32 %v1176, %v2598
        %v2611 = vmul.f32 %v1177, %v2599
        %v2612 = vmul.f32 %v1178, %v2600
        %v2613 = vmul.f32 %v1179, %v2601
        %v2614 = vmul.f32 %v1180, %v2602
        %v2615 = vadd.f32 %v2603, 0.0001
        %v2616 = vadd.f32 %v2604, 0.0001
        %v2617 = vadd.f32 %v2605, 0.0001
        %v2618 = vadd.f32 %v2606, 0.0001
        %v2619 = vadd.f32 %v2607, 0.0001
        %v2620 = vadd.f32 %v2608, 0.0001
        %v2621 = vadd.f32 %v2609, 0.0001
        %v2622 = vadd.f32 %v2610, 0.0001
        %v2623 = vadd.f32 %v2611, 0.0001
        %v2624 = vadd.f32 %v2612, 0.0001
        %v2625 = vadd.f32 %v2613, 0.0001
        %v2626 = vadd.f32 %v2614, 0.0001
        %v2627 = vlog2.pop %v2615
        %v2628 = vmul.f32 %v2627, 0.6931472
        %v2629 = vlog2.pop %v2616
        %v2630 = vmul.f32 %v2629, 0.6931472
        %v2631 = vlog2.pop %v2617
        %v2632 = vmul.f32 %v2631, 0.6931472
        %v2633 = vlog2.pop %v2618
        %v2634 = vmul.f32 %v2633, 0.6931472
        %v2635 = vlog2.pop %v2619
        %v2636 = vmul.f32 %v2635, 0.6931472
        %v2637 = vlog2.pop %v2620
        %v2638 = vmul.f32 %v2637, 0.6931472
        %v2639 = vlog2.pop %v2621
        %v2640 = vmul.f32 %v2639, 0.6931472
        %v2641 = vlog2.pop %v2622
        %v2642 = vmul.f32 %v2641, 0.6931472
        %v2643 = vlog2.pop %v2623
        %v2644 = vmul.f32 %v2643, 0.6931472
        %v2645 = vlog2.pop %v2624
        %v2646 = vmul.f32 %v2645, 0.6931472
        %v2647 = vlog2.pop %v2625
        %v2648 = vmul.f32 %v2647, 0.6931472
        %v2649 = vlog2.pop %v2626
        %v2650 = vmul.f32 %v2649, 0.6931472
        %v2651 = vmul.f32 %v2628, -1.2
        %v2652 = vmul.f32 %v2630, -1.2
        %v2653 = vmul.f32 %v2632, -1.2
        %v2654 = vmul.f32 %v2634, -1.2
        %v2655 = vmul.f32 %v2636, -1.2
        %v2656 = vmul.f32 %v2638, -1.2
        %v2657 = vmul.f32 %v2640, -1.2
        %v2658 = vmul.f32 %v2642, -1.2
        %v2659 = vmul.f32 %v2644, -1.2
        %v2660 = vmul.f32 %v2646, -1.2
        %v2661 = vmul.f32 %v2648, -1.2
        %v2662 = vmul.f32 %v2650, -1.2
        %v2663 = vmul.f32 %v2651, 1.442695
        %v2664 = vpow.pop %v2663
        %v2665 = vmul.f32 %v2652, 1.442695
        %v2666 = vpow.pop %v2665
        %v2667 = vmul.f32 %v2653, 1.442695
        %v2668 = vpow.pop %v2667
        %v2669 = vmul.f32 %v2654, 1.442695
        %v2670 = vpow.pop %v2669
        %v2671 = vmul.f32 %v2655, 1.442695
        %v2672 = vpow.pop %v2671
        %v2673 = vmul.f32 %v2656, 1.442695
        %v2674 = vpow.pop %v2673
        %v2675 = vmul.f32 %v2657, 1.442695
        %v2676 = vpow.pop %v2675
        %v2677 = vmul.f32 %v2658, 1.442695
        %v2678 = vpow.pop %v2677
        %v2679 = vmul.f32 %v2659, 1.442695
        %v2680 = vpow.pop %v2679
        %v2681 = vmul.f32 %v2660, 1.442695
        %v2682 = vpow.pop %v2681
        %v2683 = vmul.f32 %v2661, 1.442695
        %v2684 = vpow.pop %v2683
        %v2685 = vmul.f32 %v2662, 1.442695
        %v2686 = vpow.pop %v2685
        %v2687 = vmul.f32 %v2664, %v347
        %v2688 = vmul.f32 %v2666, %v348
        %v2689 = vmul.f32 %v2668, %v349
        %v2690 = vmul.f32 %v2670, %v350
        %v2691 = vmul.f32 %v2672, %v351
        %v2692 = vmul.f32 %v2674, %v352
        %v2693 = vmul.f32 %v2676, %v353
        %v2694 = vmul.f32 %v2678, %v354
        %v2695 = vmul.f32 %v2680, %v355
        %v2696 = vmul.f32 %v2682, %v356
        %v2697 = vmul.f32 %v2684, %v357
        %v2698 = vmul.f32 %v2686, %v358
        %v2699 = vmul.f32 %v2664, %v1181
        %v2700 = vmul.f32 %v2666, %v1182
        %v2701 = vmul.f32 %v2668, %v1183
        %v2702 = vmul.f32 %v2670, %v1184
        %v2703 = vmul.f32 %v2672, %v1185
        %v2704 = vmul.f32 %v2674, %v1186
        %v2705 = vmul.f32 %v2676, %v1187
        %v2706 = vmul.f32 %v2678, %v1188
        %v2707 = vmul.f32 %v2680, %v1189
        %v2708 = vmul.f32 %v2682, %v1190
        %v2709 = vmul.f32 %v2684, %v1191
        %v2710 = vmul.f32 %v2686, %v1192
        %v2712 = vsel %vm1361, %v2664, 0
        %v2715 = vsel %vm1361, %v2666, 0
        %v2718 = vsel %vm1361, %v2668, 0
        %v2721 = vsel %vm1361, %v2670, 0
        %v2724 = vsel %vm1361, %v2672, 0
        %v2727 = vsel %vm1361, %v2674, 0
        %v2730 = vsel %vm1361, %v2676, 0
        %v2733 = vsel %vm1361, %v2678, 0
        %v2736 = vsel %vm1361, %v2680, 0
        %v2739 = vsel %vm1361, %v2682, 0
        %v2742 = vsel %vm1361, %v2684, 0
        %v2745 = vsel %vm1361, %v2686, 0
        %v2748 = vsel %vm1361, %v2687, 0
        %v2751 = vsel %vm1361, %v2688, 0
        %v2754 = vsel %vm1361, %v2689, 0
        %v2757 = vsel %vm1361, %v2690, 0
        %v2760 = vsel %vm1361, %v2691, 0
        %v2763 = vsel %vm1361, %v2692, 0
        %v2766 = vsel %vm1361, %v2693, 0
        %v2769 = vsel %vm1361, %v2694, 0
        %v2772 = vsel %vm1361, %v2695, 0
        %v2775 = vsel %vm1361, %v2696, 0
        %v2778 = vsel %vm1361, %v2697, 0
        %v2781 = vsel %vm1361, %v2698, 0
        %v2784 = vsel %vm1361, %v2699, 0
        %v2787 = vsel %vm1361, %v2700, 0
        %v2790 = vsel %vm1361, %v2701, 0
        %v2793 = vsel %vm1361, %v2702, 0
        %v2796 = vsel %vm1361, %v2703, 0
        %v2799 = vsel %vm1361, %v2704, 0
        %v2802 = vsel %vm1361, %v2705, 0
        %v2805 = vsel %vm1361, %v2706, 0
        %v2808 = vsel %vm1361, %v2707, 0
        %v2811 = vsel %vm1361, %v2708, 0
        %v2814 = vsel %vm1361, %v2709, 0
        %v2817 = vsel %vm1361, %v2710, 0
        %2819 = vmatpush.msra.mxu0 0.0
        %2820 = vmatpush.msra.mxu0 %v385
        %2821 = vmatpush.msra.mxu0 %v384
        %2822 = vmatpush.msra.mxu0 %v383
        %2823 = vmatpush.msra.mxu0 %v382
        %2824 = vmatpush.msra.mxu0 %v381
        %2825 = vmatpush.msra.mxu0 %v380
        %2826 = vmatpush.msra.mxu0 %v379
        %2827 = vmatpush.msra.mxu0 %v378
        %2828 = vmatpush.msra.mxu0 %v377
        %2829 = vmatpush.msra.mxu0 %v376
        %2830 = vmatpush.msra.mxu0 %v375
        %2831 = vmatpush.msra.mxu0 %v374
        %2832 = vmatpush.msra.mxu0 %v373
        %2833 = vmatpush.msra.mxu0 %v372
        %2834 = vmatpush.msra.mxu0 %v371
        %2835 = vmatmul.f32.gmra.mxu0 %v2712
        %v2836 = vpop.f32.mrf.mxu0
        %v2837 = vadd.f32 0.0, %v2836
        %2838 = vmatmul.f32.gmra.mxu0 %v2715
        %v2839 = vpop.f32.mrf.mxu0
        %v2840 = vadd.f32 0.0, %v2839
        %2841 = vmatmul.f32.gmra.mxu0 %v2718
        %v2842 = vpop.f32.mrf.mxu0
        %v2843 = vadd.f32 0.0, %v2842
        %2844 = vmatmul.f32.gmra.mxu0 %v2721
        %v2845 = vpop.f32.mrf.mxu0
        %v2846 = vadd.f32 0.0, %v2845
        %2847 = vmatmul.f32.gmra.mxu0 %v2724
        %v2848 = vpop.f32.mrf.mxu0
        %v2849 = vadd.f32 0.0, %v2848
        %2850 = vmatmul.f32.gmra.mxu0 %v2727
        %v2851 = vpop.f32.mrf.mxu0
        %v2852 = vadd.f32 0.0, %v2851
        %2853 = vmatmul.f32.gmra.mxu0 %v2730
        %v2854 = vpop.f32.mrf.mxu0
        %v2855 = vadd.f32 0.0, %v2854
        %2856 = vmatmul.f32.gmra.mxu0 %v2733
        %v2857 = vpop.f32.mrf.mxu0
        %v2858 = vadd.f32 0.0, %v2857
        %2859 = vmatmul.f32.gmra.mxu0 %v2736
        %v2860 = vpop.f32.mrf.mxu0
        %v2861 = vadd.f32 0.0, %v2860
        %2862 = vmatmul.f32.gmra.mxu0 %v2739
        %v2863 = vpop.f32.mrf.mxu0
        %v2864 = vadd.f32 0.0, %v2863
        %2865 = vmatmul.f32.gmra.mxu0 %v2742
        %v2866 = vpop.f32.mrf.mxu0
        %v2867 = vadd.f32 0.0, %v2866
        %2868 = vmatmul.f32.gmra.mxu0 %v2745
        %v2869 = vpop.f32.mrf.mxu0
        %v2870 = vadd.f32 0.0, %v2869
        %2871 = vmatmul.f32.gmra.mxu0 %v2748
        %v2872 = vpop.f32.mrf.mxu0
        %v2873 = vadd.f32 0.0, %v2872
        %2874 = vmatmul.f32.gmra.mxu0 %v2751
        %v2875 = vpop.f32.mrf.mxu0
        %v2876 = vadd.f32 0.0, %v2875
        %2877 = vmatmul.f32.gmra.mxu0 %v2754
        %v2878 = vpop.f32.mrf.mxu0
        %v2879 = vadd.f32 0.0, %v2878
        %2880 = vmatmul.f32.gmra.mxu0 %v2757
        %v2881 = vpop.f32.mrf.mxu0
        %v2882 = vadd.f32 0.0, %v2881
        %2883 = vmatmul.f32.gmra.mxu0 %v2760
        %v2884 = vpop.f32.mrf.mxu0
        %v2885 = vadd.f32 0.0, %v2884
        %2886 = vmatmul.f32.gmra.mxu0 %v2763
        %v2887 = vpop.f32.mrf.mxu0
        %v2888 = vadd.f32 0.0, %v2887
        %2889 = vmatmul.f32.gmra.mxu0 %v2766
        %v2890 = vpop.f32.mrf.mxu0
        %v2891 = vadd.f32 0.0, %v2890
        %2892 = vmatmul.f32.gmra.mxu0 %v2769
        %v2893 = vpop.f32.mrf.mxu0
        %v2894 = vadd.f32 0.0, %v2893
        %2895 = vmatmul.f32.gmra.mxu0 %v2772
        %v2896 = vpop.f32.mrf.mxu0
        %v2897 = vadd.f32 0.0, %v2896
        %2898 = vmatmul.f32.gmra.mxu0 %v2775
        %v2899 = vpop.f32.mrf.mxu0
        %v2900 = vadd.f32 0.0, %v2899
        %2901 = vmatmul.f32.gmra.mxu0 %v2778
        %v2902 = vpop.f32.mrf.mxu0
        %v2903 = vadd.f32 0.0, %v2902
        %2904 = vmatmul.f32.gmra.mxu0 %v2781
        %v2905 = vpop.f32.mrf.mxu0
        %v2906 = vadd.f32 0.0, %v2905
        %2907 = vmatmul.f32.gmra.mxu0 %v2784
        %v2908 = vpop.f32.mrf.mxu0
        %v2909 = vadd.f32 0.0, %v2908
        %2910 = vmatmul.f32.gmra.mxu0 %v2787
        %v2911 = vpop.f32.mrf.mxu0
        %v2912 = vadd.f32 0.0, %v2911
        %2913 = vmatmul.f32.gmra.mxu0 %v2790
        %v2914 = vpop.f32.mrf.mxu0
        %v2915 = vadd.f32 0.0, %v2914
        %2916 = vmatmul.f32.gmra.mxu0 %v2793
        %v2917 = vpop.f32.mrf.mxu0
        %v2918 = vadd.f32 0.0, %v2917
        %2919 = vmatmul.f32.gmra.mxu0 %v2796
        %v2920 = vpop.f32.mrf.mxu0
        %v2921 = vadd.f32 0.0, %v2920
        %2922 = vmatmul.f32.gmra.mxu0 %v2799
        %v2923 = vpop.f32.mrf.mxu0
        %v2924 = vadd.f32 0.0, %v2923
        %2925 = vmatmul.f32.gmra.mxu0 %v2802
        %v2926 = vpop.f32.mrf.mxu0
        %v2927 = vadd.f32 0.0, %v2926
        %2928 = vmatmul.f32.gmra.mxu0 %v2805
        %v2929 = vpop.f32.mrf.mxu0
        %v2930 = vadd.f32 0.0, %v2929
        %2931 = vmatmul.f32.gmra.mxu0 %v2808
        %v2932 = vpop.f32.mrf.mxu0
        %v2933 = vadd.f32 0.0, %v2932
        %2934 = vmatmul.f32.gmra.mxu0 %v2811
        %v2935 = vpop.f32.mrf.mxu0
        %v2936 = vadd.f32 0.0, %v2935
        %2937 = vmatmul.f32.gmra.mxu0 %v2814
        %v2938 = vpop.f32.mrf.mxu0
        %v2939 = vadd.f32 0.0, %v2938
        %2940 = vmatmul.f32.gmra.mxu0 %v2817
        %v2941 = vpop.f32.mrf.mxu0
        %v2942 = vadd.f32 0.0, %v2941
        %2943 = vdwg.mxu0
        %2944 = vmatpush.msra.mxu0 0.0
        %2945 = vmatpush.msra.mxu0 0.0
        %2946 = vmatpush.msra.mxu0 0.0
        %2947 = vmatpush.msra.mxu0 0.0
        %2948 = vmatpush.msra.mxu0 %v2870
        %2949 = vmatpush.msra.mxu0 %v2867
        %2950 = vmatpush.msra.mxu0 %v2864
        %2951 = vmatpush.msra.mxu0 %v2861
        %2952 = vmatpush.msra.mxu0 %v2858
        %2953 = vmatpush.msra.mxu0 %v2855
        %2954 = vmatpush.msra.mxu0 %v2852
        %2955 = vmatpush.msra.mxu0 %v2849
        %2956 = vmatpush.msra.mxu0 %v2846
        %2957 = vmatpush.msra.mxu0 %v2843
        %2958 = vmatpush.msra.mxu0 %v2840
        %2959 = vmatpush.msra.mxu0 %v2837
        %2960 = vmatmul.f32.gmra.mxu0 %v1597
        %v2961 = vpop.f32.mrf.mxu0
        %v2962 = vadd.f32 0.0, %v2961
        %2963 = vmatmul.f32.gmra.mxu0 %v1600
        %v2964 = vpop.f32.mrf.mxu0
        %v2965 = vadd.f32 0.0, %v2964
        %2966 = vmatmul.f32.gmra.mxu0 %v1603
        %v2967 = vpop.f32.mrf.mxu0
        %v2968 = vadd.f32 0.0, %v2967
        %2969 = vmatmul.f32.gmra.mxu0 %v1606
        %v2970 = vpop.f32.mrf.mxu0
        %v2971 = vadd.f32 0.0, %v2970
        %2972 = vmatmul.f32.gmra.mxu0 %v1609
        %v2973 = vpop.f32.mrf.mxu0
        %v2974 = vadd.f32 0.0, %v2973
        %2975 = vmatmul.f32.gmra.mxu0 %v1612
        %v2976 = vpop.f32.mrf.mxu0
        %v2977 = vadd.f32 0.0, %v2976
        %2978 = vmatmul.f32.gmra.mxu0 %v1615
        %v2979 = vpop.f32.mrf.mxu0
        %v2980 = vadd.f32 0.0, %v2979
        %2981 = vmatmul.f32.gmra.mxu0 %v1618
        %v2982 = vpop.f32.mrf.mxu0
        %v2983 = vadd.f32 0.0, %v2982
        %2984 = vmatmul.f32.gmra.mxu0 %v1621
        %v2985 = vpop.f32.mrf.mxu0
        %v2986 = vadd.f32 0.0, %v2985
        %2987 = vmatmul.f32.gmra.mxu0 %v1624
        %v2988 = vpop.f32.mrf.mxu0
        %v2989 = vadd.f32 0.0, %v2988
        %2990 = vmatmul.f32.gmra.mxu0 %v1627
        %v2991 = vpop.f32.mrf.mxu0
        %v2992 = vadd.f32 0.0, %v2991
        %2993 = vmatmul.f32.gmra.mxu0 %v1630
        %v2994 = vpop.f32.mrf.mxu0
        %v2995 = vadd.f32 0.0, %v2994
        %2996 = vdwg.mxu0
        %2997 = vmatpush.msra.mxu0 0.0
        %2998 = vmatpush.msra.mxu0 0.0
        %2999 = vmatpush.msra.mxu0 0.0
        %3000 = vmatpush.msra.mxu0 0.0
        %3001 = vmatpush.msra.mxu0 %v2906
        %3002 = vmatpush.msra.mxu0 %v2903
        %3003 = vmatpush.msra.mxu0 %v2900
        %3004 = vmatpush.msra.mxu0 %v2897
        %3005 = vmatpush.msra.mxu0 %v2894
        %3006 = vmatpush.msra.mxu0 %v2891
        %3007 = vmatpush.msra.mxu0 %v2888
        %3008 = vmatpush.msra.mxu0 %v2885
        %3009 = vmatpush.msra.mxu0 %v2882
        %3010 = vmatpush.msra.mxu0 %v2879
        %3011 = vmatpush.msra.mxu0 %v2876
        %3012 = vmatpush.msra.mxu0 %v2873
        %3013 = vmatmul.f32.gmra.mxu0 %v1597
        %v3014 = vpop.f32.mrf.mxu0
        %v3015 = vadd.f32 0.0, %v3014
        %3016 = vmatmul.f32.gmra.mxu0 %v1600
        %v3017 = vpop.f32.mrf.mxu0
        %v3018 = vadd.f32 0.0, %v3017
        %3019 = vmatmul.f32.gmra.mxu0 %v1603
        %v3020 = vpop.f32.mrf.mxu0
        %v3021 = vadd.f32 0.0, %v3020
        %3022 = vmatmul.f32.gmra.mxu0 %v1606
        %v3023 = vpop.f32.mrf.mxu0
        %v3024 = vadd.f32 0.0, %v3023
        %3025 = vmatmul.f32.gmra.mxu0 %v1609
        %v3026 = vpop.f32.mrf.mxu0
        %v3027 = vadd.f32 0.0, %v3026
        %3028 = vmatmul.f32.gmra.mxu0 %v1612
        %v3029 = vpop.f32.mrf.mxu0
        %v3030 = vadd.f32 0.0, %v3029
        %3031 = vmatmul.f32.gmra.mxu0 %v1615
        %v3032 = vpop.f32.mrf.mxu0
        %v3033 = vadd.f32 0.0, %v3032
        %3034 = vmatmul.f32.gmra.mxu0 %v1618
        %v3035 = vpop.f32.mrf.mxu0
        %v3036 = vadd.f32 0.0, %v3035
        %3037 = vmatmul.f32.gmra.mxu0 %v1621
        %v3038 = vpop.f32.mrf.mxu0
        %v3039 = vadd.f32 0.0, %v3038
        %3040 = vmatmul.f32.gmra.mxu0 %v1624
        %v3041 = vpop.f32.mrf.mxu0
        %v3042 = vadd.f32 0.0, %v3041
        %3043 = vmatmul.f32.gmra.mxu0 %v1627
        %v3044 = vpop.f32.mrf.mxu0
        %v3045 = vadd.f32 0.0, %v3044
        %3046 = vmatmul.f32.gmra.mxu0 %v1630
        %v3047 = vpop.f32.mrf.mxu0
        %v3048 = vadd.f32 0.0, %v3047
        %3049 = vdwg.mxu0
        %3050 = vmatpush.msra.mxu0 0.0
        %3051 = vmatpush.msra.mxu0 0.0
        %3052 = vmatpush.msra.mxu0 0.0
        %3053 = vmatpush.msra.mxu0 0.0
        %3054 = vmatpush.msra.mxu0 %v2942
        %3055 = vmatpush.msra.mxu0 %v2939
        %3056 = vmatpush.msra.mxu0 %v2936
        %3057 = vmatpush.msra.mxu0 %v2933
        %3058 = vmatpush.msra.mxu0 %v2930
        %3059 = vmatpush.msra.mxu0 %v2927
        %3060 = vmatpush.msra.mxu0 %v2924
        %3061 = vmatpush.msra.mxu0 %v2921
        %3062 = vmatpush.msra.mxu0 %v2918
        %3063 = vmatpush.msra.mxu0 %v2915
        %3064 = vmatpush.msra.mxu0 %v2912
        %3065 = vmatpush.msra.mxu0 %v2909
        %3066 = vmatmul.f32.gmra.mxu0 %v1597
        %v3067 = vpop.f32.mrf.mxu0
        %v3068 = vadd.f32 0.0, %v3067
        %3069 = vmatmul.f32.gmra.mxu0 %v1600
        %v3070 = vpop.f32.mrf.mxu0
        %v3071 = vadd.f32 0.0, %v3070
        %3072 = vmatmul.f32.gmra.mxu0 %v1603
        %v3073 = vpop.f32.mrf.mxu0
        %v3074 = vadd.f32 0.0, %v3073
        %3075 = vmatmul.f32.gmra.mxu0 %v1606
        %v3076 = vpop.f32.mrf.mxu0
        %v3077 = vadd.f32 0.0, %v3076
        %3078 = vmatmul.f32.gmra.mxu0 %v1609
        %v3079 = vpop.f32.mrf.mxu0
        %v3080 = vadd.f32 0.0, %v3079
        %3081 = vmatmul.f32.gmra.mxu0 %v1612
        %v3082 = vpop.f32.mrf.mxu0
        %v3083 = vadd.f32 0.0, %v3082
        %3084 = vmatmul.f32.gmra.mxu0 %v1615
        %v3085 = vpop.f32.mrf.mxu0
        %v3086 = vadd.f32 0.0, %v3085
        %3087 = vmatmul.f32.gmra.mxu0 %v1618
        %v3088 = vpop.f32.mrf.mxu0
        %v3089 = vadd.f32 0.0, %v3088
        %3090 = vmatmul.f32.gmra.mxu0 %v1621
        %v3091 = vpop.f32.mrf.mxu0
        %v3092 = vadd.f32 0.0, %v3091
        %3093 = vmatmul.f32.gmra.mxu0 %v1624
        %v3094 = vpop.f32.mrf.mxu0
        %v3095 = vadd.f32 0.0, %v3094
        %3096 = vmatmul.f32.gmra.mxu0 %v1627
        %v3097 = vpop.f32.mrf.mxu0
        %v3098 = vadd.f32 0.0, %v3097
        %3099 = vmatmul.f32.gmra.mxu0 %v1630
        %v3100 = vpop.f32.mrf.mxu0
        %v3101 = vadd.f32 0.0, %v3100
        %3102 = vdwg.mxu0
        %v3103 = vmul.f32 %v2962, %v1181
        %v3104 = vmul.f32 %v2965, %v1182
        %v3105 = vmul.f32 %v2968, %v1183
        %v3106 = vmul.f32 %v2971, %v1184
        %v3107 = vmul.f32 %v2974, %v1185
        %v3108 = vmul.f32 %v2977, %v1186
        %v3109 = vmul.f32 %v2980, %v1187
        %v3110 = vmul.f32 %v2983, %v1188
        %v3111 = vmul.f32 %v2986, %v1189
        %v3112 = vmul.f32 %v2989, %v1190
        %v3113 = vmul.f32 %v2992, %v1191
        %v3114 = vmul.f32 %v2995, %v1192
        %v3115 = vmul.f32 %v1803, %v3015
        %v3116 = vmul.f32 %v1804, %v3018
        %v3117 = vmul.f32 %v1805, %v3021
        %v3118 = vmul.f32 %v1806, %v3024
        %v3119 = vmul.f32 %v1807, %v3027
        %v3120 = vmul.f32 %v1808, %v3030
        %v3121 = vmul.f32 %v1809, %v3033
        %v3122 = vmul.f32 %v1810, %v3036
        %v3123 = vmul.f32 %v1811, %v3039
        %v3124 = vmul.f32 %v1812, %v3042
        %v3125 = vmul.f32 %v1813, %v3045
        %v3126 = vmul.f32 %v1814, %v3048
        %v3127 = vsub.f32 %v3103, %v3115
        %v3128 = vsub.f32 %v3104, %v3116
        %v3129 = vsub.f32 %v3105, %v3117
        %v3130 = vsub.f32 %v3106, %v3118
        %v3131 = vsub.f32 %v3107, %v3119
        %v3132 = vsub.f32 %v3108, %v3120
        %v3133 = vsub.f32 %v3109, %v3121
        %v3134 = vsub.f32 %v3110, %v3122
        %v3135 = vsub.f32 %v3111, %v3123
        %v3136 = vsub.f32 %v3112, %v3124
        %v3137 = vsub.f32 %v3113, %v3125
        %v3138 = vsub.f32 %v3114, %v3126
        %v3139 = vadd.f32 %v3127, %v3068
        %v3140 = vadd.f32 %v3128, %v3071
        %v3141 = vadd.f32 %v3129, %v3074
        %v3142 = vadd.f32 %v3130, %v3077
        %v3143 = vadd.f32 %v3131, %v3080
        %v3144 = vadd.f32 %v3132, %v3083
        %v3145 = vadd.f32 %v3133, %v3086
        %v3146 = vadd.f32 %v3134, %v3089
        %v3147 = vadd.f32 %v3135, %v3092
        %v3148 = vadd.f32 %v3136, %v3095
        %v3149 = vadd.f32 %v3137, %v3098
        %v3150 = vadd.f32 %v3138, %v3101
        %vm3151 = vcmp.eq.f32.partialorder %v1217, 1.0
        %vm3152 = vcmp.eq.f32.partialorder %v1218, 1.0
        %vm3153 = vcmp.eq.f32.partialorder %v1219, 1.0
        %vm3154 = vcmp.eq.f32.partialorder %v1220, 1.0
        %vm3155 = vcmp.eq.f32.partialorder %v1221, 1.0
        %vm3156 = vcmp.eq.f32.partialorder %v1222, 1.0
        %vm3157 = vcmp.eq.f32.partialorder %v1223, 1.0
        %vm3158 = vcmp.eq.f32.partialorder %v1224, 1.0
        %vm3159 = vcmp.eq.f32.partialorder %v1225, 1.0
        %vm3160 = vcmp.eq.f32.partialorder %v1226, 1.0
        %vm3161 = vcmp.eq.f32.partialorder %v1227, 1.0
        %vm3162 = vcmp.eq.f32.partialorder %v1228, 1.0
        %v3163 = vsub.f32 2.0, %v1205
        %v3164 = vsub.f32 2.0, %v1206
        %v3165 = vsub.f32 2.0, %v1207
        %v3166 = vsub.f32 2.0, %v1208
        %v3167 = vsub.f32 2.0, %v1209
        %v3168 = vsub.f32 2.0, %v1210
        %v3169 = vsub.f32 2.0, %v1211
        %v3170 = vsub.f32 2.0, %v1212
        %v3171 = vsub.f32 2.0, %v1213
        %v3172 = vsub.f32 2.0, %v1214
        %v3173 = vsub.f32 2.0, %v1215
        %v3174 = vsub.f32 2.0, %v1216
        %v3175 = vsel %vm3151, %v3163, 0.0
        %v3176 = vsel %vm3152, %v3164, 0.0
        %v3177 = vsel %vm3153, %v3165, 0.0
        %v3178 = vsel %vm3154, %v3166, 0.0
        %v3179 = vsel %vm3155, %v3167, 0.0
        %v3180 = vsel %vm3156, %v3168, 0.0
        %v3181 = vsel %vm3157, %v3169, 0.0
        %v3182 = vsel %vm3158, %v3170, 0.0
        %v3183 = vsel %vm3159, %v3171, 0.0
        %v3184 = vsel %vm3160, %v3172, 0.0
        %v3185 = vsel %vm3161, %v3173, 0.0
        %v3186 = vsel %vm3162, %v3174, 0.0
        %vm3187 = vcmp.eq.f32.partialorder %v1229, 2.0
        %vm3188 = vcmp.eq.f32.partialorder %v1230, 2.0
        %vm3189 = vcmp.eq.f32.partialorder %v1231, 2.0
        %vm3190 = vcmp.eq.f32.partialorder %v1232, 2.0
        %vm3191 = vcmp.eq.f32.partialorder %v1233, 2.0
        %vm3192 = vcmp.eq.f32.partialorder %v1234, 2.0
        %vm3193 = vcmp.eq.f32.partialorder %v1235, 2.0
        %vm3194 = vcmp.eq.f32.partialorder %v1236, 2.0
        %vm3195 = vcmp.eq.f32.partialorder %v1237, 2.0
        %vm3196 = vcmp.eq.f32.partialorder %v1238, 2.0
        %vm3197 = vcmp.eq.f32.partialorder %v1239, 2.0
        %vm3198 = vcmp.eq.f32.partialorder %v1240, 2.0
        %v3199 = vsel %vm3187, %v1851, 0.0
        %v3200 = vsel %vm3188, %v1852, 0.0
        %v3201 = vsel %vm3189, %v1853, 0.0
        %v3202 = vsel %vm3190, %v1854, 0.0
        %v3203 = vsel %vm3191, %v1855, 0.0
        %v3204 = vsel %vm3192, %v1856, 0.0
        %v3205 = vsel %vm3193, %v1857, 0.0
        %v3206 = vsel %vm3194, %v1858, 0.0
        %v3207 = vsel %vm3195, %v1859, 0.0
        %v3208 = vsel %vm3196, %v1860, 0.0
        %v3209 = vsel %vm3197, %v1861, 0.0
        %v3210 = vsel %vm3198, %v1862, 0.0
        %v3211 = vmul.f32 %v2411, %v3175
        %v3212 = vmul.f32 %v2412, %v3176
        %v3213 = vmul.f32 %v2413, %v3177
        %v3214 = vmul.f32 %v2414, %v3178
        %v3215 = vmul.f32 %v2415, %v3179
        %v3216 = vmul.f32 %v2416, %v3180
        %v3217 = vmul.f32 %v2417, %v3181
        %v3218 = vmul.f32 %v2418, %v3182
        %v3219 = vmul.f32 %v2419, %v3183
        %v3220 = vmul.f32 %v2420, %v3184
        %v3221 = vmul.f32 %v2421, %v3185
        %v3222 = vmul.f32 %v2422, %v3186
        %v3223 = vadd.f32 %v2519, %v3211
        %v3224 = vadd.f32 %v2520, %v3212
        %v3225 = vadd.f32 %v2521, %v3213
        %v3226 = vadd.f32 %v2522, %v3214
        %v3227 = vadd.f32 %v2523, %v3215
        %v3228 = vadd.f32 %v2524, %v3216
        %v3229 = vadd.f32 %v2525, %v3217
        %v3230 = vadd.f32 %v2526, %v3218
        %v3231 = vadd.f32 %v2527, %v3219
        %v3232 = vadd.f32 %v2528, %v3220
        %v3233 = vadd.f32 %v2529, %v3221
        %v3234 = vadd.f32 %v2530, %v3222
        %v3235 = vmul.f32 %v3139, %v3199
        %v3236 = vmul.f32 %v3140, %v3200
        %v3237 = vmul.f32 %v3141, %v3201
        %v3238 = vmul.f32 %v3142, %v3202
        %v3239 = vmul.f32 %v3143, %v3203
        %v3240 = vmul.f32 %v3144, %v3204
        %v3241 = vmul.f32 %v3145, %v3205
        %v3242 = vmul.f32 %v3146, %v3206
        %v3243 = vmul.f32 %v3147, %v3207
        %v3244 = vmul.f32 %v3148, %v3208
        %v3245 = vmul.f32 %v3149, %v3209
        %v3246 = vmul.f32 %v3150, %v3210
        %v3247 = vadd.f32 %v3223, %v3235
        %v3248 = vadd.f32 %v3224, %v3236
        %v3249 = vadd.f32 %v3225, %v3237
        %v3250 = vadd.f32 %v3226, %v3238
        %v3251 = vadd.f32 %v3227, %v3239
        %v3252 = vadd.f32 %v3228, %v3240
        %v3253 = vadd.f32 %v3229, %v3241
        %v3254 = vadd.f32 %v3230, %v3242
        %v3255 = vadd.f32 %v3231, %v3243
        %v3256 = vadd.f32 %v3232, %v3244
        %v3257 = vadd.f32 %v3233, %v3245
        %v3258 = vadd.f32 %v3234, %v3246
        %v3259 = vmul.f32 %v2234, %v3175
        %v3260 = vmul.f32 %v2237, %v3176
        %v3261 = vmul.f32 %v2240, %v3177
        %v3262 = vmul.f32 %v2243, %v3178
        %v3263 = vmul.f32 %v2246, %v3179
        %v3264 = vmul.f32 %v2249, %v3180
        %v3265 = vmul.f32 %v2252, %v3181
        %v3266 = vmul.f32 %v2255, %v3182
        %v3267 = vmul.f32 %v2258, %v3183
        %v3268 = vmul.f32 %v2261, %v3184
        %v3269 = vmul.f32 %v2264, %v3185
        %v3270 = vmul.f32 %v2267, %v3186
        %v3271 = vadd.f32 %v2567, %v3259
        %v3272 = vadd.f32 %v2568, %v3260
        %v3273 = vadd.f32 %v2569, %v3261
        %v3274 = vadd.f32 %v2570, %v3262
        %v3275 = vadd.f32 %v2571, %v3263
        %v3276 = vadd.f32 %v2572, %v3264
        %v3277 = vadd.f32 %v2573, %v3265
        %v3278 = vadd.f32 %v2574, %v3266
        %v3279 = vadd.f32 %v2575, %v3267
        %v3280 = vadd.f32 %v2576, %v3268
        %v3281 = vadd.f32 %v2577, %v3269
        %v3282 = vadd.f32 %v2578, %v3270
        %v3283 = vmul.f32 %v2962, %v3199
        %v3284 = vmul.f32 %v2965, %v3200
        %v3285 = vmul.f32 %v2968, %v3201
        %v3286 = vmul.f32 %v2971, %v3202
        %v3287 = vmul.f32 %v2974, %v3203
        %v3288 = vmul.f32 %v2977, %v3204
        %v3289 = vmul.f32 %v2980, %v3205
        %v3290 = vmul.f32 %v2983, %v3206
        %v3291 = vmul.f32 %v2986, %v3207
        %v3292 = vmul.f32 %v2989, %v3208
        %v3293 = vmul.f32 %v2992, %v3209
        %v3294 = vmul.f32 %v2995, %v3210
        %v3295 = vadd.f32 %v3271, %v3283
        %v3296 = vadd.f32 %v3272, %v3284
        %v3297 = vadd.f32 %v3273, %v3285
        %v3298 = vadd.f32 %v3274, %v3286
        %v3299 = vadd.f32 %v3275, %v3287
        %v3300 = vadd.f32 %v3276, %v3288
        %v3301 = vadd.f32 %v3277, %v3289
        %v3302 = vadd.f32 %v3278, %v3290
        %v3303 = vadd.f32 %v3279, %v3291
        %v3304 = vadd.f32 %v3280, %v3292
        %v3305 = vadd.f32 %v3281, %v3293
        %v3306 = vadd.f32 %v3282, %v3294
        %v3307 = vsub.f32 %v1205, 3.0
        %v3308 = vsub.f32 %v1206, 3.0
        %v3309 = vsub.f32 %v1207, 3.0
        %v3310 = vsub.f32 %v1208, 3.0
        %v3311 = vsub.f32 %v1209, 3.0
        %v3312 = vsub.f32 %v1210, 3.0
        %v3313 = vsub.f32 %v1211, 3.0
        %v3314 = vsub.f32 %v1212, 3.0
        %v3315 = vsub.f32 %v1213, 3.0
        %v3316 = vsub.f32 %v1214, 3.0
        %v3317 = vsub.f32 %v1215, 3.0
        %v3318 = vsub.f32 %v1216, 3.0
        %v3319 = vand.u32 2147483647, %v3307
        %v3320 = vand.u32 2147483647, %v3308
        %v3321 = vand.u32 2147483647, %v3309
        %v3322 = vand.u32 2147483647, %v3310
        %v3323 = vand.u32 2147483647, %v3311
        %v3324 = vand.u32 2147483647, %v3312
        %v3325 = vand.u32 2147483647, %v3313
        %v3326 = vand.u32 2147483647, %v3314
        %v3327 = vand.u32 2147483647, %v3315
        %v3328 = vand.u32 2147483647, %v3316
        %v3329 = vand.u32 2147483647, %v3317
        %v3330 = vand.u32 2147483647, %v3318
        %v3331 = vmul.f32 %v1169, %v3319
        %v3332 = vmul.f32 %v1170, %v3320
        %v3333 = vmul.f32 %v1171, %v3321
        %v3334 = vmul.f32 %v1172, %v3322
        %v3335 = vmul.f32 %v1173, %v3323
        %v3336 = vmul.f32 %v1174, %v3324
        %v3337 = vmul.f32 %v1175, %v3325
        %v3338 = vmul.f32 %v1176, %v3326
        %v3339 = vmul.f32 %v1177, %v3327
        %v3340 = vmul.f32 %v1178, %v3328
        %v3341 = vmul.f32 %v1179, %v3329
        %v3342 = vmul.f32 %v1180, %v3330
        %v3343 = vadd.f32 %v3331, 0.0001
        %v3344 = vadd.f32 %v3332, 0.0001
        %v3345 = vadd.f32 %v3333, 0.0001
        %v3346 = vadd.f32 %v3334, 0.0001
        %v3347 = vadd.f32 %v3335, 0.0001
        %v3348 = vadd.f32 %v3336, 0.0001
        %v3349 = vadd.f32 %v3337, 0.0001
        %v3350 = vadd.f32 %v3338, 0.0001
        %v3351 = vadd.f32 %v3339, 0.0001
        %v3352 = vadd.f32 %v3340, 0.0001
        %v3353 = vadd.f32 %v3341, 0.0001
        %v3354 = vadd.f32 %v3342, 0.0001
        %v3355 = vlog2.pop %v3343
        %v3356 = vmul.f32 %v3355, 0.6931472
        %v3357 = vlog2.pop %v3344
        %v3358 = vmul.f32 %v3357, 0.6931472
        %v3359 = vlog2.pop %v3345
        %v3360 = vmul.f32 %v3359, 0.6931472
        %v3361 = vlog2.pop %v3346
        %v3362 = vmul.f32 %v3361, 0.6931472
        %v3363 = vlog2.pop %v3347
        %v3364 = vmul.f32 %v3363, 0.6931472
        %v3365 = vlog2.pop %v3348
        %v3366 = vmul.f32 %v3365, 0.6931472
        %v3367 = vlog2.pop %v3349
        %v3368 = vmul.f32 %v3367, 0.6931472
        %v3369 = vlog2.pop %v3350
        %v3370 = vmul.f32 %v3369, 0.6931472
        %v3371 = vlog2.pop %v3351
        %v3372 = vmul.f32 %v3371, 0.6931472
        %v3373 = vlog2.pop %v3352
        %v3374 = vmul.f32 %v3373, 0.6931472
        %v3375 = vlog2.pop %v3353
        %v3376 = vmul.f32 %v3375, 0.6931472
        %v3377 = vlog2.pop %v3354
        %v3378 = vmul.f32 %v3377, 0.6931472
        %v3379 = vmul.f32 %v3356, -1.2
        %v3380 = vmul.f32 %v3358, -1.2
        %v3381 = vmul.f32 %v3360, -1.2
        %v3382 = vmul.f32 %v3362, -1.2
        %v3383 = vmul.f32 %v3364, -1.2
        %v3384 = vmul.f32 %v3366, -1.2
        %v3385 = vmul.f32 %v3368, -1.2
        %v3386 = vmul.f32 %v3370, -1.2
        %v3387 = vmul.f32 %v3372, -1.2
        %v3388 = vmul.f32 %v3374, -1.2
        %v3389 = vmul.f32 %v3376, -1.2
        %v3390 = vmul.f32 %v3378, -1.2
        %v3391 = vmul.f32 %v3379, 1.442695
        %v3392 = vpow.pop %v3391
        %v3393 = vmul.f32 %v3380, 1.442695
        %v3394 = vpow.pop %v3393
        %v3395 = vmul.f32 %v3381, 1.442695
        %v3396 = vpow.pop %v3395
        %v3397 = vmul.f32 %v3382, 1.442695
        %v3398 = vpow.pop %v3397
        %v3399 = vmul.f32 %v3383, 1.442695
        %v3400 = vpow.pop %v3399
        %v3401 = vmul.f32 %v3384, 1.442695
        %v3402 = vpow.pop %v3401
        %v3403 = vmul.f32 %v3385, 1.442695
        %v3404 = vpow.pop %v3403
        %v3405 = vmul.f32 %v3386, 1.442695
        %v3406 = vpow.pop %v3405
        %v3407 = vmul.f32 %v3387, 1.442695
        %v3408 = vpow.pop %v3407
        %v3409 = vmul.f32 %v3388, 1.442695
        %v3410 = vpow.pop %v3409
        %v3411 = vmul.f32 %v3389, 1.442695
        %v3412 = vpow.pop %v3411
        %v3413 = vmul.f32 %v3390, 1.442695
        %v3414 = vpow.pop %v3413
        %v3415 = vmul.f32 %v3392, %v347
        %v3416 = vmul.f32 %v3394, %v348
        %v3417 = vmul.f32 %v3396, %v349
        %v3418 = vmul.f32 %v3398, %v350
        %v3419 = vmul.f32 %v3400, %v351
        %v3420 = vmul.f32 %v3402, %v352
        %v3421 = vmul.f32 %v3404, %v353
        %v3422 = vmul.f32 %v3406, %v354
        %v3423 = vmul.f32 %v3408, %v355
        %v3424 = vmul.f32 %v3410, %v356
        %v3425 = vmul.f32 %v3412, %v357
        %v3426 = vmul.f32 %v3414, %v358
        %v3427 = vmul.f32 %v3392, %v1181
        %v3428 = vmul.f32 %v3394, %v1182
        %v3429 = vmul.f32 %v3396, %v1183
        %v3430 = vmul.f32 %v3398, %v1184
        %v3431 = vmul.f32 %v3400, %v1185
        %v3432 = vmul.f32 %v3402, %v1186
        %v3433 = vmul.f32 %v3404, %v1187
        %v3434 = vmul.f32 %v3406, %v1188
        %v3435 = vmul.f32 %v3408, %v1189
        %v3436 = vmul.f32 %v3410, %v1190
        %v3437 = vmul.f32 %v3412, %v1191
        %v3438 = vmul.f32 %v3414, %v1192
        %v3440 = vsel %vm1361, %v3392, 0
        %v3443 = vsel %vm1361, %v3394, 0
        %v3446 = vsel %vm1361, %v3396, 0
        %v3449 = vsel %vm1361, %v3398, 0
        %v3452 = vsel %vm1361, %v3400, 0
        %v3455 = vsel %vm1361, %v3402, 0
        %v3458 = vsel %vm1361, %v3404, 0
        %v3461 = vsel %vm1361, %v3406, 0
        %v3464 = vsel %vm1361, %v3408, 0
        %v3467 = vsel %vm1361, %v3410, 0
        %v3470 = vsel %vm1361, %v3412, 0
        %v3473 = vsel %vm1361, %v3414, 0
        %v3476 = vsel %vm1361, %v3415, 0
        %v3479 = vsel %vm1361, %v3416, 0
        %v3482 = vsel %vm1361, %v3417, 0
        %v3485 = vsel %vm1361, %v3418, 0
        %v3488 = vsel %vm1361, %v3419, 0
        %v3491 = vsel %vm1361, %v3420, 0
        %v3494 = vsel %vm1361, %v3421, 0
        %v3497 = vsel %vm1361, %v3422, 0
        %v3500 = vsel %vm1361, %v3423, 0
        %v3503 = vsel %vm1361, %v3424, 0
        %v3506 = vsel %vm1361, %v3425, 0
        %v3509 = vsel %vm1361, %v3426, 0
        %v3512 = vsel %vm1361, %v3427, 0
        %v3515 = vsel %vm1361, %v3428, 0
        %v3518 = vsel %vm1361, %v3429, 0
        %v3521 = vsel %vm1361, %v3430, 0
        %v3524 = vsel %vm1361, %v3431, 0
        %v3527 = vsel %vm1361, %v3432, 0
        %v3530 = vsel %vm1361, %v3433, 0
        %v3533 = vsel %vm1361, %v3434, 0
        %v3536 = vsel %vm1361, %v3435, 0
        %v3539 = vsel %vm1361, %v3436, 0
        %v3542 = vsel %vm1361, %v3437, 0
        %v3545 = vsel %vm1361, %v3438, 0
        %3547 = vmatpush.msra.mxu0 0.0
        %3548 = vmatpush.msra.mxu0 %v385
        %3549 = vmatpush.msra.mxu0 %v384
        %3550 = vmatpush.msra.mxu0 %v383
        %3551 = vmatpush.msra.mxu0 %v382
        %3552 = vmatpush.msra.mxu0 %v381
        %3553 = vmatpush.msra.mxu0 %v380
        %3554 = vmatpush.msra.mxu0 %v379
        %3555 = vmatpush.msra.mxu0 %v378
        %3556 = vmatpush.msra.mxu0 %v377
        %3557 = vmatpush.msra.mxu0 %v376
        %3558 = vmatpush.msra.mxu0 %v375
        %3559 = vmatpush.msra.mxu0 %v374
        %3560 = vmatpush.msra.mxu0 %v373
        %3561 = vmatpush.msra.mxu0 %v372
        %3562 = vmatpush.msra.mxu0 %v371
        %3563 = vmatmul.f32.gmra.mxu0 %v3440
        %v3564 = vpop.f32.mrf.mxu0
        %v3565 = vadd.f32 0.0, %v3564
        %3566 = vmatmul.f32.gmra.mxu0 %v3443
        %v3567 = vpop.f32.mrf.mxu0
        %v3568 = vadd.f32 0.0, %v3567
        %3569 = vmatmul.f32.gmra.mxu0 %v3446
        %v3570 = vpop.f32.mrf.mxu0
        %v3571 = vadd.f32 0.0, %v3570
        %3572 = vmatmul.f32.gmra.mxu0 %v3449
        %v3573 = vpop.f32.mrf.mxu0
        %v3574 = vadd.f32 0.0, %v3573
        %3575 = vmatmul.f32.gmra.mxu0 %v3452
        %v3576 = vpop.f32.mrf.mxu0
        %v3577 = vadd.f32 0.0, %v3576
        %3578 = vmatmul.f32.gmra.mxu0 %v3455
        %v3579 = vpop.f32.mrf.mxu0
        %v3580 = vadd.f32 0.0, %v3579
        %3581 = vmatmul.f32.gmra.mxu0 %v3458
        %v3582 = vpop.f32.mrf.mxu0
        %v3583 = vadd.f32 0.0, %v3582
        %3584 = vmatmul.f32.gmra.mxu0 %v3461
        %v3585 = vpop.f32.mrf.mxu0
        %v3586 = vadd.f32 0.0, %v3585
        %3587 = vmatmul.f32.gmra.mxu0 %v3464
        %v3588 = vpop.f32.mrf.mxu0
        %v3589 = vadd.f32 0.0, %v3588
        %3590 = vmatmul.f32.gmra.mxu0 %v3467
        %v3591 = vpop.f32.mrf.mxu0
        %v3592 = vadd.f32 0.0, %v3591
        %3593 = vmatmul.f32.gmra.mxu0 %v3470
        %v3594 = vpop.f32.mrf.mxu0
        %v3595 = vadd.f32 0.0, %v3594
        %3596 = vmatmul.f32.gmra.mxu0 %v3473
        %v3597 = vpop.f32.mrf.mxu0
        %v3598 = vadd.f32 0.0, %v3597
        %3599 = vmatmul.f32.gmra.mxu0 %v3476
        %v3600 = vpop.f32.mrf.mxu0
        %v3601 = vadd.f32 0.0, %v3600
        %3602 = vmatmul.f32.gmra.mxu0 %v3479
        %v3603 = vpop.f32.mrf.mxu0
        %v3604 = vadd.f32 0.0, %v3603
        %3605 = vmatmul.f32.gmra.mxu0 %v3482
        %v3606 = vpop.f32.mrf.mxu0
        %v3607 = vadd.f32 0.0, %v3606
        %3608 = vmatmul.f32.gmra.mxu0 %v3485
        %v3609 = vpop.f32.mrf.mxu0
        %v3610 = vadd.f32 0.0, %v3609
        %3611 = vmatmul.f32.gmra.mxu0 %v3488
        %v3612 = vpop.f32.mrf.mxu0
        %v3613 = vadd.f32 0.0, %v3612
        %3614 = vmatmul.f32.gmra.mxu0 %v3491
        %v3615 = vpop.f32.mrf.mxu0
        %v3616 = vadd.f32 0.0, %v3615
        %3617 = vmatmul.f32.gmra.mxu0 %v3494
        %v3618 = vpop.f32.mrf.mxu0
        %v3619 = vadd.f32 0.0, %v3618
        %3620 = vmatmul.f32.gmra.mxu0 %v3497
        %v3621 = vpop.f32.mrf.mxu0
        %v3622 = vadd.f32 0.0, %v3621
        %3623 = vmatmul.f32.gmra.mxu0 %v3500
        %v3624 = vpop.f32.mrf.mxu0
        %v3625 = vadd.f32 0.0, %v3624
        %3626 = vmatmul.f32.gmra.mxu0 %v3503
        %v3627 = vpop.f32.mrf.mxu0
        %v3628 = vadd.f32 0.0, %v3627
        %3629 = vmatmul.f32.gmra.mxu0 %v3506
        %v3630 = vpop.f32.mrf.mxu0
        %v3631 = vadd.f32 0.0, %v3630
        %3632 = vmatmul.f32.gmra.mxu0 %v3509
        %v3633 = vpop.f32.mrf.mxu0
        %v3634 = vadd.f32 0.0, %v3633
        %3635 = vmatmul.f32.gmra.mxu0 %v3512
        %v3636 = vpop.f32.mrf.mxu0
        %v3637 = vadd.f32 0.0, %v3636
        %3638 = vmatmul.f32.gmra.mxu0 %v3515
        %v3639 = vpop.f32.mrf.mxu0
        %v3640 = vadd.f32 0.0, %v3639
        %3641 = vmatmul.f32.gmra.mxu0 %v3518
        %v3642 = vpop.f32.mrf.mxu0
        %v3643 = vadd.f32 0.0, %v3642
        %3644 = vmatmul.f32.gmra.mxu0 %v3521
        %v3645 = vpop.f32.mrf.mxu0
        %v3646 = vadd.f32 0.0, %v3645
        %3647 = vmatmul.f32.gmra.mxu0 %v3524
        %v3648 = vpop.f32.mrf.mxu0
        %v3649 = vadd.f32 0.0, %v3648
        %3650 = vmatmul.f32.gmra.mxu0 %v3527
        %v3651 = vpop.f32.mrf.mxu0
        %v3652 = vadd.f32 0.0, %v3651
        %3653 = vmatmul.f32.gmra.mxu0 %v3530
        %v3654 = vpop.f32.mrf.mxu0
        %v3655 = vadd.f32 0.0, %v3654
        %3656 = vmatmul.f32.gmra.mxu0 %v3533
        %v3657 = vpop.f32.mrf.mxu0
        %v3658 = vadd.f32 0.0, %v3657
        %3659 = vmatmul.f32.gmra.mxu0 %v3536
        %v3660 = vpop.f32.mrf.mxu0
        %v3661 = vadd.f32 0.0, %v3660
        %3662 = vmatmul.f32.gmra.mxu0 %v3539
        %v3663 = vpop.f32.mrf.mxu0
        %v3664 = vadd.f32 0.0, %v3663
        %3665 = vmatmul.f32.gmra.mxu0 %v3542
        %v3666 = vpop.f32.mrf.mxu0
        %v3667 = vadd.f32 0.0, %v3666
        %3668 = vmatmul.f32.gmra.mxu0 %v3545
        %v3669 = vpop.f32.mrf.mxu0
        %v3670 = vadd.f32 0.0, %v3669
        %3671 = vdwg.mxu0
        %3672 = vmatpush.msra.mxu0 0.0
        %3673 = vmatpush.msra.mxu0 0.0
        %3674 = vmatpush.msra.mxu0 0.0
        %3675 = vmatpush.msra.mxu0 0.0
        %3676 = vmatpush.msra.mxu0 %v3598
        %3677 = vmatpush.msra.mxu0 %v3595
        %3678 = vmatpush.msra.mxu0 %v3592
        %3679 = vmatpush.msra.mxu0 %v3589
        %3680 = vmatpush.msra.mxu0 %v3586
        %3681 = vmatpush.msra.mxu0 %v3583
        %3682 = vmatpush.msra.mxu0 %v3580
        %3683 = vmatpush.msra.mxu0 %v3577
        %3684 = vmatpush.msra.mxu0 %v3574
        %3685 = vmatpush.msra.mxu0 %v3571
        %3686 = vmatpush.msra.mxu0 %v3568
        %3687 = vmatpush.msra.mxu0 %v3565
        %3688 = vmatmul.f32.gmra.mxu0 %v1597
        %v3689 = vpop.f32.mrf.mxu0
        %v3690 = vadd.f32 0.0, %v3689
        %3691 = vmatmul.f32.gmra.mxu0 %v1600
        %v3692 = vpop.f32.mrf.mxu0
        %v3693 = vadd.f32 0.0, %v3692
        %3694 = vmatmul.f32.gmra.mxu0 %v1603
        %v3695 = vpop.f32.mrf.mxu0
        %v3696 = vadd.f32 0.0, %v3695
        %3697 = vmatmul.f32.gmra.mxu0 %v1606
        %v3698 = vpop.f32.mrf.mxu0
        %v3699 = vadd.f32 0.0, %v3698
        %3700 = vmatmul.f32.gmra.mxu0 %v1609
        %v3701 = vpop.f32.mrf.mxu0
        %v3702 = vadd.f32 0.0, %v3701
        %3703 = vmatmul.f32.gmra.mxu0 %v1612
        %v3704 = vpop.f32.mrf.mxu0
        %v3705 = vadd.f32 0.0, %v3704
        %3706 = vmatmul.f32.gmra.mxu0 %v1615
        %v3707 = vpop.f32.mrf.mxu0
        %v3708 = vadd.f32 0.0, %v3707
        %3709 = vmatmul.f32.gmra.mxu0 %v1618
        %v3710 = vpop.f32.mrf.mxu0
        %v3711 = vadd.f32 0.0, %v3710
        %3712 = vmatmul.f32.gmra.mxu0 %v1621
        %v3713 = vpop.f32.mrf.mxu0
        %v3714 = vadd.f32 0.0, %v3713
        %3715 = vmatmul.f32.gmra.mxu0 %v1624
        %v3716 = vpop.f32.mrf.mxu0
        %v3717 = vadd.f32 0.0, %v3716
        %3718 = vmatmul.f32.gmra.mxu0 %v1627
        %v3719 = vpop.f32.mrf.mxu0
        %v3720 = vadd.f32 0.0, %v3719
        %3721 = vmatmul.f32.gmra.mxu0 %v1630
        %v3722 = vpop.f32.mrf.mxu0
        %v3723 = vadd.f32 0.0, %v3722
        %3724 = vdwg.mxu0
        %3725 = vmatpush.msra.mxu0 0.0
        %3726 = vmatpush.msra.mxu0 0.0
        %3727 = vmatpush.msra.mxu0 0.0
        %3728 = vmatpush.msra.mxu0 0.0
        %3729 = vmatpush.msra.mxu0 %v3634
        %3730 = vmatpush.msra.mxu0 %v3631
        %3731 = vmatpush.msra.mxu0 %v3628
        %3732 = vmatpush.msra.mxu0 %v3625
        %3733 = vmatpush.msra.mxu0 %v3622
        %3734 = vmatpush.msra.mxu0 %v3619
        %3735 = vmatpush.msra.mxu0 %v3616
        %3736 = vmatpush.msra.mxu0 %v3613
        %3737 = vmatpush.msra.mxu0 %v3610
        %3738 = vmatpush.msra.mxu0 %v3607
        %3739 = vmatpush.msra.mxu0 %v3604
        %3740 = vmatpush.msra.mxu0 %v3601
        %3741 = vmatmul.f32.gmra.mxu0 %v1597
        %v3742 = vpop.f32.mrf.mxu0
        %v3743 = vadd.f32 0.0, %v3742
        %3744 = vmatmul.f32.gmra.mxu0 %v1600
        %v3745 = vpop.f32.mrf.mxu0
        %v3746 = vadd.f32 0.0, %v3745
        %3747 = vmatmul.f32.gmra.mxu0 %v1603
        %v3748 = vpop.f32.mrf.mxu0
        %v3749 = vadd.f32 0.0, %v3748
        %3750 = vmatmul.f32.gmra.mxu0 %v1606
        %v3751 = vpop.f32.mrf.mxu0
        %v3752 = vadd.f32 0.0, %v3751
        %3753 = vmatmul.f32.gmra.mxu0 %v1609
        %v3754 = vpop.f32.mrf.mxu0
        %v3755 = vadd.f32 0.0, %v3754
        %3756 = vmatmul.f32.gmra.mxu0 %v1612
        %v3757 = vpop.f32.mrf.mxu0
        %v3758 = vadd.f32 0.0, %v3757
        %3759 = vmatmul.f32.gmra.mxu0 %v1615
        %v3760 = vpop.f32.mrf.mxu0
        %v3761 = vadd.f32 0.0, %v3760
        %3762 = vmatmul.f32.gmra.mxu0 %v1618
        %v3763 = vpop.f32.mrf.mxu0
        %v3764 = vadd.f32 0.0, %v3763
        %3765 = vmatmul.f32.gmra.mxu0 %v1621
        %v3766 = vpop.f32.mrf.mxu0
        %v3767 = vadd.f32 0.0, %v3766
        %3768 = vmatmul.f32.gmra.mxu0 %v1624
        %v3769 = vpop.f32.mrf.mxu0
        %v3770 = vadd.f32 0.0, %v3769
        %3771 = vmatmul.f32.gmra.mxu0 %v1627
        %v3772 = vpop.f32.mrf.mxu0
        %v3773 = vadd.f32 0.0, %v3772
        %3774 = vmatmul.f32.gmra.mxu0 %v1630
        %v3775 = vpop.f32.mrf.mxu0
        %v3776 = vadd.f32 0.0, %v3775
        %3777 = vdwg.mxu0
        %3778 = vmatpush.msra.mxu0 0.0
        %3779 = vmatpush.msra.mxu0 0.0
        %3780 = vmatpush.msra.mxu0 0.0
        %3781 = vmatpush.msra.mxu0 0.0
        %3782 = vmatpush.msra.mxu0 %v3670
        %3783 = vmatpush.msra.mxu0 %v3667
        %3784 = vmatpush.msra.mxu0 %v3664
        %3785 = vmatpush.msra.mxu0 %v3661
        %3786 = vmatpush.msra.mxu0 %v3658
        %3787 = vmatpush.msra.mxu0 %v3655
        %3788 = vmatpush.msra.mxu0 %v3652
        %3789 = vmatpush.msra.mxu0 %v3649
        %3790 = vmatpush.msra.mxu0 %v3646
        %3791 = vmatpush.msra.mxu0 %v3643
        %3792 = vmatpush.msra.mxu0 %v3640
        %3793 = vmatpush.msra.mxu0 %v3637
        %3794 = vmatmul.f32.gmra.mxu0 %v1597
        %v3795 = vpop.f32.mrf.mxu0
        %v3796 = vadd.f32 0.0, %v3795
        %3797 = vmatmul.f32.gmra.mxu0 %v1600
        %v3798 = vpop.f32.mrf.mxu0
        %v3799 = vadd.f32 0.0, %v3798
        %3800 = vmatmul.f32.gmra.mxu0 %v1603
        %v3801 = vpop.f32.mrf.mxu0
        %v3802 = vadd.f32 0.0, %v3801
        %3803 = vmatmul.f32.gmra.mxu0 %v1606
        %v3804 = vpop.f32.mrf.mxu0
        %v3805 = vadd.f32 0.0, %v3804
        %3806 = vmatmul.f32.gmra.mxu0 %v1609
        %v3807 = vpop.f32.mrf.mxu0
        %v3808 = vadd.f32 0.0, %v3807
        %3809 = vmatmul.f32.gmra.mxu0 %v1612
        %v3810 = vpop.f32.mrf.mxu0
        %v3811 = vadd.f32 0.0, %v3810
        %3812 = vmatmul.f32.gmra.mxu0 %v1615
        %v3813 = vpop.f32.mrf.mxu0
        %v3814 = vadd.f32 0.0, %v3813
        %3815 = vmatmul.f32.gmra.mxu0 %v1618
        %v3816 = vpop.f32.mrf.mxu0
        %v3817 = vadd.f32 0.0, %v3816
        %3818 = vmatmul.f32.gmra.mxu0 %v1621
        %v3819 = vpop.f32.mrf.mxu0
        %v3820 = vadd.f32 0.0, %v3819
        %3821 = vmatmul.f32.gmra.mxu0 %v1624
        %v3822 = vpop.f32.mrf.mxu0
        %v3823 = vadd.f32 0.0, %v3822
        %3824 = vmatmul.f32.gmra.mxu0 %v1627
        %v3825 = vpop.f32.mrf.mxu0
        %v3826 = vadd.f32 0.0, %v3825
        %3827 = vmatmul.f32.gmra.mxu0 %v1630
        %v3828 = vpop.f32.mrf.mxu0
        %v3829 = vadd.f32 0.0, %v3828
        %3830 = vdwg.mxu0
        %v3831 = vmul.f32 %v3690, %v1181
        %v3832 = vmul.f32 %v3693, %v1182
        %v3833 = vmul.f32 %v3696, %v1183
        %v3834 = vmul.f32 %v3699, %v1184
        %v3835 = vmul.f32 %v3702, %v1185
        %v3836 = vmul.f32 %v3705, %v1186
        %v3837 = vmul.f32 %v3708, %v1187
        %v3838 = vmul.f32 %v3711, %v1188
        %v3839 = vmul.f32 %v3714, %v1189
        %v3840 = vmul.f32 %v3717, %v1190
        %v3841 = vmul.f32 %v3720, %v1191
        %v3842 = vmul.f32 %v3723, %v1192
        %v3843 = vmul.f32 %v1803, %v3743
        %v3844 = vmul.f32 %v1804, %v3746
        %v3845 = vmul.f32 %v1805, %v3749
        %v3846 = vmul.f32 %v1806, %v3752
        %v3847 = vmul.f32 %v1807, %v3755
        %v3848 = vmul.f32 %v1808, %v3758
        %v3849 = vmul.f32 %v1809, %v3761
        %v3850 = vmul.f32 %v1810, %v3764
        %v3851 = vmul.f32 %v1811, %v3767
        %v3852 = vmul.f32 %v1812, %v3770
        %v3853 = vmul.f32 %v1813, %v3773
        %v3854 = vmul.f32 %v1814, %v3776
        %v3855 = vsub.f32 %v3831, %v3843
        %v3856 = vsub.f32 %v3832, %v3844
        %v3857 = vsub.f32 %v3833, %v3845
        %v3858 = vsub.f32 %v3834, %v3846
        %v3859 = vsub.f32 %v3835, %v3847
        %v3860 = vsub.f32 %v3836, %v3848
        %v3861 = vsub.f32 %v3837, %v3849
        %v3862 = vsub.f32 %v3838, %v3850
        %v3863 = vsub.f32 %v3839, %v3851
        %v3864 = vsub.f32 %v3840, %v3852
        %v3865 = vsub.f32 %v3841, %v3853
        %v3866 = vsub.f32 %v3842, %v3854
        %v3867 = vadd.f32 %v3855, %v3796
        %v3868 = vadd.f32 %v3856, %v3799
        %v3869 = vadd.f32 %v3857, %v3802
        %v3870 = vadd.f32 %v3858, %v3805
        %v3871 = vadd.f32 %v3859, %v3808
        %v3872 = vadd.f32 %v3860, %v3811
        %v3873 = vadd.f32 %v3861, %v3814
        %v3874 = vadd.f32 %v3862, %v3817
        %v3875 = vadd.f32 %v3863, %v3820
        %v3876 = vadd.f32 %v3864, %v3823
        %v3877 = vadd.f32 %v3865, %v3826
        %v3878 = vadd.f32 %v3866, %v3829
        %vm3879 = vcmp.eq.f32.partialorder %v1217, 2.0
        %vm3880 = vcmp.eq.f32.partialorder %v1218, 2.0
        %vm3881 = vcmp.eq.f32.partialorder %v1219, 2.0
        %vm3882 = vcmp.eq.f32.partialorder %v1220, 2.0
        %vm3883 = vcmp.eq.f32.partialorder %v1221, 2.0
        %vm3884 = vcmp.eq.f32.partialorder %v1222, 2.0
        %vm3885 = vcmp.eq.f32.partialorder %v1223, 2.0
        %vm3886 = vcmp.eq.f32.partialorder %v1224, 2.0
        %vm3887 = vcmp.eq.f32.partialorder %v1225, 2.0
        %vm3888 = vcmp.eq.f32.partialorder %v1226, 2.0
        %vm3889 = vcmp.eq.f32.partialorder %v1227, 2.0
        %vm3890 = vcmp.eq.f32.partialorder %v1228, 2.0
        %v3891 = vsub.f32 3.0, %v1205
        %v3892 = vsub.f32 3.0, %v1206
        %v3893 = vsub.f32 3.0, %v1207
        %v3894 = vsub.f32 3.0, %v1208
        %v3895 = vsub.f32 3.0, %v1209
        %v3896 = vsub.f32 3.0, %v1210
        %v3897 = vsub.f32 3.0, %v1211
        %v3898 = vsub.f32 3.0, %v1212
        %v3899 = vsub.f32 3.0, %v1213
        %v3900 = vsub.f32 3.0, %v1214
        %v3901 = vsub.f32 3.0, %v1215
        %v3902 = vsub.f32 3.0, %v1216
        %v3903 = vsel %vm3879, %v3891, 0.0
        %v3904 = vsel %vm3880, %v3892, 0.0
        %v3905 = vsel %vm3881, %v3893, 0.0
        %v3906 = vsel %vm3882, %v3894, 0.0
        %v3907 = vsel %vm3883, %v3895, 0.0
        %v3908 = vsel %vm3884, %v3896, 0.0
        %v3909 = vsel %vm3885, %v3897, 0.0
        %v3910 = vsel %vm3886, %v3898, 0.0
        %v3911 = vsel %vm3887, %v3899, 0.0
        %v3912 = vsel %vm3888, %v3900, 0.0
        %v3913 = vsel %vm3889, %v3901, 0.0
        %v3914 = vsel %vm3890, %v3902, 0.0
        %vm3915 = vcmp.eq.f32.partialorder %v1229, 3.0
        %vm3916 = vcmp.eq.f32.partialorder %v1230, 3.0
        %vm3917 = vcmp.eq.f32.partialorder %v1231, 3.0
        %vm3918 = vcmp.eq.f32.partialorder %v1232, 3.0
        %vm3919 = vcmp.eq.f32.partialorder %v1233, 3.0
        %vm3920 = vcmp.eq.f32.partialorder %v1234, 3.0
        %vm3921 = vcmp.eq.f32.partialorder %v1235, 3.0
        %vm3922 = vcmp.eq.f32.partialorder %v1236, 3.0
        %vm3923 = vcmp.eq.f32.partialorder %v1237, 3.0
        %vm3924 = vcmp.eq.f32.partialorder %v1238, 3.0
        %vm3925 = vcmp.eq.f32.partialorder %v1239, 3.0
        %vm3926 = vcmp.eq.f32.partialorder %v1240, 3.0
        %v3927 = vsel %vm3915, %v2579, 0.0
        %v3928 = vsel %vm3916, %v2580, 0.0
        %v3929 = vsel %vm3917, %v2581, 0.0
        %v3930 = vsel %vm3918, %v2582, 0.0
        %v3931 = vsel %vm3919, %v2583, 0.0
        %v3932 = vsel %vm3920, %v2584, 0.0
        %v3933 = vsel %vm3921, %v2585, 0.0
        %v3934 = vsel %vm3922, %v2586, 0.0
        %v3935 = vsel %vm3923, %v2587, 0.0
        %v3936 = vsel %vm3924, %v2588, 0.0
        %v3937 = vsel %vm3925, %v2589, 0.0
        %v3938 = vsel %vm3926, %v2590, 0.0
        %v3939 = vmul.f32 %v3139, %v3903
        %v3940 = vmul.f32 %v3140, %v3904
        %v3941 = vmul.f32 %v3141, %v3905
        %v3942 = vmul.f32 %v3142, %v3906
        %v3943 = vmul.f32 %v3143, %v3907
        %v3944 = vmul.f32 %v3144, %v3908
        %v3945 = vmul.f32 %v3145, %v3909
        %v3946 = vmul.f32 %v3146, %v3910
        %v3947 = vmul.f32 %v3147, %v3911
        %v3948 = vmul.f32 %v3148, %v3912
        %v3949 = vmul.f32 %v3149, %v3913
        %v3950 = vmul.f32 %v3150, %v3914
        %v3951 = vadd.f32 %v3247, %v3939
        %v3952 = vadd.f32 %v3248, %v3940
        %v3953 = vadd.f32 %v3249, %v3941
        %v3954 = vadd.f32 %v3250, %v3942
        %v3955 = vadd.f32 %v3251, %v3943
        %v3956 = vadd.f32 %v3252, %v3944
        %v3957 = vadd.f32 %v3253, %v3945
        %v3958 = vadd.f32 %v3254, %v3946
        %v3959 = vadd.f32 %v3255, %v3947
        %v3960 = vadd.f32 %v3256, %v3948
        %v3961 = vadd.f32 %v3257, %v3949
        %v3962 = vadd.f32 %v3258, %v3950
        %v3963 = vmul.f32 %v3867, %v3927
        %v3964 = vmul.f32 %v3868, %v3928
        %v3965 = vmul.f32 %v3869, %v3929
        %v3966 = vmul.f32 %v3870, %v3930
        %v3967 = vmul.f32 %v3871, %v3931
        %v3968 = vmul.f32 %v3872, %v3932
        %v3969 = vmul.f32 %v3873, %v3933
        %v3970 = vmul.f32 %v3874, %v3934
        %v3971 = vmul.f32 %v3875, %v3935
        %v3972 = vmul.f32 %v3876, %v3936
        %v3973 = vmul.f32 %v3877, %v3937
        %v3974 = vmul.f32 %v3878, %v3938
        %v3975 = vadd.f32 %v3951, %v3963
        %v3976 = vadd.f32 %v3952, %v3964
        %v3977 = vadd.f32 %v3953, %v3965
        %v3978 = vadd.f32 %v3954, %v3966
        %v3979 = vadd.f32 %v3955, %v3967
        %v3980 = vadd.f32 %v3956, %v3968
        %v3981 = vadd.f32 %v3957, %v3969
        %v3982 = vadd.f32 %v3958, %v3970
        %v3983 = vadd.f32 %v3959, %v3971
        %v3984 = vadd.f32 %v3960, %v3972
        %v3985 = vadd.f32 %v3961, %v3973
        %v3986 = vadd.f32 %v3962, %v3974
        %v3987 = vmul.f32 %v2962, %v3903
        %v3988 = vmul.f32 %v2965, %v3904
        %v3989 = vmul.f32 %v2968, %v3905
        %v3990 = vmul.f32 %v2971, %v3906
        %v3991 = vmul.f32 %v2974, %v3907
        %v3992 = vmul.f32 %v2977, %v3908
        %v3993 = vmul.f32 %v2980, %v3909
        %v3994 = vmul.f32 %v2983, %v3910
        %v3995 = vmul.f32 %v2986, %v3911
        %v3996 = vmul.f32 %v2989, %v3912
        %v3997 = vmul.f32 %v2992, %v3913
        %v3998 = vmul.f32 %v2995, %v3914
        %v3999 = vadd.f32 %v3295, %v3987
        %v4000 = vadd.f32 %v3296, %v3988
        %v4001 = vadd.f32 %v3297, %v3989
        %v4002 = vadd.f32 %v3298, %v3990
        %v4003 = vadd.f32 %v3299, %v3991
        %v4004 = vadd.f32 %v3300, %v3992
        %v4005 = vadd.f32 %v3301, %v3993
        %v4006 = vadd.f32 %v3302, %v3994
        %v4007 = vadd.f32 %v3303, %v3995
        %v4008 = vadd.f32 %v3304, %v3996
        %v4009 = vadd.f32 %v3305, %v3997
        %v4010 = vadd.f32 %v3306, %v3998
        %v4011 = vmul.f32 %v3690, %v3927
        %v4012 = vmul.f32 %v3693, %v3928
        %v4013 = vmul.f32 %v3696, %v3929
        %v4014 = vmul.f32 %v3699, %v3930
        %v4015 = vmul.f32 %v3702, %v3931
        %v4016 = vmul.f32 %v3705, %v3932
        %v4017 = vmul.f32 %v3708, %v3933
        %v4018 = vmul.f32 %v3711, %v3934
        %v4019 = vmul.f32 %v3714, %v3935
        %v4020 = vmul.f32 %v3717, %v3936
        %v4021 = vmul.f32 %v3720, %v3937
        %v4022 = vmul.f32 %v3723, %v3938
        %v4023 = vadd.f32 %v3999, %v4011
        %v4024 = vadd.f32 %v4000, %v4012
        %v4025 = vadd.f32 %v4001, %v4013
        %v4026 = vadd.f32 %v4002, %v4014
        %v4027 = vadd.f32 %v4003, %v4015
        %v4028 = vadd.f32 %v4004, %v4016
        %v4029 = vadd.f32 %v4005, %v4017
        %v4030 = vadd.f32 %v4006, %v4018
        %v4031 = vadd.f32 %v4007, %v4019
        %v4032 = vadd.f32 %v4008, %v4020
        %v4033 = vadd.f32 %v4009, %v4021
        %v4034 = vadd.f32 %v4010, %v4022
        %v4035 = vsub.f32 %v1205, 4.0
        %v4036 = vsub.f32 %v1206, 4.0
        %v4037 = vsub.f32 %v1207, 4.0
        %v4038 = vsub.f32 %v1208, 4.0
        %v4039 = vsub.f32 %v1209, 4.0
        %v4040 = vsub.f32 %v1210, 4.0
        %v4041 = vsub.f32 %v1211, 4.0
        %v4042 = vsub.f32 %v1212, 4.0
        %v4043 = vsub.f32 %v1213, 4.0
        %v4044 = vsub.f32 %v1214, 4.0
        %v4045 = vsub.f32 %v1215, 4.0
        %v4046 = vsub.f32 %v1216, 4.0
        %v4047 = vand.u32 2147483647, %v4035
        %v4048 = vand.u32 2147483647, %v4036
        %v4049 = vand.u32 2147483647, %v4037
        %v4050 = vand.u32 2147483647, %v4038
        %v4051 = vand.u32 2147483647, %v4039
        %v4052 = vand.u32 2147483647, %v4040
        %v4053 = vand.u32 2147483647, %v4041
        %v4054 = vand.u32 2147483647, %v4042
        %v4055 = vand.u32 2147483647, %v4043
        %v4056 = vand.u32 2147483647, %v4044
        %v4057 = vand.u32 2147483647, %v4045
        %v4058 = vand.u32 2147483647, %v4046
        %v4059 = vmul.f32 %v1169, %v4047
        %v4060 = vmul.f32 %v1170, %v4048
        %v4061 = vmul.f32 %v1171, %v4049
        %v4062 = vmul.f32 %v1172, %v4050
        %v4063 = vmul.f32 %v1173, %v4051
        %v4064 = vmul.f32 %v1174, %v4052
        %v4065 = vmul.f32 %v1175, %v4053
        %v4066 = vmul.f32 %v1176, %v4054
        %v4067 = vmul.f32 %v1177, %v4055
        %v4068 = vmul.f32 %v1178, %v4056
        %v4069 = vmul.f32 %v1179, %v4057
        %v4070 = vmul.f32 %v1180, %v4058
        %v4071 = vadd.f32 %v4059, 0.0001
        %v4072 = vadd.f32 %v4060, 0.0001
        %v4073 = vadd.f32 %v4061, 0.0001
        %v4074 = vadd.f32 %v4062, 0.0001
        %v4075 = vadd.f32 %v4063, 0.0001
        %v4076 = vadd.f32 %v4064, 0.0001
        %v4077 = vadd.f32 %v4065, 0.0001
        %v4078 = vadd.f32 %v4066, 0.0001
        %v4079 = vadd.f32 %v4067, 0.0001
        %v4080 = vadd.f32 %v4068, 0.0001
        %v4081 = vadd.f32 %v4069, 0.0001
        %v4082 = vadd.f32 %v4070, 0.0001
        %v4083 = vlog2.pop %v4071
        %v4084 = vmul.f32 %v4083, 0.6931472
        %v4085 = vlog2.pop %v4072
        %v4086 = vmul.f32 %v4085, 0.6931472
        %v4087 = vlog2.pop %v4073
        %v4088 = vmul.f32 %v4087, 0.6931472
        %v4089 = vlog2.pop %v4074
        %v4090 = vmul.f32 %v4089, 0.6931472
        %v4091 = vlog2.pop %v4075
        %v4092 = vmul.f32 %v4091, 0.6931472
        %v4093 = vlog2.pop %v4076
        %v4094 = vmul.f32 %v4093, 0.6931472
        %v4095 = vlog2.pop %v4077
        %v4096 = vmul.f32 %v4095, 0.6931472
        %v4097 = vlog2.pop %v4078
        %v4098 = vmul.f32 %v4097, 0.6931472
        %v4099 = vlog2.pop %v4079
        %v4100 = vmul.f32 %v4099, 0.6931472
        %v4101 = vlog2.pop %v4080
        %v4102 = vmul.f32 %v4101, 0.6931472
        %v4103 = vlog2.pop %v4081
        %v4104 = vmul.f32 %v4103, 0.6931472
        %v4105 = vlog2.pop %v4082
        %v4106 = vmul.f32 %v4105, 0.6931472
        %v4107 = vmul.f32 %v4084, -1.2
        %v4108 = vmul.f32 %v4086, -1.2
        %v4109 = vmul.f32 %v4088, -1.2
        %v4110 = vmul.f32 %v4090, -1.2
        %v4111 = vmul.f32 %v4092, -1.2
        %v4112 = vmul.f32 %v4094, -1.2
        %v4113 = vmul.f32 %v4096, -1.2
        %v4114 = vmul.f32 %v4098, -1.2
        %v4115 = vmul.f32 %v4100, -1.2
        %v4116 = vmul.f32 %v4102, -1.2
        %v4117 = vmul.f32 %v4104, -1.2
        %v4118 = vmul.f32 %v4106, -1.2
        %v4119 = vmul.f32 %v4107, 1.442695
        %v4120 = vpow.pop %v4119
        %v4121 = vmul.f32 %v4108, 1.442695
        %v4122 = vpow.pop %v4121
        %v4123 = vmul.f32 %v4109, 1.442695
        %v4124 = vpow.pop %v4123
        %v4125 = vmul.f32 %v4110, 1.442695
        %v4126 = vpow.pop %v4125
        %v4127 = vmul.f32 %v4111, 1.442695
        %v4128 = vpow.pop %v4127
        %v4129 = vmul.f32 %v4112, 1.442695
        %v4130 = vpow.pop %v4129
        %v4131 = vmul.f32 %v4113, 1.442695
        %v4132 = vpow.pop %v4131
        %v4133 = vmul.f32 %v4114, 1.442695
        %v4134 = vpow.pop %v4133
        %v4135 = vmul.f32 %v4115, 1.442695
        %v4136 = vpow.pop %v4135
        %v4137 = vmul.f32 %v4116, 1.442695
        %v4138 = vpow.pop %v4137
        %v4139 = vmul.f32 %v4117, 1.442695
        %v4140 = vpow.pop %v4139
        %v4141 = vmul.f32 %v4118, 1.442695
        %v4142 = vpow.pop %v4141
        %v4143 = vmul.f32 %v4120, %v347
        %v4144 = vmul.f32 %v4122, %v348
        %v4145 = vmul.f32 %v4124, %v349
        %v4146 = vmul.f32 %v4126, %v350
        %v4147 = vmul.f32 %v4128, %v351
        %v4148 = vmul.f32 %v4130, %v352
        %v4149 = vmul.f32 %v4132, %v353
        %v4150 = vmul.f32 %v4134, %v354
        %v4151 = vmul.f32 %v4136, %v355
        %v4152 = vmul.f32 %v4138, %v356
        %v4153 = vmul.f32 %v4140, %v357
        %v4154 = vmul.f32 %v4142, %v358
        %v4155 = vmul.f32 %v4120, %v1181
        %v4156 = vmul.f32 %v4122, %v1182
        %v4157 = vmul.f32 %v4124, %v1183
        %v4158 = vmul.f32 %v4126, %v1184
        %v4159 = vmul.f32 %v4128, %v1185
        %v4160 = vmul.f32 %v4130, %v1186
        %v4161 = vmul.f32 %v4132, %v1187
        %v4162 = vmul.f32 %v4134, %v1188
        %v4163 = vmul.f32 %v4136, %v1189
        %v4164 = vmul.f32 %v4138, %v1190
        %v4165 = vmul.f32 %v4140, %v1191
        %v4166 = vmul.f32 %v4142, %v1192
        %v4168 = vsel %vm1361, %v4120, 0
        %v4171 = vsel %vm1361, %v4122, 0
        %v4174 = vsel %vm1361, %v4124, 0
        %v4177 = vsel %vm1361, %v4126, 0
        %v4180 = vsel %vm1361, %v4128, 0
        %v4183 = vsel %vm1361, %v4130, 0
        %v4186 = vsel %vm1361, %v4132, 0
        %v4189 = vsel %vm1361, %v4134, 0
        %v4192 = vsel %vm1361, %v4136, 0
        %v4195 = vsel %vm1361, %v4138, 0
        %v4198 = vsel %vm1361, %v4140, 0
        %v4201 = vsel %vm1361, %v4142, 0
        %v4204 = vsel %vm1361, %v4143, 0
        %v4207 = vsel %vm1361, %v4144, 0
        %v4210 = vsel %vm1361, %v4145, 0
        %v4213 = vsel %vm1361, %v4146, 0
        %v4216 = vsel %vm1361, %v4147, 0
        %v4219 = vsel %vm1361, %v4148, 0
        %v4222 = vsel %vm1361, %v4149, 0
        %v4225 = vsel %vm1361, %v4150, 0
        %v4228 = vsel %vm1361, %v4151, 0
        %v4231 = vsel %vm1361, %v4152, 0
        %v4234 = vsel %vm1361, %v4153, 0
        %v4237 = vsel %vm1361, %v4154, 0
        %v4240 = vsel %vm1361, %v4155, 0
        %v4243 = vsel %vm1361, %v4156, 0
        %v4246 = vsel %vm1361, %v4157, 0
        %v4249 = vsel %vm1361, %v4158, 0
        %v4252 = vsel %vm1361, %v4159, 0
        %v4255 = vsel %vm1361, %v4160, 0
        %v4258 = vsel %vm1361, %v4161, 0
        %v4261 = vsel %vm1361, %v4162, 0
        %v4264 = vsel %vm1361, %v4163, 0
        %v4267 = vsel %vm1361, %v4164, 0
        %v4270 = vsel %vm1361, %v4165, 0
        %v4273 = vsel %vm1361, %v4166, 0
        %4275 = vmatpush.msra.mxu0 0.0
        %4276 = vmatpush.msra.mxu0 %v385
        %4277 = vmatpush.msra.mxu0 %v384
        %4278 = vmatpush.msra.mxu0 %v383
        %4279 = vmatpush.msra.mxu0 %v382
        %4280 = vmatpush.msra.mxu0 %v381
        %4281 = vmatpush.msra.mxu0 %v380
        %4282 = vmatpush.msra.mxu0 %v379
        %4283 = vmatpush.msra.mxu0 %v378
        %4284 = vmatpush.msra.mxu0 %v377
        %4285 = vmatpush.msra.mxu0 %v376
        %4286 = vmatpush.msra.mxu0 %v375
        %4287 = vmatpush.msra.mxu0 %v374
        %4288 = vmatpush.msra.mxu0 %v373
        %4289 = vmatpush.msra.mxu0 %v372
        %4290 = vmatpush.msra.mxu0 %v371
        %4291 = vmatmul.f32.gmra.mxu0 %v4168
        %v4292 = vpop.f32.mrf.mxu0
        %v4293 = vadd.f32 0.0, %v4292
        %4294 = vmatmul.f32.gmra.mxu0 %v4171
        %v4295 = vpop.f32.mrf.mxu0
        %v4296 = vadd.f32 0.0, %v4295
        %4297 = vmatmul.f32.gmra.mxu0 %v4174
        %v4298 = vpop.f32.mrf.mxu0
        %v4299 = vadd.f32 0.0, %v4298
        %4300 = vmatmul.f32.gmra.mxu0 %v4177
        %v4301 = vpop.f32.mrf.mxu0
        %v4302 = vadd.f32 0.0, %v4301
        %4303 = vmatmul.f32.gmra.mxu0 %v4180
        %v4304 = vpop.f32.mrf.mxu0
        %v4305 = vadd.f32 0.0, %v4304
        %4306 = vmatmul.f32.gmra.mxu0 %v4183
        %v4307 = vpop.f32.mrf.mxu0
        %v4308 = vadd.f32 0.0, %v4307
        %4309 = vmatmul.f32.gmra.mxu0 %v4186
        %v4310 = vpop.f32.mrf.mxu0
        %v4311 = vadd.f32 0.0, %v4310
        %4312 = vmatmul.f32.gmra.mxu0 %v4189
        %v4313 = vpop.f32.mrf.mxu0
        %v4314 = vadd.f32 0.0, %v4313
        %4315 = vmatmul.f32.gmra.mxu0 %v4192
        %v4316 = vpop.f32.mrf.mxu0
        %v4317 = vadd.f32 0.0, %v4316
        %4318 = vmatmul.f32.gmra.mxu0 %v4195
        %v4319 = vpop.f32.mrf.mxu0
        %v4320 = vadd.f32 0.0, %v4319
        %4321 = vmatmul.f32.gmra.mxu0 %v4198
        %v4322 = vpop.f32.mrf.mxu0
        %v4323 = vadd.f32 0.0, %v4322
        %4324 = vmatmul.f32.gmra.mxu0 %v4201
        %v4325 = vpop.f32.mrf.mxu0
        %v4326 = vadd.f32 0.0, %v4325
        %4327 = vmatmul.f32.gmra.mxu0 %v4204
        %v4328 = vpop.f32.mrf.mxu0
        %v4329 = vadd.f32 0.0, %v4328
        %4330 = vmatmul.f32.gmra.mxu0 %v4207
        %v4331 = vpop.f32.mrf.mxu0
        %v4332 = vadd.f32 0.0, %v4331
        %4333 = vmatmul.f32.gmra.mxu0 %v4210
        %v4334 = vpop.f32.mrf.mxu0
        %v4335 = vadd.f32 0.0, %v4334
        %4336 = vmatmul.f32.gmra.mxu0 %v4213
        %v4337 = vpop.f32.mrf.mxu0
        %v4338 = vadd.f32 0.0, %v4337
        %4339 = vmatmul.f32.gmra.mxu0 %v4216
        %v4340 = vpop.f32.mrf.mxu0
        %v4341 = vadd.f32 0.0, %v4340
        %4342 = vmatmul.f32.gmra.mxu0 %v4219
        %v4343 = vpop.f32.mrf.mxu0
        %v4344 = vadd.f32 0.0, %v4343
        %4345 = vmatmul.f32.gmra.mxu0 %v4222
        %v4346 = vpop.f32.mrf.mxu0
        %v4347 = vadd.f32 0.0, %v4346
        %4348 = vmatmul.f32.gmra.mxu0 %v4225
        %v4349 = vpop.f32.mrf.mxu0
        %v4350 = vadd.f32 0.0, %v4349
        %4351 = vmatmul.f32.gmra.mxu0 %v4228
        %v4352 = vpop.f32.mrf.mxu0
        %v4353 = vadd.f32 0.0, %v4352
        %4354 = vmatmul.f32.gmra.mxu0 %v4231
        %v4355 = vpop.f32.mrf.mxu0
        %v4356 = vadd.f32 0.0, %v4355
        %4357 = vmatmul.f32.gmra.mxu0 %v4234
        %v4358 = vpop.f32.mrf.mxu0
        %v4359 = vadd.f32 0.0, %v4358
        %4360 = vmatmul.f32.gmra.mxu0 %v4237
        %v4361 = vpop.f32.mrf.mxu0
        %v4362 = vadd.f32 0.0, %v4361
        %4363 = vmatmul.f32.gmra.mxu0 %v4240
        %v4364 = vpop.f32.mrf.mxu0
        %v4365 = vadd.f32 0.0, %v4364
        %4366 = vmatmul.f32.gmra.mxu0 %v4243
        %v4367 = vpop.f32.mrf.mxu0
        %v4368 = vadd.f32 0.0, %v4367
        %4369 = vmatmul.f32.gmra.mxu0 %v4246
        %v4370 = vpop.f32.mrf.mxu0
        %v4371 = vadd.f32 0.0, %v4370
        %4372 = vmatmul.f32.gmra.mxu0 %v4249
        %v4373 = vpop.f32.mrf.mxu0
        %v4374 = vadd.f32 0.0, %v4373
        %4375 = vmatmul.f32.gmra.mxu0 %v4252
        %v4376 = vpop.f32.mrf.mxu0
        %v4377 = vadd.f32 0.0, %v4376
        %4378 = vmatmul.f32.gmra.mxu0 %v4255
        %v4379 = vpop.f32.mrf.mxu0
        %v4380 = vadd.f32 0.0, %v4379
        %4381 = vmatmul.f32.gmra.mxu0 %v4258
        %v4382 = vpop.f32.mrf.mxu0
        %v4383 = vadd.f32 0.0, %v4382
        %4384 = vmatmul.f32.gmra.mxu0 %v4261
        %v4385 = vpop.f32.mrf.mxu0
        %v4386 = vadd.f32 0.0, %v4385
        %4387 = vmatmul.f32.gmra.mxu0 %v4264
        %v4388 = vpop.f32.mrf.mxu0
        %v4389 = vadd.f32 0.0, %v4388
        %4390 = vmatmul.f32.gmra.mxu0 %v4267
        %v4391 = vpop.f32.mrf.mxu0
        %v4392 = vadd.f32 0.0, %v4391
        %4393 = vmatmul.f32.gmra.mxu0 %v4270
        %v4394 = vpop.f32.mrf.mxu0
        %v4395 = vadd.f32 0.0, %v4394
        %4396 = vmatmul.f32.gmra.mxu0 %v4273
        %v4397 = vpop.f32.mrf.mxu0
        %v4398 = vadd.f32 0.0, %v4397
        %4399 = vdwg.mxu0
        %4400 = vmatpush.msra.mxu0 0.0
        %4401 = vmatpush.msra.mxu0 0.0
        %4402 = vmatpush.msra.mxu0 0.0
        %4403 = vmatpush.msra.mxu0 0.0
        %4404 = vmatpush.msra.mxu0 %v4326
        %4405 = vmatpush.msra.mxu0 %v4323
        %4406 = vmatpush.msra.mxu0 %v4320
        %4407 = vmatpush.msra.mxu0 %v4317
        %4408 = vmatpush.msra.mxu0 %v4314
        %4409 = vmatpush.msra.mxu0 %v4311
        %4410 = vmatpush.msra.mxu0 %v4308
        %4411 = vmatpush.msra.mxu0 %v4305
        %4412 = vmatpush.msra.mxu0 %v4302
        %4413 = vmatpush.msra.mxu0 %v4299
        %4414 = vmatpush.msra.mxu0 %v4296
        %4415 = vmatpush.msra.mxu0 %v4293
        %4416 = vmatmul.f32.gmra.mxu0 %v1597
        %v4417 = vpop.f32.mrf.mxu0
        %v4418 = vadd.f32 0.0, %v4417
        %4419 = vmatmul.f32.gmra.mxu0 %v1600
        %v4420 = vpop.f32.mrf.mxu0
        %v4421 = vadd.f32 0.0, %v4420
        %4422 = vmatmul.f32.gmra.mxu0 %v1603
        %v4423 = vpop.f32.mrf.mxu0
        %v4424 = vadd.f32 0.0, %v4423
        %4425 = vmatmul.f32.gmra.mxu0 %v1606
        %v4426 = vpop.f32.mrf.mxu0
        %v4427 = vadd.f32 0.0, %v4426
        %4428 = vmatmul.f32.gmra.mxu0 %v1609
        %v4429 = vpop.f32.mrf.mxu0
        %v4430 = vadd.f32 0.0, %v4429
        %4431 = vmatmul.f32.gmra.mxu0 %v1612
        %v4432 = vpop.f32.mrf.mxu0
        %v4433 = vadd.f32 0.0, %v4432
        %4434 = vmatmul.f32.gmra.mxu0 %v1615
        %v4435 = vpop.f32.mrf.mxu0
        %v4436 = vadd.f32 0.0, %v4435
        %4437 = vmatmul.f32.gmra.mxu0 %v1618
        %v4438 = vpop.f32.mrf.mxu0
        %v4439 = vadd.f32 0.0, %v4438
        %4440 = vmatmul.f32.gmra.mxu0 %v1621
        %v4441 = vpop.f32.mrf.mxu0
        %v4442 = vadd.f32 0.0, %v4441
        %4443 = vmatmul.f32.gmra.mxu0 %v1624
        %v4444 = vpop.f32.mrf.mxu0
        %v4445 = vadd.f32 0.0, %v4444
        %4446 = vmatmul.f32.gmra.mxu0 %v1627
        %v4447 = vpop.f32.mrf.mxu0
        %v4448 = vadd.f32 0.0, %v4447
        %4449 = vmatmul.f32.gmra.mxu0 %v1630
        %v4450 = vpop.f32.mrf.mxu0
        %v4451 = vadd.f32 0.0, %v4450
        %4452 = vdwg.mxu0
        %4453 = vmatpush.msra.mxu0 0.0
        %4454 = vmatpush.msra.mxu0 0.0
        %4455 = vmatpush.msra.mxu0 0.0
        %4456 = vmatpush.msra.mxu0 0.0
        %4457 = vmatpush.msra.mxu0 %v4362
        %4458 = vmatpush.msra.mxu0 %v4359
        %4459 = vmatpush.msra.mxu0 %v4356
        %4460 = vmatpush.msra.mxu0 %v4353
        %4461 = vmatpush.msra.mxu0 %v4350
        %4462 = vmatpush.msra.mxu0 %v4347
        %4463 = vmatpush.msra.mxu0 %v4344
        %4464 = vmatpush.msra.mxu0 %v4341
        %4465 = vmatpush.msra.mxu0 %v4338
        %4466 = vmatpush.msra.mxu0 %v4335
        %4467 = vmatpush.msra.mxu0 %v4332
        %4468 = vmatpush.msra.mxu0 %v4329
        %4469 = vmatmul.f32.gmra.mxu0 %v1597
        %v4470 = vpop.f32.mrf.mxu0
        %v4471 = vadd.f32 0.0, %v4470
        %4472 = vmatmul.f32.gmra.mxu0 %v1600
        %v4473 = vpop.f32.mrf.mxu0
        %v4474 = vadd.f32 0.0, %v4473
        %4475 = vmatmul.f32.gmra.mxu0 %v1603
        %v4476 = vpop.f32.mrf.mxu0
        %v4477 = vadd.f32 0.0, %v4476
        %4478 = vmatmul.f32.gmra.mxu0 %v1606
        %v4479 = vpop.f32.mrf.mxu0
        %v4480 = vadd.f32 0.0, %v4479
        %4481 = vmatmul.f32.gmra.mxu0 %v1609
        %v4482 = vpop.f32.mrf.mxu0
        %v4483 = vadd.f32 0.0, %v4482
        %4484 = vmatmul.f32.gmra.mxu0 %v1612
        %v4485 = vpop.f32.mrf.mxu0
        %v4486 = vadd.f32 0.0, %v4485
        %4487 = vmatmul.f32.gmra.mxu0 %v1615
        %v4488 = vpop.f32.mrf.mxu0
        %v4489 = vadd.f32 0.0, %v4488
        %4490 = vmatmul.f32.gmra.mxu0 %v1618
        %v4491 = vpop.f32.mrf.mxu0
        %v4492 = vadd.f32 0.0, %v4491
        %4493 = vmatmul.f32.gmra.mxu0 %v1621
        %v4494 = vpop.f32.mrf.mxu0
        %v4495 = vadd.f32 0.0, %v4494
        %4496 = vmatmul.f32.gmra.mxu0 %v1624
        %v4497 = vpop.f32.mrf.mxu0
        %v4498 = vadd.f32 0.0, %v4497
        %4499 = vmatmul.f32.gmra.mxu0 %v1627
        %v4500 = vpop.f32.mrf.mxu0
        %v4501 = vadd.f32 0.0, %v4500
        %4502 = vmatmul.f32.gmra.mxu0 %v1630
        %v4503 = vpop.f32.mrf.mxu0
        %v4504 = vadd.f32 0.0, %v4503
        %4505 = vdwg.mxu0
        %4506 = vmatpush.msra.mxu0 0.0
        %4507 = vmatpush.msra.mxu0 0.0
        %4508 = vmatpush.msra.mxu0 0.0
        %4509 = vmatpush.msra.mxu0 0.0
        %4510 = vmatpush.msra.mxu0 %v4398
        %4511 = vmatpush.msra.mxu0 %v4395
        %4512 = vmatpush.msra.mxu0 %v4392
        %4513 = vmatpush.msra.mxu0 %v4389
        %4514 = vmatpush.msra.mxu0 %v4386
        %4515 = vmatpush.msra.mxu0 %v4383
        %4516 = vmatpush.msra.mxu0 %v4380
        %4517 = vmatpush.msra.mxu0 %v4377
        %4518 = vmatpush.msra.mxu0 %v4374
        %4519 = vmatpush.msra.mxu0 %v4371
        %4520 = vmatpush.msra.mxu0 %v4368
        %4521 = vmatpush.msra.mxu0 %v4365
        %4522 = vmatmul.f32.gmra.mxu0 %v1597
        %v4523 = vpop.f32.mrf.mxu0
        %v4524 = vadd.f32 0.0, %v4523
        %4525 = vmatmul.f32.gmra.mxu0 %v1600
        %v4526 = vpop.f32.mrf.mxu0
        %v4527 = vadd.f32 0.0, %v4526
        %4528 = vmatmul.f32.gmra.mxu0 %v1603
        %v4529 = vpop.f32.mrf.mxu0
        %v4530 = vadd.f32 0.0, %v4529
        %4531 = vmatmul.f32.gmra.mxu0 %v1606
        %v4532 = vpop.f32.mrf.mxu0
        %v4533 = vadd.f32 0.0, %v4532
        %4534 = vmatmul.f32.gmra.mxu0 %v1609
        %v4535 = vpop.f32.mrf.mxu0
        %v4536 = vadd.f32 0.0, %v4535
        %4537 = vmatmul.f32.gmra.mxu0 %v1612
        %v4538 = vpop.f32.mrf.mxu0
        %v4539 = vadd.f32 0.0, %v4538
        %4540 = vmatmul.f32.gmra.mxu0 %v1615
        %v4541 = vpop.f32.mrf.mxu0
        %v4542 = vadd.f32 0.0, %v4541
        %4543 = vmatmul.f32.gmra.mxu0 %v1618
        %v4544 = vpop.f32.mrf.mxu0
        %v4545 = vadd.f32 0.0, %v4544
        %4546 = vmatmul.f32.gmra.mxu0 %v1621
        %v4547 = vpop.f32.mrf.mxu0
        %v4548 = vadd.f32 0.0, %v4547
        %4549 = vmatmul.f32.gmra.mxu0 %v1624
        %v4550 = vpop.f32.mrf.mxu0
        %v4551 = vadd.f32 0.0, %v4550
        %4552 = vmatmul.f32.gmra.mxu0 %v1627
        %v4553 = vpop.f32.mrf.mxu0
        %v4554 = vadd.f32 0.0, %v4553
        %4555 = vmatmul.f32.gmra.mxu0 %v1630
        %v4556 = vpop.f32.mrf.mxu0
        %v4557 = vadd.f32 0.0, %v4556
        %4558 = vdwg.mxu0
        %v4559 = vmul.f32 %v4418, %v1181
        %v4560 = vmul.f32 %v4421, %v1182
        %v4561 = vmul.f32 %v4424, %v1183
        %v4562 = vmul.f32 %v4427, %v1184
        %v4563 = vmul.f32 %v4430, %v1185
        %v4564 = vmul.f32 %v4433, %v1186
        %v4565 = vmul.f32 %v4436, %v1187
        %v4566 = vmul.f32 %v4439, %v1188
        %v4567 = vmul.f32 %v4442, %v1189
        %v4568 = vmul.f32 %v4445, %v1190
        %v4569 = vmul.f32 %v4448, %v1191
        %v4570 = vmul.f32 %v4451, %v1192
        %v4571 = vmul.f32 %v1803, %v4471
        %v4572 = vmul.f32 %v1804, %v4474
        %v4573 = vmul.f32 %v1805, %v4477
        %v4574 = vmul.f32 %v1806, %v4480
        %v4575 = vmul.f32 %v1807, %v4483
        %v4576 = vmul.f32 %v1808, %v4486
        %v4577 = vmul.f32 %v1809, %v4489
        %v4578 = vmul.f32 %v1810, %v4492
        %v4579 = vmul.f32 %v1811, %v4495
        %v4580 = vmul.f32 %v1812, %v4498
        %v4581 = vmul.f32 %v1813, %v4501
        %v4582 = vmul.f32 %v1814, %v4504
        %v4583 = vsub.f32 %v4559, %v4571
        %v4584 = vsub.f32 %v4560, %v4572
        %v4585 = vsub.f32 %v4561, %v4573
        %v4586 = vsub.f32 %v4562, %v4574
        %v4587 = vsub.f32 %v4563, %v4575
        %v4588 = vsub.f32 %v4564, %v4576
        %v4589 = vsub.f32 %v4565, %v4577
        %v4590 = vsub.f32 %v4566, %v4578
        %v4591 = vsub.f32 %v4567, %v4579
        %v4592 = vsub.f32 %v4568, %v4580
        %v4593 = vsub.f32 %v4569, %v4581
        %v4594 = vsub.f32 %v4570, %v4582
        %v4595 = vadd.f32 %v4583, %v4524
        %v4596 = vadd.f32 %v4584, %v4527
        %v4597 = vadd.f32 %v4585, %v4530
        %v4598 = vadd.f32 %v4586, %v4533
        %v4599 = vadd.f32 %v4587, %v4536
        %v4600 = vadd.f32 %v4588, %v4539
        %v4601 = vadd.f32 %v4589, %v4542
        %v4602 = vadd.f32 %v4590, %v4545
        %v4603 = vadd.f32 %v4591, %v4548
        %v4604 = vadd.f32 %v4592, %v4551
        %v4605 = vadd.f32 %v4593, %v4554
        %v4606 = vadd.f32 %v4594, %v4557
        %vm4607 = vcmp.eq.f32.partialorder %v1217, 3.0
        %vm4608 = vcmp.eq.f32.partialorder %v1218, 3.0
        %vm4609 = vcmp.eq.f32.partialorder %v1219, 3.0
        %vm4610 = vcmp.eq.f32.partialorder %v1220, 3.0
        %vm4611 = vcmp.eq.f32.partialorder %v1221, 3.0
        %vm4612 = vcmp.eq.f32.partialorder %v1222, 3.0
        %vm4613 = vcmp.eq.f32.partialorder %v1223, 3.0
        %vm4614 = vcmp.eq.f32.partialorder %v1224, 3.0
        %vm4615 = vcmp.eq.f32.partialorder %v1225, 3.0
        %vm4616 = vcmp.eq.f32.partialorder %v1226, 3.0
        %vm4617 = vcmp.eq.f32.partialorder %v1227, 3.0
        %vm4618 = vcmp.eq.f32.partialorder %v1228, 3.0
        %v4619 = vsub.f32 4.0, %v1205
        %v4620 = vsub.f32 4.0, %v1206
        %v4621 = vsub.f32 4.0, %v1207
        %v4622 = vsub.f32 4.0, %v1208
        %v4623 = vsub.f32 4.0, %v1209
        %v4624 = vsub.f32 4.0, %v1210
        %v4625 = vsub.f32 4.0, %v1211
        %v4626 = vsub.f32 4.0, %v1212
        %v4627 = vsub.f32 4.0, %v1213
        %v4628 = vsub.f32 4.0, %v1214
        %v4629 = vsub.f32 4.0, %v1215
        %v4630 = vsub.f32 4.0, %v1216
        %v4631 = vsel %vm4607, %v4619, 0.0
        %v4632 = vsel %vm4608, %v4620, 0.0
        %v4633 = vsel %vm4609, %v4621, 0.0
        %v4634 = vsel %vm4610, %v4622, 0.0
        %v4635 = vsel %vm4611, %v4623, 0.0
        %v4636 = vsel %vm4612, %v4624, 0.0
        %v4637 = vsel %vm4613, %v4625, 0.0
        %v4638 = vsel %vm4614, %v4626, 0.0
        %v4639 = vsel %vm4615, %v4627, 0.0
        %v4640 = vsel %vm4616, %v4628, 0.0
        %v4641 = vsel %vm4617, %v4629, 0.0
        %v4642 = vsel %vm4618, %v4630, 0.0
        %vm4643 = vcmp.eq.f32.partialorder %v1229, 4.0
        %vm4644 = vcmp.eq.f32.partialorder %v1230, 4.0
        %vm4645 = vcmp.eq.f32.partialorder %v1231, 4.0
        %vm4646 = vcmp.eq.f32.partialorder %v1232, 4.0
        %vm4647 = vcmp.eq.f32.partialorder %v1233, 4.0
        %vm4648 = vcmp.eq.f32.partialorder %v1234, 4.0
        %vm4649 = vcmp.eq.f32.partialorder %v1235, 4.0
        %vm4650 = vcmp.eq.f32.partialorder %v1236, 4.0
        %vm4651 = vcmp.eq.f32.partialorder %v1237, 4.0
        %vm4652 = vcmp.eq.f32.partialorder %v1238, 4.0
        %vm4653 = vcmp.eq.f32.partialorder %v1239, 4.0
        %vm4654 = vcmp.eq.f32.partialorder %v1240, 4.0
        %v4655 = vsel %vm4643, %v3307, 0.0
        %v4656 = vsel %vm4644, %v3308, 0.0
        %v4657 = vsel %vm4645, %v3309, 0.0
        %v4658 = vsel %vm4646, %v3310, 0.0
        %v4659 = vsel %vm4647, %v3311, 0.0
        %v4660 = vsel %vm4648, %v3312, 0.0
        %v4661 = vsel %vm4649, %v3313, 0.0
        %v4662 = vsel %vm4650, %v3314, 0.0
        %v4663 = vsel %vm4651, %v3315, 0.0
        %v4664 = vsel %vm4652, %v3316, 0.0
        %v4665 = vsel %vm4653, %v3317, 0.0
        %v4666 = vsel %vm4654, %v3318, 0.0
        %v4667 = vmul.f32 %v3867, %v4631
        %v4668 = vmul.f32 %v3868, %v4632
        %v4669 = vmul.f32 %v3869, %v4633
        %v4670 = vmul.f32 %v3870, %v4634
        %v4671 = vmul.f32 %v3871, %v4635
        %v4672 = vmul.f32 %v3872, %v4636
        %v4673 = vmul.f32 %v3873, %v4637
        %v4674 = vmul.f32 %v3874, %v4638
        %v4675 = vmul.f32 %v3875, %v4639
        %v4676 = vmul.f32 %v3876, %v4640
        %v4677 = vmul.f32 %v3877, %v4641
        %v4678 = vmul.f32 %v3878, %v4642
        %v4679 = vadd.f32 %v3975, %v4667
        %v4680 = vadd.f32 %v3976, %v4668
        %v4681 = vadd.f32 %v3977, %v4669
        %v4682 = vadd.f32 %v3978, %v4670
        %v4683 = vadd.f32 %v3979, %v4671
        %v4684 = vadd.f32 %v3980, %v4672
        %v4685 = vadd.f32 %v3981, %v4673
        %v4686 = vadd.f32 %v3982, %v4674
        %v4687 = vadd.f32 %v3983, %v4675
        %v4688 = vadd.f32 %v3984, %v4676
        %v4689 = vadd.f32 %v3985, %v4677
        %v4690 = vadd.f32 %v3986, %v4678
        %v4691 = vmul.f32 %v4595, %v4655
        %v4692 = vmul.f32 %v4596, %v4656
        %v4693 = vmul.f32 %v4597, %v4657
        %v4694 = vmul.f32 %v4598, %v4658
        %v4695 = vmul.f32 %v4599, %v4659
        %v4696 = vmul.f32 %v4600, %v4660
        %v4697 = vmul.f32 %v4601, %v4661
        %v4698 = vmul.f32 %v4602, %v4662
        %v4699 = vmul.f32 %v4603, %v4663
        %v4700 = vmul.f32 %v4604, %v4664
        %v4701 = vmul.f32 %v4605, %v4665
        %v4702 = vmul.f32 %v4606, %v4666
        %v4703 = vadd.f32 %v4679, %v4691
        %v4704 = vadd.f32 %v4680, %v4692
        %v4705 = vadd.f32 %v4681, %v4693
        %v4706 = vadd.f32 %v4682, %v4694
        %v4707 = vadd.f32 %v4683, %v4695
        %v4708 = vadd.f32 %v4684, %v4696
        %v4709 = vadd.f32 %v4685, %v4697
        %v4710 = vadd.f32 %v4686, %v4698
        %v4711 = vadd.f32 %v4687, %v4699
        %v4712 = vadd.f32 %v4688, %v4700
        %v4713 = vadd.f32 %v4689, %v4701
        %v4714 = vadd.f32 %v4690, %v4702
        %v4715 = vmul.f32 %v3690, %v4631
        %v4716 = vmul.f32 %v3693, %v4632
        %v4717 = vmul.f32 %v3696, %v4633
        %v4718 = vmul.f32 %v3699, %v4634
        %v4719 = vmul.f32 %v3702, %v4635
        %v4720 = vmul.f32 %v3705, %v4636
        %v4721 = vmul.f32 %v3708, %v4637
        %v4722 = vmul.f32 %v3711, %v4638
        %v4723 = vmul.f32 %v3714, %v4639
        %v4724 = vmul.f32 %v3717, %v4640
        %v4725 = vmul.f32 %v3720, %v4641
        %v4726 = vmul.f32 %v3723, %v4642
        %v4727 = vadd.f32 %v4023, %v4715
        %v4728 = vadd.f32 %v4024, %v4716
        %v4729 = vadd.f32 %v4025, %v4717
        %v4730 = vadd.f32 %v4026, %v4718
        %v4731 = vadd.f32 %v4027, %v4719
        %v4732 = vadd.f32 %v4028, %v4720
        %v4733 = vadd.f32 %v4029, %v4721
        %v4734 = vadd.f32 %v4030, %v4722
        %v4735 = vadd.f32 %v4031, %v4723
        %v4736 = vadd.f32 %v4032, %v4724
        %v4737 = vadd.f32 %v4033, %v4725
        %v4738 = vadd.f32 %v4034, %v4726
        %v4739 = vmul.f32 %v4418, %v4655
        %v4740 = vmul.f32 %v4421, %v4656
        %v4741 = vmul.f32 %v4424, %v4657
        %v4742 = vmul.f32 %v4427, %v4658
        %v4743 = vmul.f32 %v4430, %v4659
        %v4744 = vmul.f32 %v4433, %v4660
        %v4745 = vmul.f32 %v4436, %v4661
        %v4746 = vmul.f32 %v4439, %v4662
        %v4747 = vmul.f32 %v4442, %v4663
        %v4748 = vmul.f32 %v4445, %v4664
        %v4749 = vmul.f32 %v4448, %v4665
        %v4750 = vmul.f32 %v4451, %v4666
        %v4751 = vadd.f32 %v4727, %v4739
        %v4752 = vadd.f32 %v4728, %v4740
        %v4753 = vadd.f32 %v4729, %v4741
        %v4754 = vadd.f32 %v4730, %v4742
        %v4755 = vadd.f32 %v4731, %v4743
        %v4756 = vadd.f32 %v4732, %v4744
        %v4757 = vadd.f32 %v4733, %v4745
        %v4758 = vadd.f32 %v4734, %v4746
        %v4759 = vadd.f32 %v4735, %v4747
        %v4760 = vadd.f32 %v4736, %v4748
        %v4761 = vadd.f32 %v4737, %v4749
        %v4762 = vadd.f32 %v4738, %v4750
        %v4763 = vsub.f32 %v1205, 5.0
        %v4764 = vsub.f32 %v1206, 5.0
        %v4765 = vsub.f32 %v1207, 5.0
        %v4766 = vsub.f32 %v1208, 5.0
        %v4767 = vsub.f32 %v1209, 5.0
        %v4768 = vsub.f32 %v1210, 5.0
        %v4769 = vsub.f32 %v1211, 5.0
        %v4770 = vsub.f32 %v1212, 5.0
        %v4771 = vsub.f32 %v1213, 5.0
        %v4772 = vsub.f32 %v1214, 5.0
        %v4773 = vsub.f32 %v1215, 5.0
        %v4774 = vsub.f32 %v1216, 5.0
        %v4775 = vand.u32 2147483647, %v4763
        %v4776 = vand.u32 2147483647, %v4764
        %v4777 = vand.u32 2147483647, %v4765
        %v4778 = vand.u32 2147483647, %v4766
        %v4779 = vand.u32 2147483647, %v4767
        %v4780 = vand.u32 2147483647, %v4768
        %v4781 = vand.u32 2147483647, %v4769
        %v4782 = vand.u32 2147483647, %v4770
        %v4783 = vand.u32 2147483647, %v4771
        %v4784 = vand.u32 2147483647, %v4772
        %v4785 = vand.u32 2147483647, %v4773
        %v4786 = vand.u32 2147483647, %v4774
        %v4787 = vmul.f32 %v1169, %v4775
        %v4788 = vmul.f32 %v1170, %v4776
        %v4789 = vmul.f32 %v1171, %v4777
        %v4790 = vmul.f32 %v1172, %v4778
        %v4791 = vmul.f32 %v1173, %v4779
        %v4792 = vmul.f32 %v1174, %v4780
        %v4793 = vmul.f32 %v1175, %v4781
        %v4794 = vmul.f32 %v1176, %v4782
        %v4795 = vmul.f32 %v1177, %v4783
        %v4796 = vmul.f32 %v1178, %v4784
        %v4797 = vmul.f32 %v1179, %v4785
        %v4798 = vmul.f32 %v1180, %v4786
        %v4799 = vadd.f32 %v4787, 0.0001
        %v4800 = vadd.f32 %v4788, 0.0001
        %v4801 = vadd.f32 %v4789, 0.0001
        %v4802 = vadd.f32 %v4790, 0.0001
        %v4803 = vadd.f32 %v4791, 0.0001
        %v4804 = vadd.f32 %v4792, 0.0001
        %v4805 = vadd.f32 %v4793, 0.0001
        %v4806 = vadd.f32 %v4794, 0.0001
        %v4807 = vadd.f32 %v4795, 0.0001
        %v4808 = vadd.f32 %v4796, 0.0001
        %v4809 = vadd.f32 %v4797, 0.0001
        %v4810 = vadd.f32 %v4798, 0.0001
        %v4811 = vlog2.pop %v4799
        %v4812 = vmul.f32 %v4811, 0.6931472
        %v4813 = vlog2.pop %v4800
        %v4814 = vmul.f32 %v4813, 0.6931472
        %v4815 = vlog2.pop %v4801
        %v4816 = vmul.f32 %v4815, 0.6931472
        %v4817 = vlog2.pop %v4802
        %v4818 = vmul.f32 %v4817, 0.6931472
        %v4819 = vlog2.pop %v4803
        %v4820 = vmul.f32 %v4819, 0.6931472
        %v4821 = vlog2.pop %v4804
        %v4822 = vmul.f32 %v4821, 0.6931472
        %v4823 = vlog2.pop %v4805
        %v4824 = vmul.f32 %v4823, 0.6931472
        %v4825 = vlog2.pop %v4806
        %v4826 = vmul.f32 %v4825, 0.6931472
        %v4827 = vlog2.pop %v4807
        %v4828 = vmul.f32 %v4827, 0.6931472
        %v4829 = vlog2.pop %v4808
        %v4830 = vmul.f32 %v4829, 0.6931472
        %v4831 = vlog2.pop %v4809
        %v4832 = vmul.f32 %v4831, 0.6931472
        %v4833 = vlog2.pop %v4810
        %v4834 = vmul.f32 %v4833, 0.6931472
        %v4835 = vmul.f32 %v4812, -1.2
        %v4836 = vmul.f32 %v4814, -1.2
        %v4837 = vmul.f32 %v4816, -1.2
        %v4838 = vmul.f32 %v4818, -1.2
        %v4839 = vmul.f32 %v4820, -1.2
        %v4840 = vmul.f32 %v4822, -1.2
        %v4841 = vmul.f32 %v4824, -1.2
        %v4842 = vmul.f32 %v4826, -1.2
        %v4843 = vmul.f32 %v4828, -1.2
        %v4844 = vmul.f32 %v4830, -1.2
        %v4845 = vmul.f32 %v4832, -1.2
        %v4846 = vmul.f32 %v4834, -1.2
        %v4847 = vmul.f32 %v4835, 1.442695
        %v4848 = vpow.pop %v4847
        %v4849 = vmul.f32 %v4836, 1.442695
        %v4850 = vpow.pop %v4849
        %v4851 = vmul.f32 %v4837, 1.442695
        %v4852 = vpow.pop %v4851
        %v4853 = vmul.f32 %v4838, 1.442695
        %v4854 = vpow.pop %v4853
        %v4855 = vmul.f32 %v4839, 1.442695
        %v4856 = vpow.pop %v4855
        %v4857 = vmul.f32 %v4840, 1.442695
        %v4858 = vpow.pop %v4857
        %v4859 = vmul.f32 %v4841, 1.442695
        %v4860 = vpow.pop %v4859
        %v4861 = vmul.f32 %v4842, 1.442695
        %v4862 = vpow.pop %v4861
        %v4863 = vmul.f32 %v4843, 1.442695
        %v4864 = vpow.pop %v4863
        %v4865 = vmul.f32 %v4844, 1.442695
        %v4866 = vpow.pop %v4865
        %v4867 = vmul.f32 %v4845, 1.442695
        %v4868 = vpow.pop %v4867
        %v4869 = vmul.f32 %v4846, 1.442695
        %v4870 = vpow.pop %v4869
        %v4871 = vmul.f32 %v4848, %v347
        %v4872 = vmul.f32 %v4850, %v348
        %v4873 = vmul.f32 %v4852, %v349
        %v4874 = vmul.f32 %v4854, %v350
        %v4875 = vmul.f32 %v4856, %v351
        %v4876 = vmul.f32 %v4858, %v352
        %v4877 = vmul.f32 %v4860, %v353
        %v4878 = vmul.f32 %v4862, %v354
        %v4879 = vmul.f32 %v4864, %v355
        %v4880 = vmul.f32 %v4866, %v356
        %v4881 = vmul.f32 %v4868, %v357
        %v4882 = vmul.f32 %v4870, %v358
        %v4883 = vmul.f32 %v4848, %v1181
        %v4884 = vmul.f32 %v4850, %v1182
        %v4885 = vmul.f32 %v4852, %v1183
        %v4886 = vmul.f32 %v4854, %v1184
        %v4887 = vmul.f32 %v4856, %v1185
        %v4888 = vmul.f32 %v4858, %v1186
        %v4889 = vmul.f32 %v4860, %v1187
        %v4890 = vmul.f32 %v4862, %v1188
        %v4891 = vmul.f32 %v4864, %v1189
        %v4892 = vmul.f32 %v4866, %v1190
        %v4893 = vmul.f32 %v4868, %v1191
        %v4894 = vmul.f32 %v4870, %v1192
        %v4896 = vsel %vm1361, %v4848, 0
        %v4899 = vsel %vm1361, %v4850, 0
        %v4902 = vsel %vm1361, %v4852, 0
        %v4905 = vsel %vm1361, %v4854, 0
        %v4908 = vsel %vm1361, %v4856, 0
        %v4911 = vsel %vm1361, %v4858, 0
        %v4914 = vsel %vm1361, %v4860, 0
        %v4917 = vsel %vm1361, %v4862, 0
        %v4920 = vsel %vm1361, %v4864, 0
        %v4923 = vsel %vm1361, %v4866, 0
        %v4926 = vsel %vm1361, %v4868, 0
        %v4929 = vsel %vm1361, %v4870, 0
        %v4932 = vsel %vm1361, %v4871, 0
        %v4935 = vsel %vm1361, %v4872, 0
        %v4938 = vsel %vm1361, %v4873, 0
        %v4941 = vsel %vm1361, %v4874, 0
        %v4944 = vsel %vm1361, %v4875, 0
        %v4947 = vsel %vm1361, %v4876, 0
        %v4950 = vsel %vm1361, %v4877, 0
        %v4953 = vsel %vm1361, %v4878, 0
        %v4956 = vsel %vm1361, %v4879, 0
        %v4959 = vsel %vm1361, %v4880, 0
        %v4962 = vsel %vm1361, %v4881, 0
        %v4965 = vsel %vm1361, %v4882, 0
        %v4968 = vsel %vm1361, %v4883, 0
        %v4971 = vsel %vm1361, %v4884, 0
        %v4974 = vsel %vm1361, %v4885, 0
        %v4977 = vsel %vm1361, %v4886, 0
        %v4980 = vsel %vm1361, %v4887, 0
        %v4983 = vsel %vm1361, %v4888, 0
        %v4986 = vsel %vm1361, %v4889, 0
        %v4989 = vsel %vm1361, %v4890, 0
        %v4992 = vsel %vm1361, %v4891, 0
        %v4995 = vsel %vm1361, %v4892, 0
        %v4998 = vsel %vm1361, %v4893, 0
        %v5001 = vsel %vm1361, %v4894, 0
        %5003 = vmatpush.msra.mxu0 0.0
        %5004 = vmatpush.msra.mxu0 %v385
        %5005 = vmatpush.msra.mxu0 %v384
        %5006 = vmatpush.msra.mxu0 %v383
        %5007 = vmatpush.msra.mxu0 %v382
        %5008 = vmatpush.msra.mxu0 %v381
        %5009 = vmatpush.msra.mxu0 %v380
        %5010 = vmatpush.msra.mxu0 %v379
        %5011 = vmatpush.msra.mxu0 %v378
        %5012 = vmatpush.msra.mxu0 %v377
        %5013 = vmatpush.msra.mxu0 %v376
        %5014 = vmatpush.msra.mxu0 %v375
        %5015 = vmatpush.msra.mxu0 %v374
        %5016 = vmatpush.msra.mxu0 %v373
        %5017 = vmatpush.msra.mxu0 %v372
        %5018 = vmatpush.msra.mxu0 %v371
        %5019 = vmatmul.f32.gmra.mxu0 %v4896
        %v5020 = vpop.f32.mrf.mxu0
        %v5021 = vadd.f32 0.0, %v5020
        %5022 = vmatmul.f32.gmra.mxu0 %v4899
        %v5023 = vpop.f32.mrf.mxu0
        %v5024 = vadd.f32 0.0, %v5023
        %5025 = vmatmul.f32.gmra.mxu0 %v4902
        %v5026 = vpop.f32.mrf.mxu0
        %v5027 = vadd.f32 0.0, %v5026
        %5028 = vmatmul.f32.gmra.mxu0 %v4905
        %v5029 = vpop.f32.mrf.mxu0
        %v5030 = vadd.f32 0.0, %v5029
        %5031 = vmatmul.f32.gmra.mxu0 %v4908
        %v5032 = vpop.f32.mrf.mxu0
        %v5033 = vadd.f32 0.0, %v5032
        %5034 = vmatmul.f32.gmra.mxu0 %v4911
        %v5035 = vpop.f32.mrf.mxu0
        %v5036 = vadd.f32 0.0, %v5035
        %5037 = vmatmul.f32.gmra.mxu0 %v4914
        %v5038 = vpop.f32.mrf.mxu0
        %v5039 = vadd.f32 0.0, %v5038
        %5040 = vmatmul.f32.gmra.mxu0 %v4917
        %v5041 = vpop.f32.mrf.mxu0
        %v5042 = vadd.f32 0.0, %v5041
        %5043 = vmatmul.f32.gmra.mxu0 %v4920
        %v5044 = vpop.f32.mrf.mxu0
        %v5045 = vadd.f32 0.0, %v5044
        %5046 = vmatmul.f32.gmra.mxu0 %v4923
        %v5047 = vpop.f32.mrf.mxu0
        %v5048 = vadd.f32 0.0, %v5047
        %5049 = vmatmul.f32.gmra.mxu0 %v4926
        %v5050 = vpop.f32.mrf.mxu0
        %v5051 = vadd.f32 0.0, %v5050
        %5052 = vmatmul.f32.gmra.mxu0 %v4929
        %v5053 = vpop.f32.mrf.mxu0
        %v5054 = vadd.f32 0.0, %v5053
        %5055 = vmatmul.f32.gmra.mxu0 %v4932
        %v5056 = vpop.f32.mrf.mxu0
        %v5057 = vadd.f32 0.0, %v5056
        %5058 = vmatmul.f32.gmra.mxu0 %v4935
        %v5059 = vpop.f32.mrf.mxu0
        %v5060 = vadd.f32 0.0, %v5059
        %5061 = vmatmul.f32.gmra.mxu0 %v4938
        %v5062 = vpop.f32.mrf.mxu0
        %v5063 = vadd.f32 0.0, %v5062
        %5064 = vmatmul.f32.gmra.mxu0 %v4941
        %v5065 = vpop.f32.mrf.mxu0
        %v5066 = vadd.f32 0.0, %v5065
        %5067 = vmatmul.f32.gmra.mxu0 %v4944
        %v5068 = vpop.f32.mrf.mxu0
        %v5069 = vadd.f32 0.0, %v5068
        %5070 = vmatmul.f32.gmra.mxu0 %v4947
        %v5071 = vpop.f32.mrf.mxu0
        %v5072 = vadd.f32 0.0, %v5071
        %5073 = vmatmul.f32.gmra.mxu0 %v4950
        %v5074 = vpop.f32.mrf.mxu0
        %v5075 = vadd.f32 0.0, %v5074
        %5076 = vmatmul.f32.gmra.mxu0 %v4953
        %v5077 = vpop.f32.mrf.mxu0
        %v5078 = vadd.f32 0.0, %v5077
        %5079 = vmatmul.f32.gmra.mxu0 %v4956
        %v5080 = vpop.f32.mrf.mxu0
        %v5081 = vadd.f32 0.0, %v5080
        %5082 = vmatmul.f32.gmra.mxu0 %v4959
        %v5083 = vpop.f32.mrf.mxu0
        %v5084 = vadd.f32 0.0, %v5083
        %5085 = vmatmul.f32.gmra.mxu0 %v4962
        %v5086 = vpop.f32.mrf.mxu0
        %v5087 = vadd.f32 0.0, %v5086
        %5088 = vmatmul.f32.gmra.mxu0 %v4965
        %v5089 = vpop.f32.mrf.mxu0
        %v5090 = vadd.f32 0.0, %v5089
        %5091 = vmatmul.f32.gmra.mxu0 %v4968
        %v5092 = vpop.f32.mrf.mxu0
        %v5093 = vadd.f32 0.0, %v5092
        %5094 = vmatmul.f32.gmra.mxu0 %v4971
        %v5095 = vpop.f32.mrf.mxu0
        %v5096 = vadd.f32 0.0, %v5095
        %5097 = vmatmul.f32.gmra.mxu0 %v4974
        %v5098 = vpop.f32.mrf.mxu0
        %v5099 = vadd.f32 0.0, %v5098
        %5100 = vmatmul.f32.gmra.mxu0 %v4977
        %v5101 = vpop.f32.mrf.mxu0
        %v5102 = vadd.f32 0.0, %v5101
        %5103 = vmatmul.f32.gmra.mxu0 %v4980
        %v5104 = vpop.f32.mrf.mxu0
        %v5105 = vadd.f32 0.0, %v5104
        %5106 = vmatmul.f32.gmra.mxu0 %v4983
        %v5107 = vpop.f32.mrf.mxu0
        %v5108 = vadd.f32 0.0, %v5107
        %5109 = vmatmul.f32.gmra.mxu0 %v4986
        %v5110 = vpop.f32.mrf.mxu0
        %v5111 = vadd.f32 0.0, %v5110
        %5112 = vmatmul.f32.gmra.mxu0 %v4989
        %v5113 = vpop.f32.mrf.mxu0
        %v5114 = vadd.f32 0.0, %v5113
        %5115 = vmatmul.f32.gmra.mxu0 %v4992
        %v5116 = vpop.f32.mrf.mxu0
        %v5117 = vadd.f32 0.0, %v5116
        %5118 = vmatmul.f32.gmra.mxu0 %v4995
        %v5119 = vpop.f32.mrf.mxu0
        %v5120 = vadd.f32 0.0, %v5119
        %5121 = vmatmul.f32.gmra.mxu0 %v4998
        %v5122 = vpop.f32.mrf.mxu0
        %v5123 = vadd.f32 0.0, %v5122
        %5124 = vmatmul.f32.gmra.mxu0 %v5001
        %v5125 = vpop.f32.mrf.mxu0
        %v5126 = vadd.f32 0.0, %v5125
        %5127 = vdwg.mxu0
        %5128 = vmatpush.msra.mxu0 0.0
        %5129 = vmatpush.msra.mxu0 0.0
        %5130 = vmatpush.msra.mxu0 0.0
        %5131 = vmatpush.msra.mxu0 0.0
        %5132 = vmatpush.msra.mxu0 %v5054
        %5133 = vmatpush.msra.mxu0 %v5051
        %5134 = vmatpush.msra.mxu0 %v5048
        %5135 = vmatpush.msra.mxu0 %v5045
        %5136 = vmatpush.msra.mxu0 %v5042
        %5137 = vmatpush.msra.mxu0 %v5039
        %5138 = vmatpush.msra.mxu0 %v5036
        %5139 = vmatpush.msra.mxu0 %v5033
        %5140 = vmatpush.msra.mxu0 %v5030
        %5141 = vmatpush.msra.mxu0 %v5027
        %5142 = vmatpush.msra.mxu0 %v5024
        %5143 = vmatpush.msra.mxu0 %v5021
        %5144 = vmatmul.f32.gmra.mxu0 %v1597
        %v5145 = vpop.f32.mrf.mxu0
        %v5146 = vadd.f32 0.0, %v5145
        %5147 = vmatmul.f32.gmra.mxu0 %v1600
        %v5148 = vpop.f32.mrf.mxu0
        %v5149 = vadd.f32 0.0, %v5148
        %5150 = vmatmul.f32.gmra.mxu0 %v1603
        %v5151 = vpop.f32.mrf.mxu0
        %v5152 = vadd.f32 0.0, %v5151
        %5153 = vmatmul.f32.gmra.mxu0 %v1606
        %v5154 = vpop.f32.mrf.mxu0
        %v5155 = vadd.f32 0.0, %v5154
        %5156 = vmatmul.f32.gmra.mxu0 %v1609
        %v5157 = vpop.f32.mrf.mxu0
        %v5158 = vadd.f32 0.0, %v5157
        %5159 = vmatmul.f32.gmra.mxu0 %v1612
        %v5160 = vpop.f32.mrf.mxu0
        %v5161 = vadd.f32 0.0, %v5160
        %5162 = vmatmul.f32.gmra.mxu0 %v1615
        %v5163 = vpop.f32.mrf.mxu0
        %v5164 = vadd.f32 0.0, %v5163
        %5165 = vmatmul.f32.gmra.mxu0 %v1618
        %v5166 = vpop.f32.mrf.mxu0
        %v5167 = vadd.f32 0.0, %v5166
        %5168 = vmatmul.f32.gmra.mxu0 %v1621
        %v5169 = vpop.f32.mrf.mxu0
        %v5170 = vadd.f32 0.0, %v5169
        %5171 = vmatmul.f32.gmra.mxu0 %v1624
        %v5172 = vpop.f32.mrf.mxu0
        %v5173 = vadd.f32 0.0, %v5172
        %5174 = vmatmul.f32.gmra.mxu0 %v1627
        %v5175 = vpop.f32.mrf.mxu0
        %v5176 = vadd.f32 0.0, %v5175
        %5177 = vmatmul.f32.gmra.mxu0 %v1630
        %v5178 = vpop.f32.mrf.mxu0
        %v5179 = vadd.f32 0.0, %v5178
        %5180 = vdwg.mxu0
        %5181 = vmatpush.msra.mxu0 0.0
        %5182 = vmatpush.msra.mxu0 0.0
        %5183 = vmatpush.msra.mxu0 0.0
        %5184 = vmatpush.msra.mxu0 0.0
        %5185 = vmatpush.msra.mxu0 %v5090
        %5186 = vmatpush.msra.mxu0 %v5087
        %5187 = vmatpush.msra.mxu0 %v5084
        %5188 = vmatpush.msra.mxu0 %v5081
        %5189 = vmatpush.msra.mxu0 %v5078
        %5190 = vmatpush.msra.mxu0 %v5075
        %5191 = vmatpush.msra.mxu0 %v5072
        %5192 = vmatpush.msra.mxu0 %v5069
        %5193 = vmatpush.msra.mxu0 %v5066
        %5194 = vmatpush.msra.mxu0 %v5063
        %5195 = vmatpush.msra.mxu0 %v5060
        %5196 = vmatpush.msra.mxu0 %v5057
        %5197 = vmatmul.f32.gmra.mxu0 %v1597
        %v5198 = vpop.f32.mrf.mxu0
        %v5199 = vadd.f32 0.0, %v5198
        %5200 = vmatmul.f32.gmra.mxu0 %v1600
        %v5201 = vpop.f32.mrf.mxu0
        %v5202 = vadd.f32 0.0, %v5201
        %5203 = vmatmul.f32.gmra.mxu0 %v1603
        %v5204 = vpop.f32.mrf.mxu0
        %v5205 = vadd.f32 0.0, %v5204
        %5206 = vmatmul.f32.gmra.mxu0 %v1606
        %v5207 = vpop.f32.mrf.mxu0
        %v5208 = vadd.f32 0.0, %v5207
        %5209 = vmatmul.f32.gmra.mxu0 %v1609
        %v5210 = vpop.f32.mrf.mxu0
        %v5211 = vadd.f32 0.0, %v5210
        %5212 = vmatmul.f32.gmra.mxu0 %v1612
        %v5213 = vpop.f32.mrf.mxu0
        %v5214 = vadd.f32 0.0, %v5213
        %5215 = vmatmul.f32.gmra.mxu0 %v1615
        %v5216 = vpop.f32.mrf.mxu0
        %v5217 = vadd.f32 0.0, %v5216
        %5218 = vmatmul.f32.gmra.mxu0 %v1618
        %v5219 = vpop.f32.mrf.mxu0
        %v5220 = vadd.f32 0.0, %v5219
        %5221 = vmatmul.f32.gmra.mxu0 %v1621
        %v5222 = vpop.f32.mrf.mxu0
        %v5223 = vadd.f32 0.0, %v5222
        %5224 = vmatmul.f32.gmra.mxu0 %v1624
        %v5225 = vpop.f32.mrf.mxu0
        %v5226 = vadd.f32 0.0, %v5225
        %5227 = vmatmul.f32.gmra.mxu0 %v1627
        %v5228 = vpop.f32.mrf.mxu0
        %v5229 = vadd.f32 0.0, %v5228
        %5230 = vmatmul.f32.gmra.mxu0 %v1630
        %v5231 = vpop.f32.mrf.mxu0
        %v5232 = vadd.f32 0.0, %v5231
        %5233 = vdwg.mxu0
        %5234 = vmatpush.msra.mxu0 0.0
        %5235 = vmatpush.msra.mxu0 0.0
        %5236 = vmatpush.msra.mxu0 0.0
        %5237 = vmatpush.msra.mxu0 0.0
        %5238 = vmatpush.msra.mxu0 %v5126
        %5239 = vmatpush.msra.mxu0 %v5123
        %5240 = vmatpush.msra.mxu0 %v5120
        %5241 = vmatpush.msra.mxu0 %v5117
        %5242 = vmatpush.msra.mxu0 %v5114
        %5243 = vmatpush.msra.mxu0 %v5111
        %5244 = vmatpush.msra.mxu0 %v5108
        %5245 = vmatpush.msra.mxu0 %v5105
        %5246 = vmatpush.msra.mxu0 %v5102
        %5247 = vmatpush.msra.mxu0 %v5099
        %5248 = vmatpush.msra.mxu0 %v5096
        %5249 = vmatpush.msra.mxu0 %v5093
        %5250 = vmatmul.f32.gmra.mxu0 %v1597
        %v5251 = vpop.f32.mrf.mxu0
        %v5252 = vadd.f32 0.0, %v5251
        %5253 = vmatmul.f32.gmra.mxu0 %v1600
        %v5254 = vpop.f32.mrf.mxu0
        %v5255 = vadd.f32 0.0, %v5254
        %5256 = vmatmul.f32.gmra.mxu0 %v1603
        %v5257 = vpop.f32.mrf.mxu0
        %v5258 = vadd.f32 0.0, %v5257
        %5259 = vmatmul.f32.gmra.mxu0 %v1606
        %v5260 = vpop.f32.mrf.mxu0
        %v5261 = vadd.f32 0.0, %v5260
        %5262 = vmatmul.f32.gmra.mxu0 %v1609
        %v5263 = vpop.f32.mrf.mxu0
        %v5264 = vadd.f32 0.0, %v5263
        %5265 = vmatmul.f32.gmra.mxu0 %v1612
        %v5266 = vpop.f32.mrf.mxu0
        %v5267 = vadd.f32 0.0, %v5266
        %5268 = vmatmul.f32.gmra.mxu0 %v1615
        %v5269 = vpop.f32.mrf.mxu0
        %v5270 = vadd.f32 0.0, %v5269
        %5271 = vmatmul.f32.gmra.mxu0 %v1618
        %v5272 = vpop.f32.mrf.mxu0
        %v5273 = vadd.f32 0.0, %v5272
        %5274 = vmatmul.f32.gmra.mxu0 %v1621
        %v5275 = vpop.f32.mrf.mxu0
        %v5276 = vadd.f32 0.0, %v5275
        %5277 = vmatmul.f32.gmra.mxu0 %v1624
        %v5278 = vpop.f32.mrf.mxu0
        %v5279 = vadd.f32 0.0, %v5278
        %5280 = vmatmul.f32.gmra.mxu0 %v1627
        %v5281 = vpop.f32.mrf.mxu0
        %v5282 = vadd.f32 0.0, %v5281
        %5283 = vmatmul.f32.gmra.mxu0 %v1630
        %v5284 = vpop.f32.mrf.mxu0
        %v5285 = vadd.f32 0.0, %v5284
        %5286 = vdwg.mxu0
        %v5287 = vmul.f32 %v5146, %v1181
        %v5288 = vmul.f32 %v5149, %v1182
        %v5289 = vmul.f32 %v5152, %v1183
        %v5290 = vmul.f32 %v5155, %v1184
        %v5291 = vmul.f32 %v5158, %v1185
        %v5292 = vmul.f32 %v5161, %v1186
        %v5293 = vmul.f32 %v5164, %v1187
        %v5294 = vmul.f32 %v5167, %v1188
        %v5295 = vmul.f32 %v5170, %v1189
        %v5296 = vmul.f32 %v5173, %v1190
        %v5297 = vmul.f32 %v5176, %v1191
        %v5298 = vmul.f32 %v5179, %v1192
        %v5299 = vmul.f32 %v1803, %v5199
        %v5300 = vmul.f32 %v1804, %v5202
        %v5301 = vmul.f32 %v1805, %v5205
        %v5302 = vmul.f32 %v1806, %v5208
        %v5303 = vmul.f32 %v1807, %v5211
        %v5304 = vmul.f32 %v1808, %v5214
        %v5305 = vmul.f32 %v1809, %v5217
        %v5306 = vmul.f32 %v1810, %v5220
        %v5307 = vmul.f32 %v1811, %v5223
        %v5308 = vmul.f32 %v1812, %v5226
        %v5309 = vmul.f32 %v1813, %v5229
        %v5310 = vmul.f32 %v1814, %v5232
        %v5311 = vsub.f32 %v5287, %v5299
        %v5312 = vsub.f32 %v5288, %v5300
        %v5313 = vsub.f32 %v5289, %v5301
        %v5314 = vsub.f32 %v5290, %v5302
        %v5315 = vsub.f32 %v5291, %v5303
        %v5316 = vsub.f32 %v5292, %v5304
        %v5317 = vsub.f32 %v5293, %v5305
        %v5318 = vsub.f32 %v5294, %v5306
        %v5319 = vsub.f32 %v5295, %v5307
        %v5320 = vsub.f32 %v5296, %v5308
        %v5321 = vsub.f32 %v5297, %v5309
        %v5322 = vsub.f32 %v5298, %v5310
        %v5323 = vadd.f32 %v5311, %v5252
        %v5324 = vadd.f32 %v5312, %v5255
        %v5325 = vadd.f32 %v5313, %v5258
        %v5326 = vadd.f32 %v5314, %v5261
        %v5327 = vadd.f32 %v5315, %v5264
        %v5328 = vadd.f32 %v5316, %v5267
        %v5329 = vadd.f32 %v5317, %v5270
        %v5330 = vadd.f32 %v5318, %v5273
        %v5331 = vadd.f32 %v5319, %v5276
        %v5332 = vadd.f32 %v5320, %v5279
        %v5333 = vadd.f32 %v5321, %v5282
        %v5334 = vadd.f32 %v5322, %v5285
        %vm5335 = vcmp.eq.f32.partialorder %v1217, 4.0
        %vm5336 = vcmp.eq.f32.partialorder %v1218, 4.0
        %vm5337 = vcmp.eq.f32.partialorder %v1219, 4.0
        %vm5338 = vcmp.eq.f32.partialorder %v1220, 4.0
        %vm5339 = vcmp.eq.f32.partialorder %v1221, 4.0
        %vm5340 = vcmp.eq.f32.partialorder %v1222, 4.0
        %vm5341 = vcmp.eq.f32.partialorder %v1223, 4.0
        %vm5342 = vcmp.eq.f32.partialorder %v1224, 4.0
        %vm5343 = vcmp.eq.f32.partialorder %v1225, 4.0
        %vm5344 = vcmp.eq.f32.partialorder %v1226, 4.0
        %vm5345 = vcmp.eq.f32.partialorder %v1227, 4.0
        %vm5346 = vcmp.eq.f32.partialorder %v1228, 4.0
        %v5347 = vsub.f32 5.0, %v1205
        %v5348 = vsub.f32 5.0, %v1206
        %v5349 = vsub.f32 5.0, %v1207
        %v5350 = vsub.f32 5.0, %v1208
        %v5351 = vsub.f32 5.0, %v1209
        %v5352 = vsub.f32 5.0, %v1210
        %v5353 = vsub.f32 5.0, %v1211
        %v5354 = vsub.f32 5.0, %v1212
        %v5355 = vsub.f32 5.0, %v1213
        %v5356 = vsub.f32 5.0, %v1214
        %v5357 = vsub.f32 5.0, %v1215
        %v5358 = vsub.f32 5.0, %v1216
        %v5359 = vsel %vm5335, %v5347, 0.0
        %v5360 = vsel %vm5336, %v5348, 0.0
        %v5361 = vsel %vm5337, %v5349, 0.0
        %v5362 = vsel %vm5338, %v5350, 0.0
        %v5363 = vsel %vm5339, %v5351, 0.0
        %v5364 = vsel %vm5340, %v5352, 0.0
        %v5365 = vsel %vm5341, %v5353, 0.0
        %v5366 = vsel %vm5342, %v5354, 0.0
        %v5367 = vsel %vm5343, %v5355, 0.0
        %v5368 = vsel %vm5344, %v5356, 0.0
        %v5369 = vsel %vm5345, %v5357, 0.0
        %v5370 = vsel %vm5346, %v5358, 0.0
        %vm5371 = vcmp.eq.f32.partialorder %v1229, 5.0
        %vm5372 = vcmp.eq.f32.partialorder %v1230, 5.0
        %vm5373 = vcmp.eq.f32.partialorder %v1231, 5.0
        %vm5374 = vcmp.eq.f32.partialorder %v1232, 5.0
        %vm5375 = vcmp.eq.f32.partialorder %v1233, 5.0
        %vm5376 = vcmp.eq.f32.partialorder %v1234, 5.0
        %vm5377 = vcmp.eq.f32.partialorder %v1235, 5.0
        %vm5378 = vcmp.eq.f32.partialorder %v1236, 5.0
        %vm5379 = vcmp.eq.f32.partialorder %v1237, 5.0
        %vm5380 = vcmp.eq.f32.partialorder %v1238, 5.0
        %vm5381 = vcmp.eq.f32.partialorder %v1239, 5.0
        %vm5382 = vcmp.eq.f32.partialorder %v1240, 5.0
        %v5383 = vsel %vm5371, %v4035, 0.0
        %v5384 = vsel %vm5372, %v4036, 0.0
        %v5385 = vsel %vm5373, %v4037, 0.0
        %v5386 = vsel %vm5374, %v4038, 0.0
        %v5387 = vsel %vm5375, %v4039, 0.0
        %v5388 = vsel %vm5376, %v4040, 0.0
        %v5389 = vsel %vm5377, %v4041, 0.0
        %v5390 = vsel %vm5378, %v4042, 0.0
        %v5391 = vsel %vm5379, %v4043, 0.0
        %v5392 = vsel %vm5380, %v4044, 0.0
        %v5393 = vsel %vm5381, %v4045, 0.0
        %v5394 = vsel %vm5382, %v4046, 0.0
        %v5395 = vmul.f32 %v4595, %v5359
        %v5396 = vmul.f32 %v4596, %v5360
        %v5397 = vmul.f32 %v4597, %v5361
        %v5398 = vmul.f32 %v4598, %v5362
        %v5399 = vmul.f32 %v4599, %v5363
        %v5400 = vmul.f32 %v4600, %v5364
        %v5401 = vmul.f32 %v4601, %v5365
        %v5402 = vmul.f32 %v4602, %v5366
        %v5403 = vmul.f32 %v4603, %v5367
        %v5404 = vmul.f32 %v4604, %v5368
        %v5405 = vmul.f32 %v4605, %v5369
        %v5406 = vmul.f32 %v4606, %v5370
        %v5407 = vadd.f32 %v4703, %v5395
        %v5408 = vadd.f32 %v4704, %v5396
        %v5409 = vadd.f32 %v4705, %v5397
        %v5410 = vadd.f32 %v4706, %v5398
        %v5411 = vadd.f32 %v4707, %v5399
        %v5412 = vadd.f32 %v4708, %v5400
        %v5413 = vadd.f32 %v4709, %v5401
        %v5414 = vadd.f32 %v4710, %v5402
        %v5415 = vadd.f32 %v4711, %v5403
        %v5416 = vadd.f32 %v4712, %v5404
        %v5417 = vadd.f32 %v4713, %v5405
        %v5418 = vadd.f32 %v4714, %v5406
        %v5419 = vmul.f32 %v5323, %v5383
        %v5420 = vmul.f32 %v5324, %v5384
        %v5421 = vmul.f32 %v5325, %v5385
        %v5422 = vmul.f32 %v5326, %v5386
        %v5423 = vmul.f32 %v5327, %v5387
        %v5424 = vmul.f32 %v5328, %v5388
        %v5425 = vmul.f32 %v5329, %v5389
        %v5426 = vmul.f32 %v5330, %v5390
        %v5427 = vmul.f32 %v5331, %v5391
        %v5428 = vmul.f32 %v5332, %v5392
        %v5429 = vmul.f32 %v5333, %v5393
        %v5430 = vmul.f32 %v5334, %v5394
        %v5431 = vadd.f32 %v5407, %v5419
        %v5432 = vadd.f32 %v5408, %v5420
        %v5433 = vadd.f32 %v5409, %v5421
        %v5434 = vadd.f32 %v5410, %v5422
        %v5435 = vadd.f32 %v5411, %v5423
        %v5436 = vadd.f32 %v5412, %v5424
        %v5437 = vadd.f32 %v5413, %v5425
        %v5438 = vadd.f32 %v5414, %v5426
        %v5439 = vadd.f32 %v5415, %v5427
        %v5440 = vadd.f32 %v5416, %v5428
        %v5441 = vadd.f32 %v5417, %v5429
        %v5442 = vadd.f32 %v5418, %v5430
        %v5443 = vmul.f32 %v4418, %v5359
        %v5444 = vmul.f32 %v4421, %v5360
        %v5445 = vmul.f32 %v4424, %v5361
        %v5446 = vmul.f32 %v4427, %v5362
        %v5447 = vmul.f32 %v4430, %v5363
        %v5448 = vmul.f32 %v4433, %v5364
        %v5449 = vmul.f32 %v4436, %v5365
        %v5450 = vmul.f32 %v4439, %v5366
        %v5451 = vmul.f32 %v4442, %v5367
        %v5452 = vmul.f32 %v4445, %v5368
        %v5453 = vmul.f32 %v4448, %v5369
        %v5454 = vmul.f32 %v4451, %v5370
        %v5455 = vadd.f32 %v4751, %v5443
        %v5456 = vadd.f32 %v4752, %v5444
        %v5457 = vadd.f32 %v4753, %v5445
        %v5458 = vadd.f32 %v4754, %v5446
        %v5459 = vadd.f32 %v4755, %v5447
        %v5460 = vadd.f32 %v4756, %v5448
        %v5461 = vadd.f32 %v4757, %v5449
        %v5462 = vadd.f32 %v4758, %v5450
        %v5463 = vadd.f32 %v4759, %v5451
        %v5464 = vadd.f32 %v4760, %v5452
        %v5465 = vadd.f32 %v4761, %v5453
        %v5466 = vadd.f32 %v4762, %v5454
        %v5467 = vmul.f32 %v5146, %v5383
        %v5468 = vmul.f32 %v5149, %v5384
        %v5469 = vmul.f32 %v5152, %v5385
        %v5470 = vmul.f32 %v5155, %v5386
        %v5471 = vmul.f32 %v5158, %v5387
        %v5472 = vmul.f32 %v5161, %v5388
        %v5473 = vmul.f32 %v5164, %v5389
        %v5474 = vmul.f32 %v5167, %v5390
        %v5475 = vmul.f32 %v5170, %v5391
        %v5476 = vmul.f32 %v5173, %v5392
        %v5477 = vmul.f32 %v5176, %v5393
        %v5478 = vmul.f32 %v5179, %v5394
        %v5479 = vadd.f32 %v5455, %v5467
        %v5480 = vadd.f32 %v5456, %v5468
        %v5481 = vadd.f32 %v5457, %v5469
        %v5482 = vadd.f32 %v5458, %v5470
        %v5483 = vadd.f32 %v5459, %v5471
        %v5484 = vadd.f32 %v5460, %v5472
        %v5485 = vadd.f32 %v5461, %v5473
        %v5486 = vadd.f32 %v5462, %v5474
        %v5487 = vadd.f32 %v5463, %v5475
        %v5488 = vadd.f32 %v5464, %v5476
        %v5489 = vadd.f32 %v5465, %v5477
        %v5490 = vadd.f32 %v5466, %v5478
        %v5491 = vsub.f32 %v1205, 6.0
        %v5492 = vsub.f32 %v1206, 6.0
        %v5493 = vsub.f32 %v1207, 6.0
        %v5494 = vsub.f32 %v1208, 6.0
        %v5495 = vsub.f32 %v1209, 6.0
        %v5496 = vsub.f32 %v1210, 6.0
        %v5497 = vsub.f32 %v1211, 6.0
        %v5498 = vsub.f32 %v1212, 6.0
        %v5499 = vsub.f32 %v1213, 6.0
        %v5500 = vsub.f32 %v1214, 6.0
        %v5501 = vsub.f32 %v1215, 6.0
        %v5502 = vsub.f32 %v1216, 6.0
        %v5503 = vand.u32 2147483647, %v5491
        %v5504 = vand.u32 2147483647, %v5492
        %v5505 = vand.u32 2147483647, %v5493
        %v5506 = vand.u32 2147483647, %v5494
        %v5507 = vand.u32 2147483647, %v5495
        %v5508 = vand.u32 2147483647, %v5496
        %v5509 = vand.u32 2147483647, %v5497
        %v5510 = vand.u32 2147483647, %v5498
        %v5511 = vand.u32 2147483647, %v5499
        %v5512 = vand.u32 2147483647, %v5500
        %v5513 = vand.u32 2147483647, %v5501
        %v5514 = vand.u32 2147483647, %v5502
        %v5515 = vmul.f32 %v1169, %v5503
        %v5516 = vmul.f32 %v1170, %v5504
        %v5517 = vmul.f32 %v1171, %v5505
        %v5518 = vmul.f32 %v1172, %v5506
        %v5519 = vmul.f32 %v1173, %v5507
        %v5520 = vmul.f32 %v1174, %v5508
        %v5521 = vmul.f32 %v1175, %v5509
        %v5522 = vmul.f32 %v1176, %v5510
        %v5523 = vmul.f32 %v1177, %v5511
        %v5524 = vmul.f32 %v1178, %v5512
        %v5525 = vmul.f32 %v1179, %v5513
        %v5526 = vmul.f32 %v1180, %v5514
        %v5527 = vadd.f32 %v5515, 0.0001
        %v5528 = vadd.f32 %v5516, 0.0001
        %v5529 = vadd.f32 %v5517, 0.0001
        %v5530 = vadd.f32 %v5518, 0.0001
        %v5531 = vadd.f32 %v5519, 0.0001
        %v5532 = vadd.f32 %v5520, 0.0001
        %v5533 = vadd.f32 %v5521, 0.0001
        %v5534 = vadd.f32 %v5522, 0.0001
        %v5535 = vadd.f32 %v5523, 0.0001
        %v5536 = vadd.f32 %v5524, 0.0001
        %v5537 = vadd.f32 %v5525, 0.0001
        %v5538 = vadd.f32 %v5526, 0.0001
        %v5539 = vlog2.pop %v5527
        %v5540 = vmul.f32 %v5539, 0.6931472
        %v5541 = vlog2.pop %v5528
        %v5542 = vmul.f32 %v5541, 0.6931472
        %v5543 = vlog2.pop %v5529
        %v5544 = vmul.f32 %v5543, 0.6931472
        %v5545 = vlog2.pop %v5530
        %v5546 = vmul.f32 %v5545, 0.6931472
        %v5547 = vlog2.pop %v5531
        %v5548 = vmul.f32 %v5547, 0.6931472
        %v5549 = vlog2.pop %v5532
        %v5550 = vmul.f32 %v5549, 0.6931472
        %v5551 = vlog2.pop %v5533
        %v5552 = vmul.f32 %v5551, 0.6931472
        %v5553 = vlog2.pop %v5534
        %v5554 = vmul.f32 %v5553, 0.6931472
        %v5555 = vlog2.pop %v5535
        %v5556 = vmul.f32 %v5555, 0.6931472
        %v5557 = vlog2.pop %v5536
        %v5558 = vmul.f32 %v5557, 0.6931472
        %v5559 = vlog2.pop %v5537
        %v5560 = vmul.f32 %v5559, 0.6931472
        %v5561 = vlog2.pop %v5538
        %v5562 = vmul.f32 %v5561, 0.6931472
        %v5563 = vmul.f32 %v5540, -1.2
        %v5564 = vmul.f32 %v5542, -1.2
        %v5565 = vmul.f32 %v5544, -1.2
        %v5566 = vmul.f32 %v5546, -1.2
        %v5567 = vmul.f32 %v5548, -1.2
        %v5568 = vmul.f32 %v5550, -1.2
        %v5569 = vmul.f32 %v5552, -1.2
        %v5570 = vmul.f32 %v5554, -1.2
        %v5571 = vmul.f32 %v5556, -1.2
        %v5572 = vmul.f32 %v5558, -1.2
        %v5573 = vmul.f32 %v5560, -1.2
        %v5574 = vmul.f32 %v5562, -1.2
        %v5575 = vmul.f32 %v5563, 1.442695
        %v5576 = vpow.pop %v5575
        %v5577 = vmul.f32 %v5564, 1.442695
        %v5578 = vpow.pop %v5577
        %v5579 = vmul.f32 %v5565, 1.442695
        %v5580 = vpow.pop %v5579
        %v5581 = vmul.f32 %v5566, 1.442695
        %v5582 = vpow.pop %v5581
        %v5583 = vmul.f32 %v5567, 1.442695
        %v5584 = vpow.pop %v5583
        %v5585 = vmul.f32 %v5568, 1.442695
        %v5586 = vpow.pop %v5585
        %v5587 = vmul.f32 %v5569, 1.442695
        %v5588 = vpow.pop %v5587
        %v5589 = vmul.f32 %v5570, 1.442695
        %v5590 = vpow.pop %v5589
        %v5591 = vmul.f32 %v5571, 1.442695
        %v5592 = vpow.pop %v5591
        %v5593 = vmul.f32 %v5572, 1.442695
        %v5594 = vpow.pop %v5593
        %v5595 = vmul.f32 %v5573, 1.442695
        %v5596 = vpow.pop %v5595
        %v5597 = vmul.f32 %v5574, 1.442695
        %v5598 = vpow.pop %v5597
        %v5599 = vmul.f32 %v5576, %v347
        %v5600 = vmul.f32 %v5578, %v348
        %v5601 = vmul.f32 %v5580, %v349
        %v5602 = vmul.f32 %v5582, %v350
        %v5603 = vmul.f32 %v5584, %v351
        %v5604 = vmul.f32 %v5586, %v352
        %v5605 = vmul.f32 %v5588, %v353
        %v5606 = vmul.f32 %v5590, %v354
        %v5607 = vmul.f32 %v5592, %v355
        %v5608 = vmul.f32 %v5594, %v356
        %v5609 = vmul.f32 %v5596, %v357
        %v5610 = vmul.f32 %v5598, %v358
        %v5611 = vmul.f32 %v5576, %v1181
        %v5612 = vmul.f32 %v5578, %v1182
        %v5613 = vmul.f32 %v5580, %v1183
        %v5614 = vmul.f32 %v5582, %v1184
        %v5615 = vmul.f32 %v5584, %v1185
        %v5616 = vmul.f32 %v5586, %v1186
        %v5617 = vmul.f32 %v5588, %v1187
        %v5618 = vmul.f32 %v5590, %v1188
        %v5619 = vmul.f32 %v5592, %v1189
        %v5620 = vmul.f32 %v5594, %v1190
        %v5621 = vmul.f32 %v5596, %v1191
        %v5622 = vmul.f32 %v5598, %v1192
        %v5624 = vsel %vm1361, %v5576, 0
        %v5627 = vsel %vm1361, %v5578, 0
        %v5630 = vsel %vm1361, %v5580, 0
        %v5633 = vsel %vm1361, %v5582, 0
        %v5636 = vsel %vm1361, %v5584, 0
        %v5639 = vsel %vm1361, %v5586, 0
        %v5642 = vsel %vm1361, %v5588, 0
        %v5645 = vsel %vm1361, %v5590, 0
        %v5648 = vsel %vm1361, %v5592, 0
        %v5651 = vsel %vm1361, %v5594, 0
        %v5654 = vsel %vm1361, %v5596, 0
        %v5657 = vsel %vm1361, %v5598, 0
        %v5660 = vsel %vm1361, %v5599, 0
        %v5663 = vsel %vm1361, %v5600, 0
        %v5666 = vsel %vm1361, %v5601, 0
        %v5669 = vsel %vm1361, %v5602, 0
        %v5672 = vsel %vm1361, %v5603, 0
        %v5675 = vsel %vm1361, %v5604, 0
        %v5678 = vsel %vm1361, %v5605, 0
        %v5681 = vsel %vm1361, %v5606, 0
        %v5684 = vsel %vm1361, %v5607, 0
        %v5687 = vsel %vm1361, %v5608, 0
        %v5690 = vsel %vm1361, %v5609, 0
        %v5693 = vsel %vm1361, %v5610, 0
        %v5696 = vsel %vm1361, %v5611, 0
        %v5699 = vsel %vm1361, %v5612, 0
        %v5702 = vsel %vm1361, %v5613, 0
        %v5705 = vsel %vm1361, %v5614, 0
        %v5708 = vsel %vm1361, %v5615, 0
        %v5711 = vsel %vm1361, %v5616, 0
        %v5714 = vsel %vm1361, %v5617, 0
        %v5717 = vsel %vm1361, %v5618, 0
        %v5720 = vsel %vm1361, %v5619, 0
        %v5723 = vsel %vm1361, %v5620, 0
        %v5726 = vsel %vm1361, %v5621, 0
        %v5729 = vsel %vm1361, %v5622, 0
        %5731 = vmatpush.msra.mxu0 0.0
        %5732 = vmatpush.msra.mxu0 %v385
        %5733 = vmatpush.msra.mxu0 %v384
        %5734 = vmatpush.msra.mxu0 %v383
        %5735 = vmatpush.msra.mxu0 %v382
        %5736 = vmatpush.msra.mxu0 %v381
        %5737 = vmatpush.msra.mxu0 %v380
        %5738 = vmatpush.msra.mxu0 %v379
        %5739 = vmatpush.msra.mxu0 %v378
        %5740 = vmatpush.msra.mxu0 %v377
        %5741 = vmatpush.msra.mxu0 %v376
        %5742 = vmatpush.msra.mxu0 %v375
        %5743 = vmatpush.msra.mxu0 %v374
        %5744 = vmatpush.msra.mxu0 %v373
        %5745 = vmatpush.msra.mxu0 %v372
        %5746 = vmatpush.msra.mxu0 %v371
        %5747 = vmatmul.f32.gmra.mxu0 %v5624
        %v5748 = vpop.f32.mrf.mxu0
        %v5749 = vadd.f32 0.0, %v5748
        %5750 = vmatmul.f32.gmra.mxu0 %v5627
        %v5751 = vpop.f32.mrf.mxu0
        %v5752 = vadd.f32 0.0, %v5751
        %5753 = vmatmul.f32.gmra.mxu0 %v5630
        %v5754 = vpop.f32.mrf.mxu0
        %v5755 = vadd.f32 0.0, %v5754
        %5756 = vmatmul.f32.gmra.mxu0 %v5633
        %v5757 = vpop.f32.mrf.mxu0
        %v5758 = vadd.f32 0.0, %v5757
        %5759 = vmatmul.f32.gmra.mxu0 %v5636
        %v5760 = vpop.f32.mrf.mxu0
        %v5761 = vadd.f32 0.0, %v5760
        %5762 = vmatmul.f32.gmra.mxu0 %v5639
        %v5763 = vpop.f32.mrf.mxu0
        %v5764 = vadd.f32 0.0, %v5763
        %5765 = vmatmul.f32.gmra.mxu0 %v5642
        %v5766 = vpop.f32.mrf.mxu0
        %v5767 = vadd.f32 0.0, %v5766
        %5768 = vmatmul.f32.gmra.mxu0 %v5645
        %v5769 = vpop.f32.mrf.mxu0
        %v5770 = vadd.f32 0.0, %v5769
        %5771 = vmatmul.f32.gmra.mxu0 %v5648
        %v5772 = vpop.f32.mrf.mxu0
        %v5773 = vadd.f32 0.0, %v5772
        %5774 = vmatmul.f32.gmra.mxu0 %v5651
        %v5775 = vpop.f32.mrf.mxu0
        %v5776 = vadd.f32 0.0, %v5775
        %5777 = vmatmul.f32.gmra.mxu0 %v5654
        %v5778 = vpop.f32.mrf.mxu0
        %v5779 = vadd.f32 0.0, %v5778
        %5780 = vmatmul.f32.gmra.mxu0 %v5657
        %v5781 = vpop.f32.mrf.mxu0
        %v5782 = vadd.f32 0.0, %v5781
        %5783 = vmatmul.f32.gmra.mxu0 %v5660
        %v5784 = vpop.f32.mrf.mxu0
        %v5785 = vadd.f32 0.0, %v5784
        %5786 = vmatmul.f32.gmra.mxu0 %v5663
        %v5787 = vpop.f32.mrf.mxu0
        %v5788 = vadd.f32 0.0, %v5787
        %5789 = vmatmul.f32.gmra.mxu0 %v5666
        %v5790 = vpop.f32.mrf.mxu0
        %v5791 = vadd.f32 0.0, %v5790
        %5792 = vmatmul.f32.gmra.mxu0 %v5669
        %v5793 = vpop.f32.mrf.mxu0
        %v5794 = vadd.f32 0.0, %v5793
        %5795 = vmatmul.f32.gmra.mxu0 %v5672
        %v5796 = vpop.f32.mrf.mxu0
        %v5797 = vadd.f32 0.0, %v5796
        %5798 = vmatmul.f32.gmra.mxu0 %v5675
        %v5799 = vpop.f32.mrf.mxu0
        %v5800 = vadd.f32 0.0, %v5799
        %5801 = vmatmul.f32.gmra.mxu0 %v5678
        %v5802 = vpop.f32.mrf.mxu0
        %v5803 = vadd.f32 0.0, %v5802
        %5804 = vmatmul.f32.gmra.mxu0 %v5681
        %v5805 = vpop.f32.mrf.mxu0
        %v5806 = vadd.f32 0.0, %v5805
        %5807 = vmatmul.f32.gmra.mxu0 %v5684
        %v5808 = vpop.f32.mrf.mxu0
        %v5809 = vadd.f32 0.0, %v5808
        %5810 = vmatmul.f32.gmra.mxu0 %v5687
        %v5811 = vpop.f32.mrf.mxu0
        %v5812 = vadd.f32 0.0, %v5811
        %5813 = vmatmul.f32.gmra.mxu0 %v5690
        %v5814 = vpop.f32.mrf.mxu0
        %v5815 = vadd.f32 0.0, %v5814
        %5816 = vmatmul.f32.gmra.mxu0 %v5693
        %v5817 = vpop.f32.mrf.mxu0
        %v5818 = vadd.f32 0.0, %v5817
        %5819 = vmatmul.f32.gmra.mxu0 %v5696
        %v5820 = vpop.f32.mrf.mxu0
        %v5821 = vadd.f32 0.0, %v5820
        %5822 = vmatmul.f32.gmra.mxu0 %v5699
        %v5823 = vpop.f32.mrf.mxu0
        %v5824 = vadd.f32 0.0, %v5823
        %5825 = vmatmul.f32.gmra.mxu0 %v5702
        %v5826 = vpop.f32.mrf.mxu0
        %v5827 = vadd.f32 0.0, %v5826
        %5828 = vmatmul.f32.gmra.mxu0 %v5705
        %v5829 = vpop.f32.mrf.mxu0
        %v5830 = vadd.f32 0.0, %v5829
        %5831 = vmatmul.f32.gmra.mxu0 %v5708
        %v5832 = vpop.f32.mrf.mxu0
        %v5833 = vadd.f32 0.0, %v5832
        %5834 = vmatmul.f32.gmra.mxu0 %v5711
        %v5835 = vpop.f32.mrf.mxu0
        %v5836 = vadd.f32 0.0, %v5835
        %5837 = vmatmul.f32.gmra.mxu0 %v5714
        %v5838 = vpop.f32.mrf.mxu0
        %v5839 = vadd.f32 0.0, %v5838
        %5840 = vmatmul.f32.gmra.mxu0 %v5717
        %v5841 = vpop.f32.mrf.mxu0
        %v5842 = vadd.f32 0.0, %v5841
        %5843 = vmatmul.f32.gmra.mxu0 %v5720
        %v5844 = vpop.f32.mrf.mxu0
        %v5845 = vadd.f32 0.0, %v5844
        %5846 = vmatmul.f32.gmra.mxu0 %v5723
        %v5847 = vpop.f32.mrf.mxu0
        %v5848 = vadd.f32 0.0, %v5847
        %5849 = vmatmul.f32.gmra.mxu0 %v5726
        %v5850 = vpop.f32.mrf.mxu0
        %v5851 = vadd.f32 0.0, %v5850
        %5852 = vmatmul.f32.gmra.mxu0 %v5729
        %v5853 = vpop.f32.mrf.mxu0
        %v5854 = vadd.f32 0.0, %v5853
        %5855 = vdwg.mxu0
        %5856 = vmatpush.msra.mxu0 0.0
        %5857 = vmatpush.msra.mxu0 0.0
        %5858 = vmatpush.msra.mxu0 0.0
        %5859 = vmatpush.msra.mxu0 0.0
        %5860 = vmatpush.msra.mxu0 %v5782
        %5861 = vmatpush.msra.mxu0 %v5779
        %5862 = vmatpush.msra.mxu0 %v5776
        %5863 = vmatpush.msra.mxu0 %v5773
        %5864 = vmatpush.msra.mxu0 %v5770
        %5865 = vmatpush.msra.mxu0 %v5767
        %5866 = vmatpush.msra.mxu0 %v5764
        %5867 = vmatpush.msra.mxu0 %v5761
        %5868 = vmatpush.msra.mxu0 %v5758
        %5869 = vmatpush.msra.mxu0 %v5755
        %5870 = vmatpush.msra.mxu0 %v5752
        %5871 = vmatpush.msra.mxu0 %v5749
        %5872 = vmatmul.f32.gmra.mxu0 %v1597
        %v5873 = vpop.f32.mrf.mxu0
        %v5874 = vadd.f32 0.0, %v5873
        %5875 = vmatmul.f32.gmra.mxu0 %v1600
        %v5876 = vpop.f32.mrf.mxu0
        %v5877 = vadd.f32 0.0, %v5876
        %5878 = vmatmul.f32.gmra.mxu0 %v1603
        %v5879 = vpop.f32.mrf.mxu0
        %v5880 = vadd.f32 0.0, %v5879
        %5881 = vmatmul.f32.gmra.mxu0 %v1606
        %v5882 = vpop.f32.mrf.mxu0
        %v5883 = vadd.f32 0.0, %v5882
        %5884 = vmatmul.f32.gmra.mxu0 %v1609
        %v5885 = vpop.f32.mrf.mxu0
        %v5886 = vadd.f32 0.0, %v5885
        %5887 = vmatmul.f32.gmra.mxu0 %v1612
        %v5888 = vpop.f32.mrf.mxu0
        %v5889 = vadd.f32 0.0, %v5888
        %5890 = vmatmul.f32.gmra.mxu0 %v1615
        %v5891 = vpop.f32.mrf.mxu0
        %v5892 = vadd.f32 0.0, %v5891
        %5893 = vmatmul.f32.gmra.mxu0 %v1618
        %v5894 = vpop.f32.mrf.mxu0
        %v5895 = vadd.f32 0.0, %v5894
        %5896 = vmatmul.f32.gmra.mxu0 %v1621
        %v5897 = vpop.f32.mrf.mxu0
        %v5898 = vadd.f32 0.0, %v5897
        %5899 = vmatmul.f32.gmra.mxu0 %v1624
        %v5900 = vpop.f32.mrf.mxu0
        %v5901 = vadd.f32 0.0, %v5900
        %5902 = vmatmul.f32.gmra.mxu0 %v1627
        %v5903 = vpop.f32.mrf.mxu0
        %v5904 = vadd.f32 0.0, %v5903
        %5905 = vmatmul.f32.gmra.mxu0 %v1630
        %v5906 = vpop.f32.mrf.mxu0
        %v5907 = vadd.f32 0.0, %v5906
        %5908 = vdwg.mxu0
        %5909 = vmatpush.msra.mxu0 0.0
        %5910 = vmatpush.msra.mxu0 0.0
        %5911 = vmatpush.msra.mxu0 0.0
        %5912 = vmatpush.msra.mxu0 0.0
        %5913 = vmatpush.msra.mxu0 %v5818
        %5914 = vmatpush.msra.mxu0 %v5815
        %5915 = vmatpush.msra.mxu0 %v5812
        %5916 = vmatpush.msra.mxu0 %v5809
        %5917 = vmatpush.msra.mxu0 %v5806
        %5918 = vmatpush.msra.mxu0 %v5803
        %5919 = vmatpush.msra.mxu0 %v5800
        %5920 = vmatpush.msra.mxu0 %v5797
        %5921 = vmatpush.msra.mxu0 %v5794
        %5922 = vmatpush.msra.mxu0 %v5791
        %5923 = vmatpush.msra.mxu0 %v5788
        %5924 = vmatpush.msra.mxu0 %v5785
        %5925 = vmatmul.f32.gmra.mxu0 %v1597
        %v5926 = vpop.f32.mrf.mxu0
        %v5927 = vadd.f32 0.0, %v5926
        %5928 = vmatmul.f32.gmra.mxu0 %v1600
        %v5929 = vpop.f32.mrf.mxu0
        %v5930 = vadd.f32 0.0, %v5929
        %5931 = vmatmul.f32.gmra.mxu0 %v1603
        %v5932 = vpop.f32.mrf.mxu0
        %v5933 = vadd.f32 0.0, %v5932
        %5934 = vmatmul.f32.gmra.mxu0 %v1606
        %v5935 = vpop.f32.mrf.mxu0
        %v5936 = vadd.f32 0.0, %v5935
        %5937 = vmatmul.f32.gmra.mxu0 %v1609
        %v5938 = vpop.f32.mrf.mxu0
        %v5939 = vadd.f32 0.0, %v5938
        %5940 = vmatmul.f32.gmra.mxu0 %v1612
        %v5941 = vpop.f32.mrf.mxu0
        %v5942 = vadd.f32 0.0, %v5941
        %5943 = vmatmul.f32.gmra.mxu0 %v1615
        %v5944 = vpop.f32.mrf.mxu0
        %v5945 = vadd.f32 0.0, %v5944
        %5946 = vmatmul.f32.gmra.mxu0 %v1618
        %v5947 = vpop.f32.mrf.mxu0
        %v5948 = vadd.f32 0.0, %v5947
        %5949 = vmatmul.f32.gmra.mxu0 %v1621
        %v5950 = vpop.f32.mrf.mxu0
        %v5951 = vadd.f32 0.0, %v5950
        %5952 = vmatmul.f32.gmra.mxu0 %v1624
        %v5953 = vpop.f32.mrf.mxu0
        %v5954 = vadd.f32 0.0, %v5953
        %5955 = vmatmul.f32.gmra.mxu0 %v1627
        %v5956 = vpop.f32.mrf.mxu0
        %v5957 = vadd.f32 0.0, %v5956
        %5958 = vmatmul.f32.gmra.mxu0 %v1630
        %v5959 = vpop.f32.mrf.mxu0
        %v5960 = vadd.f32 0.0, %v5959
        %5961 = vdwg.mxu0
        %5962 = vmatpush.msra.mxu0 0.0
        %5963 = vmatpush.msra.mxu0 0.0
        %5964 = vmatpush.msra.mxu0 0.0
        %5965 = vmatpush.msra.mxu0 0.0
        %5966 = vmatpush.msra.mxu0 %v5854
        %5967 = vmatpush.msra.mxu0 %v5851
        %5968 = vmatpush.msra.mxu0 %v5848
        %5969 = vmatpush.msra.mxu0 %v5845
        %5970 = vmatpush.msra.mxu0 %v5842
        %5971 = vmatpush.msra.mxu0 %v5839
        %5972 = vmatpush.msra.mxu0 %v5836
        %5973 = vmatpush.msra.mxu0 %v5833
        %5974 = vmatpush.msra.mxu0 %v5830
        %5975 = vmatpush.msra.mxu0 %v5827
        %5976 = vmatpush.msra.mxu0 %v5824
        %5977 = vmatpush.msra.mxu0 %v5821
        %5978 = vmatmul.f32.gmra.mxu0 %v1597
        %v5979 = vpop.f32.mrf.mxu0
        %v5980 = vadd.f32 0.0, %v5979
        %5981 = vmatmul.f32.gmra.mxu0 %v1600
        %v5982 = vpop.f32.mrf.mxu0
        %v5983 = vadd.f32 0.0, %v5982
        %5984 = vmatmul.f32.gmra.mxu0 %v1603
        %v5985 = vpop.f32.mrf.mxu0
        %v5986 = vadd.f32 0.0, %v5985
        %5987 = vmatmul.f32.gmra.mxu0 %v1606
        %v5988 = vpop.f32.mrf.mxu0
        %v5989 = vadd.f32 0.0, %v5988
        %5990 = vmatmul.f32.gmra.mxu0 %v1609
        %v5991 = vpop.f32.mrf.mxu0
        %v5992 = vadd.f32 0.0, %v5991
        %5993 = vmatmul.f32.gmra.mxu0 %v1612
        %v5994 = vpop.f32.mrf.mxu0
        %v5995 = vadd.f32 0.0, %v5994
        %5996 = vmatmul.f32.gmra.mxu0 %v1615
        %v5997 = vpop.f32.mrf.mxu0
        %v5998 = vadd.f32 0.0, %v5997
        %5999 = vmatmul.f32.gmra.mxu0 %v1618
        %v6000 = vpop.f32.mrf.mxu0
        %v6001 = vadd.f32 0.0, %v6000
        %6002 = vmatmul.f32.gmra.mxu0 %v1621
        %v6003 = vpop.f32.mrf.mxu0
        %v6004 = vadd.f32 0.0, %v6003
        %6005 = vmatmul.f32.gmra.mxu0 %v1624
        %v6006 = vpop.f32.mrf.mxu0
        %v6007 = vadd.f32 0.0, %v6006
        %6008 = vmatmul.f32.gmra.mxu0 %v1627
        %v6009 = vpop.f32.mrf.mxu0
        %v6010 = vadd.f32 0.0, %v6009
        %6011 = vmatmul.f32.gmra.mxu0 %v1630
        %v6012 = vpop.f32.mrf.mxu0
        %v6013 = vadd.f32 0.0, %v6012
        %6014 = vdwg.mxu0
        %v6015 = vmul.f32 %v5874, %v1181
        %v6016 = vmul.f32 %v5877, %v1182
        %v6017 = vmul.f32 %v5880, %v1183
        %v6018 = vmul.f32 %v5883, %v1184
        %v6019 = vmul.f32 %v5886, %v1185
        %v6020 = vmul.f32 %v5889, %v1186
        %v6021 = vmul.f32 %v5892, %v1187
        %v6022 = vmul.f32 %v5895, %v1188
        %v6023 = vmul.f32 %v5898, %v1189
        %v6024 = vmul.f32 %v5901, %v1190
        %v6025 = vmul.f32 %v5904, %v1191
        %v6026 = vmul.f32 %v5907, %v1192
        %v6027 = vmul.f32 %v1803, %v5927
        %v6028 = vmul.f32 %v1804, %v5930
        %v6029 = vmul.f32 %v1805, %v5933
        %v6030 = vmul.f32 %v1806, %v5936
        %v6031 = vmul.f32 %v1807, %v5939
        %v6032 = vmul.f32 %v1808, %v5942
        %v6033 = vmul.f32 %v1809, %v5945
        %v6034 = vmul.f32 %v1810, %v5948
        %v6035 = vmul.f32 %v1811, %v5951
        %v6036 = vmul.f32 %v1812, %v5954
        %v6037 = vmul.f32 %v1813, %v5957
        %v6038 = vmul.f32 %v1814, %v5960
        %v6039 = vsub.f32 %v6015, %v6027
        %v6040 = vsub.f32 %v6016, %v6028
        %v6041 = vsub.f32 %v6017, %v6029
        %v6042 = vsub.f32 %v6018, %v6030
        %v6043 = vsub.f32 %v6019, %v6031
        %v6044 = vsub.f32 %v6020, %v6032
        %v6045 = vsub.f32 %v6021, %v6033
        %v6046 = vsub.f32 %v6022, %v6034
        %v6047 = vsub.f32 %v6023, %v6035
        %v6048 = vsub.f32 %v6024, %v6036
        %v6049 = vsub.f32 %v6025, %v6037
        %v6050 = vsub.f32 %v6026, %v6038
        %v6051 = vadd.f32 %v6039, %v5980
        %v6052 = vadd.f32 %v6040, %v5983
        %v6053 = vadd.f32 %v6041, %v5986
        %v6054 = vadd.f32 %v6042, %v5989
        %v6055 = vadd.f32 %v6043, %v5992
        %v6056 = vadd.f32 %v6044, %v5995
        %v6057 = vadd.f32 %v6045, %v5998
        %v6058 = vadd.f32 %v6046, %v6001
        %v6059 = vadd.f32 %v6047, %v6004
        %v6060 = vadd.f32 %v6048, %v6007
        %v6061 = vadd.f32 %v6049, %v6010
        %v6062 = vadd.f32 %v6050, %v6013
        %vm6063 = vcmp.eq.f32.partialorder %v1217, 5.0
        %vm6064 = vcmp.eq.f32.partialorder %v1218, 5.0
        %vm6065 = vcmp.eq.f32.partialorder %v1219, 5.0
        %vm6066 = vcmp.eq.f32.partialorder %v1220, 5.0
        %vm6067 = vcmp.eq.f32.partialorder %v1221, 5.0
        %vm6068 = vcmp.eq.f32.partialorder %v1222, 5.0
        %vm6069 = vcmp.eq.f32.partialorder %v1223, 5.0
        %vm6070 = vcmp.eq.f32.partialorder %v1224, 5.0
        %vm6071 = vcmp.eq.f32.partialorder %v1225, 5.0
        %vm6072 = vcmp.eq.f32.partialorder %v1226, 5.0
        %vm6073 = vcmp.eq.f32.partialorder %v1227, 5.0
        %vm6074 = vcmp.eq.f32.partialorder %v1228, 5.0
        %v6075 = vsub.f32 6.0, %v1205
        %v6076 = vsub.f32 6.0, %v1206
        %v6077 = vsub.f32 6.0, %v1207
        %v6078 = vsub.f32 6.0, %v1208
        %v6079 = vsub.f32 6.0, %v1209
        %v6080 = vsub.f32 6.0, %v1210
        %v6081 = vsub.f32 6.0, %v1211
        %v6082 = vsub.f32 6.0, %v1212
        %v6083 = vsub.f32 6.0, %v1213
        %v6084 = vsub.f32 6.0, %v1214
        %v6085 = vsub.f32 6.0, %v1215
        %v6086 = vsub.f32 6.0, %v1216
        %v6087 = vsel %vm6063, %v6075, 0.0
        %v6088 = vsel %vm6064, %v6076, 0.0
        %v6089 = vsel %vm6065, %v6077, 0.0
        %v6090 = vsel %vm6066, %v6078, 0.0
        %v6091 = vsel %vm6067, %v6079, 0.0
        %v6092 = vsel %vm6068, %v6080, 0.0
        %v6093 = vsel %vm6069, %v6081, 0.0
        %v6094 = vsel %vm6070, %v6082, 0.0
        %v6095 = vsel %vm6071, %v6083, 0.0
        %v6096 = vsel %vm6072, %v6084, 0.0
        %v6097 = vsel %vm6073, %v6085, 0.0
        %v6098 = vsel %vm6074, %v6086, 0.0
        %vm6099 = vcmp.eq.f32.partialorder %v1229, 6.0
        %vm6100 = vcmp.eq.f32.partialorder %v1230, 6.0
        %vm6101 = vcmp.eq.f32.partialorder %v1231, 6.0
        %vm6102 = vcmp.eq.f32.partialorder %v1232, 6.0
        %vm6103 = vcmp.eq.f32.partialorder %v1233, 6.0
        %vm6104 = vcmp.eq.f32.partialorder %v1234, 6.0
        %vm6105 = vcmp.eq.f32.partialorder %v1235, 6.0
        %vm6106 = vcmp.eq.f32.partialorder %v1236, 6.0
        %vm6107 = vcmp.eq.f32.partialorder %v1237, 6.0
        %vm6108 = vcmp.eq.f32.partialorder %v1238, 6.0
        %vm6109 = vcmp.eq.f32.partialorder %v1239, 6.0
        %vm6110 = vcmp.eq.f32.partialorder %v1240, 6.0
        %v6111 = vsel %vm6099, %v4763, 0.0
        %v6112 = vsel %vm6100, %v4764, 0.0
        %v6113 = vsel %vm6101, %v4765, 0.0
        %v6114 = vsel %vm6102, %v4766, 0.0
        %v6115 = vsel %vm6103, %v4767, 0.0
        %v6116 = vsel %vm6104, %v4768, 0.0
        %v6117 = vsel %vm6105, %v4769, 0.0
        %v6118 = vsel %vm6106, %v4770, 0.0
        %v6119 = vsel %vm6107, %v4771, 0.0
        %v6120 = vsel %vm6108, %v4772, 0.0
        %v6121 = vsel %vm6109, %v4773, 0.0
        %v6122 = vsel %vm6110, %v4774, 0.0
        %v6123 = vmul.f32 %v5323, %v6087
        %v6124 = vmul.f32 %v5324, %v6088
        %v6125 = vmul.f32 %v5325, %v6089
        %v6126 = vmul.f32 %v5326, %v6090
        %v6127 = vmul.f32 %v5327, %v6091
        %v6128 = vmul.f32 %v5328, %v6092
        %v6129 = vmul.f32 %v5329, %v6093
        %v6130 = vmul.f32 %v5330, %v6094
        %v6131 = vmul.f32 %v5331, %v6095
        %v6132 = vmul.f32 %v5332, %v6096
        %v6133 = vmul.f32 %v5333, %v6097
        %v6134 = vmul.f32 %v5334, %v6098
        %v6135 = vadd.f32 %v5431, %v6123
        %v6136 = vadd.f32 %v5432, %v6124
        %v6137 = vadd.f32 %v5433, %v6125
        %v6138 = vadd.f32 %v5434, %v6126
        %v6139 = vadd.f32 %v5435, %v6127
        %v6140 = vadd.f32 %v5436, %v6128
        %v6141 = vadd.f32 %v5437, %v6129
        %v6142 = vadd.f32 %v5438, %v6130
        %v6143 = vadd.f32 %v5439, %v6131
        %v6144 = vadd.f32 %v5440, %v6132
        %v6145 = vadd.f32 %v5441, %v6133
        %v6146 = vadd.f32 %v5442, %v6134
        %v6147 = vmul.f32 %v6051, %v6111
        %v6148 = vmul.f32 %v6052, %v6112
        %v6149 = vmul.f32 %v6053, %v6113
        %v6150 = vmul.f32 %v6054, %v6114
        %v6151 = vmul.f32 %v6055, %v6115
        %v6152 = vmul.f32 %v6056, %v6116
        %v6153 = vmul.f32 %v6057, %v6117
        %v6154 = vmul.f32 %v6058, %v6118
        %v6155 = vmul.f32 %v6059, %v6119
        %v6156 = vmul.f32 %v6060, %v6120
        %v6157 = vmul.f32 %v6061, %v6121
        %v6158 = vmul.f32 %v6062, %v6122
        %v6159 = vadd.f32 %v6135, %v6147
        %v6160 = vadd.f32 %v6136, %v6148
        %v6161 = vadd.f32 %v6137, %v6149
        %v6162 = vadd.f32 %v6138, %v6150
        %v6163 = vadd.f32 %v6139, %v6151
        %v6164 = vadd.f32 %v6140, %v6152
        %v6165 = vadd.f32 %v6141, %v6153
        %v6166 = vadd.f32 %v6142, %v6154
        %v6167 = vadd.f32 %v6143, %v6155
        %v6168 = vadd.f32 %v6144, %v6156
        %v6169 = vadd.f32 %v6145, %v6157
        %v6170 = vadd.f32 %v6146, %v6158
        %v6171 = vmul.f32 %v5146, %v6087
        %v6172 = vmul.f32 %v5149, %v6088
        %v6173 = vmul.f32 %v5152, %v6089
        %v6174 = vmul.f32 %v5155, %v6090
        %v6175 = vmul.f32 %v5158, %v6091
        %v6176 = vmul.f32 %v5161, %v6092
        %v6177 = vmul.f32 %v5164, %v6093
        %v6178 = vmul.f32 %v5167, %v6094
        %v6179 = vmul.f32 %v5170, %v6095
        %v6180 = vmul.f32 %v5173, %v6096
        %v6181 = vmul.f32 %v5176, %v6097
        %v6182 = vmul.f32 %v5179, %v6098
        %v6183 = vadd.f32 %v5479, %v6171
        %v6184 = vadd.f32 %v5480, %v6172
        %v6185 = vadd.f32 %v5481, %v6173
        %v6186 = vadd.f32 %v5482, %v6174
        %v6187 = vadd.f32 %v5483, %v6175
        %v6188 = vadd.f32 %v5484, %v6176
        %v6189 = vadd.f32 %v5485, %v6177
        %v6190 = vadd.f32 %v5486, %v6178
        %v6191 = vadd.f32 %v5487, %v6179
        %v6192 = vadd.f32 %v5488, %v6180
        %v6193 = vadd.f32 %v5489, %v6181
        %v6194 = vadd.f32 %v5490, %v6182
        %v6195 = vmul.f32 %v5874, %v6111
        %v6196 = vmul.f32 %v5877, %v6112
        %v6197 = vmul.f32 %v5880, %v6113
        %v6198 = vmul.f32 %v5883, %v6114
        %v6199 = vmul.f32 %v5886, %v6115
        %v6200 = vmul.f32 %v5889, %v6116
        %v6201 = vmul.f32 %v5892, %v6117
        %v6202 = vmul.f32 %v5895, %v6118
        %v6203 = vmul.f32 %v5898, %v6119
        %v6204 = vmul.f32 %v5901, %v6120
        %v6205 = vmul.f32 %v5904, %v6121
        %v6206 = vmul.f32 %v5907, %v6122
        %v6207 = vadd.f32 %v6183, %v6195
        %v6208 = vadd.f32 %v6184, %v6196
        %v6209 = vadd.f32 %v6185, %v6197
        %v6210 = vadd.f32 %v6186, %v6198
        %v6211 = vadd.f32 %v6187, %v6199
        %v6212 = vadd.f32 %v6188, %v6200
        %v6213 = vadd.f32 %v6189, %v6201
        %v6214 = vadd.f32 %v6190, %v6202
        %v6215 = vadd.f32 %v6191, %v6203
        %v6216 = vadd.f32 %v6192, %v6204
        %v6217 = vadd.f32 %v6193, %v6205
        %v6218 = vadd.f32 %v6194, %v6206
        %v6219 = vsub.f32 %v1205, 7.0
        %v6220 = vsub.f32 %v1206, 7.0
        %v6221 = vsub.f32 %v1207, 7.0
        %v6222 = vsub.f32 %v1208, 7.0
        %v6223 = vsub.f32 %v1209, 7.0
        %v6224 = vsub.f32 %v1210, 7.0
        %v6225 = vsub.f32 %v1211, 7.0
        %v6226 = vsub.f32 %v1212, 7.0
        %v6227 = vsub.f32 %v1213, 7.0
        %v6228 = vsub.f32 %v1214, 7.0
        %v6229 = vsub.f32 %v1215, 7.0
        %v6230 = vsub.f32 %v1216, 7.0
        %v6231 = vand.u32 2147483647, %v6219
        %v6232 = vand.u32 2147483647, %v6220
        %v6233 = vand.u32 2147483647, %v6221
        %v6234 = vand.u32 2147483647, %v6222
        %v6235 = vand.u32 2147483647, %v6223
        %v6236 = vand.u32 2147483647, %v6224
        %v6237 = vand.u32 2147483647, %v6225
        %v6238 = vand.u32 2147483647, %v6226
        %v6239 = vand.u32 2147483647, %v6227
        %v6240 = vand.u32 2147483647, %v6228
        %v6241 = vand.u32 2147483647, %v6229
        %v6242 = vand.u32 2147483647, %v6230
        %v6243 = vmul.f32 %v1169, %v6231
        %v6244 = vmul.f32 %v1170, %v6232
        %v6245 = vmul.f32 %v1171, %v6233
        %v6246 = vmul.f32 %v1172, %v6234
        %v6247 = vmul.f32 %v1173, %v6235
        %v6248 = vmul.f32 %v1174, %v6236
        %v6249 = vmul.f32 %v1175, %v6237
        %v6250 = vmul.f32 %v1176, %v6238
        %v6251 = vmul.f32 %v1177, %v6239
        %v6252 = vmul.f32 %v1178, %v6240
        %v6253 = vmul.f32 %v1179, %v6241
        %v6254 = vmul.f32 %v1180, %v6242
        %v6255 = vadd.f32 %v6243, 0.0001
        %v6256 = vadd.f32 %v6244, 0.0001
        %v6257 = vadd.f32 %v6245, 0.0001
        %v6258 = vadd.f32 %v6246, 0.0001
        %v6259 = vadd.f32 %v6247, 0.0001
        %v6260 = vadd.f32 %v6248, 0.0001
        %v6261 = vadd.f32 %v6249, 0.0001
        %v6262 = vadd.f32 %v6250, 0.0001
        %v6263 = vadd.f32 %v6251, 0.0001
        %v6264 = vadd.f32 %v6252, 0.0001
        %v6265 = vadd.f32 %v6253, 0.0001
        %v6266 = vadd.f32 %v6254, 0.0001
        %v6267 = vlog2.pop %v6255
        %v6268 = vmul.f32 %v6267, 0.6931472
        %v6269 = vlog2.pop %v6256
        %v6270 = vmul.f32 %v6269, 0.6931472
        %v6271 = vlog2.pop %v6257
        %v6272 = vmul.f32 %v6271, 0.6931472
        %v6273 = vlog2.pop %v6258
        %v6274 = vmul.f32 %v6273, 0.6931472
        %v6275 = vlog2.pop %v6259
        %v6276 = vmul.f32 %v6275, 0.6931472
        %v6277 = vlog2.pop %v6260
        %v6278 = vmul.f32 %v6277, 0.6931472
        %v6279 = vlog2.pop %v6261
        %v6280 = vmul.f32 %v6279, 0.6931472
        %v6281 = vlog2.pop %v6262
        %v6282 = vmul.f32 %v6281, 0.6931472
        %v6283 = vlog2.pop %v6263
        %v6284 = vmul.f32 %v6283, 0.6931472
        %v6285 = vlog2.pop %v6264
        %v6286 = vmul.f32 %v6285, 0.6931472
        %v6287 = vlog2.pop %v6265
        %v6288 = vmul.f32 %v6287, 0.6931472
        %v6289 = vlog2.pop %v6266
        %v6290 = vmul.f32 %v6289, 0.6931472
        %v6291 = vmul.f32 %v6268, -1.2
        %v6292 = vmul.f32 %v6270, -1.2
        %v6293 = vmul.f32 %v6272, -1.2
        %v6294 = vmul.f32 %v6274, -1.2
        %v6295 = vmul.f32 %v6276, -1.2
        %v6296 = vmul.f32 %v6278, -1.2
        %v6297 = vmul.f32 %v6280, -1.2
        %v6298 = vmul.f32 %v6282, -1.2
        %v6299 = vmul.f32 %v6284, -1.2
        %v6300 = vmul.f32 %v6286, -1.2
        %v6301 = vmul.f32 %v6288, -1.2
        %v6302 = vmul.f32 %v6290, -1.2
        %v6303 = vmul.f32 %v6291, 1.442695
        %v6304 = vpow.pop %v6303
        %v6305 = vmul.f32 %v6292, 1.442695
        %v6306 = vpow.pop %v6305
        %v6307 = vmul.f32 %v6293, 1.442695
        %v6308 = vpow.pop %v6307
        %v6309 = vmul.f32 %v6294, 1.442695
        %v6310 = vpow.pop %v6309
        %v6311 = vmul.f32 %v6295, 1.442695
        %v6312 = vpow.pop %v6311
        %v6313 = vmul.f32 %v6296, 1.442695
        %v6314 = vpow.pop %v6313
        %v6315 = vmul.f32 %v6297, 1.442695
        %v6316 = vpow.pop %v6315
        %v6317 = vmul.f32 %v6298, 1.442695
        %v6318 = vpow.pop %v6317
        %v6319 = vmul.f32 %v6299, 1.442695
        %v6320 = vpow.pop %v6319
        %v6321 = vmul.f32 %v6300, 1.442695
        %v6322 = vpow.pop %v6321
        %v6323 = vmul.f32 %v6301, 1.442695
        %v6324 = vpow.pop %v6323
        %v6325 = vmul.f32 %v6302, 1.442695
        %v6326 = vpow.pop %v6325
        %v6327 = vmul.f32 %v6304, %v347
        %v6328 = vmul.f32 %v6306, %v348
        %v6329 = vmul.f32 %v6308, %v349
        %v6330 = vmul.f32 %v6310, %v350
        %v6331 = vmul.f32 %v6312, %v351
        %v6332 = vmul.f32 %v6314, %v352
        %v6333 = vmul.f32 %v6316, %v353
        %v6334 = vmul.f32 %v6318, %v354
        %v6335 = vmul.f32 %v6320, %v355
        %v6336 = vmul.f32 %v6322, %v356
        %v6337 = vmul.f32 %v6324, %v357
        %v6338 = vmul.f32 %v6326, %v358
        %v6339 = vmul.f32 %v6304, %v1181
        %v6340 = vmul.f32 %v6306, %v1182
        %v6341 = vmul.f32 %v6308, %v1183
        %v6342 = vmul.f32 %v6310, %v1184
        %v6343 = vmul.f32 %v6312, %v1185
        %v6344 = vmul.f32 %v6314, %v1186
        %v6345 = vmul.f32 %v6316, %v1187
        %v6346 = vmul.f32 %v6318, %v1188
        %v6347 = vmul.f32 %v6320, %v1189
        %v6348 = vmul.f32 %v6322, %v1190
        %v6349 = vmul.f32 %v6324, %v1191
        %v6350 = vmul.f32 %v6326, %v1192
        %v6352 = vsel %vm1361, %v6304, 0
        %v6355 = vsel %vm1361, %v6306, 0
        %v6358 = vsel %vm1361, %v6308, 0
        %v6361 = vsel %vm1361, %v6310, 0
        %v6364 = vsel %vm1361, %v6312, 0
        %v6367 = vsel %vm1361, %v6314, 0
        %v6370 = vsel %vm1361, %v6316, 0
        %v6373 = vsel %vm1361, %v6318, 0
        %v6376 = vsel %vm1361, %v6320, 0
        %v6379 = vsel %vm1361, %v6322, 0
        %v6382 = vsel %vm1361, %v6324, 0
        %v6385 = vsel %vm1361, %v6326, 0
        %v6388 = vsel %vm1361, %v6327, 0
        %v6391 = vsel %vm1361, %v6328, 0
        %v6394 = vsel %vm1361, %v6329, 0
        %v6397 = vsel %vm1361, %v6330, 0
        %v6400 = vsel %vm1361, %v6331, 0
        %v6403 = vsel %vm1361, %v6332, 0
        %v6406 = vsel %vm1361, %v6333, 0
        %v6409 = vsel %vm1361, %v6334, 0
        %v6412 = vsel %vm1361, %v6335, 0
        %v6415 = vsel %vm1361, %v6336, 0
        %v6418 = vsel %vm1361, %v6337, 0
        %v6421 = vsel %vm1361, %v6338, 0
        %v6424 = vsel %vm1361, %v6339, 0
        %v6427 = vsel %vm1361, %v6340, 0
        %v6430 = vsel %vm1361, %v6341, 0
        %v6433 = vsel %vm1361, %v6342, 0
        %v6436 = vsel %vm1361, %v6343, 0
        %v6439 = vsel %vm1361, %v6344, 0
        %v6442 = vsel %vm1361, %v6345, 0
        %v6445 = vsel %vm1361, %v6346, 0
        %v6448 = vsel %vm1361, %v6347, 0
        %v6451 = vsel %vm1361, %v6348, 0
        %v6454 = vsel %vm1361, %v6349, 0
        %v6457 = vsel %vm1361, %v6350, 0
        %6459 = vmatpush.msra.mxu0 0.0
        %6460 = vmatpush.msra.mxu0 %v385
        %6461 = vmatpush.msra.mxu0 %v384
        %6462 = vmatpush.msra.mxu0 %v383
        %6463 = vmatpush.msra.mxu0 %v382
        %6464 = vmatpush.msra.mxu0 %v381
        %6465 = vmatpush.msra.mxu0 %v380
        %6466 = vmatpush.msra.mxu0 %v379
        %6467 = vmatpush.msra.mxu0 %v378
        %6468 = vmatpush.msra.mxu0 %v377
        %6469 = vmatpush.msra.mxu0 %v376
        %6470 = vmatpush.msra.mxu0 %v375
        %6471 = vmatpush.msra.mxu0 %v374
        %6472 = vmatpush.msra.mxu0 %v373
        %6473 = vmatpush.msra.mxu0 %v372
        %6474 = vmatpush.msra.mxu0 %v371
        %6475 = vmatmul.f32.gmra.mxu0 %v6352
        %v6476 = vpop.f32.mrf.mxu0
        %v6477 = vadd.f32 0.0, %v6476
        %6478 = vmatmul.f32.gmra.mxu0 %v6355
        %v6479 = vpop.f32.mrf.mxu0
        %v6480 = vadd.f32 0.0, %v6479
        %6481 = vmatmul.f32.gmra.mxu0 %v6358
        %v6482 = vpop.f32.mrf.mxu0
        %v6483 = vadd.f32 0.0, %v6482
        %6484 = vmatmul.f32.gmra.mxu0 %v6361
        %v6485 = vpop.f32.mrf.mxu0
        %v6486 = vadd.f32 0.0, %v6485
        %6487 = vmatmul.f32.gmra.mxu0 %v6364
        %v6488 = vpop.f32.mrf.mxu0
        %v6489 = vadd.f32 0.0, %v6488
        %6490 = vmatmul.f32.gmra.mxu0 %v6367
        %v6491 = vpop.f32.mrf.mxu0
        %v6492 = vadd.f32 0.0, %v6491
        %6493 = vmatmul.f32.gmra.mxu0 %v6370
        %v6494 = vpop.f32.mrf.mxu0
        %v6495 = vadd.f32 0.0, %v6494
        %6496 = vmatmul.f32.gmra.mxu0 %v6373
        %v6497 = vpop.f32.mrf.mxu0
        %v6498 = vadd.f32 0.0, %v6497
        %6499 = vmatmul.f32.gmra.mxu0 %v6376
        %v6500 = vpop.f32.mrf.mxu0
        %v6501 = vadd.f32 0.0, %v6500
        %6502 = vmatmul.f32.gmra.mxu0 %v6379
        %v6503 = vpop.f32.mrf.mxu0
        %v6504 = vadd.f32 0.0, %v6503
        %6505 = vmatmul.f32.gmra.mxu0 %v6382
        %v6506 = vpop.f32.mrf.mxu0
        %v6507 = vadd.f32 0.0, %v6506
        %6508 = vmatmul.f32.gmra.mxu0 %v6385
        %v6509 = vpop.f32.mrf.mxu0
        %v6510 = vadd.f32 0.0, %v6509
        %6511 = vmatmul.f32.gmra.mxu0 %v6388
        %v6512 = vpop.f32.mrf.mxu0
        %v6513 = vadd.f32 0.0, %v6512
        %6514 = vmatmul.f32.gmra.mxu0 %v6391
        %v6515 = vpop.f32.mrf.mxu0
        %v6516 = vadd.f32 0.0, %v6515
        %6517 = vmatmul.f32.gmra.mxu0 %v6394
        %v6518 = vpop.f32.mrf.mxu0
        %v6519 = vadd.f32 0.0, %v6518
        %6520 = vmatmul.f32.gmra.mxu0 %v6397
        %v6521 = vpop.f32.mrf.mxu0
        %v6522 = vadd.f32 0.0, %v6521
        %6523 = vmatmul.f32.gmra.mxu0 %v6400
        %v6524 = vpop.f32.mrf.mxu0
        %v6525 = vadd.f32 0.0, %v6524
        %6526 = vmatmul.f32.gmra.mxu0 %v6403
        %v6527 = vpop.f32.mrf.mxu0
        %v6528 = vadd.f32 0.0, %v6527
        %6529 = vmatmul.f32.gmra.mxu0 %v6406
        %v6530 = vpop.f32.mrf.mxu0
        %v6531 = vadd.f32 0.0, %v6530
        %6532 = vmatmul.f32.gmra.mxu0 %v6409
        %v6533 = vpop.f32.mrf.mxu0
        %v6534 = vadd.f32 0.0, %v6533
        %6535 = vmatmul.f32.gmra.mxu0 %v6412
        %v6536 = vpop.f32.mrf.mxu0
        %v6537 = vadd.f32 0.0, %v6536
        %6538 = vmatmul.f32.gmra.mxu0 %v6415
        %v6539 = vpop.f32.mrf.mxu0
        %v6540 = vadd.f32 0.0, %v6539
        %6541 = vmatmul.f32.gmra.mxu0 %v6418
        %v6542 = vpop.f32.mrf.mxu0
        %v6543 = vadd.f32 0.0, %v6542
        %6544 = vmatmul.f32.gmra.mxu0 %v6421
        %v6545 = vpop.f32.mrf.mxu0
        %v6546 = vadd.f32 0.0, %v6545
        %6547 = vmatmul.f32.gmra.mxu0 %v6424
        %v6548 = vpop.f32.mrf.mxu0
        %v6549 = vadd.f32 0.0, %v6548
        %6550 = vmatmul.f32.gmra.mxu0 %v6427
        %v6551 = vpop.f32.mrf.mxu0
        %v6552 = vadd.f32 0.0, %v6551
        %6553 = vmatmul.f32.gmra.mxu0 %v6430
        %v6554 = vpop.f32.mrf.mxu0
        %v6555 = vadd.f32 0.0, %v6554
        %6556 = vmatmul.f32.gmra.mxu0 %v6433
        %v6557 = vpop.f32.mrf.mxu0
        %v6558 = vadd.f32 0.0, %v6557
        %6559 = vmatmul.f32.gmra.mxu0 %v6436
        %v6560 = vpop.f32.mrf.mxu0
        %v6561 = vadd.f32 0.0, %v6560
        %6562 = vmatmul.f32.gmra.mxu0 %v6439
        %v6563 = vpop.f32.mrf.mxu0
        %v6564 = vadd.f32 0.0, %v6563
        %6565 = vmatmul.f32.gmra.mxu0 %v6442
        %v6566 = vpop.f32.mrf.mxu0
        %v6567 = vadd.f32 0.0, %v6566
        %6568 = vmatmul.f32.gmra.mxu0 %v6445
        %v6569 = vpop.f32.mrf.mxu0
        %v6570 = vadd.f32 0.0, %v6569
        %6571 = vmatmul.f32.gmra.mxu0 %v6448
        %v6572 = vpop.f32.mrf.mxu0
        %v6573 = vadd.f32 0.0, %v6572
        %6574 = vmatmul.f32.gmra.mxu0 %v6451
        %v6575 = vpop.f32.mrf.mxu0
        %v6576 = vadd.f32 0.0, %v6575
        %6577 = vmatmul.f32.gmra.mxu0 %v6454
        %v6578 = vpop.f32.mrf.mxu0
        %v6579 = vadd.f32 0.0, %v6578
        %6580 = vmatmul.f32.gmra.mxu0 %v6457
        %v6581 = vpop.f32.mrf.mxu0
        %v6582 = vadd.f32 0.0, %v6581
        %6583 = vdwg.mxu0
        %6584 = vmatpush.msra.mxu0 0.0
        %6585 = vmatpush.msra.mxu0 0.0
        %6586 = vmatpush.msra.mxu0 0.0
        %6587 = vmatpush.msra.mxu0 0.0
        %6588 = vmatpush.msra.mxu0 %v6510
        %6589 = vmatpush.msra.mxu0 %v6507
        %6590 = vmatpush.msra.mxu0 %v6504
        %6591 = vmatpush.msra.mxu0 %v6501
        %6592 = vmatpush.msra.mxu0 %v6498
        %6593 = vmatpush.msra.mxu0 %v6495
        %6594 = vmatpush.msra.mxu0 %v6492
        %6595 = vmatpush.msra.mxu0 %v6489
        %6596 = vmatpush.msra.mxu0 %v6486
        %6597 = vmatpush.msra.mxu0 %v6483
        %6598 = vmatpush.msra.mxu0 %v6480
        %6599 = vmatpush.msra.mxu0 %v6477
        %6600 = vmatmul.f32.gmra.mxu0 %v1597
        %v6601 = vpop.f32.mrf.mxu0
        %v6602 = vadd.f32 0.0, %v6601
        %6603 = vmatmul.f32.gmra.mxu0 %v1600
        %v6604 = vpop.f32.mrf.mxu0
        %v6605 = vadd.f32 0.0, %v6604
        %6606 = vmatmul.f32.gmra.mxu0 %v1603
        %v6607 = vpop.f32.mrf.mxu0
        %v6608 = vadd.f32 0.0, %v6607
        %6609 = vmatmul.f32.gmra.mxu0 %v1606
        %v6610 = vpop.f32.mrf.mxu0
        %v6611 = vadd.f32 0.0, %v6610
        %6612 = vmatmul.f32.gmra.mxu0 %v1609
        %v6613 = vpop.f32.mrf.mxu0
        %v6614 = vadd.f32 0.0, %v6613
        %6615 = vmatmul.f32.gmra.mxu0 %v1612
        %v6616 = vpop.f32.mrf.mxu0
        %v6617 = vadd.f32 0.0, %v6616
        %6618 = vmatmul.f32.gmra.mxu0 %v1615
        %v6619 = vpop.f32.mrf.mxu0
        %v6620 = vadd.f32 0.0, %v6619
        %6621 = vmatmul.f32.gmra.mxu0 %v1618
        %v6622 = vpop.f32.mrf.mxu0
        %v6623 = vadd.f32 0.0, %v6622
        %6624 = vmatmul.f32.gmra.mxu0 %v1621
        %v6625 = vpop.f32.mrf.mxu0
        %v6626 = vadd.f32 0.0, %v6625
        %6627 = vmatmul.f32.gmra.mxu0 %v1624
        %v6628 = vpop.f32.mrf.mxu0
        %v6629 = vadd.f32 0.0, %v6628
        %6630 = vmatmul.f32.gmra.mxu0 %v1627
        %v6631 = vpop.f32.mrf.mxu0
        %v6632 = vadd.f32 0.0, %v6631
        %6633 = vmatmul.f32.gmra.mxu0 %v1630
        %v6634 = vpop.f32.mrf.mxu0
        %v6635 = vadd.f32 0.0, %v6634
        %6636 = vdwg.mxu0
        %6637 = vmatpush.msra.mxu0 0.0
        %6638 = vmatpush.msra.mxu0 0.0
        %6639 = vmatpush.msra.mxu0 0.0
        %6640 = vmatpush.msra.mxu0 0.0
        %6641 = vmatpush.msra.mxu0 %v6546
        %6642 = vmatpush.msra.mxu0 %v6543
        %6643 = vmatpush.msra.mxu0 %v6540
        %6644 = vmatpush.msra.mxu0 %v6537
        %6645 = vmatpush.msra.mxu0 %v6534
        %6646 = vmatpush.msra.mxu0 %v6531
        %6647 = vmatpush.msra.mxu0 %v6528
        %6648 = vmatpush.msra.mxu0 %v6525
        %6649 = vmatpush.msra.mxu0 %v6522
        %6650 = vmatpush.msra.mxu0 %v6519
        %6651 = vmatpush.msra.mxu0 %v6516
        %6652 = vmatpush.msra.mxu0 %v6513
        %6653 = vmatmul.f32.gmra.mxu0 %v1597
        %v6654 = vpop.f32.mrf.mxu0
        %v6655 = vadd.f32 0.0, %v6654
        %6656 = vmatmul.f32.gmra.mxu0 %v1600
        %v6657 = vpop.f32.mrf.mxu0
        %v6658 = vadd.f32 0.0, %v6657
        %6659 = vmatmul.f32.gmra.mxu0 %v1603
        %v6660 = vpop.f32.mrf.mxu0
        %v6661 = vadd.f32 0.0, %v6660
        %6662 = vmatmul.f32.gmra.mxu0 %v1606
        %v6663 = vpop.f32.mrf.mxu0
        %v6664 = vadd.f32 0.0, %v6663
        %6665 = vmatmul.f32.gmra.mxu0 %v1609
        %v6666 = vpop.f32.mrf.mxu0
        %v6667 = vadd.f32 0.0, %v6666
        %6668 = vmatmul.f32.gmra.mxu0 %v1612
        %v6669 = vpop.f32.mrf.mxu0
        %v6670 = vadd.f32 0.0, %v6669
        %6671 = vmatmul.f32.gmra.mxu0 %v1615
        %v6672 = vpop.f32.mrf.mxu0
        %v6673 = vadd.f32 0.0, %v6672
        %6674 = vmatmul.f32.gmra.mxu0 %v1618
        %v6675 = vpop.f32.mrf.mxu0
        %v6676 = vadd.f32 0.0, %v6675
        %6677 = vmatmul.f32.gmra.mxu0 %v1621
        %v6678 = vpop.f32.mrf.mxu0
        %v6679 = vadd.f32 0.0, %v6678
        %6680 = vmatmul.f32.gmra.mxu0 %v1624
        %v6681 = vpop.f32.mrf.mxu0
        %v6682 = vadd.f32 0.0, %v6681
        %6683 = vmatmul.f32.gmra.mxu0 %v1627
        %v6684 = vpop.f32.mrf.mxu0
        %v6685 = vadd.f32 0.0, %v6684
        %6686 = vmatmul.f32.gmra.mxu0 %v1630
        %v6687 = vpop.f32.mrf.mxu0
        %v6688 = vadd.f32 0.0, %v6687
        %6689 = vdwg.mxu0
        %6690 = vmatpush.msra.mxu0 0.0
        %6691 = vmatpush.msra.mxu0 0.0
        %6692 = vmatpush.msra.mxu0 0.0
        %6693 = vmatpush.msra.mxu0 0.0
        %6694 = vmatpush.msra.mxu0 %v6582
        %6695 = vmatpush.msra.mxu0 %v6579
        %6696 = vmatpush.msra.mxu0 %v6576
        %6697 = vmatpush.msra.mxu0 %v6573
        %6698 = vmatpush.msra.mxu0 %v6570
        %6699 = vmatpush.msra.mxu0 %v6567
        %6700 = vmatpush.msra.mxu0 %v6564
        %6701 = vmatpush.msra.mxu0 %v6561
        %6702 = vmatpush.msra.mxu0 %v6558
        %6703 = vmatpush.msra.mxu0 %v6555
        %6704 = vmatpush.msra.mxu0 %v6552
        %6705 = vmatpush.msra.mxu0 %v6549
        %6706 = vmatmul.f32.gmra.mxu0 %v1597
        %v6707 = vpop.f32.mrf.mxu0
        %v6708 = vadd.f32 0.0, %v6707
        %6709 = vmatmul.f32.gmra.mxu0 %v1600
        %v6710 = vpop.f32.mrf.mxu0
        %v6711 = vadd.f32 0.0, %v6710
        %6712 = vmatmul.f32.gmra.mxu0 %v1603
        %v6713 = vpop.f32.mrf.mxu0
        %v6714 = vadd.f32 0.0, %v6713
        %6715 = vmatmul.f32.gmra.mxu0 %v1606
        %v6716 = vpop.f32.mrf.mxu0
        %v6717 = vadd.f32 0.0, %v6716
        %6718 = vmatmul.f32.gmra.mxu0 %v1609
        %v6719 = vpop.f32.mrf.mxu0
        %v6720 = vadd.f32 0.0, %v6719
        %6721 = vmatmul.f32.gmra.mxu0 %v1612
        %v6722 = vpop.f32.mrf.mxu0
        %v6723 = vadd.f32 0.0, %v6722
        %6724 = vmatmul.f32.gmra.mxu0 %v1615
        %v6725 = vpop.f32.mrf.mxu0
        %v6726 = vadd.f32 0.0, %v6725
        %6727 = vmatmul.f32.gmra.mxu0 %v1618
        %v6728 = vpop.f32.mrf.mxu0
        %v6729 = vadd.f32 0.0, %v6728
        %6730 = vmatmul.f32.gmra.mxu0 %v1621
        %v6731 = vpop.f32.mrf.mxu0
        %v6732 = vadd.f32 0.0, %v6731
        %6733 = vmatmul.f32.gmra.mxu0 %v1624
        %v6734 = vpop.f32.mrf.mxu0
        %v6735 = vadd.f32 0.0, %v6734
        %6736 = vmatmul.f32.gmra.mxu0 %v1627
        %v6737 = vpop.f32.mrf.mxu0
        %v6738 = vadd.f32 0.0, %v6737
        %6739 = vmatmul.f32.gmra.mxu0 %v1630
        %v6740 = vpop.f32.mrf.mxu0
        %v6741 = vadd.f32 0.0, %v6740
        %6742 = vdwg.mxu0
        %v6743 = vmul.f32 %v6602, %v1181
        %v6744 = vmul.f32 %v6605, %v1182
        %v6745 = vmul.f32 %v6608, %v1183
        %v6746 = vmul.f32 %v6611, %v1184
        %v6747 = vmul.f32 %v6614, %v1185
        %v6748 = vmul.f32 %v6617, %v1186
        %v6749 = vmul.f32 %v6620, %v1187
        %v6750 = vmul.f32 %v6623, %v1188
        %v6751 = vmul.f32 %v6626, %v1189
        %v6752 = vmul.f32 %v6629, %v1190
        %v6753 = vmul.f32 %v6632, %v1191
        %v6754 = vmul.f32 %v6635, %v1192
        %v6755 = vmul.f32 %v1803, %v6655
        %v6756 = vmul.f32 %v1804, %v6658
        %v6757 = vmul.f32 %v1805, %v6661
        %v6758 = vmul.f32 %v1806, %v6664
        %v6759 = vmul.f32 %v1807, %v6667
        %v6760 = vmul.f32 %v1808, %v6670
        %v6761 = vmul.f32 %v1809, %v6673
        %v6762 = vmul.f32 %v1810, %v6676
        %v6763 = vmul.f32 %v1811, %v6679
        %v6764 = vmul.f32 %v1812, %v6682
        %v6765 = vmul.f32 %v1813, %v6685
        %v6766 = vmul.f32 %v1814, %v6688
        %v6767 = vsub.f32 %v6743, %v6755
        %v6768 = vsub.f32 %v6744, %v6756
        %v6769 = vsub.f32 %v6745, %v6757
        %v6770 = vsub.f32 %v6746, %v6758
        %v6771 = vsub.f32 %v6747, %v6759
        %v6772 = vsub.f32 %v6748, %v6760
        %v6773 = vsub.f32 %v6749, %v6761
        %v6774 = vsub.f32 %v6750, %v6762
        %v6775 = vsub.f32 %v6751, %v6763
        %v6776 = vsub.f32 %v6752, %v6764
        %v6777 = vsub.f32 %v6753, %v6765
        %v6778 = vsub.f32 %v6754, %v6766
        %v6779 = vadd.f32 %v6767, %v6708
        %v6780 = vadd.f32 %v6768, %v6711
        %v6781 = vadd.f32 %v6769, %v6714
        %v6782 = vadd.f32 %v6770, %v6717
        %v6783 = vadd.f32 %v6771, %v6720
        %v6784 = vadd.f32 %v6772, %v6723
        %v6785 = vadd.f32 %v6773, %v6726
        %v6786 = vadd.f32 %v6774, %v6729
        %v6787 = vadd.f32 %v6775, %v6732
        %v6788 = vadd.f32 %v6776, %v6735
        %v6789 = vadd.f32 %v6777, %v6738
        %v6790 = vadd.f32 %v6778, %v6741
        %vm6791 = vcmp.eq.f32.partialorder %v1217, 6.0
        %vm6792 = vcmp.eq.f32.partialorder %v1218, 6.0
        %vm6793 = vcmp.eq.f32.partialorder %v1219, 6.0
        %vm6794 = vcmp.eq.f32.partialorder %v1220, 6.0
        %vm6795 = vcmp.eq.f32.partialorder %v1221, 6.0
        %vm6796 = vcmp.eq.f32.partialorder %v1222, 6.0
        %vm6797 = vcmp.eq.f32.partialorder %v1223, 6.0
        %vm6798 = vcmp.eq.f32.partialorder %v1224, 6.0
        %vm6799 = vcmp.eq.f32.partialorder %v1225, 6.0
        %vm6800 = vcmp.eq.f32.partialorder %v1226, 6.0
        %vm6801 = vcmp.eq.f32.partialorder %v1227, 6.0
        %vm6802 = vcmp.eq.f32.partialorder %v1228, 6.0
        %v6803 = vsub.f32 7.0, %v1205
        %v6804 = vsub.f32 7.0, %v1206
        %v6805 = vsub.f32 7.0, %v1207
        %v6806 = vsub.f32 7.0, %v1208
        %v6807 = vsub.f32 7.0, %v1209
        %v6808 = vsub.f32 7.0, %v1210
        %v6809 = vsub.f32 7.0, %v1211
        %v6810 = vsub.f32 7.0, %v1212
        %v6811 = vsub.f32 7.0, %v1213
        %v6812 = vsub.f32 7.0, %v1214
        %v6813 = vsub.f32 7.0, %v1215
        %v6814 = vsub.f32 7.0, %v1216
        %v6815 = vsel %vm6791, %v6803, 0.0
        %v6816 = vsel %vm6792, %v6804, 0.0
        %v6817 = vsel %vm6793, %v6805, 0.0
        %v6818 = vsel %vm6794, %v6806, 0.0
        %v6819 = vsel %vm6795, %v6807, 0.0
        %v6820 = vsel %vm6796, %v6808, 0.0
        %v6821 = vsel %vm6797, %v6809, 0.0
        %v6822 = vsel %vm6798, %v6810, 0.0
        %v6823 = vsel %vm6799, %v6811, 0.0
        %v6824 = vsel %vm6800, %v6812, 0.0
        %v6825 = vsel %vm6801, %v6813, 0.0
        %v6826 = vsel %vm6802, %v6814, 0.0
        %vm6827 = vcmp.eq.f32.partialorder %v1229, 7.0
        %vm6828 = vcmp.eq.f32.partialorder %v1230, 7.0
        %vm6829 = vcmp.eq.f32.partialorder %v1231, 7.0
        %vm6830 = vcmp.eq.f32.partialorder %v1232, 7.0
        %vm6831 = vcmp.eq.f32.partialorder %v1233, 7.0
        %vm6832 = vcmp.eq.f32.partialorder %v1234, 7.0
        %vm6833 = vcmp.eq.f32.partialorder %v1235, 7.0
        %vm6834 = vcmp.eq.f32.partialorder %v1236, 7.0
        %vm6835 = vcmp.eq.f32.partialorder %v1237, 7.0
        %vm6836 = vcmp.eq.f32.partialorder %v1238, 7.0
        %vm6837 = vcmp.eq.f32.partialorder %v1239, 7.0
        %vm6838 = vcmp.eq.f32.partialorder %v1240, 7.0
        %v6839 = vsel %vm6827, %v5491, 0.0
        %v6840 = vsel %vm6828, %v5492, 0.0
        %v6841 = vsel %vm6829, %v5493, 0.0
        %v6842 = vsel %vm6830, %v5494, 0.0
        %v6843 = vsel %vm6831, %v5495, 0.0
        %v6844 = vsel %vm6832, %v5496, 0.0
        %v6845 = vsel %vm6833, %v5497, 0.0
        %v6846 = vsel %vm6834, %v5498, 0.0
        %v6847 = vsel %vm6835, %v5499, 0.0
        %v6848 = vsel %vm6836, %v5500, 0.0
        %v6849 = vsel %vm6837, %v5501, 0.0
        %v6850 = vsel %vm6838, %v5502, 0.0
        %v6851 = vmul.f32 %v6051, %v6815
        %v6852 = vmul.f32 %v6052, %v6816
        %v6853 = vmul.f32 %v6053, %v6817
        %v6854 = vmul.f32 %v6054, %v6818
        %v6855 = vmul.f32 %v6055, %v6819
        %v6856 = vmul.f32 %v6056, %v6820
        %v6857 = vmul.f32 %v6057, %v6821
        %v6858 = vmul.f32 %v6058, %v6822
        %v6859 = vmul.f32 %v6059, %v6823
        %v6860 = vmul.f32 %v6060, %v6824
        %v6861 = vmul.f32 %v6061, %v6825
        %v6862 = vmul.f32 %v6062, %v6826
        %v6863 = vadd.f32 %v6159, %v6851
        %v6864 = vadd.f32 %v6160, %v6852
        %v6865 = vadd.f32 %v6161, %v6853
        %v6866 = vadd.f32 %v6162, %v6854
        %v6867 = vadd.f32 %v6163, %v6855
        %v6868 = vadd.f32 %v6164, %v6856
        %v6869 = vadd.f32 %v6165, %v6857
        %v6870 = vadd.f32 %v6166, %v6858
        %v6871 = vadd.f32 %v6167, %v6859
        %v6872 = vadd.f32 %v6168, %v6860
        %v6873 = vadd.f32 %v6169, %v6861
        %v6874 = vadd.f32 %v6170, %v6862
        %v6875 = vmul.f32 %v6779, %v6839
        %v6876 = vmul.f32 %v6780, %v6840
        %v6877 = vmul.f32 %v6781, %v6841
        %v6878 = vmul.f32 %v6782, %v6842
        %v6879 = vmul.f32 %v6783, %v6843
        %v6880 = vmul.f32 %v6784, %v6844
        %v6881 = vmul.f32 %v6785, %v6845
        %v6882 = vmul.f32 %v6786, %v6846
        %v6883 = vmul.f32 %v6787, %v6847
        %v6884 = vmul.f32 %v6788, %v6848
        %v6885 = vmul.f32 %v6789, %v6849
        %v6886 = vmul.f32 %v6790, %v6850
        %v6887 = vadd.f32 %v6863, %v6875
        %v6888 = vadd.f32 %v6864, %v6876
        %v6889 = vadd.f32 %v6865, %v6877
        %v6890 = vadd.f32 %v6866, %v6878
        %v6891 = vadd.f32 %v6867, %v6879
        %v6892 = vadd.f32 %v6868, %v6880
        %v6893 = vadd.f32 %v6869, %v6881
        %v6894 = vadd.f32 %v6870, %v6882
        %v6895 = vadd.f32 %v6871, %v6883
        %v6896 = vadd.f32 %v6872, %v6884
        %v6897 = vadd.f32 %v6873, %v6885
        %v6898 = vadd.f32 %v6874, %v6886
        %v6899 = vmul.f32 %v5874, %v6815
        %v6900 = vmul.f32 %v5877, %v6816
        %v6901 = vmul.f32 %v5880, %v6817
        %v6902 = vmul.f32 %v5883, %v6818
        %v6903 = vmul.f32 %v5886, %v6819
        %v6904 = vmul.f32 %v5889, %v6820
        %v6905 = vmul.f32 %v5892, %v6821
        %v6906 = vmul.f32 %v5895, %v6822
        %v6907 = vmul.f32 %v5898, %v6823
        %v6908 = vmul.f32 %v5901, %v6824
        %v6909 = vmul.f32 %v5904, %v6825
        %v6910 = vmul.f32 %v5907, %v6826
        %v6911 = vadd.f32 %v6207, %v6899
        %v6912 = vadd.f32 %v6208, %v6900
        %v6913 = vadd.f32 %v6209, %v6901
        %v6914 = vadd.f32 %v6210, %v6902
        %v6915 = vadd.f32 %v6211, %v6903
        %v6916 = vadd.f32 %v6212, %v6904
        %v6917 = vadd.f32 %v6213, %v6905
        %v6918 = vadd.f32 %v6214, %v6906
        %v6919 = vadd.f32 %v6215, %v6907
        %v6920 = vadd.f32 %v6216, %v6908
        %v6921 = vadd.f32 %v6217, %v6909
        %v6922 = vadd.f32 %v6218, %v6910
        %v6923 = vmul.f32 %v6602, %v6839
        %v6924 = vmul.f32 %v6605, %v6840
        %v6925 = vmul.f32 %v6608, %v6841
        %v6926 = vmul.f32 %v6611, %v6842
        %v6927 = vmul.f32 %v6614, %v6843
        %v6928 = vmul.f32 %v6617, %v6844
        %v6929 = vmul.f32 %v6620, %v6845
        %v6930 = vmul.f32 %v6623, %v6846
        %v6931 = vmul.f32 %v6626, %v6847
        %v6932 = vmul.f32 %v6629, %v6848
        %v6933 = vmul.f32 %v6632, %v6849
        %v6934 = vmul.f32 %v6635, %v6850
        %v6935 = vadd.f32 %v6911, %v6923
        %v6936 = vadd.f32 %v6912, %v6924
        %v6937 = vadd.f32 %v6913, %v6925
        %v6938 = vadd.f32 %v6914, %v6926
        %v6939 = vadd.f32 %v6915, %v6927
        %v6940 = vadd.f32 %v6916, %v6928
        %v6941 = vadd.f32 %v6917, %v6929
        %v6942 = vadd.f32 %v6918, %v6930
        %v6943 = vadd.f32 %v6919, %v6931
        %v6944 = vadd.f32 %v6920, %v6932
        %v6945 = vadd.f32 %v6921, %v6933
        %v6946 = vadd.f32 %v6922, %v6934
        %v6947 = vsub.f32 %v1205, 8.0
        %v6948 = vsub.f32 %v1206, 8.0
        %v6949 = vsub.f32 %v1207, 8.0
        %v6950 = vsub.f32 %v1208, 8.0
        %v6951 = vsub.f32 %v1209, 8.0
        %v6952 = vsub.f32 %v1210, 8.0
        %v6953 = vsub.f32 %v1211, 8.0
        %v6954 = vsub.f32 %v1212, 8.0
        %v6955 = vsub.f32 %v1213, 8.0
        %v6956 = vsub.f32 %v1214, 8.0
        %v6957 = vsub.f32 %v1215, 8.0
        %v6958 = vsub.f32 %v1216, 8.0
        %v6959 = vand.u32 2147483647, %v6947
        %v6960 = vand.u32 2147483647, %v6948
        %v6961 = vand.u32 2147483647, %v6949
        %v6962 = vand.u32 2147483647, %v6950
        %v6963 = vand.u32 2147483647, %v6951
        %v6964 = vand.u32 2147483647, %v6952
        %v6965 = vand.u32 2147483647, %v6953
        %v6966 = vand.u32 2147483647, %v6954
        %v6967 = vand.u32 2147483647, %v6955
        %v6968 = vand.u32 2147483647, %v6956
        %v6969 = vand.u32 2147483647, %v6957
        %v6970 = vand.u32 2147483647, %v6958
        %v6971 = vmul.f32 %v1169, %v6959
        %v6972 = vmul.f32 %v1170, %v6960
        %v6973 = vmul.f32 %v1171, %v6961
        %v6974 = vmul.f32 %v1172, %v6962
        %v6975 = vmul.f32 %v1173, %v6963
        %v6976 = vmul.f32 %v1174, %v6964
        %v6977 = vmul.f32 %v1175, %v6965
        %v6978 = vmul.f32 %v1176, %v6966
        %v6979 = vmul.f32 %v1177, %v6967
        %v6980 = vmul.f32 %v1178, %v6968
        %v6981 = vmul.f32 %v1179, %v6969
        %v6982 = vmul.f32 %v1180, %v6970
        %v6983 = vadd.f32 %v6971, 0.0001
        %v6984 = vadd.f32 %v6972, 0.0001
        %v6985 = vadd.f32 %v6973, 0.0001
        %v6986 = vadd.f32 %v6974, 0.0001
        %v6987 = vadd.f32 %v6975, 0.0001
        %v6988 = vadd.f32 %v6976, 0.0001
        %v6989 = vadd.f32 %v6977, 0.0001
        %v6990 = vadd.f32 %v6978, 0.0001
        %v6991 = vadd.f32 %v6979, 0.0001
        %v6992 = vadd.f32 %v6980, 0.0001
        %v6993 = vadd.f32 %v6981, 0.0001
        %v6994 = vadd.f32 %v6982, 0.0001
        %v6995 = vlog2.pop %v6983
        %v6996 = vmul.f32 %v6995, 0.6931472
        %v6997 = vlog2.pop %v6984
        %v6998 = vmul.f32 %v6997, 0.6931472
        %v6999 = vlog2.pop %v6985
        %v7000 = vmul.f32 %v6999, 0.6931472
        %v7001 = vlog2.pop %v6986
        %v7002 = vmul.f32 %v7001, 0.6931472
        %v7003 = vlog2.pop %v6987
        %v7004 = vmul.f32 %v7003, 0.6931472
        %v7005 = vlog2.pop %v6988
        %v7006 = vmul.f32 %v7005, 0.6931472
        %v7007 = vlog2.pop %v6989
        %v7008 = vmul.f32 %v7007, 0.6931472
        %v7009 = vlog2.pop %v6990
        %v7010 = vmul.f32 %v7009, 0.6931472
        %v7011 = vlog2.pop %v6991
        %v7012 = vmul.f32 %v7011, 0.6931472
        %v7013 = vlog2.pop %v6992
        %v7014 = vmul.f32 %v7013, 0.6931472
        %v7015 = vlog2.pop %v6993
        %v7016 = vmul.f32 %v7015, 0.6931472
        %v7017 = vlog2.pop %v6994
        %v7018 = vmul.f32 %v7017, 0.6931472
        %v7019 = vmul.f32 %v6996, -1.2
        %v7020 = vmul.f32 %v6998, -1.2
        %v7021 = vmul.f32 %v7000, -1.2
        %v7022 = vmul.f32 %v7002, -1.2
        %v7023 = vmul.f32 %v7004, -1.2
        %v7024 = vmul.f32 %v7006, -1.2
        %v7025 = vmul.f32 %v7008, -1.2
        %v7026 = vmul.f32 %v7010, -1.2
        %v7027 = vmul.f32 %v7012, -1.2
        %v7028 = vmul.f32 %v7014, -1.2
        %v7029 = vmul.f32 %v7016, -1.2
        %v7030 = vmul.f32 %v7018, -1.2
        %v7031 = vmul.f32 %v7019, 1.442695
        %v7032 = vpow.pop %v7031
        %v7033 = vmul.f32 %v7020, 1.442695
        %v7034 = vpow.pop %v7033
        %v7035 = vmul.f32 %v7021, 1.442695
        %v7036 = vpow.pop %v7035
        %v7037 = vmul.f32 %v7022, 1.442695
        %v7038 = vpow.pop %v7037
        %v7039 = vmul.f32 %v7023, 1.442695
        %v7040 = vpow.pop %v7039
        %v7041 = vmul.f32 %v7024, 1.442695
        %v7042 = vpow.pop %v7041
        %v7043 = vmul.f32 %v7025, 1.442695
        %v7044 = vpow.pop %v7043
        %v7045 = vmul.f32 %v7026, 1.442695
        %v7046 = vpow.pop %v7045
        %v7047 = vmul.f32 %v7027, 1.442695
        %v7048 = vpow.pop %v7047
        %v7049 = vmul.f32 %v7028, 1.442695
        %v7050 = vpow.pop %v7049
        %v7051 = vmul.f32 %v7029, 1.442695
        %v7052 = vpow.pop %v7051
        %v7053 = vmul.f32 %v7030, 1.442695
        %v7054 = vpow.pop %v7053
        %v7055 = vmul.f32 %v7032, %v347
        %v7056 = vmul.f32 %v7034, %v348
        %v7057 = vmul.f32 %v7036, %v349
        %v7058 = vmul.f32 %v7038, %v350
        %v7059 = vmul.f32 %v7040, %v351
        %v7060 = vmul.f32 %v7042, %v352
        %v7061 = vmul.f32 %v7044, %v353
        %v7062 = vmul.f32 %v7046, %v354
        %v7063 = vmul.f32 %v7048, %v355
        %v7064 = vmul.f32 %v7050, %v356
        %v7065 = vmul.f32 %v7052, %v357
        %v7066 = vmul.f32 %v7054, %v358
        %v7067 = vmul.f32 %v7032, %v1181
        %v7068 = vmul.f32 %v7034, %v1182
        %v7069 = vmul.f32 %v7036, %v1183
        %v7070 = vmul.f32 %v7038, %v1184
        %v7071 = vmul.f32 %v7040, %v1185
        %v7072 = vmul.f32 %v7042, %v1186
        %v7073 = vmul.f32 %v7044, %v1187
        %v7074 = vmul.f32 %v7046, %v1188
        %v7075 = vmul.f32 %v7048, %v1189
        %v7076 = vmul.f32 %v7050, %v1190
        %v7077 = vmul.f32 %v7052, %v1191
        %v7078 = vmul.f32 %v7054, %v1192
        %v7080 = vsel %vm1361, %v7032, 0
        %v7083 = vsel %vm1361, %v7034, 0
        %v7086 = vsel %vm1361, %v7036, 0
        %v7089 = vsel %vm1361, %v7038, 0
        %v7092 = vsel %vm1361, %v7040, 0
        %v7095 = vsel %vm1361, %v7042, 0
        %v7098 = vsel %vm1361, %v7044, 0
        %v7101 = vsel %vm1361, %v7046, 0
        %v7104 = vsel %vm1361, %v7048, 0
        %v7107 = vsel %vm1361, %v7050, 0
        %v7110 = vsel %vm1361, %v7052, 0
        %v7113 = vsel %vm1361, %v7054, 0
        %v7116 = vsel %vm1361, %v7055, 0
        %v7119 = vsel %vm1361, %v7056, 0
        %v7122 = vsel %vm1361, %v7057, 0
        %v7125 = vsel %vm1361, %v7058, 0
        %v7128 = vsel %vm1361, %v7059, 0
        %v7131 = vsel %vm1361, %v7060, 0
        %v7134 = vsel %vm1361, %v7061, 0
        %v7137 = vsel %vm1361, %v7062, 0
        %v7140 = vsel %vm1361, %v7063, 0
        %v7143 = vsel %vm1361, %v7064, 0
        %v7146 = vsel %vm1361, %v7065, 0
        %v7149 = vsel %vm1361, %v7066, 0
        %v7152 = vsel %vm1361, %v7067, 0
        %v7155 = vsel %vm1361, %v7068, 0
        %v7158 = vsel %vm1361, %v7069, 0
        %v7161 = vsel %vm1361, %v7070, 0
        %v7164 = vsel %vm1361, %v7071, 0
        %v7167 = vsel %vm1361, %v7072, 0
        %v7170 = vsel %vm1361, %v7073, 0
        %v7173 = vsel %vm1361, %v7074, 0
        %v7176 = vsel %vm1361, %v7075, 0
        %v7179 = vsel %vm1361, %v7076, 0
        %v7182 = vsel %vm1361, %v7077, 0
        %v7185 = vsel %vm1361, %v7078, 0
        %7187 = vmatpush.msra.mxu0 0.0
        %7188 = vmatpush.msra.mxu0 %v385
        %7189 = vmatpush.msra.mxu0 %v384
        %7190 = vmatpush.msra.mxu0 %v383
        %7191 = vmatpush.msra.mxu0 %v382
        %7192 = vmatpush.msra.mxu0 %v381
        %7193 = vmatpush.msra.mxu0 %v380
        %7194 = vmatpush.msra.mxu0 %v379
        %7195 = vmatpush.msra.mxu0 %v378
        %7196 = vmatpush.msra.mxu0 %v377
        %7197 = vmatpush.msra.mxu0 %v376
        %7198 = vmatpush.msra.mxu0 %v375
        %7199 = vmatpush.msra.mxu0 %v374
        %7200 = vmatpush.msra.mxu0 %v373
        %7201 = vmatpush.msra.mxu0 %v372
        %7202 = vmatpush.msra.mxu0 %v371
        %7203 = vmatmul.f32.gmra.mxu0 %v7080
        %v7204 = vpop.f32.mrf.mxu0
        %v7205 = vadd.f32 0.0, %v7204
        %7206 = vmatmul.f32.gmra.mxu0 %v7083
        %v7207 = vpop.f32.mrf.mxu0
        %v7208 = vadd.f32 0.0, %v7207
        %7209 = vmatmul.f32.gmra.mxu0 %v7086
        %v7210 = vpop.f32.mrf.mxu0
        %v7211 = vadd.f32 0.0, %v7210
        %7212 = vmatmul.f32.gmra.mxu0 %v7089
        %v7213 = vpop.f32.mrf.mxu0
        %v7214 = vadd.f32 0.0, %v7213
        %7215 = vmatmul.f32.gmra.mxu0 %v7092
        %v7216 = vpop.f32.mrf.mxu0
        %v7217 = vadd.f32 0.0, %v7216
        %7218 = vmatmul.f32.gmra.mxu0 %v7095
        %v7219 = vpop.f32.mrf.mxu0
        %v7220 = vadd.f32 0.0, %v7219
        %7221 = vmatmul.f32.gmra.mxu0 %v7098
        %v7222 = vpop.f32.mrf.mxu0
        %v7223 = vadd.f32 0.0, %v7222
        %7224 = vmatmul.f32.gmra.mxu0 %v7101
        %v7225 = vpop.f32.mrf.mxu0
        %v7226 = vadd.f32 0.0, %v7225
        %7227 = vmatmul.f32.gmra.mxu0 %v7104
        %v7228 = vpop.f32.mrf.mxu0
        %v7229 = vadd.f32 0.0, %v7228
        %7230 = vmatmul.f32.gmra.mxu0 %v7107
        %v7231 = vpop.f32.mrf.mxu0
        %v7232 = vadd.f32 0.0, %v7231
        %7233 = vmatmul.f32.gmra.mxu0 %v7110
        %v7234 = vpop.f32.mrf.mxu0
        %v7235 = vadd.f32 0.0, %v7234
        %7236 = vmatmul.f32.gmra.mxu0 %v7113
        %v7237 = vpop.f32.mrf.mxu0
        %v7238 = vadd.f32 0.0, %v7237
        %7239 = vmatmul.f32.gmra.mxu0 %v7116
        %v7240 = vpop.f32.mrf.mxu0
        %v7241 = vadd.f32 0.0, %v7240
        %7242 = vmatmul.f32.gmra.mxu0 %v7119
        %v7243 = vpop.f32.mrf.mxu0
        %v7244 = vadd.f32 0.0, %v7243
        %7245 = vmatmul.f32.gmra.mxu0 %v7122
        %v7246 = vpop.f32.mrf.mxu0
        %v7247 = vadd.f32 0.0, %v7246
        %7248 = vmatmul.f32.gmra.mxu0 %v7125
        %v7249 = vpop.f32.mrf.mxu0
        %v7250 = vadd.f32 0.0, %v7249
        %7251 = vmatmul.f32.gmra.mxu0 %v7128
        %v7252 = vpop.f32.mrf.mxu0
        %v7253 = vadd.f32 0.0, %v7252
        %7254 = vmatmul.f32.gmra.mxu0 %v7131
        %v7255 = vpop.f32.mrf.mxu0
        %v7256 = vadd.f32 0.0, %v7255
        %7257 = vmatmul.f32.gmra.mxu0 %v7134
        %v7258 = vpop.f32.mrf.mxu0
        %v7259 = vadd.f32 0.0, %v7258
        %7260 = vmatmul.f32.gmra.mxu0 %v7137
        %v7261 = vpop.f32.mrf.mxu0
        %v7262 = vadd.f32 0.0, %v7261
        %7263 = vmatmul.f32.gmra.mxu0 %v7140
        %v7264 = vpop.f32.mrf.mxu0
        %v7265 = vadd.f32 0.0, %v7264
        %7266 = vmatmul.f32.gmra.mxu0 %v7143
        %v7267 = vpop.f32.mrf.mxu0
        %v7268 = vadd.f32 0.0, %v7267
        %7269 = vmatmul.f32.gmra.mxu0 %v7146
        %v7270 = vpop.f32.mrf.mxu0
        %v7271 = vadd.f32 0.0, %v7270
        %7272 = vmatmul.f32.gmra.mxu0 %v7149
        %v7273 = vpop.f32.mrf.mxu0
        %v7274 = vadd.f32 0.0, %v7273
        %7275 = vmatmul.f32.gmra.mxu0 %v7152
        %v7276 = vpop.f32.mrf.mxu0
        %v7277 = vadd.f32 0.0, %v7276
        %7278 = vmatmul.f32.gmra.mxu0 %v7155
        %v7279 = vpop.f32.mrf.mxu0
        %v7280 = vadd.f32 0.0, %v7279
        %7281 = vmatmul.f32.gmra.mxu0 %v7158
        %v7282 = vpop.f32.mrf.mxu0
        %v7283 = vadd.f32 0.0, %v7282
        %7284 = vmatmul.f32.gmra.mxu0 %v7161
        %v7285 = vpop.f32.mrf.mxu0
        %v7286 = vadd.f32 0.0, %v7285
        %7287 = vmatmul.f32.gmra.mxu0 %v7164
        %v7288 = vpop.f32.mrf.mxu0
        %v7289 = vadd.f32 0.0, %v7288
        %7290 = vmatmul.f32.gmra.mxu0 %v7167
        %v7291 = vpop.f32.mrf.mxu0
        %v7292 = vadd.f32 0.0, %v7291
        %7293 = vmatmul.f32.gmra.mxu0 %v7170
        %v7294 = vpop.f32.mrf.mxu0
        %v7295 = vadd.f32 0.0, %v7294
        %7296 = vmatmul.f32.gmra.mxu0 %v7173
        %v7297 = vpop.f32.mrf.mxu0
        %v7298 = vadd.f32 0.0, %v7297
        %7299 = vmatmul.f32.gmra.mxu0 %v7176
        %v7300 = vpop.f32.mrf.mxu0
        %v7301 = vadd.f32 0.0, %v7300
        %7302 = vmatmul.f32.gmra.mxu0 %v7179
        %v7303 = vpop.f32.mrf.mxu0
        %v7304 = vadd.f32 0.0, %v7303
        %7305 = vmatmul.f32.gmra.mxu0 %v7182
        %v7306 = vpop.f32.mrf.mxu0
        %v7307 = vadd.f32 0.0, %v7306
        %7308 = vmatmul.f32.gmra.mxu0 %v7185
        %v7309 = vpop.f32.mrf.mxu0
        %v7310 = vadd.f32 0.0, %v7309
        %7311 = vdwg.mxu0
        %7312 = vmatpush.msra.mxu0 0.0
        %7313 = vmatpush.msra.mxu0 0.0
        %7314 = vmatpush.msra.mxu0 0.0
        %7315 = vmatpush.msra.mxu0 0.0
        %7316 = vmatpush.msra.mxu0 %v7238
        %7317 = vmatpush.msra.mxu0 %v7235
        %7318 = vmatpush.msra.mxu0 %v7232
        %7319 = vmatpush.msra.mxu0 %v7229
        %7320 = vmatpush.msra.mxu0 %v7226
        %7321 = vmatpush.msra.mxu0 %v7223
        %7322 = vmatpush.msra.mxu0 %v7220
        %7323 = vmatpush.msra.mxu0 %v7217
        %7324 = vmatpush.msra.mxu0 %v7214
        %7325 = vmatpush.msra.mxu0 %v7211
        %7326 = vmatpush.msra.mxu0 %v7208
        %7327 = vmatpush.msra.mxu0 %v7205
        %7328 = vmatmul.f32.gmra.mxu0 %v1597
        %v7329 = vpop.f32.mrf.mxu0
        %v7330 = vadd.f32 0.0, %v7329
        %7331 = vmatmul.f32.gmra.mxu0 %v1600
        %v7332 = vpop.f32.mrf.mxu0
        %v7333 = vadd.f32 0.0, %v7332
        %7334 = vmatmul.f32.gmra.mxu0 %v1603
        %v7335 = vpop.f32.mrf.mxu0
        %v7336 = vadd.f32 0.0, %v7335
        %7337 = vmatmul.f32.gmra.mxu0 %v1606
        %v7338 = vpop.f32.mrf.mxu0
        %v7339 = vadd.f32 0.0, %v7338
        %7340 = vmatmul.f32.gmra.mxu0 %v1609
        %v7341 = vpop.f32.mrf.mxu0
        %v7342 = vadd.f32 0.0, %v7341
        %7343 = vmatmul.f32.gmra.mxu0 %v1612
        %v7344 = vpop.f32.mrf.mxu0
        %v7345 = vadd.f32 0.0, %v7344
        %7346 = vmatmul.f32.gmra.mxu0 %v1615
        %v7347 = vpop.f32.mrf.mxu0
        %v7348 = vadd.f32 0.0, %v7347
        %7349 = vmatmul.f32.gmra.mxu0 %v1618
        %v7350 = vpop.f32.mrf.mxu0
        %v7351 = vadd.f32 0.0, %v7350
        %7352 = vmatmul.f32.gmra.mxu0 %v1621
        %v7353 = vpop.f32.mrf.mxu0
        %v7354 = vadd.f32 0.0, %v7353
        %7355 = vmatmul.f32.gmra.mxu0 %v1624
        %v7356 = vpop.f32.mrf.mxu0
        %v7357 = vadd.f32 0.0, %v7356
        %7358 = vmatmul.f32.gmra.mxu0 %v1627
        %v7359 = vpop.f32.mrf.mxu0
        %v7360 = vadd.f32 0.0, %v7359
        %7361 = vmatmul.f32.gmra.mxu0 %v1630
        %v7362 = vpop.f32.mrf.mxu0
        %v7363 = vadd.f32 0.0, %v7362
        %7364 = vdwg.mxu0
        %7365 = vmatpush.msra.mxu0 0.0
        %7366 = vmatpush.msra.mxu0 0.0
        %7367 = vmatpush.msra.mxu0 0.0
        %7368 = vmatpush.msra.mxu0 0.0
        %7369 = vmatpush.msra.mxu0 %v7274
        %7370 = vmatpush.msra.mxu0 %v7271
        %7371 = vmatpush.msra.mxu0 %v7268
        %7372 = vmatpush.msra.mxu0 %v7265
        %7373 = vmatpush.msra.mxu0 %v7262
        %7374 = vmatpush.msra.mxu0 %v7259
        %7375 = vmatpush.msra.mxu0 %v7256
        %7376 = vmatpush.msra.mxu0 %v7253
        %7377 = vmatpush.msra.mxu0 %v7250
        %7378 = vmatpush.msra.mxu0 %v7247
        %7379 = vmatpush.msra.mxu0 %v7244
        %7380 = vmatpush.msra.mxu0 %v7241
        %7381 = vmatmul.f32.gmra.mxu0 %v1597
        %v7382 = vpop.f32.mrf.mxu0
        %v7383 = vadd.f32 0.0, %v7382
        %7384 = vmatmul.f32.gmra.mxu0 %v1600
        %v7385 = vpop.f32.mrf.mxu0
        %v7386 = vadd.f32 0.0, %v7385
        %7387 = vmatmul.f32.gmra.mxu0 %v1603
        %v7388 = vpop.f32.mrf.mxu0
        %v7389 = vadd.f32 0.0, %v7388
        %7390 = vmatmul.f32.gmra.mxu0 %v1606
        %v7391 = vpop.f32.mrf.mxu0
        %v7392 = vadd.f32 0.0, %v7391
        %7393 = vmatmul.f32.gmra.mxu0 %v1609
        %v7394 = vpop.f32.mrf.mxu0
        %v7395 = vadd.f32 0.0, %v7394
        %7396 = vmatmul.f32.gmra.mxu0 %v1612
        %v7397 = vpop.f32.mrf.mxu0
        %v7398 = vadd.f32 0.0, %v7397
        %7399 = vmatmul.f32.gmra.mxu0 %v1615
        %v7400 = vpop.f32.mrf.mxu0
        %v7401 = vadd.f32 0.0, %v7400
        %7402 = vmatmul.f32.gmra.mxu0 %v1618
        %v7403 = vpop.f32.mrf.mxu0
        %v7404 = vadd.f32 0.0, %v7403
        %7405 = vmatmul.f32.gmra.mxu0 %v1621
        %v7406 = vpop.f32.mrf.mxu0
        %v7407 = vadd.f32 0.0, %v7406
        %7408 = vmatmul.f32.gmra.mxu0 %v1624
        %v7409 = vpop.f32.mrf.mxu0
        %v7410 = vadd.f32 0.0, %v7409
        %7411 = vmatmul.f32.gmra.mxu0 %v1627
        %v7412 = vpop.f32.mrf.mxu0
        %v7413 = vadd.f32 0.0, %v7412
        %7414 = vmatmul.f32.gmra.mxu0 %v1630
        %v7415 = vpop.f32.mrf.mxu0
        %v7416 = vadd.f32 0.0, %v7415
        %7417 = vdwg.mxu0
        %7418 = vmatpush.msra.mxu0 0.0
        %7419 = vmatpush.msra.mxu0 0.0
        %7420 = vmatpush.msra.mxu0 0.0
        %7421 = vmatpush.msra.mxu0 0.0
        %7422 = vmatpush.msra.mxu0 %v7310
        %7423 = vmatpush.msra.mxu0 %v7307
        %7424 = vmatpush.msra.mxu0 %v7304
        %7425 = vmatpush.msra.mxu0 %v7301
        %7426 = vmatpush.msra.mxu0 %v7298
        %7427 = vmatpush.msra.mxu0 %v7295
        %7428 = vmatpush.msra.mxu0 %v7292
        %7429 = vmatpush.msra.mxu0 %v7289
        %7430 = vmatpush.msra.mxu0 %v7286
        %7431 = vmatpush.msra.mxu0 %v7283
        %7432 = vmatpush.msra.mxu0 %v7280
        %7433 = vmatpush.msra.mxu0 %v7277
        %7434 = vmatmul.f32.gmra.mxu0 %v1597
        %v7435 = vpop.f32.mrf.mxu0
        %v7436 = vadd.f32 0.0, %v7435
        %7437 = vmatmul.f32.gmra.mxu0 %v1600
        %v7438 = vpop.f32.mrf.mxu0
        %v7439 = vadd.f32 0.0, %v7438
        %7440 = vmatmul.f32.gmra.mxu0 %v1603
        %v7441 = vpop.f32.mrf.mxu0
        %v7442 = vadd.f32 0.0, %v7441
        %7443 = vmatmul.f32.gmra.mxu0 %v1606
        %v7444 = vpop.f32.mrf.mxu0
        %v7445 = vadd.f32 0.0, %v7444
        %7446 = vmatmul.f32.gmra.mxu0 %v1609
        %v7447 = vpop.f32.mrf.mxu0
        %v7448 = vadd.f32 0.0, %v7447
        %7449 = vmatmul.f32.gmra.mxu0 %v1612
        %v7450 = vpop.f32.mrf.mxu0
        %v7451 = vadd.f32 0.0, %v7450
        %7452 = vmatmul.f32.gmra.mxu0 %v1615
        %v7453 = vpop.f32.mrf.mxu0
        %v7454 = vadd.f32 0.0, %v7453
        %7455 = vmatmul.f32.gmra.mxu0 %v1618
        %v7456 = vpop.f32.mrf.mxu0
        %v7457 = vadd.f32 0.0, %v7456
        %7458 = vmatmul.f32.gmra.mxu0 %v1621
        %v7459 = vpop.f32.mrf.mxu0
        %v7460 = vadd.f32 0.0, %v7459
        %7461 = vmatmul.f32.gmra.mxu0 %v1624
        %v7462 = vpop.f32.mrf.mxu0
        %v7463 = vadd.f32 0.0, %v7462
        %7464 = vmatmul.f32.gmra.mxu0 %v1627
        %v7465 = vpop.f32.mrf.mxu0
        %v7466 = vadd.f32 0.0, %v7465
        %7467 = vmatmul.f32.gmra.mxu0 %v1630
        %v7468 = vpop.f32.mrf.mxu0
        %v7469 = vadd.f32 0.0, %v7468
        %7470 = vdwg.mxu0
        %v7471 = vmul.f32 %v7330, %v1181
        %v7472 = vmul.f32 %v7333, %v1182
        %v7473 = vmul.f32 %v7336, %v1183
        %v7474 = vmul.f32 %v7339, %v1184
        %v7475 = vmul.f32 %v7342, %v1185
        %v7476 = vmul.f32 %v7345, %v1186
        %v7477 = vmul.f32 %v7348, %v1187
        %v7478 = vmul.f32 %v7351, %v1188
        %v7479 = vmul.f32 %v7354, %v1189
        %v7480 = vmul.f32 %v7357, %v1190
        %v7481 = vmul.f32 %v7360, %v1191
        %v7482 = vmul.f32 %v7363, %v1192
        %v7483 = vmul.f32 %v1803, %v7383
        %v7484 = vmul.f32 %v1804, %v7386
        %v7485 = vmul.f32 %v1805, %v7389
        %v7486 = vmul.f32 %v1806, %v7392
        %v7487 = vmul.f32 %v1807, %v7395
        %v7488 = vmul.f32 %v1808, %v7398
        %v7489 = vmul.f32 %v1809, %v7401
        %v7490 = vmul.f32 %v1810, %v7404
        %v7491 = vmul.f32 %v1811, %v7407
        %v7492 = vmul.f32 %v1812, %v7410
        %v7493 = vmul.f32 %v1813, %v7413
        %v7494 = vmul.f32 %v1814, %v7416
        %v7495 = vsub.f32 %v7471, %v7483
        %v7496 = vsub.f32 %v7472, %v7484
        %v7497 = vsub.f32 %v7473, %v7485
        %v7498 = vsub.f32 %v7474, %v7486
        %v7499 = vsub.f32 %v7475, %v7487
        %v7500 = vsub.f32 %v7476, %v7488
        %v7501 = vsub.f32 %v7477, %v7489
        %v7502 = vsub.f32 %v7478, %v7490
        %v7503 = vsub.f32 %v7479, %v7491
        %v7504 = vsub.f32 %v7480, %v7492
        %v7505 = vsub.f32 %v7481, %v7493
        %v7506 = vsub.f32 %v7482, %v7494
        %v7507 = vadd.f32 %v7495, %v7436
        %v7508 = vadd.f32 %v7496, %v7439
        %v7509 = vadd.f32 %v7497, %v7442
        %v7510 = vadd.f32 %v7498, %v7445
        %v7511 = vadd.f32 %v7499, %v7448
        %v7512 = vadd.f32 %v7500, %v7451
        %v7513 = vadd.f32 %v7501, %v7454
        %v7514 = vadd.f32 %v7502, %v7457
        %v7515 = vadd.f32 %v7503, %v7460
        %v7516 = vadd.f32 %v7504, %v7463
        %v7517 = vadd.f32 %v7505, %v7466
        %v7518 = vadd.f32 %v7506, %v7469
        %vm7519 = vcmp.eq.f32.partialorder %v1217, 7.0
        %vm7520 = vcmp.eq.f32.partialorder %v1218, 7.0
        %vm7521 = vcmp.eq.f32.partialorder %v1219, 7.0
        %vm7522 = vcmp.eq.f32.partialorder %v1220, 7.0
        %vm7523 = vcmp.eq.f32.partialorder %v1221, 7.0
        %vm7524 = vcmp.eq.f32.partialorder %v1222, 7.0
        %vm7525 = vcmp.eq.f32.partialorder %v1223, 7.0
        %vm7526 = vcmp.eq.f32.partialorder %v1224, 7.0
        %vm7527 = vcmp.eq.f32.partialorder %v1225, 7.0
        %vm7528 = vcmp.eq.f32.partialorder %v1226, 7.0
        %vm7529 = vcmp.eq.f32.partialorder %v1227, 7.0
        %vm7530 = vcmp.eq.f32.partialorder %v1228, 7.0
        %v7531 = vsub.f32 8.0, %v1205
        %v7532 = vsub.f32 8.0, %v1206
        %v7533 = vsub.f32 8.0, %v1207
        %v7534 = vsub.f32 8.0, %v1208
        %v7535 = vsub.f32 8.0, %v1209
        %v7536 = vsub.f32 8.0, %v1210
        %v7537 = vsub.f32 8.0, %v1211
        %v7538 = vsub.f32 8.0, %v1212
        %v7539 = vsub.f32 8.0, %v1213
        %v7540 = vsub.f32 8.0, %v1214
        %v7541 = vsub.f32 8.0, %v1215
        %v7542 = vsub.f32 8.0, %v1216
        %v7543 = vsel %vm7519, %v7531, 0.0
        %v7544 = vsel %vm7520, %v7532, 0.0
        %v7545 = vsel %vm7521, %v7533, 0.0
        %v7546 = vsel %vm7522, %v7534, 0.0
        %v7547 = vsel %vm7523, %v7535, 0.0
        %v7548 = vsel %vm7524, %v7536, 0.0
        %v7549 = vsel %vm7525, %v7537, 0.0
        %v7550 = vsel %vm7526, %v7538, 0.0
        %v7551 = vsel %vm7527, %v7539, 0.0
        %v7552 = vsel %vm7528, %v7540, 0.0
        %v7553 = vsel %vm7529, %v7541, 0.0
        %v7554 = vsel %vm7530, %v7542, 0.0
        %vm7555 = vcmp.eq.f32.partialorder %v1229, 8.0
        %vm7556 = vcmp.eq.f32.partialorder %v1230, 8.0
        %vm7557 = vcmp.eq.f32.partialorder %v1231, 8.0
        %vm7558 = vcmp.eq.f32.partialorder %v1232, 8.0
        %vm7559 = vcmp.eq.f32.partialorder %v1233, 8.0
        %vm7560 = vcmp.eq.f32.partialorder %v1234, 8.0
        %vm7561 = vcmp.eq.f32.partialorder %v1235, 8.0
        %vm7562 = vcmp.eq.f32.partialorder %v1236, 8.0
        %vm7563 = vcmp.eq.f32.partialorder %v1237, 8.0
        %vm7564 = vcmp.eq.f32.partialorder %v1238, 8.0
        %vm7565 = vcmp.eq.f32.partialorder %v1239, 8.0
        %vm7566 = vcmp.eq.f32.partialorder %v1240, 8.0
        %v7567 = vsel %vm7555, %v6219, 0.0
        %v7568 = vsel %vm7556, %v6220, 0.0
        %v7569 = vsel %vm7557, %v6221, 0.0
        %v7570 = vsel %vm7558, %v6222, 0.0
        %v7571 = vsel %vm7559, %v6223, 0.0
        %v7572 = vsel %vm7560, %v6224, 0.0
        %v7573 = vsel %vm7561, %v6225, 0.0
        %v7574 = vsel %vm7562, %v6226, 0.0
        %v7575 = vsel %vm7563, %v6227, 0.0
        %v7576 = vsel %vm7564, %v6228, 0.0
        %v7577 = vsel %vm7565, %v6229, 0.0
        %v7578 = vsel %vm7566, %v6230, 0.0
        %v7579 = vmul.f32 %v6779, %v7543
        %v7580 = vmul.f32 %v6780, %v7544
        %v7581 = vmul.f32 %v6781, %v7545
        %v7582 = vmul.f32 %v6782, %v7546
        %v7583 = vmul.f32 %v6783, %v7547
        %v7584 = vmul.f32 %v6784, %v7548
        %v7585 = vmul.f32 %v6785, %v7549
        %v7586 = vmul.f32 %v6786, %v7550
        %v7587 = vmul.f32 %v6787, %v7551
        %v7588 = vmul.f32 %v6788, %v7552
        %v7589 = vmul.f32 %v6789, %v7553
        %v7590 = vmul.f32 %v6790, %v7554
        %v7591 = vadd.f32 %v6887, %v7579
        %v7592 = vadd.f32 %v6888, %v7580
        %v7593 = vadd.f32 %v6889, %v7581
        %v7594 = vadd.f32 %v6890, %v7582
        %v7595 = vadd.f32 %v6891, %v7583
        %v7596 = vadd.f32 %v6892, %v7584
        %v7597 = vadd.f32 %v6893, %v7585
        %v7598 = vadd.f32 %v6894, %v7586
        %v7599 = vadd.f32 %v6895, %v7587
        %v7600 = vadd.f32 %v6896, %v7588
        %v7601 = vadd.f32 %v6897, %v7589
        %v7602 = vadd.f32 %v6898, %v7590
        %v7603 = vmul.f32 %v7507, %v7567
        %v7604 = vmul.f32 %v7508, %v7568
        %v7605 = vmul.f32 %v7509, %v7569
        %v7606 = vmul.f32 %v7510, %v7570
        %v7607 = vmul.f32 %v7511, %v7571
        %v7608 = vmul.f32 %v7512, %v7572
        %v7609 = vmul.f32 %v7513, %v7573
        %v7610 = vmul.f32 %v7514, %v7574
        %v7611 = vmul.f32 %v7515, %v7575
        %v7612 = vmul.f32 %v7516, %v7576
        %v7613 = vmul.f32 %v7517, %v7577
        %v7614 = vmul.f32 %v7518, %v7578
        %v7615 = vadd.f32 %v7591, %v7603
        %v7616 = vadd.f32 %v7592, %v7604
        %v7617 = vadd.f32 %v7593, %v7605
        %v7618 = vadd.f32 %v7594, %v7606
        %v7619 = vadd.f32 %v7595, %v7607
        %v7620 = vadd.f32 %v7596, %v7608
        %v7621 = vadd.f32 %v7597, %v7609
        %v7622 = vadd.f32 %v7598, %v7610
        %v7623 = vadd.f32 %v7599, %v7611
        %v7624 = vadd.f32 %v7600, %v7612
        %v7625 = vadd.f32 %v7601, %v7613
        %v7626 = vadd.f32 %v7602, %v7614
        %v7627 = vmul.f32 %v6602, %v7543
        %v7628 = vmul.f32 %v6605, %v7544
        %v7629 = vmul.f32 %v6608, %v7545
        %v7630 = vmul.f32 %v6611, %v7546
        %v7631 = vmul.f32 %v6614, %v7547
        %v7632 = vmul.f32 %v6617, %v7548
        %v7633 = vmul.f32 %v6620, %v7549
        %v7634 = vmul.f32 %v6623, %v7550
        %v7635 = vmul.f32 %v6626, %v7551
        %v7636 = vmul.f32 %v6629, %v7552
        %v7637 = vmul.f32 %v6632, %v7553
        %v7638 = vmul.f32 %v6635, %v7554
        %v7639 = vadd.f32 %v6935, %v7627
        %v7640 = vadd.f32 %v6936, %v7628
        %v7641 = vadd.f32 %v6937, %v7629
        %v7642 = vadd.f32 %v6938, %v7630
        %v7643 = vadd.f32 %v6939, %v7631
        %v7644 = vadd.f32 %v6940, %v7632
        %v7645 = vadd.f32 %v6941, %v7633
        %v7646 = vadd.f32 %v6942, %v7634
        %v7647 = vadd.f32 %v6943, %v7635
        %v7648 = vadd.f32 %v6944, %v7636
        %v7649 = vadd.f32 %v6945, %v7637
        %v7650 = vadd.f32 %v6946, %v7638
        %v7651 = vmul.f32 %v7330, %v7567
        %v7652 = vmul.f32 %v7333, %v7568
        %v7653 = vmul.f32 %v7336, %v7569
        %v7654 = vmul.f32 %v7339, %v7570
        %v7655 = vmul.f32 %v7342, %v7571
        %v7656 = vmul.f32 %v7345, %v7572
        %v7657 = vmul.f32 %v7348, %v7573
        %v7658 = vmul.f32 %v7351, %v7574
        %v7659 = vmul.f32 %v7354, %v7575
        %v7660 = vmul.f32 %v7357, %v7576
        %v7661 = vmul.f32 %v7360, %v7577
        %v7662 = vmul.f32 %v7363, %v7578
        %v7663 = vadd.f32 %v7639, %v7651
        %v7664 = vadd.f32 %v7640, %v7652
        %v7665 = vadd.f32 %v7641, %v7653
        %v7666 = vadd.f32 %v7642, %v7654
        %v7667 = vadd.f32 %v7643, %v7655
        %v7668 = vadd.f32 %v7644, %v7656
        %v7669 = vadd.f32 %v7645, %v7657
        %v7670 = vadd.f32 %v7646, %v7658
        %v7671 = vadd.f32 %v7647, %v7659
        %v7672 = vadd.f32 %v7648, %v7660
        %v7673 = vadd.f32 %v7649, %v7661
        %v7674 = vadd.f32 %v7650, %v7662
        %v7675 = vsub.f32 %v1205, 9.0
        %v7676 = vsub.f32 %v1206, 9.0
        %v7677 = vsub.f32 %v1207, 9.0
        %v7678 = vsub.f32 %v1208, 9.0
        %v7679 = vsub.f32 %v1209, 9.0
        %v7680 = vsub.f32 %v1210, 9.0
        %v7681 = vsub.f32 %v1211, 9.0
        %v7682 = vsub.f32 %v1212, 9.0
        %v7683 = vsub.f32 %v1213, 9.0
        %v7684 = vsub.f32 %v1214, 9.0
        %v7685 = vsub.f32 %v1215, 9.0
        %v7686 = vsub.f32 %v1216, 9.0
        %v7687 = vand.u32 2147483647, %v7675
        %v7688 = vand.u32 2147483647, %v7676
        %v7689 = vand.u32 2147483647, %v7677
        %v7690 = vand.u32 2147483647, %v7678
        %v7691 = vand.u32 2147483647, %v7679
        %v7692 = vand.u32 2147483647, %v7680
        %v7693 = vand.u32 2147483647, %v7681
        %v7694 = vand.u32 2147483647, %v7682
        %v7695 = vand.u32 2147483647, %v7683
        %v7696 = vand.u32 2147483647, %v7684
        %v7697 = vand.u32 2147483647, %v7685
        %v7698 = vand.u32 2147483647, %v7686
        %v7699 = vmul.f32 %v1169, %v7687
        %v7700 = vmul.f32 %v1170, %v7688
        %v7701 = vmul.f32 %v1171, %v7689
        %v7702 = vmul.f32 %v1172, %v7690
        %v7703 = vmul.f32 %v1173, %v7691
        %v7704 = vmul.f32 %v1174, %v7692
        %v7705 = vmul.f32 %v1175, %v7693
        %v7706 = vmul.f32 %v1176, %v7694
        %v7707 = vmul.f32 %v1177, %v7695
        %v7708 = vmul.f32 %v1178, %v7696
        %v7709 = vmul.f32 %v1179, %v7697
        %v7710 = vmul.f32 %v1180, %v7698
        %v7711 = vadd.f32 %v7699, 0.0001
        %v7712 = vadd.f32 %v7700, 0.0001
        %v7713 = vadd.f32 %v7701, 0.0001
        %v7714 = vadd.f32 %v7702, 0.0001
        %v7715 = vadd.f32 %v7703, 0.0001
        %v7716 = vadd.f32 %v7704, 0.0001
        %v7717 = vadd.f32 %v7705, 0.0001
        %v7718 = vadd.f32 %v7706, 0.0001
        %v7719 = vadd.f32 %v7707, 0.0001
        %v7720 = vadd.f32 %v7708, 0.0001
        %v7721 = vadd.f32 %v7709, 0.0001
        %v7722 = vadd.f32 %v7710, 0.0001
        %v7723 = vlog2.pop %v7711
        %v7724 = vmul.f32 %v7723, 0.6931472
        %v7725 = vlog2.pop %v7712
        %v7726 = vmul.f32 %v7725, 0.6931472
        %v7727 = vlog2.pop %v7713
        %v7728 = vmul.f32 %v7727, 0.6931472
        %v7729 = vlog2.pop %v7714
        %v7730 = vmul.f32 %v7729, 0.6931472
        %v7731 = vlog2.pop %v7715
        %v7732 = vmul.f32 %v7731, 0.6931472
        %v7733 = vlog2.pop %v7716
        %v7734 = vmul.f32 %v7733, 0.6931472
        %v7735 = vlog2.pop %v7717
        %v7736 = vmul.f32 %v7735, 0.6931472
        %v7737 = vlog2.pop %v7718
        %v7738 = vmul.f32 %v7737, 0.6931472
        %v7739 = vlog2.pop %v7719
        %v7740 = vmul.f32 %v7739, 0.6931472
        %v7741 = vlog2.pop %v7720
        %v7742 = vmul.f32 %v7741, 0.6931472
        %v7743 = vlog2.pop %v7721
        %v7744 = vmul.f32 %v7743, 0.6931472
        %v7745 = vlog2.pop %v7722
        %v7746 = vmul.f32 %v7745, 0.6931472
        %v7747 = vmul.f32 %v7724, -1.2
        %v7748 = vmul.f32 %v7726, -1.2
        %v7749 = vmul.f32 %v7728, -1.2
        %v7750 = vmul.f32 %v7730, -1.2
        %v7751 = vmul.f32 %v7732, -1.2
        %v7752 = vmul.f32 %v7734, -1.2
        %v7753 = vmul.f32 %v7736, -1.2
        %v7754 = vmul.f32 %v7738, -1.2
        %v7755 = vmul.f32 %v7740, -1.2
        %v7756 = vmul.f32 %v7742, -1.2
        %v7757 = vmul.f32 %v7744, -1.2
        %v7758 = vmul.f32 %v7746, -1.2
        %v7759 = vmul.f32 %v7747, 1.442695
        %v7760 = vpow.pop %v7759
        %v7761 = vmul.f32 %v7748, 1.442695
        %v7762 = vpow.pop %v7761
        %v7763 = vmul.f32 %v7749, 1.442695
        %v7764 = vpow.pop %v7763
        %v7765 = vmul.f32 %v7750, 1.442695
        %v7766 = vpow.pop %v7765
        %v7767 = vmul.f32 %v7751, 1.442695
        %v7768 = vpow.pop %v7767
        %v7769 = vmul.f32 %v7752, 1.442695
        %v7770 = vpow.pop %v7769
        %v7771 = vmul.f32 %v7753, 1.442695
        %v7772 = vpow.pop %v7771
        %v7773 = vmul.f32 %v7754, 1.442695
        %v7774 = vpow.pop %v7773
        %v7775 = vmul.f32 %v7755, 1.442695
        %v7776 = vpow.pop %v7775
        %v7777 = vmul.f32 %v7756, 1.442695
        %v7778 = vpow.pop %v7777
        %v7779 = vmul.f32 %v7757, 1.442695
        %v7780 = vpow.pop %v7779
        %v7781 = vmul.f32 %v7758, 1.442695
        %v7782 = vpow.pop %v7781
        %v7783 = vmul.f32 %v7760, %v347
        %v7784 = vmul.f32 %v7762, %v348
        %v7785 = vmul.f32 %v7764, %v349
        %v7786 = vmul.f32 %v7766, %v350
        %v7787 = vmul.f32 %v7768, %v351
        %v7788 = vmul.f32 %v7770, %v352
        %v7789 = vmul.f32 %v7772, %v353
        %v7790 = vmul.f32 %v7774, %v354
        %v7791 = vmul.f32 %v7776, %v355
        %v7792 = vmul.f32 %v7778, %v356
        %v7793 = vmul.f32 %v7780, %v357
        %v7794 = vmul.f32 %v7782, %v358
        %v7795 = vmul.f32 %v7760, %v1181
        %v7796 = vmul.f32 %v7762, %v1182
        %v7797 = vmul.f32 %v7764, %v1183
        %v7798 = vmul.f32 %v7766, %v1184
        %v7799 = vmul.f32 %v7768, %v1185
        %v7800 = vmul.f32 %v7770, %v1186
        %v7801 = vmul.f32 %v7772, %v1187
        %v7802 = vmul.f32 %v7774, %v1188
        %v7803 = vmul.f32 %v7776, %v1189
        %v7804 = vmul.f32 %v7778, %v1190
        %v7805 = vmul.f32 %v7780, %v1191
        %v7806 = vmul.f32 %v7782, %v1192
        %v7808 = vsel %vm1361, %v7760, 0
        %v7811 = vsel %vm1361, %v7762, 0
        %v7814 = vsel %vm1361, %v7764, 0
        %v7817 = vsel %vm1361, %v7766, 0
        %v7820 = vsel %vm1361, %v7768, 0
        %v7823 = vsel %vm1361, %v7770, 0
        %v7826 = vsel %vm1361, %v7772, 0
        %v7829 = vsel %vm1361, %v7774, 0
        %v7832 = vsel %vm1361, %v7776, 0
        %v7835 = vsel %vm1361, %v7778, 0
        %v7838 = vsel %vm1361, %v7780, 0
        %v7841 = vsel %vm1361, %v7782, 0
        %v7844 = vsel %vm1361, %v7783, 0
        %v7847 = vsel %vm1361, %v7784, 0
        %v7850 = vsel %vm1361, %v7785, 0
        %v7853 = vsel %vm1361, %v7786, 0
        %v7856 = vsel %vm1361, %v7787, 0
        %v7859 = vsel %vm1361, %v7788, 0
        %v7862 = vsel %vm1361, %v7789, 0
        %v7865 = vsel %vm1361, %v7790, 0
        %v7868 = vsel %vm1361, %v7791, 0
        %v7871 = vsel %vm1361, %v7792, 0
        %v7874 = vsel %vm1361, %v7793, 0
        %v7877 = vsel %vm1361, %v7794, 0
        %v7880 = vsel %vm1361, %v7795, 0
        %v7883 = vsel %vm1361, %v7796, 0
        %v7886 = vsel %vm1361, %v7797, 0
        %v7889 = vsel %vm1361, %v7798, 0
        %v7892 = vsel %vm1361, %v7799, 0
        %v7895 = vsel %vm1361, %v7800, 0
        %v7898 = vsel %vm1361, %v7801, 0
        %v7901 = vsel %vm1361, %v7802, 0
        %v7904 = vsel %vm1361, %v7803, 0
        %v7907 = vsel %vm1361, %v7804, 0
        %v7910 = vsel %vm1361, %v7805, 0
        %v7913 = vsel %vm1361, %v7806, 0
        %7915 = vmatpush.msra.mxu0 0.0
        %7916 = vmatpush.msra.mxu0 %v385
        %7917 = vmatpush.msra.mxu0 %v384
        %7918 = vmatpush.msra.mxu0 %v383
        %7919 = vmatpush.msra.mxu0 %v382
        %7920 = vmatpush.msra.mxu0 %v381
        %7921 = vmatpush.msra.mxu0 %v380
        %7922 = vmatpush.msra.mxu0 %v379
        %7923 = vmatpush.msra.mxu0 %v378
        %7924 = vmatpush.msra.mxu0 %v377
        %7925 = vmatpush.msra.mxu0 %v376
        %7926 = vmatpush.msra.mxu0 %v375
        %7927 = vmatpush.msra.mxu0 %v374
        %7928 = vmatpush.msra.mxu0 %v373
        %7929 = vmatpush.msra.mxu0 %v372
        %7930 = vmatpush.msra.mxu0 %v371
        %7931 = vmatmul.f32.gmra.mxu0 %v7808
        %v7932 = vpop.f32.mrf.mxu0
        %v7933 = vadd.f32 0.0, %v7932
        %7934 = vmatmul.f32.gmra.mxu0 %v7811
        %v7935 = vpop.f32.mrf.mxu0
        %v7936 = vadd.f32 0.0, %v7935
        %7937 = vmatmul.f32.gmra.mxu0 %v7814
        %v7938 = vpop.f32.mrf.mxu0
        %v7939 = vadd.f32 0.0, %v7938
        %7940 = vmatmul.f32.gmra.mxu0 %v7817
        %v7941 = vpop.f32.mrf.mxu0
        %v7942 = vadd.f32 0.0, %v7941
        %7943 = vmatmul.f32.gmra.mxu0 %v7820
        %v7944 = vpop.f32.mrf.mxu0
        %v7945 = vadd.f32 0.0, %v7944
        %7946 = vmatmul.f32.gmra.mxu0 %v7823
        %v7947 = vpop.f32.mrf.mxu0
        %v7948 = vadd.f32 0.0, %v7947
        %7949 = vmatmul.f32.gmra.mxu0 %v7826
        %v7950 = vpop.f32.mrf.mxu0
        %v7951 = vadd.f32 0.0, %v7950
        %7952 = vmatmul.f32.gmra.mxu0 %v7829
        %v7953 = vpop.f32.mrf.mxu0
        %v7954 = vadd.f32 0.0, %v7953
        %7955 = vmatmul.f32.gmra.mxu0 %v7832
        %v7956 = vpop.f32.mrf.mxu0
        %v7957 = vadd.f32 0.0, %v7956
        %7958 = vmatmul.f32.gmra.mxu0 %v7835
        %v7959 = vpop.f32.mrf.mxu0
        %v7960 = vadd.f32 0.0, %v7959
        %7961 = vmatmul.f32.gmra.mxu0 %v7838
        %v7962 = vpop.f32.mrf.mxu0
        %v7963 = vadd.f32 0.0, %v7962
        %7964 = vmatmul.f32.gmra.mxu0 %v7841
        %v7965 = vpop.f32.mrf.mxu0
        %v7966 = vadd.f32 0.0, %v7965
        %7967 = vmatmul.f32.gmra.mxu0 %v7844
        %v7968 = vpop.f32.mrf.mxu0
        %v7969 = vadd.f32 0.0, %v7968
        %7970 = vmatmul.f32.gmra.mxu0 %v7847
        %v7971 = vpop.f32.mrf.mxu0
        %v7972 = vadd.f32 0.0, %v7971
        %7973 = vmatmul.f32.gmra.mxu0 %v7850
        %v7974 = vpop.f32.mrf.mxu0
        %v7975 = vadd.f32 0.0, %v7974
        %7976 = vmatmul.f32.gmra.mxu0 %v7853
        %v7977 = vpop.f32.mrf.mxu0
        %v7978 = vadd.f32 0.0, %v7977
        %7979 = vmatmul.f32.gmra.mxu0 %v7856
        %v7980 = vpop.f32.mrf.mxu0
        %v7981 = vadd.f32 0.0, %v7980
        %7982 = vmatmul.f32.gmra.mxu0 %v7859
        %v7983 = vpop.f32.mrf.mxu0
        %v7984 = vadd.f32 0.0, %v7983
        %7985 = vmatmul.f32.gmra.mxu0 %v7862
        %v7986 = vpop.f32.mrf.mxu0
        %v7987 = vadd.f32 0.0, %v7986
        %7988 = vmatmul.f32.gmra.mxu0 %v7865
        %v7989 = vpop.f32.mrf.mxu0
        %v7990 = vadd.f32 0.0, %v7989
        %7991 = vmatmul.f32.gmra.mxu0 %v7868
        %v7992 = vpop.f32.mrf.mxu0
        %v7993 = vadd.f32 0.0, %v7992
        %7994 = vmatmul.f32.gmra.mxu0 %v7871
        %v7995 = vpop.f32.mrf.mxu0
        %v7996 = vadd.f32 0.0, %v7995
        %7997 = vmatmul.f32.gmra.mxu0 %v7874
        %v7998 = vpop.f32.mrf.mxu0
        %v7999 = vadd.f32 0.0, %v7998
        %8000 = vmatmul.f32.gmra.mxu0 %v7877
        %v8001 = vpop.f32.mrf.mxu0
        %v8002 = vadd.f32 0.0, %v8001
        %8003 = vmatmul.f32.gmra.mxu0 %v7880
        %v8004 = vpop.f32.mrf.mxu0
        %v8005 = vadd.f32 0.0, %v8004
        %8006 = vmatmul.f32.gmra.mxu0 %v7883
        %v8007 = vpop.f32.mrf.mxu0
        %v8008 = vadd.f32 0.0, %v8007
        %8009 = vmatmul.f32.gmra.mxu0 %v7886
        %v8010 = vpop.f32.mrf.mxu0
        %v8011 = vadd.f32 0.0, %v8010
        %8012 = vmatmul.f32.gmra.mxu0 %v7889
        %v8013 = vpop.f32.mrf.mxu0
        %v8014 = vadd.f32 0.0, %v8013
        %8015 = vmatmul.f32.gmra.mxu0 %v7892
        %v8016 = vpop.f32.mrf.mxu0
        %v8017 = vadd.f32 0.0, %v8016
        %8018 = vmatmul.f32.gmra.mxu0 %v7895
        %v8019 = vpop.f32.mrf.mxu0
        %v8020 = vadd.f32 0.0, %v8019
        %8021 = vmatmul.f32.gmra.mxu0 %v7898
        %v8022 = vpop.f32.mrf.mxu0
        %v8023 = vadd.f32 0.0, %v8022
        %8024 = vmatmul.f32.gmra.mxu0 %v7901
        %v8025 = vpop.f32.mrf.mxu0
        %v8026 = vadd.f32 0.0, %v8025
        %8027 = vmatmul.f32.gmra.mxu0 %v7904
        %v8028 = vpop.f32.mrf.mxu0
        %v8029 = vadd.f32 0.0, %v8028
        %8030 = vmatmul.f32.gmra.mxu0 %v7907
        %v8031 = vpop.f32.mrf.mxu0
        %v8032 = vadd.f32 0.0, %v8031
        %8033 = vmatmul.f32.gmra.mxu0 %v7910
        %v8034 = vpop.f32.mrf.mxu0
        %v8035 = vadd.f32 0.0, %v8034
        %8036 = vmatmul.f32.gmra.mxu0 %v7913
        %v8037 = vpop.f32.mrf.mxu0
        %v8038 = vadd.f32 0.0, %v8037
        %8039 = vdwg.mxu0
        %8040 = vmatpush.msra.mxu0 0.0
        %8041 = vmatpush.msra.mxu0 0.0
        %8042 = vmatpush.msra.mxu0 0.0
        %8043 = vmatpush.msra.mxu0 0.0
        %8044 = vmatpush.msra.mxu0 %v7966
        %8045 = vmatpush.msra.mxu0 %v7963
        %8046 = vmatpush.msra.mxu0 %v7960
        %8047 = vmatpush.msra.mxu0 %v7957
        %8048 = vmatpush.msra.mxu0 %v7954
        %8049 = vmatpush.msra.mxu0 %v7951
        %8050 = vmatpush.msra.mxu0 %v7948
        %8051 = vmatpush.msra.mxu0 %v7945
        %8052 = vmatpush.msra.mxu0 %v7942
        %8053 = vmatpush.msra.mxu0 %v7939
        %8054 = vmatpush.msra.mxu0 %v7936
        %8055 = vmatpush.msra.mxu0 %v7933
        %8056 = vmatmul.f32.gmra.mxu0 %v1597
        %v8057 = vpop.f32.mrf.mxu0
        %v8058 = vadd.f32 0.0, %v8057
        %8059 = vmatmul.f32.gmra.mxu0 %v1600
        %v8060 = vpop.f32.mrf.mxu0
        %v8061 = vadd.f32 0.0, %v8060
        %8062 = vmatmul.f32.gmra.mxu0 %v1603
        %v8063 = vpop.f32.mrf.mxu0
        %v8064 = vadd.f32 0.0, %v8063
        %8065 = vmatmul.f32.gmra.mxu0 %v1606
        %v8066 = vpop.f32.mrf.mxu0
        %v8067 = vadd.f32 0.0, %v8066
        %8068 = vmatmul.f32.gmra.mxu0 %v1609
        %v8069 = vpop.f32.mrf.mxu0
        %v8070 = vadd.f32 0.0, %v8069
        %8071 = vmatmul.f32.gmra.mxu0 %v1612
        %v8072 = vpop.f32.mrf.mxu0
        %v8073 = vadd.f32 0.0, %v8072
        %8074 = vmatmul.f32.gmra.mxu0 %v1615
        %v8075 = vpop.f32.mrf.mxu0
        %v8076 = vadd.f32 0.0, %v8075
        %8077 = vmatmul.f32.gmra.mxu0 %v1618
        %v8078 = vpop.f32.mrf.mxu0
        %v8079 = vadd.f32 0.0, %v8078
        %8080 = vmatmul.f32.gmra.mxu0 %v1621
        %v8081 = vpop.f32.mrf.mxu0
        %v8082 = vadd.f32 0.0, %v8081
        %8083 = vmatmul.f32.gmra.mxu0 %v1624
        %v8084 = vpop.f32.mrf.mxu0
        %v8085 = vadd.f32 0.0, %v8084
        %8086 = vmatmul.f32.gmra.mxu0 %v1627
        %v8087 = vpop.f32.mrf.mxu0
        %v8088 = vadd.f32 0.0, %v8087
        %8089 = vmatmul.f32.gmra.mxu0 %v1630
        %v8090 = vpop.f32.mrf.mxu0
        %v8091 = vadd.f32 0.0, %v8090
        %8092 = vdwg.mxu0
        %8093 = vmatpush.msra.mxu0 0.0
        %8094 = vmatpush.msra.mxu0 0.0
        %8095 = vmatpush.msra.mxu0 0.0
        %8096 = vmatpush.msra.mxu0 0.0
        %8097 = vmatpush.msra.mxu0 %v8002
        %8098 = vmatpush.msra.mxu0 %v7999
        %8099 = vmatpush.msra.mxu0 %v7996
        %8100 = vmatpush.msra.mxu0 %v7993
        %8101 = vmatpush.msra.mxu0 %v7990
        %8102 = vmatpush.msra.mxu0 %v7987
        %8103 = vmatpush.msra.mxu0 %v7984
        %8104 = vmatpush.msra.mxu0 %v7981
        %8105 = vmatpush.msra.mxu0 %v7978
        %8106 = vmatpush.msra.mxu0 %v7975
        %8107 = vmatpush.msra.mxu0 %v7972
        %8108 = vmatpush.msra.mxu0 %v7969
        %8109 = vmatmul.f32.gmra.mxu0 %v1597
        %v8110 = vpop.f32.mrf.mxu0
        %v8111 = vadd.f32 0.0, %v8110
        %8112 = vmatmul.f32.gmra.mxu0 %v1600
        %v8113 = vpop.f32.mrf.mxu0
        %v8114 = vadd.f32 0.0, %v8113
        %8115 = vmatmul.f32.gmra.mxu0 %v1603
        %v8116 = vpop.f32.mrf.mxu0
        %v8117 = vadd.f32 0.0, %v8116
        %8118 = vmatmul.f32.gmra.mxu0 %v1606
        %v8119 = vpop.f32.mrf.mxu0
        %v8120 = vadd.f32 0.0, %v8119
        %8121 = vmatmul.f32.gmra.mxu0 %v1609
        %v8122 = vpop.f32.mrf.mxu0
        %v8123 = vadd.f32 0.0, %v8122
        %8124 = vmatmul.f32.gmra.mxu0 %v1612
        %v8125 = vpop.f32.mrf.mxu0
        %v8126 = vadd.f32 0.0, %v8125
        %8127 = vmatmul.f32.gmra.mxu0 %v1615
        %v8128 = vpop.f32.mrf.mxu0
        %v8129 = vadd.f32 0.0, %v8128
        %8130 = vmatmul.f32.gmra.mxu0 %v1618
        %v8131 = vpop.f32.mrf.mxu0
        %v8132 = vadd.f32 0.0, %v8131
        %8133 = vmatmul.f32.gmra.mxu0 %v1621
        %v8134 = vpop.f32.mrf.mxu0
        %v8135 = vadd.f32 0.0, %v8134
        %8136 = vmatmul.f32.gmra.mxu0 %v1624
        %v8137 = vpop.f32.mrf.mxu0
        %v8138 = vadd.f32 0.0, %v8137
        %8139 = vmatmul.f32.gmra.mxu0 %v1627
        %v8140 = vpop.f32.mrf.mxu0
        %v8141 = vadd.f32 0.0, %v8140
        %8142 = vmatmul.f32.gmra.mxu0 %v1630
        %v8143 = vpop.f32.mrf.mxu0
        %v8144 = vadd.f32 0.0, %v8143
        %8145 = vdwg.mxu0
        %8146 = vmatpush.msra.mxu0 0.0
        %8147 = vmatpush.msra.mxu0 0.0
        %8148 = vmatpush.msra.mxu0 0.0
        %8149 = vmatpush.msra.mxu0 0.0
        %8150 = vmatpush.msra.mxu0 %v8038
        %8151 = vmatpush.msra.mxu0 %v8035
        %8152 = vmatpush.msra.mxu0 %v8032
        %8153 = vmatpush.msra.mxu0 %v8029
        %8154 = vmatpush.msra.mxu0 %v8026
        %8155 = vmatpush.msra.mxu0 %v8023
        %8156 = vmatpush.msra.mxu0 %v8020
        %8157 = vmatpush.msra.mxu0 %v8017
        %8158 = vmatpush.msra.mxu0 %v8014
        %8159 = vmatpush.msra.mxu0 %v8011
        %8160 = vmatpush.msra.mxu0 %v8008
        %8161 = vmatpush.msra.mxu0 %v8005
        %8162 = vmatmul.f32.gmra.mxu0 %v1597
        %v8163 = vpop.f32.mrf.mxu0
        %v8164 = vadd.f32 0.0, %v8163
        %8165 = vmatmul.f32.gmra.mxu0 %v1600
        %v8166 = vpop.f32.mrf.mxu0
        %v8167 = vadd.f32 0.0, %v8166
        %8168 = vmatmul.f32.gmra.mxu0 %v1603
        %v8169 = vpop.f32.mrf.mxu0
        %v8170 = vadd.f32 0.0, %v8169
        %8171 = vmatmul.f32.gmra.mxu0 %v1606
        %v8172 = vpop.f32.mrf.mxu0
        %v8173 = vadd.f32 0.0, %v8172
        %8174 = vmatmul.f32.gmra.mxu0 %v1609
        %v8175 = vpop.f32.mrf.mxu0
        %v8176 = vadd.f32 0.0, %v8175
        %8177 = vmatmul.f32.gmra.mxu0 %v1612
        %v8178 = vpop.f32.mrf.mxu0
        %v8179 = vadd.f32 0.0, %v8178
        %8180 = vmatmul.f32.gmra.mxu0 %v1615
        %v8181 = vpop.f32.mrf.mxu0
        %v8182 = vadd.f32 0.0, %v8181
        %8183 = vmatmul.f32.gmra.mxu0 %v1618
        %v8184 = vpop.f32.mrf.mxu0
        %v8185 = vadd.f32 0.0, %v8184
        %8186 = vmatmul.f32.gmra.mxu0 %v1621
        %v8187 = vpop.f32.mrf.mxu0
        %v8188 = vadd.f32 0.0, %v8187
        %8189 = vmatmul.f32.gmra.mxu0 %v1624
        %v8190 = vpop.f32.mrf.mxu0
        %v8191 = vadd.f32 0.0, %v8190
        %8192 = vmatmul.f32.gmra.mxu0 %v1627
        %v8193 = vpop.f32.mrf.mxu0
        %v8194 = vadd.f32 0.0, %v8193
        %8195 = vmatmul.f32.gmra.mxu0 %v1630
        %v8196 = vpop.f32.mrf.mxu0
        %v8197 = vadd.f32 0.0, %v8196
        %8198 = vdwg.mxu0
        %v8199 = vmul.f32 %v8058, %v1181
        %v8200 = vmul.f32 %v8061, %v1182
        %v8201 = vmul.f32 %v8064, %v1183
        %v8202 = vmul.f32 %v8067, %v1184
        %v8203 = vmul.f32 %v8070, %v1185
        %v8204 = vmul.f32 %v8073, %v1186
        %v8205 = vmul.f32 %v8076, %v1187
        %v8206 = vmul.f32 %v8079, %v1188
        %v8207 = vmul.f32 %v8082, %v1189
        %v8208 = vmul.f32 %v8085, %v1190
        %v8209 = vmul.f32 %v8088, %v1191
        %v8210 = vmul.f32 %v8091, %v1192
        %v8211 = vmul.f32 %v1803, %v8111
        %v8212 = vmul.f32 %v1804, %v8114
        %v8213 = vmul.f32 %v1805, %v8117
        %v8214 = vmul.f32 %v1806, %v8120
        %v8215 = vmul.f32 %v1807, %v8123
        %v8216 = vmul.f32 %v1808, %v8126
        %v8217 = vmul.f32 %v1809, %v8129
        %v8218 = vmul.f32 %v1810, %v8132
        %v8219 = vmul.f32 %v1811, %v8135
        %v8220 = vmul.f32 %v1812, %v8138
        %v8221 = vmul.f32 %v1813, %v8141
        %v8222 = vmul.f32 %v1814, %v8144
        %v8223 = vsub.f32 %v8199, %v8211
        %v8224 = vsub.f32 %v8200, %v8212
        %v8225 = vsub.f32 %v8201, %v8213
        %v8226 = vsub.f32 %v8202, %v8214
        %v8227 = vsub.f32 %v8203, %v8215
        %v8228 = vsub.f32 %v8204, %v8216
        %v8229 = vsub.f32 %v8205, %v8217
        %v8230 = vsub.f32 %v8206, %v8218
        %v8231 = vsub.f32 %v8207, %v8219
        %v8232 = vsub.f32 %v8208, %v8220
        %v8233 = vsub.f32 %v8209, %v8221
        %v8234 = vsub.f32 %v8210, %v8222
        %v8235 = vadd.f32 %v8223, %v8164
        %v8236 = vadd.f32 %v8224, %v8167
        %v8237 = vadd.f32 %v8225, %v8170
        %v8238 = vadd.f32 %v8226, %v8173
        %v8239 = vadd.f32 %v8227, %v8176
        %v8240 = vadd.f32 %v8228, %v8179
        %v8241 = vadd.f32 %v8229, %v8182
        %v8242 = vadd.f32 %v8230, %v8185
        %v8243 = vadd.f32 %v8231, %v8188
        %v8244 = vadd.f32 %v8232, %v8191
        %v8245 = vadd.f32 %v8233, %v8194
        %v8246 = vadd.f32 %v8234, %v8197
        %vm8247 = vcmp.eq.f32.partialorder %v1217, 8.0
        %vm8248 = vcmp.eq.f32.partialorder %v1218, 8.0
        %vm8249 = vcmp.eq.f32.partialorder %v1219, 8.0
        %vm8250 = vcmp.eq.f32.partialorder %v1220, 8.0
        %vm8251 = vcmp.eq.f32.partialorder %v1221, 8.0
        %vm8252 = vcmp.eq.f32.partialorder %v1222, 8.0
        %vm8253 = vcmp.eq.f32.partialorder %v1223, 8.0
        %vm8254 = vcmp.eq.f32.partialorder %v1224, 8.0
        %vm8255 = vcmp.eq.f32.partialorder %v1225, 8.0
        %vm8256 = vcmp.eq.f32.partialorder %v1226, 8.0
        %vm8257 = vcmp.eq.f32.partialorder %v1227, 8.0
        %vm8258 = vcmp.eq.f32.partialorder %v1228, 8.0
        %v8259 = vsub.f32 9.0, %v1205
        %v8260 = vsub.f32 9.0, %v1206
        %v8261 = vsub.f32 9.0, %v1207
        %v8262 = vsub.f32 9.0, %v1208
        %v8263 = vsub.f32 9.0, %v1209
        %v8264 = vsub.f32 9.0, %v1210
        %v8265 = vsub.f32 9.0, %v1211
        %v8266 = vsub.f32 9.0, %v1212
        %v8267 = vsub.f32 9.0, %v1213
        %v8268 = vsub.f32 9.0, %v1214
        %v8269 = vsub.f32 9.0, %v1215
        %v8270 = vsub.f32 9.0, %v1216
        %v8271 = vsel %vm8247, %v8259, 0.0
        %v8272 = vsel %vm8248, %v8260, 0.0
        %v8273 = vsel %vm8249, %v8261, 0.0
        %v8274 = vsel %vm8250, %v8262, 0.0
        %v8275 = vsel %vm8251, %v8263, 0.0
        %v8276 = vsel %vm8252, %v8264, 0.0
        %v8277 = vsel %vm8253, %v8265, 0.0
        %v8278 = vsel %vm8254, %v8266, 0.0
        %v8279 = vsel %vm8255, %v8267, 0.0
        %v8280 = vsel %vm8256, %v8268, 0.0
        %v8281 = vsel %vm8257, %v8269, 0.0
        %v8282 = vsel %vm8258, %v8270, 0.0
        %vm8283 = vcmp.eq.f32.partialorder %v1229, 9.0
        %vm8284 = vcmp.eq.f32.partialorder %v1230, 9.0
        %vm8285 = vcmp.eq.f32.partialorder %v1231, 9.0
        %vm8286 = vcmp.eq.f32.partialorder %v1232, 9.0
        %vm8287 = vcmp.eq.f32.partialorder %v1233, 9.0
        %vm8288 = vcmp.eq.f32.partialorder %v1234, 9.0
        %vm8289 = vcmp.eq.f32.partialorder %v1235, 9.0
        %vm8290 = vcmp.eq.f32.partialorder %v1236, 9.0
        %vm8291 = vcmp.eq.f32.partialorder %v1237, 9.0
        %vm8292 = vcmp.eq.f32.partialorder %v1238, 9.0
        %vm8293 = vcmp.eq.f32.partialorder %v1239, 9.0
        %vm8294 = vcmp.eq.f32.partialorder %v1240, 9.0
        %v8295 = vsel %vm8283, %v6947, 0.0
        %v8296 = vsel %vm8284, %v6948, 0.0
        %v8297 = vsel %vm8285, %v6949, 0.0
        %v8298 = vsel %vm8286, %v6950, 0.0
        %v8299 = vsel %vm8287, %v6951, 0.0
        %v8300 = vsel %vm8288, %v6952, 0.0
        %v8301 = vsel %vm8289, %v6953, 0.0
        %v8302 = vsel %vm8290, %v6954, 0.0
        %v8303 = vsel %vm8291, %v6955, 0.0
        %v8304 = vsel %vm8292, %v6956, 0.0
        %v8305 = vsel %vm8293, %v6957, 0.0
        %v8306 = vsel %vm8294, %v6958, 0.0
        %v8307 = vmul.f32 %v7507, %v8271
        %v8308 = vmul.f32 %v7508, %v8272
        %v8309 = vmul.f32 %v7509, %v8273
        %v8310 = vmul.f32 %v7510, %v8274
        %v8311 = vmul.f32 %v7511, %v8275
        %v8312 = vmul.f32 %v7512, %v8276
        %v8313 = vmul.f32 %v7513, %v8277
        %v8314 = vmul.f32 %v7514, %v8278
        %v8315 = vmul.f32 %v7515, %v8279
        %v8316 = vmul.f32 %v7516, %v8280
        %v8317 = vmul.f32 %v7517, %v8281
        %v8318 = vmul.f32 %v7518, %v8282
        %v8319 = vadd.f32 %v7615, %v8307
        %v8320 = vadd.f32 %v7616, %v8308
        %v8321 = vadd.f32 %v7617, %v8309
        %v8322 = vadd.f32 %v7618, %v8310
        %v8323 = vadd.f32 %v7619, %v8311
        %v8324 = vadd.f32 %v7620, %v8312
        %v8325 = vadd.f32 %v7621, %v8313
        %v8326 = vadd.f32 %v7622, %v8314
        %v8327 = vadd.f32 %v7623, %v8315
        %v8328 = vadd.f32 %v7624, %v8316
        %v8329 = vadd.f32 %v7625, %v8317
        %v8330 = vadd.f32 %v7626, %v8318
        %v8331 = vmul.f32 %v8235, %v8295
        %v8332 = vmul.f32 %v8236, %v8296
        %v8333 = vmul.f32 %v8237, %v8297
        %v8334 = vmul.f32 %v8238, %v8298
        %v8335 = vmul.f32 %v8239, %v8299
        %v8336 = vmul.f32 %v8240, %v8300
        %v8337 = vmul.f32 %v8241, %v8301
        %v8338 = vmul.f32 %v8242, %v8302
        %v8339 = vmul.f32 %v8243, %v8303
        %v8340 = vmul.f32 %v8244, %v8304
        %v8341 = vmul.f32 %v8245, %v8305
        %v8342 = vmul.f32 %v8246, %v8306
        %v8343 = vadd.f32 %v8319, %v8331
        %v8344 = vadd.f32 %v8320, %v8332
        %v8345 = vadd.f32 %v8321, %v8333
        %v8346 = vadd.f32 %v8322, %v8334
        %v8347 = vadd.f32 %v8323, %v8335
        %v8348 = vadd.f32 %v8324, %v8336
        %v8349 = vadd.f32 %v8325, %v8337
        %v8350 = vadd.f32 %v8326, %v8338
        %v8351 = vadd.f32 %v8327, %v8339
        %v8352 = vadd.f32 %v8328, %v8340
        %v8353 = vadd.f32 %v8329, %v8341
        %v8354 = vadd.f32 %v8330, %v8342
        %v8355 = vmul.f32 %v7330, %v8271
        %v8356 = vmul.f32 %v7333, %v8272
        %v8357 = vmul.f32 %v7336, %v8273
        %v8358 = vmul.f32 %v7339, %v8274
        %v8359 = vmul.f32 %v7342, %v8275
        %v8360 = vmul.f32 %v7345, %v8276
        %v8361 = vmul.f32 %v7348, %v8277
        %v8362 = vmul.f32 %v7351, %v8278
        %v8363 = vmul.f32 %v7354, %v8279
        %v8364 = vmul.f32 %v7357, %v8280
        %v8365 = vmul.f32 %v7360, %v8281
        %v8366 = vmul.f32 %v7363, %v8282
        %v8367 = vadd.f32 %v7663, %v8355
        %v8368 = vadd.f32 %v7664, %v8356
        %v8369 = vadd.f32 %v7665, %v8357
        %v8370 = vadd.f32 %v7666, %v8358
        %v8371 = vadd.f32 %v7667, %v8359
        %v8372 = vadd.f32 %v7668, %v8360
        %v8373 = vadd.f32 %v7669, %v8361
        %v8374 = vadd.f32 %v7670, %v8362
        %v8375 = vadd.f32 %v7671, %v8363
        %v8376 = vadd.f32 %v7672, %v8364
        %v8377 = vadd.f32 %v7673, %v8365
        %v8378 = vadd.f32 %v7674, %v8366
        %v8379 = vmul.f32 %v8058, %v8295
        %v8380 = vmul.f32 %v8061, %v8296
        %v8381 = vmul.f32 %v8064, %v8297
        %v8382 = vmul.f32 %v8067, %v8298
        %v8383 = vmul.f32 %v8070, %v8299
        %v8384 = vmul.f32 %v8073, %v8300
        %v8385 = vmul.f32 %v8076, %v8301
        %v8386 = vmul.f32 %v8079, %v8302
        %v8387 = vmul.f32 %v8082, %v8303
        %v8388 = vmul.f32 %v8085, %v8304
        %v8389 = vmul.f32 %v8088, %v8305
        %v8390 = vmul.f32 %v8091, %v8306
        %v8391 = vadd.f32 %v8367, %v8379
        %v8392 = vadd.f32 %v8368, %v8380
        %v8393 = vadd.f32 %v8369, %v8381
        %v8394 = vadd.f32 %v8370, %v8382
        %v8395 = vadd.f32 %v8371, %v8383
        %v8396 = vadd.f32 %v8372, %v8384
        %v8397 = vadd.f32 %v8373, %v8385
        %v8398 = vadd.f32 %v8374, %v8386
        %v8399 = vadd.f32 %v8375, %v8387
        %v8400 = vadd.f32 %v8376, %v8388
        %v8401 = vadd.f32 %v8377, %v8389
        %v8402 = vadd.f32 %v8378, %v8390
        %v8403 = vsub.f32 %v1205, 10.0
        %v8404 = vsub.f32 %v1206, 10.0
        %v8405 = vsub.f32 %v1207, 10.0
        %v8406 = vsub.f32 %v1208, 10.0
        %v8407 = vsub.f32 %v1209, 10.0
        %v8408 = vsub.f32 %v1210, 10.0
        %v8409 = vsub.f32 %v1211, 10.0
        %v8410 = vsub.f32 %v1212, 10.0
        %v8411 = vsub.f32 %v1213, 10.0
        %v8412 = vsub.f32 %v1214, 10.0
        %v8413 = vsub.f32 %v1215, 10.0
        %v8414 = vsub.f32 %v1216, 10.0
        %v8415 = vand.u32 2147483647, %v8403
        %v8416 = vand.u32 2147483647, %v8404
        %v8417 = vand.u32 2147483647, %v8405
        %v8418 = vand.u32 2147483647, %v8406
        %v8419 = vand.u32 2147483647, %v8407
        %v8420 = vand.u32 2147483647, %v8408
        %v8421 = vand.u32 2147483647, %v8409
        %v8422 = vand.u32 2147483647, %v8410
        %v8423 = vand.u32 2147483647, %v8411
        %v8424 = vand.u32 2147483647, %v8412
        %v8425 = vand.u32 2147483647, %v8413
        %v8426 = vand.u32 2147483647, %v8414
        %v8427 = vmul.f32 %v1169, %v8415
        %v8428 = vmul.f32 %v1170, %v8416
        %v8429 = vmul.f32 %v1171, %v8417
        %v8430 = vmul.f32 %v1172, %v8418
        %v8431 = vmul.f32 %v1173, %v8419
        %v8432 = vmul.f32 %v1174, %v8420
        %v8433 = vmul.f32 %v1175, %v8421
        %v8434 = vmul.f32 %v1176, %v8422
        %v8435 = vmul.f32 %v1177, %v8423
        %v8436 = vmul.f32 %v1178, %v8424
        %v8437 = vmul.f32 %v1179, %v8425
        %v8438 = vmul.f32 %v1180, %v8426
        %v8439 = vadd.f32 %v8427, 0.0001
        %v8440 = vadd.f32 %v8428, 0.0001
        %v8441 = vadd.f32 %v8429, 0.0001
        %v8442 = vadd.f32 %v8430, 0.0001
        %v8443 = vadd.f32 %v8431, 0.0001
        %v8444 = vadd.f32 %v8432, 0.0001
        %v8445 = vadd.f32 %v8433, 0.0001
        %v8446 = vadd.f32 %v8434, 0.0001
        %v8447 = vadd.f32 %v8435, 0.0001
        %v8448 = vadd.f32 %v8436, 0.0001
        %v8449 = vadd.f32 %v8437, 0.0001
        %v8450 = vadd.f32 %v8438, 0.0001
        %v8451 = vlog2.pop %v8439
        %v8452 = vmul.f32 %v8451, 0.6931472
        %v8453 = vlog2.pop %v8440
        %v8454 = vmul.f32 %v8453, 0.6931472
        %v8455 = vlog2.pop %v8441
        %v8456 = vmul.f32 %v8455, 0.6931472
        %v8457 = vlog2.pop %v8442
        %v8458 = vmul.f32 %v8457, 0.6931472
        %v8459 = vlog2.pop %v8443
        %v8460 = vmul.f32 %v8459, 0.6931472
        %v8461 = vlog2.pop %v8444
        %v8462 = vmul.f32 %v8461, 0.6931472
        %v8463 = vlog2.pop %v8445
        %v8464 = vmul.f32 %v8463, 0.6931472
        %v8465 = vlog2.pop %v8446
        %v8466 = vmul.f32 %v8465, 0.6931472
        %v8467 = vlog2.pop %v8447
        %v8468 = vmul.f32 %v8467, 0.6931472
        %v8469 = vlog2.pop %v8448
        %v8470 = vmul.f32 %v8469, 0.6931472
        %v8471 = vlog2.pop %v8449
        %v8472 = vmul.f32 %v8471, 0.6931472
        %v8473 = vlog2.pop %v8450
        %v8474 = vmul.f32 %v8473, 0.6931472
        %v8475 = vmul.f32 %v8452, -1.2
        %v8476 = vmul.f32 %v8454, -1.2
        %v8477 = vmul.f32 %v8456, -1.2
        %v8478 = vmul.f32 %v8458, -1.2
        %v8479 = vmul.f32 %v8460, -1.2
        %v8480 = vmul.f32 %v8462, -1.2
        %v8481 = vmul.f32 %v8464, -1.2
        %v8482 = vmul.f32 %v8466, -1.2
        %v8483 = vmul.f32 %v8468, -1.2
        %v8484 = vmul.f32 %v8470, -1.2
        %v8485 = vmul.f32 %v8472, -1.2
        %v8486 = vmul.f32 %v8474, -1.2
        %v8487 = vmul.f32 %v8475, 1.442695
        %v8488 = vpow.pop %v8487
        %v8489 = vmul.f32 %v8476, 1.442695
        %v8490 = vpow.pop %v8489
        %v8491 = vmul.f32 %v8477, 1.442695
        %v8492 = vpow.pop %v8491
        %v8493 = vmul.f32 %v8478, 1.442695
        %v8494 = vpow.pop %v8493
        %v8495 = vmul.f32 %v8479, 1.442695
        %v8496 = vpow.pop %v8495
        %v8497 = vmul.f32 %v8480, 1.442695
        %v8498 = vpow.pop %v8497
        %v8499 = vmul.f32 %v8481, 1.442695
        %v8500 = vpow.pop %v8499
        %v8501 = vmul.f32 %v8482, 1.442695
        %v8502 = vpow.pop %v8501
        %v8503 = vmul.f32 %v8483, 1.442695
        %v8504 = vpow.pop %v8503
        %v8505 = vmul.f32 %v8484, 1.442695
        %v8506 = vpow.pop %v8505
        %v8507 = vmul.f32 %v8485, 1.442695
        %v8508 = vpow.pop %v8507
        %v8509 = vmul.f32 %v8486, 1.442695
        %v8510 = vpow.pop %v8509
        %v8511 = vmul.f32 %v8488, %v347
        %v8512 = vmul.f32 %v8490, %v348
        %v8513 = vmul.f32 %v8492, %v349
        %v8514 = vmul.f32 %v8494, %v350
        %v8515 = vmul.f32 %v8496, %v351
        %v8516 = vmul.f32 %v8498, %v352
        %v8517 = vmul.f32 %v8500, %v353
        %v8518 = vmul.f32 %v8502, %v354
        %v8519 = vmul.f32 %v8504, %v355
        %v8520 = vmul.f32 %v8506, %v356
        %v8521 = vmul.f32 %v8508, %v357
        %v8522 = vmul.f32 %v8510, %v358
        %v8523 = vmul.f32 %v8488, %v1181
        %v8524 = vmul.f32 %v8490, %v1182
        %v8525 = vmul.f32 %v8492, %v1183
        %v8526 = vmul.f32 %v8494, %v1184
        %v8527 = vmul.f32 %v8496, %v1185
        %v8528 = vmul.f32 %v8498, %v1186
        %v8529 = vmul.f32 %v8500, %v1187
        %v8530 = vmul.f32 %v8502, %v1188
        %v8531 = vmul.f32 %v8504, %v1189
        %v8532 = vmul.f32 %v8506, %v1190
        %v8533 = vmul.f32 %v8508, %v1191
        %v8534 = vmul.f32 %v8510, %v1192
        %v8536 = vsel %vm1361, %v8488, 0
        %v8539 = vsel %vm1361, %v8490, 0
        %v8542 = vsel %vm1361, %v8492, 0
        %v8545 = vsel %vm1361, %v8494, 0
        %v8548 = vsel %vm1361, %v8496, 0
        %v8551 = vsel %vm1361, %v8498, 0
        %v8554 = vsel %vm1361, %v8500, 0
        %v8557 = vsel %vm1361, %v8502, 0
        %v8560 = vsel %vm1361, %v8504, 0
        %v8563 = vsel %vm1361, %v8506, 0
        %v8566 = vsel %vm1361, %v8508, 0
        %v8569 = vsel %vm1361, %v8510, 0
        %v8572 = vsel %vm1361, %v8511, 0
        %v8575 = vsel %vm1361, %v8512, 0
        %v8578 = vsel %vm1361, %v8513, 0
        %v8581 = vsel %vm1361, %v8514, 0
        %v8584 = vsel %vm1361, %v8515, 0
        %v8587 = vsel %vm1361, %v8516, 0
        %v8590 = vsel %vm1361, %v8517, 0
        %v8593 = vsel %vm1361, %v8518, 0
        %v8596 = vsel %vm1361, %v8519, 0
        %v8599 = vsel %vm1361, %v8520, 0
        %v8602 = vsel %vm1361, %v8521, 0
        %v8605 = vsel %vm1361, %v8522, 0
        %v8608 = vsel %vm1361, %v8523, 0
        %v8611 = vsel %vm1361, %v8524, 0
        %v8614 = vsel %vm1361, %v8525, 0
        %v8617 = vsel %vm1361, %v8526, 0
        %v8620 = vsel %vm1361, %v8527, 0
        %v8623 = vsel %vm1361, %v8528, 0
        %v8626 = vsel %vm1361, %v8529, 0
        %v8629 = vsel %vm1361, %v8530, 0
        %v8632 = vsel %vm1361, %v8531, 0
        %v8635 = vsel %vm1361, %v8532, 0
        %v8638 = vsel %vm1361, %v8533, 0
        %v8641 = vsel %vm1361, %v8534, 0
        %8643 = vmatpush.msra.mxu0 0.0
        %8644 = vmatpush.msra.mxu0 %v385
        %8645 = vmatpush.msra.mxu0 %v384
        %8646 = vmatpush.msra.mxu0 %v383
        %8647 = vmatpush.msra.mxu0 %v382
        %8648 = vmatpush.msra.mxu0 %v381
        %8649 = vmatpush.msra.mxu0 %v380
        %8650 = vmatpush.msra.mxu0 %v379
        %8651 = vmatpush.msra.mxu0 %v378
        %8652 = vmatpush.msra.mxu0 %v377
        %8653 = vmatpush.msra.mxu0 %v376
        %8654 = vmatpush.msra.mxu0 %v375
        %8655 = vmatpush.msra.mxu0 %v374
        %8656 = vmatpush.msra.mxu0 %v373
        %8657 = vmatpush.msra.mxu0 %v372
        %8658 = vmatpush.msra.mxu0 %v371
        %8659 = vmatmul.f32.gmra.mxu0 %v8536
        %v8660 = vpop.f32.mrf.mxu0
        %v8661 = vadd.f32 0.0, %v8660
        %8662 = vmatmul.f32.gmra.mxu0 %v8539
        %v8663 = vpop.f32.mrf.mxu0
        %v8664 = vadd.f32 0.0, %v8663
        %8665 = vmatmul.f32.gmra.mxu0 %v8542
        %v8666 = vpop.f32.mrf.mxu0
        %v8667 = vadd.f32 0.0, %v8666
        %8668 = vmatmul.f32.gmra.mxu0 %v8545
        %v8669 = vpop.f32.mrf.mxu0
        %v8670 = vadd.f32 0.0, %v8669
        %8671 = vmatmul.f32.gmra.mxu0 %v8548
        %v8672 = vpop.f32.mrf.mxu0
        %v8673 = vadd.f32 0.0, %v8672
        %8674 = vmatmul.f32.gmra.mxu0 %v8551
        %v8675 = vpop.f32.mrf.mxu0
        %v8676 = vadd.f32 0.0, %v8675
        %8677 = vmatmul.f32.gmra.mxu0 %v8554
        %v8678 = vpop.f32.mrf.mxu0
        %v8679 = vadd.f32 0.0, %v8678
        %8680 = vmatmul.f32.gmra.mxu0 %v8557
        %v8681 = vpop.f32.mrf.mxu0
        %v8682 = vadd.f32 0.0, %v8681
        %8683 = vmatmul.f32.gmra.mxu0 %v8560
        %v8684 = vpop.f32.mrf.mxu0
        %v8685 = vadd.f32 0.0, %v8684
        %8686 = vmatmul.f32.gmra.mxu0 %v8563
        %v8687 = vpop.f32.mrf.mxu0
        %v8688 = vadd.f32 0.0, %v8687
        %8689 = vmatmul.f32.gmra.mxu0 %v8566
        %v8690 = vpop.f32.mrf.mxu0
        %v8691 = vadd.f32 0.0, %v8690
        %8692 = vmatmul.f32.gmra.mxu0 %v8569
        %v8693 = vpop.f32.mrf.mxu0
        %v8694 = vadd.f32 0.0, %v8693
        %8695 = vmatmul.f32.gmra.mxu0 %v8572
        %v8696 = vpop.f32.mrf.mxu0
        %v8697 = vadd.f32 0.0, %v8696
        %8698 = vmatmul.f32.gmra.mxu0 %v8575
        %v8699 = vpop.f32.mrf.mxu0
        %v8700 = vadd.f32 0.0, %v8699
        %8701 = vmatmul.f32.gmra.mxu0 %v8578
        %v8702 = vpop.f32.mrf.mxu0
        %v8703 = vadd.f32 0.0, %v8702
        %8704 = vmatmul.f32.gmra.mxu0 %v8581
        %v8705 = vpop.f32.mrf.mxu0
        %v8706 = vadd.f32 0.0, %v8705
        %8707 = vmatmul.f32.gmra.mxu0 %v8584
        %v8708 = vpop.f32.mrf.mxu0
        %v8709 = vadd.f32 0.0, %v8708
        %8710 = vmatmul.f32.gmra.mxu0 %v8587
        %v8711 = vpop.f32.mrf.mxu0
        %v8712 = vadd.f32 0.0, %v8711
        %8713 = vmatmul.f32.gmra.mxu0 %v8590
        %v8714 = vpop.f32.mrf.mxu0
        %v8715 = vadd.f32 0.0, %v8714
        %8716 = vmatmul.f32.gmra.mxu0 %v8593
        %v8717 = vpop.f32.mrf.mxu0
        %v8718 = vadd.f32 0.0, %v8717
        %8719 = vmatmul.f32.gmra.mxu0 %v8596
        %v8720 = vpop.f32.mrf.mxu0
        %v8721 = vadd.f32 0.0, %v8720
        %8722 = vmatmul.f32.gmra.mxu0 %v8599
        %v8723 = vpop.f32.mrf.mxu0
        %v8724 = vadd.f32 0.0, %v8723
        %8725 = vmatmul.f32.gmra.mxu0 %v8602
        %v8726 = vpop.f32.mrf.mxu0
        %v8727 = vadd.f32 0.0, %v8726
        %8728 = vmatmul.f32.gmra.mxu0 %v8605
        %v8729 = vpop.f32.mrf.mxu0
        %v8730 = vadd.f32 0.0, %v8729
        %8731 = vmatmul.f32.gmra.mxu0 %v8608
        %v8732 = vpop.f32.mrf.mxu0
        %v8733 = vadd.f32 0.0, %v8732
        %8734 = vmatmul.f32.gmra.mxu0 %v8611
        %v8735 = vpop.f32.mrf.mxu0
        %v8736 = vadd.f32 0.0, %v8735
        %8737 = vmatmul.f32.gmra.mxu0 %v8614
        %v8738 = vpop.f32.mrf.mxu0
        %v8739 = vadd.f32 0.0, %v8738
        %8740 = vmatmul.f32.gmra.mxu0 %v8617
        %v8741 = vpop.f32.mrf.mxu0
        %v8742 = vadd.f32 0.0, %v8741
        %8743 = vmatmul.f32.gmra.mxu0 %v8620
        %v8744 = vpop.f32.mrf.mxu0
        %v8745 = vadd.f32 0.0, %v8744
        %8746 = vmatmul.f32.gmra.mxu0 %v8623
        %v8747 = vpop.f32.mrf.mxu0
        %v8748 = vadd.f32 0.0, %v8747
        %8749 = vmatmul.f32.gmra.mxu0 %v8626
        %v8750 = vpop.f32.mrf.mxu0
        %v8751 = vadd.f32 0.0, %v8750
        %8752 = vmatmul.f32.gmra.mxu0 %v8629
        %v8753 = vpop.f32.mrf.mxu0
        %v8754 = vadd.f32 0.0, %v8753
        %8755 = vmatmul.f32.gmra.mxu0 %v8632
        %v8756 = vpop.f32.mrf.mxu0
        %v8757 = vadd.f32 0.0, %v8756
        %8758 = vmatmul.f32.gmra.mxu0 %v8635
        %v8759 = vpop.f32.mrf.mxu0
        %v8760 = vadd.f32 0.0, %v8759
        %8761 = vmatmul.f32.gmra.mxu0 %v8638
        %v8762 = vpop.f32.mrf.mxu0
        %v8763 = vadd.f32 0.0, %v8762
        %8764 = vmatmul.f32.gmra.mxu0 %v8641
        %v8765 = vpop.f32.mrf.mxu0
        %v8766 = vadd.f32 0.0, %v8765
        %8767 = vdwg.mxu0
        %8768 = vmatpush.msra.mxu0 0.0
        %8769 = vmatpush.msra.mxu0 0.0
        %8770 = vmatpush.msra.mxu0 0.0
        %8771 = vmatpush.msra.mxu0 0.0
        %8772 = vmatpush.msra.mxu0 %v8694
        %8773 = vmatpush.msra.mxu0 %v8691
        %8774 = vmatpush.msra.mxu0 %v8688
        %8775 = vmatpush.msra.mxu0 %v8685
        %8776 = vmatpush.msra.mxu0 %v8682
        %8777 = vmatpush.msra.mxu0 %v8679
        %8778 = vmatpush.msra.mxu0 %v8676
        %8779 = vmatpush.msra.mxu0 %v8673
        %8780 = vmatpush.msra.mxu0 %v8670
        %8781 = vmatpush.msra.mxu0 %v8667
        %8782 = vmatpush.msra.mxu0 %v8664
        %8783 = vmatpush.msra.mxu0 %v8661
        %8784 = vmatmul.f32.gmra.mxu0 %v1597
        %v8785 = vpop.f32.mrf.mxu0
        %v8786 = vadd.f32 0.0, %v8785
        %8787 = vmatmul.f32.gmra.mxu0 %v1600
        %v8788 = vpop.f32.mrf.mxu0
        %v8789 = vadd.f32 0.0, %v8788
        %8790 = vmatmul.f32.gmra.mxu0 %v1603
        %v8791 = vpop.f32.mrf.mxu0
        %v8792 = vadd.f32 0.0, %v8791
        %8793 = vmatmul.f32.gmra.mxu0 %v1606
        %v8794 = vpop.f32.mrf.mxu0
        %v8795 = vadd.f32 0.0, %v8794
        %8796 = vmatmul.f32.gmra.mxu0 %v1609
        %v8797 = vpop.f32.mrf.mxu0
        %v8798 = vadd.f32 0.0, %v8797
        %8799 = vmatmul.f32.gmra.mxu0 %v1612
        %v8800 = vpop.f32.mrf.mxu0
        %v8801 = vadd.f32 0.0, %v8800
        %8802 = vmatmul.f32.gmra.mxu0 %v1615
        %v8803 = vpop.f32.mrf.mxu0
        %v8804 = vadd.f32 0.0, %v8803
        %8805 = vmatmul.f32.gmra.mxu0 %v1618
        %v8806 = vpop.f32.mrf.mxu0
        %v8807 = vadd.f32 0.0, %v8806
        %8808 = vmatmul.f32.gmra.mxu0 %v1621
        %v8809 = vpop.f32.mrf.mxu0
        %v8810 = vadd.f32 0.0, %v8809
        %8811 = vmatmul.f32.gmra.mxu0 %v1624
        %v8812 = vpop.f32.mrf.mxu0
        %v8813 = vadd.f32 0.0, %v8812
        %8814 = vmatmul.f32.gmra.mxu0 %v1627
        %v8815 = vpop.f32.mrf.mxu0
        %v8816 = vadd.f32 0.0, %v8815
        %8817 = vmatmul.f32.gmra.mxu0 %v1630
        %v8818 = vpop.f32.mrf.mxu0
        %v8819 = vadd.f32 0.0, %v8818
        %8820 = vdwg.mxu0
        %8821 = vmatpush.msra.mxu0 0.0
        %8822 = vmatpush.msra.mxu0 0.0
        %8823 = vmatpush.msra.mxu0 0.0
        %8824 = vmatpush.msra.mxu0 0.0
        %8825 = vmatpush.msra.mxu0 %v8730
        %8826 = vmatpush.msra.mxu0 %v8727
        %8827 = vmatpush.msra.mxu0 %v8724
        %8828 = vmatpush.msra.mxu0 %v8721
        %8829 = vmatpush.msra.mxu0 %v8718
        %8830 = vmatpush.msra.mxu0 %v8715
        %8831 = vmatpush.msra.mxu0 %v8712
        %8832 = vmatpush.msra.mxu0 %v8709
        %8833 = vmatpush.msra.mxu0 %v8706
        %8834 = vmatpush.msra.mxu0 %v8703
        %8835 = vmatpush.msra.mxu0 %v8700
        %8836 = vmatpush.msra.mxu0 %v8697
        %8837 = vmatmul.f32.gmra.mxu0 %v1597
        %v8838 = vpop.f32.mrf.mxu0
        %v8839 = vadd.f32 0.0, %v8838
        %8840 = vmatmul.f32.gmra.mxu0 %v1600
        %v8841 = vpop.f32.mrf.mxu0
        %v8842 = vadd.f32 0.0, %v8841
        %8843 = vmatmul.f32.gmra.mxu0 %v1603
        %v8844 = vpop.f32.mrf.mxu0
        %v8845 = vadd.f32 0.0, %v8844
        %8846 = vmatmul.f32.gmra.mxu0 %v1606
        %v8847 = vpop.f32.mrf.mxu0
        %v8848 = vadd.f32 0.0, %v8847
        %8849 = vmatmul.f32.gmra.mxu0 %v1609
        %v8850 = vpop.f32.mrf.mxu0
        %v8851 = vadd.f32 0.0, %v8850
        %8852 = vmatmul.f32.gmra.mxu0 %v1612
        %v8853 = vpop.f32.mrf.mxu0
        %v8854 = vadd.f32 0.0, %v8853
        %8855 = vmatmul.f32.gmra.mxu0 %v1615
        %v8856 = vpop.f32.mrf.mxu0
        %v8857 = vadd.f32 0.0, %v8856
        %8858 = vmatmul.f32.gmra.mxu0 %v1618
        %v8859 = vpop.f32.mrf.mxu0
        %v8860 = vadd.f32 0.0, %v8859
        %8861 = vmatmul.f32.gmra.mxu0 %v1621
        %v8862 = vpop.f32.mrf.mxu0
        %v8863 = vadd.f32 0.0, %v8862
        %8864 = vmatmul.f32.gmra.mxu0 %v1624
        %v8865 = vpop.f32.mrf.mxu0
        %v8866 = vadd.f32 0.0, %v8865
        %8867 = vmatmul.f32.gmra.mxu0 %v1627
        %v8868 = vpop.f32.mrf.mxu0
        %v8869 = vadd.f32 0.0, %v8868
        %8870 = vmatmul.f32.gmra.mxu0 %v1630
        %v8871 = vpop.f32.mrf.mxu0
        %v8872 = vadd.f32 0.0, %v8871
        %8873 = vdwg.mxu0
        %8874 = vmatpush.msra.mxu0 0.0
        %8875 = vmatpush.msra.mxu0 0.0
        %8876 = vmatpush.msra.mxu0 0.0
        %8877 = vmatpush.msra.mxu0 0.0
        %8878 = vmatpush.msra.mxu0 %v8766
        %8879 = vmatpush.msra.mxu0 %v8763
        %8880 = vmatpush.msra.mxu0 %v8760
        %8881 = vmatpush.msra.mxu0 %v8757
        %8882 = vmatpush.msra.mxu0 %v8754
        %8883 = vmatpush.msra.mxu0 %v8751
        %8884 = vmatpush.msra.mxu0 %v8748
        %8885 = vmatpush.msra.mxu0 %v8745
        %8886 = vmatpush.msra.mxu0 %v8742
        %8887 = vmatpush.msra.mxu0 %v8739
        %8888 = vmatpush.msra.mxu0 %v8736
        %8889 = vmatpush.msra.mxu0 %v8733
        %8890 = vmatmul.f32.gmra.mxu0 %v1597
        %v8891 = vpop.f32.mrf.mxu0
        %v8892 = vadd.f32 0.0, %v8891
        %8893 = vmatmul.f32.gmra.mxu0 %v1600
        %v8894 = vpop.f32.mrf.mxu0
        %v8895 = vadd.f32 0.0, %v8894
        %8896 = vmatmul.f32.gmra.mxu0 %v1603
        %v8897 = vpop.f32.mrf.mxu0
        %v8898 = vadd.f32 0.0, %v8897
        %8899 = vmatmul.f32.gmra.mxu0 %v1606
        %v8900 = vpop.f32.mrf.mxu0
        %v8901 = vadd.f32 0.0, %v8900
        %8902 = vmatmul.f32.gmra.mxu0 %v1609
        %v8903 = vpop.f32.mrf.mxu0
        %v8904 = vadd.f32 0.0, %v8903
        %8905 = vmatmul.f32.gmra.mxu0 %v1612
        %v8906 = vpop.f32.mrf.mxu0
        %v8907 = vadd.f32 0.0, %v8906
        %8908 = vmatmul.f32.gmra.mxu0 %v1615
        %v8909 = vpop.f32.mrf.mxu0
        %v8910 = vadd.f32 0.0, %v8909
        %8911 = vmatmul.f32.gmra.mxu0 %v1618
        %v8912 = vpop.f32.mrf.mxu0
        %v8913 = vadd.f32 0.0, %v8912
        %8914 = vmatmul.f32.gmra.mxu0 %v1621
        %v8915 = vpop.f32.mrf.mxu0
        %v8916 = vadd.f32 0.0, %v8915
        %8917 = vmatmul.f32.gmra.mxu0 %v1624
        %v8918 = vpop.f32.mrf.mxu0
        %v8919 = vadd.f32 0.0, %v8918
        %8920 = vmatmul.f32.gmra.mxu0 %v1627
        %v8921 = vpop.f32.mrf.mxu0
        %v8922 = vadd.f32 0.0, %v8921
        %8923 = vmatmul.f32.gmra.mxu0 %v1630
        %v8924 = vpop.f32.mrf.mxu0
        %v8925 = vadd.f32 0.0, %v8924
        %8926 = vdwg.mxu0
        %v8927 = vmul.f32 %v8786, %v1181
        %v8928 = vmul.f32 %v8789, %v1182
        %v8929 = vmul.f32 %v8792, %v1183
        %v8930 = vmul.f32 %v8795, %v1184
        %v8931 = vmul.f32 %v8798, %v1185
        %v8932 = vmul.f32 %v8801, %v1186
        %v8933 = vmul.f32 %v8804, %v1187
        %v8934 = vmul.f32 %v8807, %v1188
        %v8935 = vmul.f32 %v8810, %v1189
        %v8936 = vmul.f32 %v8813, %v1190
        %v8937 = vmul.f32 %v8816, %v1191
        %v8938 = vmul.f32 %v8819, %v1192
        %v8939 = vmul.f32 %v1803, %v8839
        %v8940 = vmul.f32 %v1804, %v8842
        %v8941 = vmul.f32 %v1805, %v8845
        %v8942 = vmul.f32 %v1806, %v8848
        %v8943 = vmul.f32 %v1807, %v8851
        %v8944 = vmul.f32 %v1808, %v8854
        %v8945 = vmul.f32 %v1809, %v8857
        %v8946 = vmul.f32 %v1810, %v8860
        %v8947 = vmul.f32 %v1811, %v8863
        %v8948 = vmul.f32 %v1812, %v8866
        %v8949 = vmul.f32 %v1813, %v8869
        %v8950 = vmul.f32 %v1814, %v8872
        %v8951 = vsub.f32 %v8927, %v8939
        %v8952 = vsub.f32 %v8928, %v8940
        %v8953 = vsub.f32 %v8929, %v8941
        %v8954 = vsub.f32 %v8930, %v8942
        %v8955 = vsub.f32 %v8931, %v8943
        %v8956 = vsub.f32 %v8932, %v8944
        %v8957 = vsub.f32 %v8933, %v8945
        %v8958 = vsub.f32 %v8934, %v8946
        %v8959 = vsub.f32 %v8935, %v8947
        %v8960 = vsub.f32 %v8936, %v8948
        %v8961 = vsub.f32 %v8937, %v8949
        %v8962 = vsub.f32 %v8938, %v8950
        %v8963 = vadd.f32 %v8951, %v8892
        %v8964 = vadd.f32 %v8952, %v8895
        %v8965 = vadd.f32 %v8953, %v8898
        %v8966 = vadd.f32 %v8954, %v8901
        %v8967 = vadd.f32 %v8955, %v8904
        %v8968 = vadd.f32 %v8956, %v8907
        %v8969 = vadd.f32 %v8957, %v8910
        %v8970 = vadd.f32 %v8958, %v8913
        %v8971 = vadd.f32 %v8959, %v8916
        %v8972 = vadd.f32 %v8960, %v8919
        %v8973 = vadd.f32 %v8961, %v8922
        %v8974 = vadd.f32 %v8962, %v8925
        %vm8975 = vcmp.eq.f32.partialorder %v1217, 9.0
        %vm8976 = vcmp.eq.f32.partialorder %v1218, 9.0
        %vm8977 = vcmp.eq.f32.partialorder %v1219, 9.0
        %vm8978 = vcmp.eq.f32.partialorder %v1220, 9.0
        %vm8979 = vcmp.eq.f32.partialorder %v1221, 9.0
        %vm8980 = vcmp.eq.f32.partialorder %v1222, 9.0
        %vm8981 = vcmp.eq.f32.partialorder %v1223, 9.0
        %vm8982 = vcmp.eq.f32.partialorder %v1224, 9.0
        %vm8983 = vcmp.eq.f32.partialorder %v1225, 9.0
        %vm8984 = vcmp.eq.f32.partialorder %v1226, 9.0
        %vm8985 = vcmp.eq.f32.partialorder %v1227, 9.0
        %vm8986 = vcmp.eq.f32.partialorder %v1228, 9.0
        %v8987 = vsub.f32 10.0, %v1205
        %v8988 = vsub.f32 10.0, %v1206
        %v8989 = vsub.f32 10.0, %v1207
        %v8990 = vsub.f32 10.0, %v1208
        %v8991 = vsub.f32 10.0, %v1209
        %v8992 = vsub.f32 10.0, %v1210
        %v8993 = vsub.f32 10.0, %v1211
        %v8994 = vsub.f32 10.0, %v1212
        %v8995 = vsub.f32 10.0, %v1213
        %v8996 = vsub.f32 10.0, %v1214
        %v8997 = vsub.f32 10.0, %v1215
        %v8998 = vsub.f32 10.0, %v1216
        %v8999 = vsel %vm8975, %v8987, 0.0
        %v9000 = vsel %vm8976, %v8988, 0.0
        %v9001 = vsel %vm8977, %v8989, 0.0
        %v9002 = vsel %vm8978, %v8990, 0.0
        %v9003 = vsel %vm8979, %v8991, 0.0
        %v9004 = vsel %vm8980, %v8992, 0.0
        %v9005 = vsel %vm8981, %v8993, 0.0
        %v9006 = vsel %vm8982, %v8994, 0.0
        %v9007 = vsel %vm8983, %v8995, 0.0
        %v9008 = vsel %vm8984, %v8996, 0.0
        %v9009 = vsel %vm8985, %v8997, 0.0
        %v9010 = vsel %vm8986, %v8998, 0.0
        %vm9011 = vcmp.eq.f32.partialorder %v1229, 10.0
        %vm9012 = vcmp.eq.f32.partialorder %v1230, 10.0
        %vm9013 = vcmp.eq.f32.partialorder %v1231, 10.0
        %vm9014 = vcmp.eq.f32.partialorder %v1232, 10.0
        %vm9015 = vcmp.eq.f32.partialorder %v1233, 10.0
        %vm9016 = vcmp.eq.f32.partialorder %v1234, 10.0
        %vm9017 = vcmp.eq.f32.partialorder %v1235, 10.0
        %vm9018 = vcmp.eq.f32.partialorder %v1236, 10.0
        %vm9019 = vcmp.eq.f32.partialorder %v1237, 10.0
        %vm9020 = vcmp.eq.f32.partialorder %v1238, 10.0
        %vm9021 = vcmp.eq.f32.partialorder %v1239, 10.0
        %vm9022 = vcmp.eq.f32.partialorder %v1240, 10.0
        %v9023 = vsel %vm9011, %v7675, 0.0
        %v9024 = vsel %vm9012, %v7676, 0.0
        %v9025 = vsel %vm9013, %v7677, 0.0
        %v9026 = vsel %vm9014, %v7678, 0.0
        %v9027 = vsel %vm9015, %v7679, 0.0
        %v9028 = vsel %vm9016, %v7680, 0.0
        %v9029 = vsel %vm9017, %v7681, 0.0
        %v9030 = vsel %vm9018, %v7682, 0.0
        %v9031 = vsel %vm9019, %v7683, 0.0
        %v9032 = vsel %vm9020, %v7684, 0.0
        %v9033 = vsel %vm9021, %v7685, 0.0
        %v9034 = vsel %vm9022, %v7686, 0.0
        %v9035 = vmul.f32 %v8235, %v8999
        %v9036 = vmul.f32 %v8236, %v9000
        %v9037 = vmul.f32 %v8237, %v9001
        %v9038 = vmul.f32 %v8238, %v9002
        %v9039 = vmul.f32 %v8239, %v9003
        %v9040 = vmul.f32 %v8240, %v9004
        %v9041 = vmul.f32 %v8241, %v9005
        %v9042 = vmul.f32 %v8242, %v9006
        %v9043 = vmul.f32 %v8243, %v9007
        %v9044 = vmul.f32 %v8244, %v9008
        %v9045 = vmul.f32 %v8245, %v9009
        %v9046 = vmul.f32 %v8246, %v9010
        %v9047 = vadd.f32 %v8343, %v9035
        %v9048 = vadd.f32 %v8344, %v9036
        %v9049 = vadd.f32 %v8345, %v9037
        %v9050 = vadd.f32 %v8346, %v9038
        %v9051 = vadd.f32 %v8347, %v9039
        %v9052 = vadd.f32 %v8348, %v9040
        %v9053 = vadd.f32 %v8349, %v9041
        %v9054 = vadd.f32 %v8350, %v9042
        %v9055 = vadd.f32 %v8351, %v9043
        %v9056 = vadd.f32 %v8352, %v9044
        %v9057 = vadd.f32 %v8353, %v9045
        %v9058 = vadd.f32 %v8354, %v9046
        %v9059 = vmul.f32 %v8963, %v9023
        %v9060 = vmul.f32 %v8964, %v9024
        %v9061 = vmul.f32 %v8965, %v9025
        %v9062 = vmul.f32 %v8966, %v9026
        %v9063 = vmul.f32 %v8967, %v9027
        %v9064 = vmul.f32 %v8968, %v9028
        %v9065 = vmul.f32 %v8969, %v9029
        %v9066 = vmul.f32 %v8970, %v9030
        %v9067 = vmul.f32 %v8971, %v9031
        %v9068 = vmul.f32 %v8972, %v9032
        %v9069 = vmul.f32 %v8973, %v9033
        %v9070 = vmul.f32 %v8974, %v9034
        %v9071 = vadd.f32 %v9047, %v9059
        %v9072 = vadd.f32 %v9048, %v9060
        %v9073 = vadd.f32 %v9049, %v9061
        %v9074 = vadd.f32 %v9050, %v9062
        %v9075 = vadd.f32 %v9051, %v9063
        %v9076 = vadd.f32 %v9052, %v9064
        %v9077 = vadd.f32 %v9053, %v9065
        %v9078 = vadd.f32 %v9054, %v9066
        %v9079 = vadd.f32 %v9055, %v9067
        %v9080 = vadd.f32 %v9056, %v9068
        %v9081 = vadd.f32 %v9057, %v9069
        %v9082 = vadd.f32 %v9058, %v9070
        %v9083 = vmul.f32 %v8058, %v8999
        %v9084 = vmul.f32 %v8061, %v9000
        %v9085 = vmul.f32 %v8064, %v9001
        %v9086 = vmul.f32 %v8067, %v9002
        %v9087 = vmul.f32 %v8070, %v9003
        %v9088 = vmul.f32 %v8073, %v9004
        %v9089 = vmul.f32 %v8076, %v9005
        %v9090 = vmul.f32 %v8079, %v9006
        %v9091 = vmul.f32 %v8082, %v9007
        %v9092 = vmul.f32 %v8085, %v9008
        %v9093 = vmul.f32 %v8088, %v9009
        %v9094 = vmul.f32 %v8091, %v9010
        %v9095 = vadd.f32 %v8391, %v9083
        %v9096 = vadd.f32 %v8392, %v9084
        %v9097 = vadd.f32 %v8393, %v9085
        %v9098 = vadd.f32 %v8394, %v9086
        %v9099 = vadd.f32 %v8395, %v9087
        %v9100 = vadd.f32 %v8396, %v9088
        %v9101 = vadd.f32 %v8397, %v9089
        %v9102 = vadd.f32 %v8398, %v9090
        %v9103 = vadd.f32 %v8399, %v9091
        %v9104 = vadd.f32 %v8400, %v9092
        %v9105 = vadd.f32 %v8401, %v9093
        %v9106 = vadd.f32 %v8402, %v9094
        %v9107 = vmul.f32 %v8786, %v9023
        %v9108 = vmul.f32 %v8789, %v9024
        %v9109 = vmul.f32 %v8792, %v9025
        %v9110 = vmul.f32 %v8795, %v9026
        %v9111 = vmul.f32 %v8798, %v9027
        %v9112 = vmul.f32 %v8801, %v9028
        %v9113 = vmul.f32 %v8804, %v9029
        %v9114 = vmul.f32 %v8807, %v9030
        %v9115 = vmul.f32 %v8810, %v9031
        %v9116 = vmul.f32 %v8813, %v9032
        %v9117 = vmul.f32 %v8816, %v9033
        %v9118 = vmul.f32 %v8819, %v9034
        %v9119 = vadd.f32 %v9095, %v9107
        %v9120 = vadd.f32 %v9096, %v9108
        %v9121 = vadd.f32 %v9097, %v9109
        %v9122 = vadd.f32 %v9098, %v9110
        %v9123 = vadd.f32 %v9099, %v9111
        %v9124 = vadd.f32 %v9100, %v9112
        %v9125 = vadd.f32 %v9101, %v9113
        %v9126 = vadd.f32 %v9102, %v9114
        %v9127 = vadd.f32 %v9103, %v9115
        %v9128 = vadd.f32 %v9104, %v9116
        %v9129 = vadd.f32 %v9105, %v9117
        %v9130 = vadd.f32 %v9106, %v9118
        %v9131 = vrcp.pop %v9119
        %v9132 = vrcp.pop %v9120
        %v9133 = vrcp.pop %v9121
        %v9134 = vrcp.pop %v9122
        %v9135 = vrcp.pop %v9123
        %v9136 = vrcp.pop %v9124
        %v9137 = vrcp.pop %v9125
        %v9138 = vrcp.pop %v9126
        %v9139 = vrcp.pop %v9127
        %v9140 = vrcp.pop %v9128
        %v9141 = vrcp.pop %v9129
        %v9142 = vrcp.pop %v9130
        %v9143 = vmul.f32 %v9071, %v9131
        %v9144 = vmul.f32 %v9072, %v9132
        %v9145 = vmul.f32 %v9073, %v9133
        %v9146 = vmul.f32 %v9074, %v9134
        %v9147 = vmul.f32 %v9075, %v9135
        %v9148 = vmul.f32 %v9076, %v9136
        %v9149 = vmul.f32 %v9077, %v9137
        %v9150 = vmul.f32 %v9078, %v9138
        %v9151 = vmul.f32 %v9079, %v9139
        %v9152 = vmul.f32 %v9080, %v9140
        %v9153 = vmul.f32 %v9081, %v9141
        %v9154 = vmul.f32 %v9082, %v9142
        %9155 = vst.msk [vmem:[%s344] sm:$0xff] %vm1361, %v9143
        %9156 = vst.msk [vmem:[%s344 + $0x8] sm:$0xff] %vm1361, %v9144
        %9157 = vst.msk [vmem:[%s344 + $0x10] sm:$0xff] %vm1361, %v9145
        %9158 = vst.msk [vmem:[%s344 + $0x18] sm:$0xff] %vm1361, %v9146
        %9159 = vst.msk [vmem:[%s344 + $0x20] sm:$0xff] %vm1361, %v9147
        %9160 = vst.msk [vmem:[%s344 + $0x28] sm:$0xff] %vm1361, %v9148
        %9161 = vst.msk [vmem:[%s344 + $0x30] sm:$0xff] %vm1361, %v9149
        %9162 = vst.msk [vmem:[%s344 + $0x38] sm:$0xff] %vm1361, %v9150
        %9163 = vst.msk [vmem:[%s344 + $0x40] sm:$0xff] %vm1361, %v9151
        %9164 = vst.msk [vmem:[%s344 + $0x48] sm:$0xff] %vm1361, %v9152
        %9165 = vst.msk [vmem:[%s344 + $0x50] sm:$0xff] %vm1361, %v9153
        %9166 = vst.msk [vmem:[%s344 + $0x58] sm:$0xff] %vm1361, %v9154
        %s9167 = sand.u32 %s166, 1
        %s9168 = scalar_lea.sflag [#allocation4], %s9167
        %s9169 = sand.u32 %s166, 1
        %s9170 = smul.addr %s9169, 96
        %s9171 = scalar_lea.vmem [#allocation14], %s9170
        // Predicated region
        $region69: #{tpu_custom_call.1} parent=43 // pred_check
          %p9172 = pneg %p176
        $region70: #{tpu_custom_call.1} parent=43 // pred_check_branch
          %9174 = sbr.rel (%p9172) target = $region72
        $region71: #{tpu_custom_call.1} parent=43 // pred_region
          %s9175 = smul.u32 12, %s27
          %9177 = vsyncadd %s9168, 0
          %s9178 = smul.addr %s9175, 8
          %s9179 = scalar_lea.hbm %s6, %s9178
          %s9180 = sshll.u32 %s9171, 4
          %s9181 = int_to_ptr.vmem [resolvable:$true] %s9180
          %s9182 = sshll.u32 %s9179, 4
          %s9183 = int_to_ptr.hbm [resolvable:$true] %s9182
          %9188 = dma.vmem_to_hbm [thread:$0]  %s9181, 1536, %s9183, %s9168, 128, 128, 8
        $region72: #{tpu_custom_call.1} parent=43 // pred_fallthru
          _
      $region44: #{tpu_custom_call.1} parent=5 // pred_fallthru
        _
      %p9189 = scmp.le.s32.totalorder 2, %s22
      // Predicated region
      $region73: #{tpu_custom_call.1} parent=5 // pred_check
        %p9190 = pneg %p9189
      $region74: #{tpu_custom_call.1} parent=5 // pred_check_branch
        %9192 = sbr.rel (%p9190) target = $region76
      $region75: #{tpu_custom_call.1} parent=5 // pred_region
        %s9193 = ssub.s32 %s22, 2
        // Predicated region
        $region77: #{tpu_custom_call.1} parent=75 // pred_check
          %p9194 = pneg %p182
        $region78: #{tpu_custom_call.1} parent=75 // pred_check_branch
          %9196 = sbr.rel (%p9194) target = $region80
        $region79: #{tpu_custom_call.1} parent=75 // pred_region
          %s9197 = sand.u32 %s167, 1
          %s9198 = scalar_lea.sflag [#allocation4], %s9197
          %s9199 = sand.u32 %s167, 1
          %s9200 = smul.addr %s9199, 96
          %s9201 = scalar_lea.vmem [#allocation14], %s9200
          %9203 = dma.done %s9198, 1536
        $region80: #{tpu_custom_call.1} parent=75 // pred_fallthru
          _
      $region76: #{tpu_custom_call.1} parent=5 // pred_fallthru
        _
    $region6: #{tpu_custom_call.1} parent=1 // loop_footer
      %s26 = sadd.s32 1, %s22
    $region7: #{tpu_custom_call.1} parent=1 // loop_footer_branch
      %21 = sbr.rel target = $region3
    $region8: #{tpu_custom_call.1} parent=1 // loop_exit
      _
    %9204 = vsyncpa [#allocation3], 1
    %s9205 = scalar_lea.sflag [#allocation3], 1
    %9206 = vsyncpa %s9205, 1
    %9207 = vsyncpa [#allocation12], 1
    %9208 = vsyncpa [#allocation4], 1
    %s9209 = scalar_lea.sflag [#allocation4], 1
    %9210 = vsyncpa %s9209, 1
    %9211 = vsyncpa [#allocation5], 1
    %s9212 = scalar_lea.sflag [#allocation5], 1
    %9213 = vsyncpa %s9212, 1
    %9214 = vsyncpa [#allocation6], 1
    %s9215 = scalar_lea.sflag [#allocation6], 1
    %9216 = vsyncpa %s9215, 1
    %9217 = vsyncpa [#allocation10], 1

</llo_original>
